<compile_context>
chip_gen: v5e
topology: v5e:2x2
jax: 0.10.0
libtpu: 0.0.40
codegen_flags: <defaults>
</compile_context>

<pallas_src>
import math

import jax
import jax.numpy as jnp
from jax.experimental import pallas as pl
from jax.experimental.pallas import tpu as pltpu

# ----------------------------------------------------------------------------
# SS2D config (module defaults, small shapes)
# ----------------------------------------------------------------------------
D_MODEL = 4
D_STATE = 16
D_CONV = 3
EXPAND = 2
D_INNER = EXPAND * D_MODEL              # 8
DT_RANK = math.ceil(D_MODEL / 16)       # 1  (dt_rank='auto')
K_DIRS = 4

BATCH, HEIGHT, WIDTH = 2, 16, 16


# ----------------------------------------------------------------------------
# deterministic parameter init (same shapes as SS2D.__init__)
# ----------------------------------------------------------------------------
def init_params(key):
    ks = jax.random.split(key, 8)

    def unif(k, shape, scale):
        return jax.random.uniform(k, shape, jnp.float32, -scale, scale)

    p = {}
    p["in_proj_w"] = unif(ks[0], (2 * D_INNER, D_MODEL), 1.0 / math.sqrt(D_MODEL))
    p["conv_w"] = unif(ks[1], (D_INNER, 1, D_CONV, D_CONV), 1.0 / D_CONV)
    p["conv_b"] = unif(ks[2], (D_INNER,), 1.0 / D_CONV)
    p["x_proj_w"] = unif(ks[3], (K_DIRS, DT_RANK + 2 * D_STATE, D_INNER),
                         1.0 / math.sqrt(D_INNER))
    p["dt_projs_w"] = unif(ks[4], (K_DIRS, D_INNER, DT_RANK), DT_RANK ** -0.5)
    u = jax.random.uniform(ks[5], (K_DIRS, D_INNER), jnp.float32)
    dt = jnp.exp(u * (math.log(0.1) - math.log(0.001)) + math.log(0.001))
    dt = jnp.clip(dt, 1e-4, None)
    p["dt_projs_b"] = dt + jnp.log(-jnp.expm1(-dt))                 # inv_dt
    a_log = jnp.log(jnp.arange(1, D_STATE + 1, dtype=jnp.float32))
    p["A_logs"] = jnp.tile(a_log[None, :], (K_DIRS * D_INNER, 1))   # (4*Din, N)
    p["Ds"] = jnp.ones((K_DIRS * D_INNER,), jnp.float32)
    p["ln_gamma"] = jnp.ones((D_INNER,), jnp.float32)
    p["ln_beta"] = jnp.zeros((D_INNER,), jnp.float32)
    p["out_proj_w"] = unif(ks[6], (D_MODEL, D_INNER), 1.0 / math.sqrt(D_INNER))
    return p


# ----------------------------------------------------------------------------
# small helpers
# ----------------------------------------------------------------------------
def _roll(x, shift, axis):
    """pltpu.roll (jnp.roll semantics) with shift normalized to [0, size)."""
    size = x.shape[axis]
    s = shift % size
    if s == 0:
        return x
    return pltpu.roll(x, s, axis)


def _block_diag(blocks):
    # blocks: (G, a, b) -> (G*a, G*b) block-diagonal
    g, a, b = blocks.shape
    eye = jnp.eye(g, dtype=blocks.dtype)
    return jnp.einsum("gij,gh->gihj", blocks, eye).reshape(g * a, g * b)


def _expand_bc(wcols, batch):
    # wcols: (K, N, Din) -> (N, B*K*Din, B*K*Din) block-diag weights whose
    # columns are identical across d_out (bakes the d-broadcast into the MXU).
    k, nst, din = wcols.shape
    blk = jnp.broadcast_to(wcols[:, :, :, None], (k, nst, din, din))
    blk = jnp.transpose(blk, (1, 0, 2, 3))            # (N, K, din, din)
    blk = jnp.tile(blk, (1, batch, 1, 1))             # (N, B*K, din, din)
    return jnp.stack([_block_diag(blk[s]) for s in range(nst)], axis=0)


# ----------------------------------------------------------------------------
# host-side weight packing for the lane-packed scan kernel
# lane order of the packed channel axis: c = b*(K*Din) + k*Din + d
# state pairing: pair p <-> states (p, p + N/2) on lanes [0:C] / [C:2C]
# ----------------------------------------------------------------------------
def _pack_params(p, batch):
    din, nst, r, k = D_INNER, D_STATE, DT_RANK, K_DIRS
    c = batch * k * din
    n_pair = nst // 2
    xw = p["x_proj_w"]                                # (K, R+2N, Din)
    dtw = p["dt_projs_w"]                             # (K, Din, R)

    # fold x_proj(dt-rows) @ dt_proj into one (Din,Din) matrix per direction
    wdt_k = jnp.einsum("krd,ker->kde", xw[:, :r, :], dtw)          # (K, Din, Din)
    wdt = _block_diag(jnp.tile(wdt_k, (batch, 1, 1)))              # (C, C)
    bias = jnp.tile(p["dt_projs_b"].reshape(-1), (batch,)).reshape(1, c)

    wb_all = _expand_bc(xw[:, r:r + nst, :], batch)                # (N, C, C)
    wc_all = _expand_bc(xw[:, r + nst:r + 2 * nst, :], batch)      # (N, C, C)
    # per state-pair: [ B_p | B_{p+8} | C_p | C_{p+8} ]  -> one (C, 4C) weight
    wbc = jnp.stack(
        [jnp.concatenate([wb_all[s], wb_all[s + n_pair],
                          wc_all[s], wc_all[s + n_pair]], axis=1)
         for s in range(n_pair)], axis=0)                          # (N/2, C, 4C)

    a_cols = jnp.tile((-jnp.exp(p["A_logs"])).T, (1, batch))       # (N, C)
    a2 = jnp.concatenate([a_cols[:n_pair], a_cols[n_pair:]],
                         axis=1)[:, None, :]                       # (N/2, 1, 2C)
    d_packed = jnp.tile(p["Ds"], (batch,)).reshape(1, c)
    return dict(wdt=wdt, bias=bias, wbc=wbc, a2=a2, d=d_packed)


# ----------------------------------------------------------------------------
# Kernel 1: in_proj (x & z) + depthwise 3x3 conv (padding=1) + SiLU
#   lane-dense layout: rows = b*H + h, lanes = w*Din + d   (32 x 128)
# ----------------------------------------------------------------------------
def _inproj_conv_kernel(x_ref, wxz_ref, wconv_ref, cb_ref, xc_ref, z_ref):
    # x_ref: (B*H, W*Cm)  wxz_ref: (W*Cm, 2*W*Din)  wconv_ref: (9, W*Din)
    rows, wd = xc_ref.shape

    xz = jnp.dot(x_ref[...], wxz_ref[...], preferred_element_type=jnp.float32)
    z_ref[...] = xz[:, wd:]                            # raw z (gated later)
    xi = xz[:, :wd]                                    # (B*H, W*Din)

    row_i = jax.lax.broadcasted_iota(jnp.int32, (rows, wd), 0)
    lane_i = jax.lax.broadcasted_iota(jnp.int32, (rows, wd), 1)
    if HEIGHT & (HEIGHT - 1) == 0:
        h_idx = row_i & (HEIGHT - 1)
    else:
        h_idx = row_i % HEIGHT
    if D_INNER & (D_INNER - 1) == 0:
        w_idx = lane_i >> int(math.log2(D_INNER))
    else:
        w_idx = lane_i // D_INNER

    acc = jnp.zeros((rows, wd), jnp.float32)
    pad = (D_CONV - 1) // 2
    for kh in range(D_CONV):
        dh = kh - pad
        for kw in range(D_CONV):
            dw = kw - pad
            shifted = xi
            if dh != 0:
                shifted = _roll(shifted, -dh, 0)               # rows  <- r+dh
            if dw != 0:
                shifted = _roll(shifted, -dw * D_INNER, 1)     # lanes <- w+dw
            masks = []
            if dh < 0:
                masks.append(h_idx >= -dh)
            elif dh > 0:
                masks.append(h_idx <= HEIGHT - 1 - dh)
            if dw < 0:
                masks.append(w_idx >= -dw)
            elif dw > 0:
                masks.append(w_idx <= WIDTH - 1 - dw)
            if masks:
                m = masks[0]
                for mm in masks[1:]:
                    m = m & mm
                shifted = jnp.where(m, shifted, 0.0)
            tap = kh * D_CONV + kw
            acc = acc + shifted * wconv_ref[tap:tap + 1, :]
    acc = acc + cb_ref[...]
    xc_ref[...] = acc * (1.0 / (1.0 + jnp.exp(-acc)))          # SiLU


def inproj_conv_silu(x, in_proj_w, conv_w, conv_b):
    bb, hh, ww, cm = x.shape
    din = D_INNER
    x2d = x.reshape(bb * hh, ww * cm)                          # (32, 64)

    w_x_t = jnp.transpose(in_proj_w[:din, :])                  # (Cm, Din)
    w_z_t = jnp.transpose(in_proj_w[din:, :])

    def _bd(wt):                                               # -> (W*Cm, W*Din)
        return _block_diag(jnp.broadcast_to(wt[None], (ww, cm, din)))

    wxz = jnp.concatenate([_bd(w_x_t), _bd(w_z_t)], axis=1)    # (64, 256)
    # torch weight (Din,1,3,3) -> (9, Din) with [kh*3+kw, d] = w[d,0,kh,kw]
    w9 = jnp.transpose(conv_w[:, 0], (1, 2, 0)).reshape(D_CONV * D_CONV, din)
    w_lane = jnp.tile(w9, (1, ww))                             # (9, W*Din)
    cb_lane = jnp.tile(conv_b, (ww,)).reshape(1, ww * din)

    return pl.pallas_call(
        _inproj_conv_kernel,
        out_shape=(jax.ShapeDtypeStruct((bb * hh, ww * din), jnp.float32),
                   jax.ShapeDtypeStruct((bb * hh, ww * din), jnp.float32)),
        grid=(1,),
        in_specs=[pl.BlockSpec((bb * hh, ww * cm), lambda i: (0, 0)),
                  pl.BlockSpec((ww * cm, 2 * ww * din), lambda i: (0, 0)),
                  pl.BlockSpec((D_CONV * D_CONV, ww * din), lambda i: (0, 0)),
                  pl.BlockSpec((1, ww * din), lambda i: (0, 0))],
        out_specs=(pl.BlockSpec((bb * hh, ww * din), lambda i: (0, 0)),
                   pl.BlockSpec((bb * hh, ww * din), lambda i: (0, 0))),
        compiler_params=pltpu.CompilerParams(dimension_semantics=("arbitrary",)),
    )(x2d, wxz, w_lane, cb_lane)


# ----------------------------------------------------------------------------
# Kernel 2: lane-packed selective scan, 2 states per vreg.
#   u:    (L, C)         C = B*K*Din channels on lanes
#   wdt:  (C, C)         block-diag fused dt projection
#   wbc:  (N/2, C, 4C)   [B_p | B_{p+8} | C_p | C_{p+8}] block-diag weights
#   a2:   (N/2, 1, 2C)   -exp(A_log), state-pair packed on lanes
#   d:    (1, C)
# ----------------------------------------------------------------------------
def _scan_kernel(u_ref, wdt_ref, bias_ref, wbc_ref, a2_ref, d_ref,
                 y_ref, eda_scr, dbu_scr, c_scr, yacc_scr):
    seq_len, chan = u_ref.shape
    n_pair = a2_ref.shape[0]
    chan2 = 2 * chan

    # ---- hoisted vectorized precompute (MXU + EUP, off the recurrence) ----
    u = u_ref[...]                                                     # (L, C)
    dt = jnp.dot(u, wdt_ref[...], preferred_element_type=jnp.float32) + bias_ref[...]
    delta = jnp.maximum(dt, 0.0) + jnp.log1p(jnp.exp(-jnp.abs(dt)))    # softplus
    du = delta * u
    delta2 = jnp.concatenate([delta, delta], axis=1)                   # (L, 2C)
    du2 = jnp.concatenate([du, du], axis=1)                            # (L, 2C)

    for s in range(n_pair):
        res = jnp.dot(u, wbc_ref[s], preferred_element_type=jnp.float32)  # (L, 4C)
        eda_scr[s] = jnp.exp(delta2 * a2_ref[s])                       # (L, 2C)
        dbu_scr[s] = du2 * res[:, :chan2]                              # (L, 2C)
        c_scr[s] = res[:, chan2:]                                      # (L, 2C)

    # ---- sequential recurrence: full-lane rows, aligned 8-step blocks ----
    def block_body(blk, hs):
        t0 = pl.multiple_of(blk * 8, 8)
        for j in range(8):
            t = t0 + j
            new_hs = []
            contribs = []
            for s in range(n_pair):
                h_s = (eda_scr[s, pl.ds(t, 1), :] * hs[s]
                       + dbu_scr[s, pl.ds(t, 1), :])
                contribs.append(c_scr[s, pl.ds(t, 1), :] * h_s)
                new_hs.append(h_s)
            while len(contribs) > 1:                     # balanced add tree
                contribs = [contribs[i] + contribs[i + 1]
                            for i in range(0, len(contribs), 2)]
            yacc_scr[pl.ds(t, 1), :] = contribs[0]       # unmasked full-lane vst
            hs = tuple(new_hs)
        return hs

    h0 = tuple(jnp.zeros((1, chan2), jnp.float32) for _ in range(n_pair))
    jax.lax.fori_loop(0, seq_len // 8, block_body, h0)

    # ---- fold the two state halves + skip term, one bulk store ----
    yfull = yacc_scr[...]                                              # (L, 2C)
    y_ref[...] = yfull[:, :chan] + yfull[:, chan:] + d_ref[...] * u


def selective_scan_packed(u_packed, pk):
    l, c = u_packed.shape
    n_pair = pk["wbc"].shape[0]
    assert l % 8 == 0
    return pl.pallas_call(
        _scan_kernel,
        out_shape=jax.ShapeDtypeStruct((l, c), jnp.float32),
        grid=(1,),
        in_specs=[pl.BlockSpec((l, c), lambda i: (0, 0)),
                  pl.BlockSpec((c, c), lambda i: (0, 0)),
                  pl.BlockSpec((1, c), lambda i: (0, 0)),
                  pl.BlockSpec((n_pair, c, 4 * c), lambda i: (0, 0, 0)),
                  pl.BlockSpec((n_pair, 1, 2 * c), lambda i: (0, 0, 0)),
                  pl.BlockSpec((1, c), lambda i: (0, 0))],
        out_specs=pl.BlockSpec((l, c), lambda i: (0, 0)),
        scratch_shapes=[pltpu.VMEM((n_pair, l, 2 * c), jnp.float32),  # exp(dA)
                        pltpu.VMEM((n_pair, l, 2 * c), jnp.float32),  # d*u*B
                        pltpu.VMEM((n_pair, l, 2 * c), jnp.float32),  # C
                        pltpu.VMEM((l, 2 * c), jnp.float32)],         # y acc
        compiler_params=pltpu.CompilerParams(
            dimension_semantics=("arbitrary",)),
    )(u_packed, pk["wdt"], pk["bias"], pk["wbc"], pk["a2"], pk["d"])


# ----------------------------------------------------------------------------
# Kernel 3: token-packed LayerNorm + SiLU(z) gate + out_proj
#   y/z: (B*L/16, 16*Din) = (32, 128)  -> out (32, 16*Dm)
# ----------------------------------------------------------------------------
def _epilogue_kernel(y_ref, z_ref, g_ref, b_ref, wo_ref, o_ref):
    y = y_ref[...]
    lane = jax.lax.broadcasted_iota(jnp.int32, y.shape, 1)

    def group_sum(v):
        # exact butterfly all-reduce inside every aligned group of D_INNER lanes
        m = 1
        while m < D_INNER:
            left = _roll(v, -m, 1)      # partner at lane + m
            right = _roll(v, m, 1)      # partner at lane - m
            v = v + jnp.where((lane & m) == 0, left, right)
            m *= 2
        return v

    inv_d = 1.0 / D_INNER
    mu = group_sum(y) * inv_d
    dy = y - mu
    var = group_sum(dy * dy) * inv_d
    yn = dy * jax.lax.rsqrt(var + 1e-5) * g_ref[...] + b_ref[...]
    z = z_ref[...]
    yg = yn * (z * (1.0 / (1.0 + jnp.exp(-z))))                # * SiLU(z)
    o_ref[...] = jnp.dot(yg, wo_ref[...], preferred_element_type=jnp.float32)


def out_norm_gate_proj(y_pk, z_pk, gamma, beta, w_out):
    rows, lanes = y_pk.shape
    din = gamma.shape[0]
    dm = w_out.shape[0]
    tok = lanes // din
    assert tok * din == lanes and (din & (din - 1)) == 0
    g_lane = jnp.tile(gamma, (tok,)).reshape(1, lanes)
    b_lane = jnp.tile(beta, (tok,)).reshape(1, lanes)
    wo_bd = _block_diag(jnp.broadcast_to(jnp.transpose(w_out)[None],
                                         (tok, din, dm)))      # (lanes, tok*Dm)
    return pl.pallas_call(
        _epilogue_kernel,
        out_shape=jax.ShapeDtypeStruct((rows, tok * dm), jnp.float32),
        grid=(1,),
        in_specs=[pl.BlockSpec((rows, lanes), lambda i: (0, 0)),
                  pl.BlockSpec((rows, lanes), lambda i: (0, 0)),
                  pl.BlockSpec((1, lanes), lambda i: (0, 0)),
                  pl.BlockSpec((1, lanes), lambda i: (0, 0)),
                  pl.BlockSpec((lanes, tok * dm), lambda i: (0, 0))],
        out_specs=pl.BlockSpec((rows, tok * dm), lambda i: (0, 0)),
        compiler_params=pltpu.CompilerParams(dimension_semantics=("arbitrary",)),
    )(y_pk, z_pk, g_lane, b_lane, wo_bd)


# ----------------------------------------------------------------------------
# Full SS2D forward (Pallas kernels + XLA glue for pure data movement)
# ----------------------------------------------------------------------------
def ss2d_forward(x, p):
    bb, hh, ww, cm = x.shape
    din, k = D_INNER, K_DIRS
    l = hh * ww

    pk = _pack_params(p, bb)

    # K1: in_proj + depthwise conv + SiLU, lane-dense (B*H, W*Din)
    xc2d, z2d = inproj_conv_silu(x, p["in_proj_w"], p["conv_w"], p["conv_b"])
    xc = xc2d.reshape(bb, hh, ww, din)

    # build the 4 scan directions (glue: transposes / flips) and lane-pack
    x_chw = jnp.transpose(xc, (0, 3, 1, 2))                       # (B,Din,H,W)
    d0 = x_chw.reshape(bb, din, l)                                # row-major HW
    d1 = jnp.transpose(x_chw, (0, 1, 3, 2)).reshape(bb, din, l)   # col-major WH
    x_hwwh = jnp.stack([d0, d1], axis=1)
    xs = jnp.concatenate([x_hwwh, jnp.flip(x_hwwh, axis=-1)], axis=1)  # (B,4,Din,L)
    u_packed = jnp.transpose(xs, (3, 0, 1, 2)).reshape(l, bb * k * din)  # (L, 64)

    # K2: packed selective scan (2 states per vreg)
    y_packed = selective_scan_packed(u_packed, pk)                # (L, 64)
    out_y = jnp.transpose(y_packed.reshape(l, bb, k, din), (1, 2, 0, 3))  # (B,K,L,Din)

    # recombine the 4 directions (glue)
    # TODO(synk): fold these flips/transposes into the epilogue pallas_call via
    #             direction-specific index_maps to cut XLA dispatches further.
    y1 = out_y[:, 0]
    y2 = jnp.flip(out_y[:, 2], axis=1)

    def wh_to_hw(t):   # t: (B, L, Din) with L ordered w*H + h
        return jnp.transpose(t.reshape(bb, ww, hh, din), (0, 2, 1, 3)).reshape(bb, l, din)

    y3 = wh_to_hw(out_y[:, 1])
    y4 = wh_to_hw(jnp.flip(out_y[:, 3], axis=1))
    y = y1 + y2 + y3 + y4                                         # (B, L, Din)

    # K3: token-packed LayerNorm + SiLU(z) gate + out_proj
    y_pk = y.reshape(bb * hh, ww * din)                           # (32, 128)
    out_pk = out_norm_gate_proj(y_pk, z2d, p["ln_gamma"], p["ln_beta"],
                                p["out_proj_w"])                  # (32, 16*Dm)
    return out_pk.reshape(bb, hh, ww, cm)


# ----------------------------------------------------------------------------
# Pure-JAX reference (mirrors the PyTorch code) for validation
# ----------------------------------------------------------------------------
def ss2d_forward_ref(x, p):
    bb, hh, ww, cm = x.shape
    din, n, r, k = D_INNER, D_STATE, DT_RANK, K_DIRS
    l = hh * ww
    hp = jax.lax.Precision.HIGHEST

    xz = jnp.einsum("bhwc,oc->bhwo", x, p["in_proj_w"], precision=hp)
    x_i, z = xz[..., :din], xz[..., din:]
    w = jnp.transpose(p["conv_w"], (2, 3, 1, 0))
    xc = jax.lax.conv_general_dilated(
        x_i, w, (1, 1), "SAME", dimension_numbers=("NHWC", "HWIO", "NHWC"),
        feature_group_count=din, precision=hp) + p["conv_b"]
    xc = jax.nn.silu(xc)

    x_chw = jnp.transpose(xc, (0, 3, 1, 2))
    d0 = x_chw.reshape(bb, din, l)
    d1 = jnp.transpose(x_chw, (0, 1, 3, 2)).reshape(bb, din, l)
    x_hwwh = jnp.stack([d0, d1], axis=1)
    xs = jnp.concatenate([x_hwwh, jnp.flip(x_hwwh, axis=-1)], axis=1)  # (B,K,Din,L)

    x_dbl = jnp.einsum("bkdl,kcd->bkcl", xs, p["x_proj_w"], precision=hp)
    dts, bs, cs = x_dbl[:, :, :r], x_dbl[:, :, r:r + n], x_dbl[:, :, r + n:]
    dts = jnp.einsum("bkrl,kdr->bkdl", dts, p["dt_projs_w"], precision=hp)

    u = xs.reshape(bb, k * din, l)
    delta = jax.nn.softplus(dts.reshape(bb, k * din, l)
                            + p["dt_projs_b"].reshape(-1)[None, :, None])
    a_mat = -jnp.exp(p["A_logs"])                       # (K*Din, N)
    b_full = jnp.repeat(bs, din, axis=1)                # (B, K*Din, N, L)
    c_full = jnp.repeat(cs, din, axis=1)
    d_vec = p["Ds"]

    def step(h, inp):
        d_t, u_t, b_t, c_t = inp
        h = jnp.exp(d_t[..., None] * a_mat) * h + d_t[..., None] * b_t * u_t[..., None]
        y = jnp.sum(h * c_t, axis=-1) + d_vec * u_t
        return h, y

    h0 = jnp.zeros((bb, k * din, n), jnp.float32)
    inputs = (jnp.moveaxis(delta, -1, 0), jnp.moveaxis(u, -1, 0),
              jnp.moveaxis(b_full, -1, 0), jnp.moveaxis(c_full, -1, 0))
    _, ys = jax.lax.scan(step, h0, inputs)              # (L, B, K*Din)
    out_y = jnp.moveaxis(ys, 0, -1).reshape(bb, k, din, l)

    y1 = out_y[:, 0]
    y2 = jnp.flip(out_y[:, 2], axis=-1)
    y3 = jnp.transpose(out_y[:, 1].reshape(bb, din, ww, hh), (0, 1, 3, 2)).reshape(bb, din, l)
    y4 = jnp.transpose(jnp.flip(out_y[:, 3], axis=-1).reshape(bb, din, ww, hh),
                       (0, 1, 3, 2)).reshape(bb, din, l)
    y = jnp.transpose(y1 + y2 + y3 + y4, (0, 2, 1)).reshape(bb, hh, ww, din)

    mu = jnp.mean(y, axis=-1, keepdims=True)
    var = jnp.mean((y - mu) ** 2, axis=-1, keepdims=True)
    yn = (y - mu) / jnp.sqrt(var + 1e-5) * p["ln_gamma"] + p["ln_beta"]
    yg = yn * jax.nn.silu(z)
    return jnp.einsum("bhwd,od->bhwo", yg, p["out_proj_w"], precision=hp)


# ----------------------------------------------------------------------------
if __name__ == "__main__":
    key = jax.random.PRNGKey(0)
    kx, kp = jax.random.split(key)
    params = init_params(kp)
    x = jax.random.normal(kx, (BATCH, HEIGHT, WIDTH, D_MODEL), jnp.float32)

    out = jax.block_until_ready(jax.jit(ss2d_forward)(x, params))
    ref = jax.block_until_ready(jax.jit(ss2d_forward_ref)(x, params))

    assert out.shape == (BATCH, HEIGHT, WIDTH, D_MODEL)
    err = float(jnp.max(jnp.abs(out - ref)))
    # margin covers default-precision MXU f32 matmuls vs the Precision.HIGHEST
    # reference plus the host-side dt-weight folding.
    assert err < 2e-2, f"max abs err {err}"
    print("KERNEL_OK")
</pallas_src>

<mosaic_0001>
module attributes {stable_mosaic.version = 11 : i64} {
  func.func @_inproj_conv_kernel(%arg0: i32, %arg1: memref<32x64xf32, #tpu.memory_space<vmem>>, %arg2: memref<64x256xf32, #tpu.memory_space<vmem>>, %arg3: memref<9x128xf32, #tpu.memory_space<vmem>>, %arg4: memref<1x128xf32, #tpu.memory_space<vmem>>, %arg5: memref<32x128xf32, #tpu.memory_space<vmem>>, %arg6: memref<32x128xf32, #tpu.memory_space<vmem>>) attributes {dimension_semantics = [#tpu.dimension_semantics<arbitrary>], iteration_bounds = array<i64: 1>, scalar_prefetch = 0 : i64, scratch_operands = 0 : i64, tpu.core_type = #tpu.core_type<tc>, window_params = [{pipeline_mode = #tpu.pipeline_mode<synchronous>, transform_indices = @transform_0, window_bounds = array<i64: 32, 64>}, {pipeline_mode = #tpu.pipeline_mode<synchronous>, transform_indices = @transform_1, window_bounds = array<i64: 64, 256>}, {pipeline_mode = #tpu.pipeline_mode<synchronous>, transform_indices = @transform_2, window_bounds = array<i64: 9, 128>}, {pipeline_mode = #tpu.pipeline_mode<synchronous>, transform_indices = @transform_3, window_bounds = array<i64: 1, 128>}, {pipeline_mode = #tpu.pipeline_mode<synchronous>, transform_indices = @transform_4, window_bounds = array<i64: 32, 128>}, {pipeline_mode = #tpu.pipeline_mode<synchronous>, transform_indices = @transform_5, window_bounds = array<i64: 32, 128>}]} {
    %c0 = arith.constant 0 : index
    %c0_0 = arith.constant 0 : index
    %0 = vector.load %arg1[%c0, %c0_0] : memref<32x64xf32, #tpu.memory_space<vmem>>, vector<32x64xf32>
    %c0_1 = arith.constant 0 : index
    %c0_2 = arith.constant 0 : index
    %1 = vector.load %arg2[%c0_1, %c0_2] : memref<64x256xf32, #tpu.memory_space<vmem>>, vector<64x256xf32>
    %cst = arith.constant dense<0.000000e+00> : vector<32x256xf32>
    %2 = tpu.matmul %0, %1, %cst {dimension_numbers = #tpu.dot_dimension_numbers<[1], [0], [0], [1], [0, 0, 1, 1], [], []>} : vector<32x64xf32>, vector<64x256xf32>, vector<32x256xf32> -> vector<32x256xf32>
    %3 = vector.extract_strided_slice %2 {offsets = [0, 128], sizes = [32, 128], strides = [1, 1]} : vector<32x256xf32> to vector<32x128xf32>
    %c0_3 = arith.constant 0 : index
    %c0_4 = arith.constant 0 : index
    %4 = vector.load %arg6[%c0_3, %c0_4] : memref<32x128xf32, #tpu.memory_space<vmem>>, vector<32x128xf32>
    tpu.vector_store %arg6[%c0_3, %c0_4], %3 {strides = array<i32>} : memref<32x128xf32, #tpu.memory_space<vmem>>, vector<32x128xf32>,
    %5 = vector.extract_strided_slice %2 {offsets = [0, 0], sizes = [32, 128], strides = [1, 1]} : vector<32x256xf32> to vector<32x128xf32>
    %6 = tpu.iota {dimensions = array<i32: 0>} : vector<32x128xi32>
    %7 = tpu.iota {dimensions = array<i32: 1>} : vector<32x128xi32>
    %c15_i32 = arith.constant 15 : i32
    %8 = vector.broadcast %c15_i32 : i32 to vector<32x128xi32>
    %9 = arith.andi %6, %8 : vector<32x128xi32>
    %c3_i32 = arith.constant 3 : i32
    %10 = vector.broadcast %c3_i32 : i32 to vector<32x128xi32>
    %11 = arith.shrsi %7, %10 : vector<32x128xi32>
    %cst_5 = arith.constant 0.000000e+00 : f32
    %12 = vector.broadcast %cst_5 : f32 to vector<32x128xf32>
    %c1_i32 = arith.constant 1 : i32
    %13 = tpu.dynamic_rotate %5 by %c1_i32 dim 0 : vector<32x128xf32>, i32 -> vector<32x128xf32>
    %c8_i32 = arith.constant 8 : i32
    %14 = tpu.dynamic_rotate %13 by %c8_i32 dim 1 : vector<32x128xf32>, i32 -> vector<32x128xf32>
    %c1_i32_6 = arith.constant 1 : i32
    %15 = vector.broadcast %c1_i32_6 : i32 to vector<32x128xi32>
    %16 = arith.cmpi sge, %9, %15 : vector<32x128xi32>
    %c1_i32_7 = arith.constant 1 : i32
    %17 = vector.broadcast %c1_i32_7 : i32 to vector<32x128xi32>
    %18 = arith.cmpi sge, %11, %17 : vector<32x128xi32>
    %19 = arith.andi %16, %18 : vector<32x128xi1>
    %cst_8 = arith.constant 0.000000e+00 : f32
    %20 = vector.broadcast %cst_8 : f32 to vector<32x128xf32>
    %21 = arith.select %19, %14, %20 : vector<32x128xi1>, vector<32x128xf32>
    %c0_9 = arith.constant 0 : index
    %c0_10 = arith.constant 0 : index
    %22 = vector.load %arg3[%c0_9, %c0_10] : memref<9x128xf32, #tpu.memory_space<vmem>>, vector<1x128xf32>
    %23 = vector.broadcast %22 : vector<1x128xf32> to vector<32x128xf32>
    %24 = arith.mulf %21, %23 : vector<32x128xf32>
    %25 = arith.addf %12, %24 : vector<32x128xf32>
    %c1_i32_11 = arith.constant 1 : i32
    %26 = tpu.dynamic_rotate %5 by %c1_i32_11 dim 0 : vector<32x128xf32>, i32 -> vector<32x128xf32>
    %c1_i32_12 = arith.constant 1 : i32
    %27 = vector.broadcast %c1_i32_12 : i32 to vector<32x128xi32>
    %28 = arith.cmpi sge, %9, %27 : vector<32x128xi32>
    %cst_13 = arith.constant 0.000000e+00 : f32
    %29 = vector.broadcast %cst_13 : f32 to vector<32x128xf32>
    %30 = arith.select %28, %26, %29 : vector<32x128xi1>, vector<32x128xf32>
    %c1 = arith.constant 1 : index
    %c0_14 = arith.constant 0 : index
    %31 = vector.load %arg3[%c1, %c0_14] : memref<9x128xf32, #tpu.memory_space<vmem>>, vector<1x128xf32>
    %32 = vector.broadcast %31 : vector<1x128xf32> to vector<32x128xf32>
    %33 = arith.mulf %30, %32 : vector<32x128xf32>
    %34 = arith.addf %25, %33 : vector<32x128xf32>
    %c1_i32_15 = arith.constant 1 : i32
    %35 = tpu.dynamic_rotate %5 by %c1_i32_15 dim 0 : vector<32x128xf32>, i32 -> vector<32x128xf32>
    %c120_i32 = arith.constant 120 : i32
    %36 = tpu.dynamic_rotate %35 by %c120_i32 dim 1 : vector<32x128xf32>, i32 -> vector<32x128xf32>
    %c1_i32_16 = arith.constant 1 : i32
    %37 = vector.broadcast %c1_i32_16 : i32 to vector<32x128xi32>
    %38 = arith.cmpi sge, %9, %37 : vector<32x128xi32>
    %c14_i32 = arith.constant 14 : i32
    %39 = vector.broadcast %c14_i32 : i32 to vector<32x128xi32>
    %40 = arith.cmpi sle, %11, %39 : vector<32x128xi32>
    %41 = arith.andi %38, %40 : vector<32x128xi1>
    %cst_17 = arith.constant 0.000000e+00 : f32
    %42 = vector.broadcast %cst_17 : f32 to vector<32x128xf32>
    %43 = arith.select %41, %36, %42 : vector<32x128xi1>, vector<32x128xf32>
    %c2 = arith.constant 2 : index
    %c0_18 = arith.constant 0 : index
    %44 = vector.load %arg3[%c2, %c0_18] : memref<9x128xf32, #tpu.memory_space<vmem>>, vector<1x128xf32>
    %45 = vector.broadcast %44 : vector<1x128xf32> to vector<32x128xf32>
    %46 = arith.mulf %43, %45 : vector<32x128xf32>
    %47 = arith.addf %34, %46 : vector<32x128xf32>
    %c8_i32_19 = arith.constant 8 : i32
    %48 = tpu.dynamic_rotate %5 by %c8_i32_19 dim 1 : vector<32x128xf32>, i32 -> vector<32x128xf32>
    %c1_i32_20 = arith.constant 1 : i32
    %49 = vector.broadcast %c1_i32_20 : i32 to vector<32x128xi32>
    %50 = arith.cmpi sge, %11, %49 : vector<32x128xi32>
    %cst_21 = arith.constant 0.000000e+00 : f32
    %51 = vector.broadcast %cst_21 : f32 to vector<32x128xf32>
    %52 = arith.select %50, %48, %51 : vector<32x128xi1>, vector<32x128xf32>
    %c3 = arith.constant 3 : index
    %c0_22 = arith.constant 0 : index
    %53 = vector.load %arg3[%c3, %c0_22] : memref<9x128xf32, #tpu.memory_space<vmem>>, vector<1x128xf32>
    %54 = vector.broadcast %53 : vector<1x128xf32> to vector<32x128xf32>
    %55 = arith.mulf %52, %54 : vector<32x128xf32>
    %56 = arith.addf %47, %55 : vector<32x128xf32>
    %c4 = arith.constant 4 : index
    %c0_23 = arith.constant 0 : index
    %57 = vector.load %arg3[%c4, %c0_23] : memref<9x128xf32, #tpu.memory_space<vmem>>, vector<1x128xf32>
    %58 = vector.broadcast %57 : vector<1x128xf32> to vector<32x128xf32>
    %59 = arith.mulf %5, %58 : vector<32x128xf32>
    %60 = arith.addf %56, %59 : vector<32x128xf32>
    %c120_i32_24 = arith.constant 120 : i32
    %61 = tpu.dynamic_rotate %5 by %c120_i32_24 dim 1 : vector<32x128xf32>, i32 -> vector<32x128xf32>
    %c14_i32_25 = arith.constant 14 : i32
    %62 = vector.broadcast %c14_i32_25 : i32 to vector<32x128xi32>
    %63 = arith.cmpi sle, %11, %62 : vector<32x128xi32>
    %cst_26 = arith.constant 0.000000e+00 : f32
    %64 = vector.broadcast %cst_26 : f32 to vector<32x128xf32>
    %65 = arith.select %63, %61, %64 : vector<32x128xi1>, vector<32x128xf32>
    %c5 = arith.constant 5 : index
    %c0_27 = arith.constant 0 : index
    %66 = vector.load %arg3[%c5, %c0_27] : memref<9x128xf32, #tpu.memory_space<vmem>>, vector<1x128xf32>
    %67 = vector.broadcast %66 : vector<1x128xf32> to vector<32x128xf32>
    %68 = arith.mulf %65, %67 : vector<32x128xf32>
    %69 = arith.addf %60, %68 : vector<32x128xf32>
    %c31_i32 = arith.constant 31 : i32
    %70 = tpu.dynamic_rotate %5 by %c31_i32 dim 0 : vector<32x128xf32>, i32 -> vector<32x128xf32>
    %c8_i32_28 = arith.constant 8 : i32
    %71 = tpu.dynamic_rotate %70 by %c8_i32_28 dim 1 : vector<32x128xf32>, i32 -> vector<32x128xf32>
    %c14_i32_29 = arith.constant 14 : i32
    %72 = vector.broadcast %c14_i32_29 : i32 to vector<32x128xi32>
    %73 = arith.cmpi sle, %9, %72 : vector<32x128xi32>
    %c1_i32_30 = arith.constant 1 : i32
    %74 = vector.broadcast %c1_i32_30 : i32 to vector<32x128xi32>
    %75 = arith.cmpi sge, %11, %74 : vector<32x128xi32>
    %76 = arith.andi %73, %75 : vector<32x128xi1>
    %cst_31 = arith.constant 0.000000e+00 : f32
    %77 = vector.broadcast %cst_31 : f32 to vector<32x128xf32>
    %78 = arith.select %76, %71, %77 : vector<32x128xi1>, vector<32x128xf32>
    %c6 = arith.constant 6 : index
    %c0_32 = arith.constant 0 : index
    %79 = vector.load %arg3[%c6, %c0_32] : memref<9x128xf32, #tpu.memory_space<vmem>>, vector<1x128xf32>
    %80 = vector.broadcast %79 : vector<1x128xf32> to vector<32x128xf32>
    %81 = arith.mulf %78, %80 : vector<32x128xf32>
    %82 = arith.addf %69, %81 : vector<32x128xf32>
    %c31_i32_33 = arith.constant 31 : i32
    %83 = tpu.dynamic_rotate %5 by %c31_i32_33 dim 0 : vector<32x128xf32>, i32 -> vector<32x128xf32>
    %c14_i32_34 = arith.constant 14 : i32
    %84 = vector.broadcast %c14_i32_34 : i32 to vector<32x128xi32>
    %85 = arith.cmpi sle, %9, %84 : vector<32x128xi32>
    %cst_35 = arith.constant 0.000000e+00 : f32
    %86 = vector.broadcast %cst_35 : f32 to vector<32x128xf32>
    %87 = arith.select %85, %83, %86 : vector<32x128xi1>, vector<32x128xf32>
    %c7 = arith.constant 7 : index
    %c0_36 = arith.constant 0 : index
    %88 = vector.load %arg3[%c7, %c0_36] : memref<9x128xf32, #tpu.memory_space<vmem>>, vector<1x128xf32>
    %89 = vector.broadcast %88 : vector<1x128xf32> to vector<32x128xf32>
    %90 = arith.mulf %87, %89 : vector<32x128xf32>
    %91 = arith.addf %82, %90 : vector<32x128xf32>
    %c31_i32_37 = arith.constant 31 : i32
    %92 = tpu.dynamic_rotate %5 by %c31_i32_37 dim 0 : vector<32x128xf32>, i32 -> vector<32x128xf32>
    %c120_i32_38 = arith.constant 120 : i32
    %93 = tpu.dynamic_rotate %92 by %c120_i32_38 dim 1 : vector<32x128xf32>, i32 -> vector<32x128xf32>
    %c14_i32_39 = arith.constant 14 : i32
    %94 = vector.broadcast %c14_i32_39 : i32 to vector<32x128xi32>
    %95 = arith.cmpi sle, %9, %94 : vector<32x128xi32>
    %c14_i32_40 = arith.constant 14 : i32
    %96 = vector.broadcast %c14_i32_40 : i32 to vector<32x128xi32>
    %97 = arith.cmpi sle, %11, %96 : vector<32x128xi32>
    %98 = arith.andi %95, %97 : vector<32x128xi1>
    %cst_41 = arith.constant 0.000000e+00 : f32
    %99 = vector.broadcast %cst_41 : f32 to vector<32x128xf32>
    %100 = arith.select %98, %93, %99 : vector<32x128xi1>, vector<32x128xf32>
    %c8 = arith.constant 8 : index
    %c0_42 = arith.constant 0 : index
    %101 = vector.load %arg3[%c8, %c0_42] : memref<9x128xf32, #tpu.memory_space<vmem>>, vector<1x128xf32>
    %102 = vector.broadcast %101 : vector<1x128xf32> to vector<32x128xf32>
    %103 = arith.mulf %100, %102 : vector<32x128xf32>
    %104 = arith.addf %91, %103 : vector<32x128xf32>
    %c0_43 = arith.constant 0 : index
    %c0_44 = arith.constant 0 : index
    %105 = vector.load %arg4[%c0_43, %c0_44] : memref<1x128xf32, #tpu.memory_space<vmem>>, vector<1x128xf32>
    %106 = vector.broadcast %105 : vector<1x128xf32> to vector<32x128xf32>
    %107 = arith.addf %104, %106 : vector<32x128xf32>
    %cst_45 = arith.constant 0.000000e+00 : f32
    %108 = vector.broadcast %cst_45 : f32 to vector<32x128xf32>
    %109 = arith.subf %108, %107 : vector<32x128xf32>
    %110 = math.exp %109 : vector<32x128xf32>
    %cst_46 = arith.constant 1.000000e+00 : f32
    %111 = vector.broadcast %cst_46 : f32 to vector<32x128xf32>
    %112 = arith.addf %111, %110 : vector<32x128xf32>
    %cst_47 = arith.constant 1.000000e+00 : f32
    %113 = vector.broadcast %cst_47 : f32 to vector<32x128xf32>
    %114 = arith.divf %113, %112 : vector<32x128xf32>
    %115 = arith.mulf %107, %114 : vector<32x128xf32>
    %c0_48 = arith.constant 0 : index
    %c0_49 = arith.constant 0 : index
    %116 = vector.load %arg5[%c0_48, %c0_49] : memref<32x128xf32, #tpu.memory_space<vmem>>, vector<32x128xf32>
    tpu.vector_store %arg5[%c0_48, %c0_49], %115 {strides = array<i32>} : memref<32x128xf32, #tpu.memory_space<vmem>>, vector<32x128xf32>,
    return
  }
  func.func @transform_0(%arg0: i32) -> (i32, i32) {
    %c0_i32 = arith.constant 0 : i32
    %c0_i32_0 = arith.constant 0 : i32
    %c0_i32_1 = arith.constant 0 : i32
    return %c0_i32, %c0_i32_0 : i32, i32
  }
  func.func @transform_1(%arg0: i32) -> (i32, i32) {
    %c0_i32 = arith.constant 0 : i32
    %c0_i32_0 = arith.constant 0 : i32
    %c0_i32_1 = arith.constant 0 : i32
    return %c0_i32, %c0_i32_0 : i32, i32
  }
  func.func @transform_2(%arg0: i32) -> (i32, i32) {
    %c0_i32 = arith.constant 0 : i32
    %c0_i32_0 = arith.constant 0 : i32
    %c0_i32_1 = arith.constant 0 : i32
    return %c0_i32, %c0_i32_0 : i32, i32
  }
  func.func @transform_3(%arg0: i32) -> (i32, i32) {
    %c0_i32 = arith.constant 0 : i32
    %c0_i32_0 = arith.constant 0 : i32
    %c0_i32_1 = arith.constant 0 : i32
    return %c0_i32, %c0_i32_0 : i32, i32
  }
  func.func @transform_4(%arg0: i32) -> (i32, i32) {
    %c0_i32 = arith.constant 0 : i32
    %c0_i32_0 = arith.constant 0 : i32
    %c0_i32_1 = arith.constant 0 : i32
    return %c0_i32, %c0_i32_0 : i32, i32
  }
  func.func @transform_5(%arg0: i32) -> (i32, i32) {
    %c0_i32 = arith.constant 0 : i32
    %c0_i32_0 = arith.constant 0 : i32
    %c0_i32_1 = arith.constant 0 : i32
    return %c0_i32, %c0_i32_0 : i32, i32
  }
}

module attributes {stable_mosaic.version = 11 : i64} {
  func.func @_scan_kernel(%arg0: i32, %arg1: memref<256x64xf32, #tpu.memory_space<vmem>>, %arg2: memref<64x64xf32, #tpu.memory_space<vmem>>, %arg3: memref<1x64xf32, #tpu.memory_space<vmem>>, %arg4: memref<8x64x256xf32, #tpu.memory_space<vmem>>, %arg5: memref<8x1x128xf32, #tpu.memory_space<vmem>>, %arg6: memref<1x64xf32, #tpu.memory_space<vmem>>, %arg7: memref<256x64xf32, #tpu.memory_space<vmem>>, %arg8: memref<8x256x128xf32, #tpu.memory_space<vmem>>, %arg9: memref<8x256x128xf32, #tpu.memory_space<vmem>>, %arg10: memref<8x256x128xf32, #tpu.memory_space<vmem>>, %arg11: memref<256x128xf32, #tpu.memory_space<vmem>>) attributes {dimension_semantics = [#tpu.dimension_semantics<arbitrary>], iteration_bounds = array<i64: 1>, scalar_prefetch = 0 : i64, scratch_operands = 4 : i64, tpu.core_type = #tpu.core_type<tc>, window_params = [{pipeline_mode = #tpu.pipeline_mode<synchronous>, transform_indices = @transform_0, window_bounds = array<i64: 256, 64>}, {pipeline_mode = #tpu.pipeline_mode<synchronous>, transform_indices = @transform_1, window_bounds = array<i64: 64, 64>}, {pipeline_mode = #tpu.pipeline_mode<synchronous>, transform_indices = @transform_2, window_bounds = array<i64: 1, 64>}, {pipeline_mode = #tpu.pipeline_mode<synchronous>, transform_indices = @transform_3, window_bounds = array<i64: 8, 64, 256>}, {pipeline_mode = #tpu.pipeline_mode<synchronous>, transform_indices = @transform_4, window_bounds = array<i64: 8, 1, 128>}, {pipeline_mode = #tpu.pipeline_mode<synchronous>, transform_indices = @transform_5, window_bounds = array<i64: 1, 64>}, {pipeline_mode = #tpu.pipeline_mode<synchronous>, transform_indices = @transform_6, window_bounds = array<i64: 256, 64>}]} {
    %c0 = arith.constant 0 : index
    %c0_0 = arith.constant 0 : index
    %0 = vector.load %arg1[%c0, %c0_0] : memref<256x64xf32, #tpu.memory_space<vmem>>, vector<256x64xf32>
    %c0_1 = arith.constant 0 : index
    %c0_2 = arith.constant 0 : index
    %1 = vector.load %arg2[%c0_1, %c0_2] : memref<64x64xf32, #tpu.memory_space<vmem>>, vector<64x64xf32>
    %cst = arith.constant dense<0.000000e+00> : vector<256x64xf32>
    %2 = tpu.matmul %0, %1, %cst {dimension_numbers = #tpu.dot_dimension_numbers<[1], [0], [0], [1], [0, 0, 1, 1], [], []>} : vector<256x64xf32>, vector<64x64xf32>, vector<256x64xf32> -> vector<256x64xf32>
    %c0_3 = arith.constant 0 : index
    %c0_4 = arith.constant 0 : index
    %3 = vector.load %arg3[%c0_3, %c0_4] : memref<1x64xf32, #tpu.memory_space<vmem>>, vector<1x64xf32>
    %4 = vector.broadcast %3 : vector<1x64xf32> to vector<256x64xf32>
    %5 = arith.addf %2, %4 : vector<256x64xf32>
    %cst_5 = arith.constant 0.000000e+00 : f32
    %6 = vector.broadcast %cst_5 : f32 to vector<256x64xf32>
    %7 = arith.maximumf %5, %6 : vector<256x64xf32>
    %8 = math.absf %5 : vector<256x64xf32>
    %cst_6 = arith.constant 0.000000e+00 : f32
    %9 = vector.broadcast %cst_6 : f32 to vector<256x64xf32>
    %10 = arith.subf %9, %8 : vector<256x64xf32>
    %11 = math.exp %10 : vector<256x64xf32>
    %12 = math.log1p %11 : vector<256x64xf32>
    %13 = arith.addf %7, %12 : vector<256x64xf32>
    %14 = arith.mulf %13, %0 : vector<256x64xf32>
    %15 = tpu.concatenate %13, %13 in 1 : vector<256x64xf32>, vector<256x64xf32> -> vector<256x128xf32>
    %16 = tpu.concatenate %14, %14 in 1 : vector<256x64xf32>, vector<256x64xf32> -> vector<256x128xf32>
    %c0_7 = arith.constant 0 : index
    %c0_8 = arith.constant 0 : index
    %c0_9 = arith.constant 0 : index
    %17 = vector.load %arg4[%c0_7, %c0_8, %c0_9] : memref<8x64x256xf32, #tpu.memory_space<vmem>>, vector<1x64x256xf32>
    %18 = vector.shape_cast %17 : vector<1x64x256xf32> to vector<64x256xf32>
    %cst_10 = arith.constant dense<0.000000e+00> : vector<256x256xf32>
    %19 = tpu.matmul %0, %18, %cst_10 {dimension_numbers = #tpu.dot_dimension_numbers<[1], [0], [0], [1], [0, 0, 1, 1], [], []>} : vector<256x64xf32>, vector<64x256xf32>, vector<256x256xf32> -> vector<256x256xf32>
    %c0_11 = arith.constant 0 : index
    %c0_12 = arith.constant 0 : index
    %c0_13 = arith.constant 0 : index
    %20 = vector.load %arg5[%c0_11, %c0_12, %c0_13] : memref<8x1x128xf32, #tpu.memory_space<vmem>>, vector<1x1x128xf32>
    %21 = vector.shape_cast %20 : vector<1x1x128xf32> to vector<1x128xf32>
    %22 = vector.broadcast %21 : vector<1x128xf32> to vector<256x128xf32>
    %23 = arith.mulf %15, %22 : vector<256x128xf32>
    %24 = math.exp %23 : vector<256x128xf32>
    %c0_14 = arith.constant 0 : index
    %c0_15 = arith.constant 0 : index
    %c0_16 = arith.constant 0 : index
    %25 = vector.load %arg8[%c0_14, %c0_15, %c0_16] : memref<8x256x128xf32, #tpu.memory_space<vmem>>, vector<1x256x128xf32>
    %26 = vector.shape_cast %25 : vector<1x256x128xf32> to vector<256x128xf32>
    %27 = vector.shape_cast %24 : vector<256x128xf32> to vector<1x256x128xf32>
    tpu.vector_store %arg8[%c0_14, %c0_15, %c0_16], %27 {strides = array<i32>} : memref<8x256x128xf32, #tpu.memory_space<vmem>>, vector<1x256x128xf32>,
    %28 = vector.extract_strided_slice %19 {offsets = [0, 0], sizes = [256, 128], strides = [1, 1]} : vector<256x256xf32> to vector<256x128xf32>
    %29 = arith.mulf %16, %28 : vector<256x128xf32>
    %c0_17 = arith.constant 0 : index
    %c0_18 = arith.constant 0 : index
    %c0_19 = arith.constant 0 : index
    %30 = vector.load %arg9[%c0_17, %c0_18, %c0_19] : memref<8x256x128xf32, #tpu.memory_space<vmem>>, vector<1x256x128xf32>
    %31 = vector.shape_cast %30 : vector<1x256x128xf32> to vector<256x128xf32>
    %32 = vector.shape_cast %29 : vector<256x128xf32> to vector<1x256x128xf32>
    tpu.vector_store %arg9[%c0_17, %c0_18, %c0_19], %32 {strides = array<i32>} : memref<8x256x128xf32, #tpu.memory_space<vmem>>, vector<1x256x128xf32>,
    %33 = vector.extract_strided_slice %19 {offsets = [0, 128], sizes = [256, 128], strides = [1, 1]} : vector<256x256xf32> to vector<256x128xf32>
    %c0_20 = arith.constant 0 : index
    %c0_21 = arith.constant 0 : index
    %c0_22 = arith.constant 0 : index
    %34 = vector.load %arg10[%c0_20, %c0_21, %c0_22] : memref<8x256x128xf32, #tpu.memory_space<vmem>>, vector<1x256x128xf32>
    %35 = vector.shape_cast %34 : vector<1x256x128xf32> to vector<256x128xf32>
    %36 = vector.shape_cast %33 : vector<256x128xf32> to vector<1x256x128xf32>
    tpu.vector_store %arg10[%c0_20, %c0_21, %c0_22], %36 {strides = array<i32>} : memref<8x256x128xf32, #tpu.memory_space<vmem>>, vector<1x256x128xf32>,
    %c1 = arith.constant 1 : index
    %c0_23 = arith.constant 0 : index
    %c0_24 = arith.constant 0 : index
    %37 = vector.load %arg4[%c1, %c0_23, %c0_24] : memref<8x64x256xf32, #tpu.memory_space<vmem>>, vector<1x64x256xf32>
    %38 = vector.shape_cast %37 : vector<1x64x256xf32> to vector<64x256xf32>
    %cst_25 = arith.constant dense<0.000000e+00> : vector<256x256xf32>
    %39 = tpu.matmul %0, %38, %cst_25 {dimension_numbers = #tpu.dot_dimension_numbers<[1], [0], [0], [1], [0, 0, 1, 1], [], []>} : vector<256x64xf32>, vector<64x256xf32>, vector<256x256xf32> -> vector<256x256xf32>
    %c1_26 = arith.constant 1 : index
    %c0_27 = arith.constant 0 : index
    %c0_28 = arith.constant 0 : index
    %40 = vector.load %arg5[%c1_26, %c0_27, %c0_28] : memref<8x1x128xf32, #tpu.memory_space<vmem>>, vector<1x1x128xf32>
    %41 = vector.shape_cast %40 : vector<1x1x128xf32> to vector<1x128xf32>
    %42 = vector.broadcast %41 : vector<1x128xf32> to vector<256x128xf32>
    %43 = arith.mulf %15, %42 : vector<256x128xf32>
    %44 = math.exp %43 : vector<256x128xf32>
    %c1_29 = arith.constant 1 : index
    %c0_30 = arith.constant 0 : index
    %c0_31 = arith.constant 0 : index
    %45 = vector.load %arg8[%c1_29, %c0_30, %c0_31] : memref<8x256x128xf32, #tpu.memory_space<vmem>>, vector<1x256x128xf32>
    %46 = vector.shape_cast %45 : vector<1x256x128xf32> to vector<256x128xf32>
    %47 = vector.shape_cast %44 : vector<256x128xf32> to vector<1x256x128xf32>
    tpu.vector_store %arg8[%c1_29, %c0_30, %c0_31], %47 {strides = array<i32>} : memref<8x256x128xf32, #tpu.memory_space<vmem>>, vector<1x256x128xf32>,
    %48 = vector.extract_strided_slice %39 {offsets = [0, 0], sizes = [256, 128], strides = [1, 1]} : vector<256x256xf32> to vector<256x128xf32>
    %49 = arith.mulf %16, %48 : vector<256x128xf32>
    %c1_32 = arith.constant 1 : index
    %c0_33 = arith.constant 0 : index
    %c0_34 = arith.constant 0 : index
    %50 = vector.load %arg9[%c1_32, %c0_33, %c0_34] : memref<8x256x128xf32, #tpu.memory_space<vmem>>, vector<1x256x128xf32>
    %51 = vector.shape_cast %50 : vector<1x256x128xf32> to vector<256x128xf32>
    %52 = vector.shape_cast %49 : vector<256x128xf32> to vector<1x256x128xf32>
    tpu.vector_store %arg9[%c1_32, %c0_33, %c0_34], %52 {strides = array<i32>} : memref<8x256x128xf32, #tpu.memory_space<vmem>>, vector<1x256x128xf32>,
    %53 = vector.extract_strided_slice %39 {offsets = [0, 128], sizes = [256, 128], strides = [1, 1]} : vector<256x256xf32> to vector<256x128xf32>
    %c1_35 = arith.constant 1 : index
    %c0_36 = arith.constant 0 : index
    %c0_37 = arith.constant 0 : index
    %54 = vector.load %arg10[%c1_35, %c0_36, %c0_37] : memref<8x256x128xf32, #tpu.memory_space<vmem>>, vector<1x256x128xf32>
    %55 = vector.shape_cast %54 : vector<1x256x128xf32> to vector<256x128xf32>
    %56 = vector.shape_cast %53 : vector<256x128xf32> to vector<1x256x128xf32>
    tpu.vector_store %arg10[%c1_35, %c0_36, %c0_37], %56 {strides = array<i32>} : memref<8x256x128xf32, #tpu.memory_space<vmem>>, vector<1x256x128xf32>,
    %c2 = arith.constant 2 : index
    %c0_38 = arith.constant 0 : index
    %c0_39 = arith.constant 0 : index
    %57 = vector.load %arg4[%c2, %c0_38, %c0_39] : memref<8x64x256xf32, #tpu.memory_space<vmem>>, vector<1x64x256xf32>
    %58 = vector.shape_cast %57 : vector<1x64x256xf32> to vector<64x256xf32>
    %cst_40 = arith.constant dense<0.000000e+00> : vector<256x256xf32>
    %59 = tpu.matmul %0, %58, %cst_40 {dimension_numbers = #tpu.dot_dimension_numbers<[1], [0], [0], [1], [0, 0, 1, 1], [], []>} : vector<256x64xf32>, vector<64x256xf32>, vector<256x256xf32> -> vector<256x256xf32>
    %c2_41 = arith.constant 2 : index
    %c0_42 = arith.constant 0 : index
    %c0_43 = arith.constant 0 : index
    %60 = vector.load %arg5[%c2_41, %c0_42, %c0_43] : memref<8x1x128xf32, #tpu.memory_space<vmem>>, vector<1x1x128xf32>
    %61 = vector.shape_cast %60 : vector<1x1x128xf32> to vector<1x128xf32>
    %62 = vector.broadcast %61 : vector<1x128xf32> to vector<256x128xf32>
    %63 = arith.mulf %15, %62 : vector<256x128xf32>
    %64 = math.exp %63 : vector<256x128xf32>
    %c2_44 = arith.constant 2 : index
    %c0_45 = arith.constant 0 : index
    %c0_46 = arith.constant 0 : index
    %65 = vector.load %arg8[%c2_44, %c0_45, %c0_46] : memref<8x256x128xf32, #tpu.memory_space<vmem>>, vector<1x256x128xf32>
    %66 = vector.shape_cast %65 : vector<1x256x128xf32> to vector<256x128xf32>
    %67 = vector.shape_cast %64 : vector<256x128xf32> to vector<1x256x128xf32>
    tpu.vector_store %arg8[%c2_44, %c0_45, %c0_46], %67 {strides = array<i32>} : memref<8x256x128xf32, #tpu.memory_space<vmem>>, vector<1x256x128xf32>,
    %68 = vector.extract_strided_slice %59 {offsets = [0, 0], sizes = [256, 128], strides = [1, 1]} : vector<256x256xf32> to vector<256x128xf32>
    %69 = arith.mulf %16, %68 : vector<256x128xf32>
    %c2_47 = arith.constant 2 : index
    %c0_48 = arith.constant 0 : index
    %c0_49 = arith.constant 0 : index
    %70 = vector.load %arg9[%c2_47, %c0_48, %c0_49] : memref<8x256x128xf32, #tpu.memory_space<vmem>>, vector<1x256x128xf32>
    %71 = vector.shape_cast %70 : vector<1x256x128xf32> to vector<256x128xf32>
    %72 = vector.shape_cast %69 : vector<256x128xf32> to vector<1x256x128xf32>
    tpu.vector_store %arg9[%c2_47, %c0_48, %c0_49], %72 {strides = array<i32>} : memref<8x256x128xf32, #tpu.memory_space<vmem>>, vector<1x256x128xf32>,
    %73 = vector.extract_strided_slice %59 {offsets = [0, 128], sizes = [256, 128], strides = [1, 1]} : vector<256x256xf32> to vector<256x128xf32>
    %c2_50 = arith.constant 2 : index
    %c0_51 = arith.constant 0 : index
    %c0_52 = arith.constant 0 : index
    %74 = vector.load %arg10[%c2_50, %c0_51, %c0_52] : memref<8x256x128xf32, #tpu.memory_space<vmem>>, vector<1x256x128xf32>
    %75 = vector.shape_cast %74 : vector<1x256x128xf32> to vector<256x128xf32>
    %76 = vector.shape_cast %73 : vector<256x128xf32> to vector<1x256x128xf32>
    tpu.vector_store %arg10[%c2_50, %c0_51, %c0_52], %76 {strides = array<i32>} : memref<8x256x128xf32, #tpu.memory_space<vmem>>, vector<1x256x128xf32>,
    %c3 = arith.constant 3 : index
    %c0_53 = arith.constant 0 : index
    %c0_54 = arith.constant 0 : index
    %77 = vector.load %arg4[%c3, %c0_53, %c0_54] : memref<8x64x256xf32, #tpu.memory_space<vmem>>, vector<1x64x256xf32>
    %78 = vector.shape_cast %77 : vector<1x64x256xf32> to vector<64x256xf32>
    %cst_55 = arith.constant dense<0.000000e+00> : vector<256x256xf32>
    %79 = tpu.matmul %0, %78, %cst_55 {dimension_numbers = #tpu.dot_dimension_numbers<[1], [0], [0], [1], [0, 0, 1, 1], [], []>} : vector<256x64xf32>, vector<64x256xf32>, vector<256x256xf32> -> vector<256x256xf32>
    %c3_56 = arith.constant 3 : index
    %c0_57 = arith.constant 0 : index
    %c0_58 = arith.constant 0 : index
    %80 = vector.load %arg5[%c3_56, %c0_57, %c0_58] : memref<8x1x128xf32, #tpu.memory_space<vmem>>, vector<1x1x128xf32>
    %81 = vector.shape_cast %80 : vector<1x1x128xf32> to vector<1x128xf32>
    %82 = vector.broadcast %81 : vector<1x128xf32> to vector<256x128xf32>
    %83 = arith.mulf %15, %82 : vector<256x128xf32>
    %84 = math.exp %83 : vector<256x128xf32>
    %c3_59 = arith.constant 3 : index
    %c0_60 = arith.constant 0 : index
    %c0_61 = arith.constant 0 : index
    %85 = vector.load %arg8[%c3_59, %c0_60, %c0_61] : memref<8x256x128xf32, #tpu.memory_space<vmem>>, vector<1x256x128xf32>
    %86 = vector.shape_cast %85 : vector<1x256x128xf32> to vector<256x128xf32>
    %87 = vector.shape_cast %84 : vector<256x128xf32> to vector<1x256x128xf32>
    tpu.vector_store %arg8[%c3_59, %c0_60, %c0_61], %87 {strides = array<i32>} : memref<8x256x128xf32, #tpu.memory_space<vmem>>, vector<1x256x128xf32>,
    %88 = vector.extract_strided_slice %79 {offsets = [0, 0], sizes = [256, 128], strides = [1, 1]} : vector<256x256xf32> to vector<256x128xf32>
    %89 = arith.mulf %16, %88 : vector<256x128xf32>
    %c3_62 = arith.constant 3 : index
    %c0_63 = arith.constant 0 : index
    %c0_64 = arith.constant 0 : index
    %90 = vector.load %arg9[%c3_62, %c0_63, %c0_64] : memref<8x256x128xf32, #tpu.memory_space<vmem>>, vector<1x256x128xf32>
    %91 = vector.shape_cast %90 : vector<1x256x128xf32> to vector<256x128xf32>
    %92 = vector.shape_cast %89 : vector<256x128xf32> to vector<1x256x128xf32>
    tpu.vector_store %arg9[%c3_62, %c0_63, %c0_64], %92 {strides = array<i32>} : memref<8x256x128xf32, #tpu.memory_space<vmem>>, vector<1x256x128xf32>,
    %93 = vector.extract_strided_slice %79 {offsets = [0, 128], sizes = [256, 128], strides = [1, 1]} : vector<256x256xf32> to vector<256x128xf32>
    %c3_65 = arith.constant 3 : index
    %c0_66 = arith.constant 0 : index
    %c0_67 = arith.constant 0 : index
    %94 = vector.load %arg10[%c3_65, %c0_66, %c0_67] : memref<8x256x128xf32, #tpu.memory_space<vmem>>, vector<1x256x128xf32>
    %95 = vector.shape_cast %94 : vector<1x256x128xf32> to vector<256x128xf32>
    %96 = vector.shape_cast %93 : vector<256x128xf32> to vector<1x256x128xf32>
    tpu.vector_store %arg10[%c3_65, %c0_66, %c0_67], %96 {strides = array<i32>} : memref<8x256x128xf32, #tpu.memory_space<vmem>>, vector<1x256x128xf32>,
    %c4 = arith.constant 4 : index
    %c0_68 = arith.constant 0 : index
    %c0_69 = arith.constant 0 : index
    %97 = vector.load %arg4[%c4, %c0_68, %c0_69] : memref<8x64x256xf32, #tpu.memory_space<vmem>>, vector<1x64x256xf32>
    %98 = vector.shape_cast %97 : vector<1x64x256xf32> to vector<64x256xf32>
    %cst_70 = arith.constant dense<0.000000e+00> : vector<256x256xf32>
    %99 = tpu.matmul %0, %98, %cst_70 {dimension_numbers = #tpu.dot_dimension_numbers<[1], [0], [0], [1], [0, 0, 1, 1], [], []>} : vector<256x64xf32>, vector<64x256xf32>, vector<256x256xf32> -> vector<256x256xf32>
    %c4_71 = arith.constant 4 : index
    %c0_72 = arith.constant 0 : index
    %c0_73 = arith.constant 0 : index
    %100 = vector.load %arg5[%c4_71, %c0_72, %c0_73] : memref<8x1x128xf32, #tpu.memory_space<vmem>>, vector<1x1x128xf32>
    %101 = vector.shape_cast %100 : vector<1x1x128xf32> to vector<1x128xf32>
    %102 = vector.broadcast %101 : vector<1x128xf32> to vector<256x128xf32>
    %103 = arith.mulf %15, %102 : vector<256x128xf32>
    %104 = math.exp %103 : vector<256x128xf32>
    %c4_74 = arith.constant 4 : index
    %c0_75 = arith.constant 0 : index
    %c0_76 = arith.constant 0 : index
    %105 = vector.load %arg8[%c4_74, %c0_75, %c0_76] : memref<8x256x128xf32, #tpu.memory_space<vmem>>, vector<1x256x128xf32>
    %106 = vector.shape_cast %105 : vector<1x256x128xf32> to vector<256x128xf32>
    %107 = vector.shape_cast %104 : vector<256x128xf32> to vector<1x256x128xf32>
    tpu.vector_store %arg8[%c4_74, %c0_75, %c0_76], %107 {strides = array<i32>} : memref<8x256x128xf32, #tpu.memory_space<vmem>>, vector<1x256x128xf32>,
    %108 = vector.extract_strided_slice %99 {offsets = [0, 0], sizes = [256, 128], strides = [1, 1]} : vector<256x256xf32> to vector<256x128xf32>
    %109 = arith.mulf %16, %108 : vector<256x128xf32>
    %c4_77 = arith.constant 4 : index
    %c0_78 = arith.constant 0 : index
    %c0_79 = arith.constant 0 : index
    %110 = vector.load %arg9[%c4_77, %c0_78, %c0_79] : memref<8x256x128xf32, #tpu.memory_space<vmem>>, vector<1x256x128xf32>
    %111 = vector.shape_cast %110 : vector<1x256x128xf32> to vector<256x128xf32>
    %112 = vector.shape_cast %109 : vector<256x128xf32> to vector<1x256x128xf32>
    tpu.vector_store %arg9[%c4_77, %c0_78, %c0_79], %112 {strides = array<i32>} : memref<8x256x128xf32, #tpu.memory_space<vmem>>, vector<1x256x128xf32>,
    %113 = vector.extract_strided_slice %99 {offsets = [0, 128], sizes = [256, 128], strides = [1, 1]} : vector<256x256xf32> to vector<256x128xf32>
    %c4_80 = arith.constant 4 : index
    %c0_81 = arith.constant 0 : index
    %c0_82 = arith.constant 0 : index
    %114 = vector.load %arg10[%c4_80, %c0_81, %c0_82] : memref<8x256x128xf32, #tpu.memory_space<vmem>>, vector<1x256x128xf32>
    %115 = vector.shape_cast %114 : vector<1x256x128xf32> to vector<256x128xf32>
    %116 = vector.shape_cast %113 : vector<256x128xf32> to vector<1x256x128xf32>
    tpu.vector_store %arg10[%c4_80, %c0_81, %c0_82], %116 {strides = array<i32>} : memref<8x256x128xf32, #tpu.memory_space<vmem>>, vector<1x256x128xf32>,
    %c5 = arith.constant 5 : index
    %c0_83 = arith.constant 0 : index
    %c0_84 = arith.constant 0 : index
    %117 = vector.load %arg4[%c5, %c0_83, %c0_84] : memref<8x64x256xf32, #tpu.memory_space<vmem>>, vector<1x64x256xf32>
    %118 = vector.shape_cast %117 : vector<1x64x256xf32> to vector<64x256xf32>
    %cst_85 = arith.constant dense<0.000000e+00> : vector<256x256xf32>
    %119 = tpu.matmul %0, %118, %cst_85 {dimension_numbers = #tpu.dot_dimension_numbers<[1], [0], [0], [1], [0, 0, 1, 1], [], []>} : vector<256x64xf32>, vector<64x256xf32>, vector<256x256xf32> -> vector<256x256xf32>
    %c5_86 = arith.constant 5 : index
    %c0_87 = arith.constant 0 : index
    %c0_88 = arith.constant 0 : index
    %120 = vector.load %arg5[%c5_86, %c0_87, %c0_88] : memref<8x1x128xf32, #tpu.memory_space<vmem>>, vector<1x1x128xf32>
    %121 = vector.shape_cast %120 : vector<1x1x128xf32> to vector<1x128xf32>
    %122 = vector.broadcast %121 : vector<1x128xf32> to vector<256x128xf32>
    %123 = arith.mulf %15, %122 : vector<256x128xf32>
    %124 = math.exp %123 : vector<256x128xf32>
    %c5_89 = arith.constant 5 : index
    %c0_90 = arith.constant 0 : index
    %c0_91 = arith.constant 0 : index
    %125 = vector.load %arg8[%c5_89, %c0_90, %c0_91] : memref<8x256x128xf32, #tpu.memory_space<vmem>>, vector<1x256x128xf32>
    %126 = vector.shape_cast %125 : vector<1x256x128xf32> to vector<256x128xf32>
    %127 = vector.shape_cast %124 : vector<256x128xf32> to vector<1x256x128xf32>
    tpu.vector_store %arg8[%c5_89, %c0_90, %c0_91], %127 {strides = array<i32>} : memref<8x256x128xf32, #tpu.memory_space<vmem>>, vector<1x256x128xf32>,
    %128 = vector.extract_strided_slice %119 {offsets = [0, 0], sizes = [256, 128], strides = [1, 1]} : vector<256x256xf32> to vector<256x128xf32>
    %129 = arith.mulf %16, %128 : vector<256x128xf32>
    %c5_92 = arith.constant 5 : index
    %c0_93 = arith.constant 0 : index
    %c0_94 = arith.constant 0 : index
    %130 = vector.load %arg9[%c5_92, %c0_93, %c0_94] : memref<8x256x128xf32, #tpu.memory_space<vmem>>, vector<1x256x128xf32>
    %131 = vector.shape_cast %130 : vector<1x256x128xf32> to vector<256x128xf32>
    %132 = vector.shape_cast %129 : vector<256x128xf32> to vector<1x256x128xf32>
    tpu.vector_store %arg9[%c5_92, %c0_93, %c0_94], %132 {strides = array<i32>} : memref<8x256x128xf32, #tpu.memory_space<vmem>>, vector<1x256x128xf32>,
    %133 = vector.extract_strided_slice %119 {offsets = [0, 128], sizes = [256, 128], strides = [1, 1]} : vector<256x256xf32> to vector<256x128xf32>
    %c5_95 = arith.constant 5 : index
    %c0_96 = arith.constant 0 : index
    %c0_97 = arith.constant 0 : index
    %134 = vector.load %arg10[%c5_95, %c0_96, %c0_97] : memref<8x256x128xf32, #tpu.memory_space<vmem>>, vector<1x256x128xf32>
    %135 = vector.shape_cast %134 : vector<1x256x128xf32> to vector<256x128xf32>
    %136 = vector.shape_cast %133 : vector<256x128xf32> to vector<1x256x128xf32>
    tpu.vector_store %arg10[%c5_95, %c0_96, %c0_97], %136 {strides = array<i32>} : memref<8x256x128xf32, #tpu.memory_space<vmem>>, vector<1x256x128xf32>,
    %c6 = arith.constant 6 : index
    %c0_98 = arith.constant 0 : index
    %c0_99 = arith.constant 0 : index
    %137 = vector.load %arg4[%c6, %c0_98, %c0_99] : memref<8x64x256xf32, #tpu.memory_space<vmem>>, vector<1x64x256xf32>
    %138 = vector.shape_cast %137 : vector<1x64x256xf32> to vector<64x256xf32>
    %cst_100 = arith.constant dense<0.000000e+00> : vector<256x256xf32>
    %139 = tpu.matmul %0, %138, %cst_100 {dimension_numbers = #tpu.dot_dimension_numbers<[1], [0], [0], [1], [0, 0, 1, 1], [], []>} : vector<256x64xf32>, vector<64x256xf32>, vector<256x256xf32> -> vector<256x256xf32>
    %c6_101 = arith.constant 6 : index
    %c0_102 = arith.constant 0 : index
    %c0_103 = arith.constant 0 : index
    %140 = vector.load %arg5[%c6_101, %c0_102, %c0_103] : memref<8x1x128xf32, #tpu.memory_space<vmem>>, vector<1x1x128xf32>
    %141 = vector.shape_cast %140 : vector<1x1x128xf32> to vector<1x128xf32>
    %142 = vector.broadcast %141 : vector<1x128xf32> to vector<256x128xf32>
    %143 = arith.mulf %15, %142 : vector<256x128xf32>
    %144 = math.exp %143 : vector<256x128xf32>
    %c6_104 = arith.constant 6 : index
    %c0_105 = arith.constant 0 : index
    %c0_106 = arith.constant 0 : index
    %145 = vector.load %arg8[%c6_104, %c0_105, %c0_106] : memref<8x256x128xf32, #tpu.memory_space<vmem>>, vector<1x256x128xf32>
    %146 = vector.shape_cast %145 : vector<1x256x128xf32> to vector<256x128xf32>
    %147 = vector.shape_cast %144 : vector<256x128xf32> to vector<1x256x128xf32>
    tpu.vector_store %arg8[%c6_104, %c0_105, %c0_106], %147 {strides = array<i32>} : memref<8x256x128xf32, #tpu.memory_space<vmem>>, vector<1x256x128xf32>,
    %148 = vector.extract_strided_slice %139 {offsets = [0, 0], sizes = [256, 128], strides = [1, 1]} : vector<256x256xf32> to vector<256x128xf32>
    %149 = arith.mulf %16, %148 : vector<256x128xf32>
    %c6_107 = arith.constant 6 : index
    %c0_108 = arith.constant 0 : index
    %c0_109 = arith.constant 0 : index
    %150 = vector.load %arg9[%c6_107, %c0_108, %c0_109] : memref<8x256x128xf32, #tpu.memory_space<vmem>>, vector<1x256x128xf32>
    %151 = vector.shape_cast %150 : vector<1x256x128xf32> to vector<256x128xf32>
    %152 = vector.shape_cast %149 : vector<256x128xf32> to vector<1x256x128xf32>
    tpu.vector_store %arg9[%c6_107, %c0_108, %c0_109], %152 {strides = array<i32>} : memref<8x256x128xf32, #tpu.memory_space<vmem>>, vector<1x256x128xf32>,
    %153 = vector.extract_strided_slice %139 {offsets = [0, 128], sizes = [256, 128], strides = [1, 1]} : vector<256x256xf32> to vector<256x128xf32>
    %c6_110 = arith.constant 6 : index
    %c0_111 = arith.constant 0 : index
    %c0_112 = arith.constant 0 : index
    %154 = vector.load %arg10[%c6_110, %c0_111, %c0_112] : memref<8x256x128xf32, #tpu.memory_space<vmem>>, vector<1x256x128xf32>
    %155 = vector.shape_cast %154 : vector<1x256x128xf32> to vector<256x128xf32>
    %156 = vector.shape_cast %153 : vector<256x128xf32> to vector<1x256x128xf32>
    tpu.vector_store %arg10[%c6_110, %c0_111, %c0_112], %156 {strides = array<i32>} : memref<8x256x128xf32, #tpu.memory_space<vmem>>, vector<1x256x128xf32>,
    %c7 = arith.constant 7 : index
    %c0_113 = arith.constant 0 : index
    %c0_114 = arith.constant 0 : index
    %157 = vector.load %arg4[%c7, %c0_113, %c0_114] : memref<8x64x256xf32, #tpu.memory_space<vmem>>, vector<1x64x256xf32>
    %158 = vector.shape_cast %157 : vector<1x64x256xf32> to vector<64x256xf32>
    %cst_115 = arith.constant dense<0.000000e+00> : vector<256x256xf32>
    %159 = tpu.matmul %0, %158, %cst_115 {dimension_numbers = #tpu.dot_dimension_numbers<[1], [0], [0], [1], [0, 0, 1, 1], [], []>} : vector<256x64xf32>, vector<64x256xf32>, vector<256x256xf32> -> vector<256x256xf32>
    %c7_116 = arith.constant 7 : index
    %c0_117 = arith.constant 0 : index
    %c0_118 = arith.constant 0 : index
    %160 = vector.load %arg5[%c7_116, %c0_117, %c0_118] : memref<8x1x128xf32, #tpu.memory_space<vmem>>, vector<1x1x128xf32>
    %161 = vector.shape_cast %160 : vector<1x1x128xf32> to vector<1x128xf32>
    %162 = vector.broadcast %161 : vector<1x128xf32> to vector<256x128xf32>
    %163 = arith.mulf %15, %162 : vector<256x128xf32>
    %164 = math.exp %163 : vector<256x128xf32>
    %c7_119 = arith.constant 7 : index
    %c0_120 = arith.constant 0 : index
    %c0_121 = arith.constant 0 : index
    %165 = vector.load %arg8[%c7_119, %c0_120, %c0_121] : memref<8x256x128xf32, #tpu.memory_space<vmem>>, vector<1x256x128xf32>
    %166 = vector.shape_cast %165 : vector<1x256x128xf32> to vector<256x128xf32>
    %167 = vector.shape_cast %164 : vector<256x128xf32> to vector<1x256x128xf32>
    tpu.vector_store %arg8[%c7_119, %c0_120, %c0_121], %167 {strides = array<i32>} : memref<8x256x128xf32, #tpu.memory_space<vmem>>, vector<1x256x128xf32>,
    %168 = vector.extract_strided_slice %159 {offsets = [0, 0], sizes = [256, 128], strides = [1, 1]} : vector<256x256xf32> to vector<256x128xf32>
    %169 = arith.mulf %16, %168 : vector<256x128xf32>
    %c7_122 = arith.constant 7 : index
    %c0_123 = arith.constant 0 : index
    %c0_124 = arith.constant 0 : index
    %170 = vector.load %arg9[%c7_122, %c0_123, %c0_124] : memref<8x256x128xf32, #tpu.memory_space<vmem>>, vector<1x256x128xf32>
    %171 = vector.shape_cast %170 : vector<1x256x128xf32> to vector<256x128xf32>
    %172 = vector.shape_cast %169 : vector<256x128xf32> to vector<1x256x128xf32>
    tpu.vector_store %arg9[%c7_122, %c0_123, %c0_124], %172 {strides = array<i32>} : memref<8x256x128xf32, #tpu.memory_space<vmem>>, vector<1x256x128xf32>,
    %173 = vector.extract_strided_slice %159 {offsets = [0, 128], sizes = [256, 128], strides = [1, 1]} : vector<256x256xf32> to vector<256x128xf32>
    %c7_125 = arith.constant 7 : index
    %c0_126 = arith.constant 0 : index
    %c0_127 = arith.constant 0 : index
    %174 = vector.load %arg10[%c7_125, %c0_126, %c0_127] : memref<8x256x128xf32, #tpu.memory_space<vmem>>, vector<1x256x128xf32>
    %175 = vector.shape_cast %174 : vector<1x256x128xf32> to vector<256x128xf32>
    %176 = vector.shape_cast %173 : vector<256x128xf32> to vector<1x256x128xf32>
    tpu.vector_store %arg10[%c7_125, %c0_126, %c0_127], %176 {strides = array<i32>} : memref<8x256x128xf32, #tpu.memory_space<vmem>>, vector<1x256x128xf32>,
    %cst_128 = arith.constant 0.000000e+00 : f32
    %177 = vector.broadcast %cst_128 : f32 to vector<1x128xf32>
    %cst_129 = arith.constant 0.000000e+00 : f32
    %178 = vector.broadcast %cst_129 : f32 to vector<1x128xf32>
    %cst_130 = arith.constant 0.000000e+00 : f32
    %179 = vector.broadcast %cst_130 : f32 to vector<1x128xf32>
    %cst_131 = arith.constant 0.000000e+00 : f32
    %180 = vector.broadcast %cst_131 : f32 to vector<1x128xf32>
    %cst_132 = arith.constant 0.000000e+00 : f32
    %181 = vector.broadcast %cst_132 : f32 to vector<1x128xf32>
    %cst_133 = arith.constant 0.000000e+00 : f32
    %182 = vector.broadcast %cst_133 : f32 to vector<1x128xf32>
    %cst_134 = arith.constant 0.000000e+00 : f32
    %183 = vector.broadcast %cst_134 : f32 to vector<1x128xf32>
    %cst_135 = arith.constant 0.000000e+00 : f32
    %184 = vector.broadcast %cst_135 : f32 to vector<1x128xf32>
    %c0_i32 = arith.constant 0 : i32
    %c32_i32 = arith.constant 32 : i32
    %185 = arith.addi %c0_i32, %c32_i32 : i32
    %c1_i32 = arith.constant 1 : i32
    %186:8 = scf.for %arg12 = %c0_i32 to %185 step %c1_i32 iter_args(%arg13 = %177, %arg14 = %178, %arg15 = %179, %arg16 = %180, %arg17 = %181, %arg18 = %182, %arg19 = %183, %arg20 = %184) -> (vector<1x128xf32>, vector<1x128xf32>, vector<1x128xf32>, vector<1x128xf32>, vector<1x128xf32>, vector<1x128xf32>, vector<1x128xf32>, vector<1x128xf32>)  : i32 {
      %c8_i32 = arith.constant 8 : i32
      %196 = arith.muli %arg12, %c8_i32 : i32
      %197 = tpu.assume_multiple %196, 8 : i32
      %c0_i32_143 = arith.constant 0 : i32
      %198 = arith.addi %197, %c0_i32_143 : i32
      %c0_144 = arith.constant 0 : index
      %199 = arith.index_cast %198 : i32 to index
      %c0_145 = arith.constant 0 : index
      %200 = vector.load %arg8[%c0_144, %199, %c0_145] : memref<8x256x128xf32, #tpu.memory_space<vmem>>, vector<1x1x128xf32>
      %201 = vector.shape_cast %200 : vector<1x1x128xf32> to vector<1x128xf32>
      %202 = arith.mulf %201, %arg13 : vector<1x128xf32>
      %c0_146 = arith.constant 0 : index
      %203 = arith.index_cast %198 : i32 to index
      %c0_147 = arith.constant 0 : index
      %204 = vector.load %arg9[%c0_146, %203, %c0_147] : memref<8x256x128xf32, #tpu.memory_space<vmem>>, vector<1x1x128xf32>
      %205 = vector.shape_cast %204 : vector<1x1x128xf32> to vector<1x128xf32>
      %206 = arith.addf %202, %205 : vector<1x128xf32>
      %c0_148 = arith.constant 0 : index
      %207 = arith.index_cast %198 : i32 to index
      %c0_149 = arith.constant 0 : index
      %208 = vector.load %arg10[%c0_148, %207, %c0_149] : memref<8x256x128xf32, #tpu.memory_space<vmem>>, vector<1x1x128xf32>
      %209 = vector.shape_cast %208 : vector<1x1x128xf32> to vector<1x128xf32>
      %210 = arith.mulf %209, %206 : vector<1x128xf32>
      %c1_150 = arith.constant 1 : index
      %211 = arith.index_cast %198 : i32 to index
      %c0_151 = arith.constant 0 : index
      %212 = vector.load %arg8[%c1_150, %211, %c0_151] : memref<8x256x128xf32, #tpu.memory_space<vmem>>, vector<1x1x128xf32>
      %213 = vector.shape_cast %212 : vector<1x1x128xf32> to vector<1x128xf32>
      %214 = arith.mulf %213, %arg14 : vector<1x128xf32>
      %c1_152 = arith.constant 1 : index
      %215 = arith.index_cast %198 : i32 to index
      %c0_153 = arith.constant 0 : index
      %216 = vector.load %arg9[%c1_152, %215, %c0_153] : memref<8x256x128xf32, #tpu.memory_space<vmem>>, vector<1x1x128xf32>
      %217 = vector.shape_cast %216 : vector<1x1x128xf32> to vector<1x128xf32>
      %218 = arith.addf %214, %217 : vector<1x128xf32>
      %c1_154 = arith.constant 1 : index
      %219 = arith.index_cast %198 : i32 to index
      %c0_155 = arith.constant 0 : index
      %220 = vector.load %arg10[%c1_154, %219, %c0_155] : memref<8x256x128xf32, #tpu.memory_space<vmem>>, vector<1x1x128xf32>
      %221 = vector.shape_cast %220 : vector<1x1x128xf32> to vector<1x128xf32>
      %222 = arith.mulf %221, %218 : vector<1x128xf32>
      %c2_156 = arith.constant 2 : index
      %223 = arith.index_cast %198 : i32 to index
      %c0_157 = arith.constant 0 : index
      %224 = vector.load %arg8[%c2_156, %223, %c0_157] : memref<8x256x128xf32, #tpu.memory_space<vmem>>, vector<1x1x128xf32>
      %225 = vector.shape_cast %224 : vector<1x1x128xf32> to vector<1x128xf32>
      %226 = arith.mulf %225, %arg15 : vector<1x128xf32>
      %c2_158 = arith.constant 2 : index
      %227 = arith.index_cast %198 : i32 to index
      %c0_159 = arith.constant 0 : index
      %228 = vector.load %arg9[%c2_158, %227, %c0_159] : memref<8x256x128xf32, #tpu.memory_space<vmem>>, vector<1x1x128xf32>
      %229 = vector.shape_cast %228 : vector<1x1x128xf32> to vector<1x128xf32>
      %230 = arith.addf %226, %229 : vector<1x128xf32>
      %c2_160 = arith.constant 2 : index
      %231 = arith.index_cast %198 : i32 to index
      %c0_161 = arith.constant 0 : index
      %232 = vector.load %arg10[%c2_160, %231, %c0_161] : memref<8x256x128xf32, #tpu.memory_space<vmem>>, vector<1x1x128xf32>
      %233 = vector.shape_cast %232 : vector<1x1x128xf32> to vector<1x128xf32>
      %234 = arith.mulf %233, %230 : vector<1x128xf32>
      %c3_162 = arith.constant 3 : index
      %235 = arith.index_cast %198 : i32 to index
      %c0_163 = arith.constant 0 : index
      %236 = vector.load %arg8[%c3_162, %235, %c0_163] : memref<8x256x128xf32, #tpu.memory_space<vmem>>, vector<1x1x128xf32>
      %237 = vector.shape_cast %236 : vector<1x1x128xf32> to vector<1x128xf32>
      %238 = arith.mulf %237, %arg16 : vector<1x128xf32>
      %c3_164 = arith.constant 3 : index
      %239 = arith.index_cast %198 : i32 to index
      %c0_165 = arith.constant 0 : index
      %240 = vector.load %arg9[%c3_164, %239, %c0_165] : memref<8x256x128xf32, #tpu.memory_space<vmem>>, vector<1x1x128xf32>
      %241 = vector.shape_cast %240 : vector<1x1x128xf32> to vector<1x128xf32>
      %242 = arith.addf %238, %241 : vector<1x128xf32>
      %c3_166 = arith.constant 3 : index
      %243 = arith.index_cast %198 : i32 to index
      %c0_167 = arith.constant 0 : index
      %244 = vector.load %arg10[%c3_166, %243, %c0_167] : memref<8x256x128xf32, #tpu.memory_space<vmem>>, vector<1x1x128xf32>
      %245 = vector.shape_cast %244 : vector<1x1x128xf32> to vector<1x128xf32>
      %246 = arith.mulf %245, %242 : vector<1x128xf32>
      %c4_168 = arith.constant 4 : index
      %247 = arith.index_cast %198 : i32 to index
      %c0_169 = arith.constant 0 : index
      %248 = vector.load %arg8[%c4_168, %247, %c0_169] : memref<8x256x128xf32, #tpu.memory_space<vmem>>, vector<1x1x128xf32>
      %249 = vector.shape_cast %248 : vector<1x1x128xf32> to vector<1x128xf32>
      %250 = arith.mulf %249, %arg17 : vector<1x128xf32>
      %c4_170 = arith.constant 4 : index
      %251 = arith.index_cast %198 : i32 to index
      %c0_171 = arith.constant 0 : index
      %252 = vector.load %arg9[%c4_170, %251, %c0_171] : memref<8x256x128xf32, #tpu.memory_space<vmem>>, vector<1x1x128xf32>
      %253 = vector.shape_cast %252 : vector<1x1x128xf32> to vector<1x128xf32>
      %254 = arith.addf %250, %253 : vector<1x128xf32>
      %c4_172 = arith.constant 4 : index
      %255 = arith.index_cast %198 : i32 to index
      %c0_173 = arith.constant 0 : index
      %256 = vector.load %arg10[%c4_172, %255, %c0_173] : memref<8x256x128xf32, #tpu.memory_space<vmem>>, vector<1x1x128xf32>
      %257 = vector.shape_cast %256 : vector<1x1x128xf32> to vector<1x128xf32>
      %258 = arith.mulf %257, %254 : vector<1x128xf32>
      %c5_174 = arith.constant 5 : index
      %259 = arith.index_cast %198 : i32 to index
      %c0_175 = arith.constant 0 : index
      %260 = vector.load %arg8[%c5_174, %259, %c0_175] : memref<8x256x128xf32, #tpu.memory_space<vmem>>, vector<1x1x128xf32>
      %261 = vector.shape_cast %260 : vector<1x1x128xf32> to vector<1x128xf32>
      %262 = arith.mulf %261, %arg18 : vector<1x128xf32>
      %c5_176 = arith.constant 5 : index
      %263 = arith.index_cast %198 : i32 to index
      %c0_177 = arith.constant 0 : index
      %264 = vector.load %arg9[%c5_176, %263, %c0_177] : memref<8x256x128xf32, #tpu.memory_space<vmem>>, vector<1x1x128xf32>
      %265 = vector.shape_cast %264 : vector<1x1x128xf32> to vector<1x128xf32>
      %266 = arith.addf %262, %265 : vector<1x128xf32>
      %c5_178 = arith.constant 5 : index
      %267 = arith.index_cast %198 : i32 to index
      %c0_179 = arith.constant 0 : index
      %268 = vector.load %arg10[%c5_178, %267, %c0_179] : memref<8x256x128xf32, #tpu.memory_space<vmem>>, vector<1x1x128xf32>
      %269 = vector.shape_cast %268 : vector<1x1x128xf32> to vector<1x128xf32>
      %270 = arith.mulf %269, %266 : vector<1x128xf32>
      %c6_180 = arith.constant 6 : index
      %271 = arith.index_cast %198 : i32 to index
      %c0_181 = arith.constant 0 : index
      %272 = vector.load %arg8[%c6_180, %271, %c0_181] : memref<8x256x128xf32, #tpu.memory_space<vmem>>, vector<1x1x128xf32>
      %273 = vector.shape_cast %272 : vector<1x1x128xf32> to vector<1x128xf32>
      %274 = arith.mulf %273, %arg19 : vector<1x128xf32>
      %c6_182 = arith.constant 6 : index
      %275 = arith.index_cast %198 : i32 to index
      %c0_183 = arith.constant 0 : index
      %276 = vector.load %arg9[%c6_182, %275, %c0_183] : memref<8x256x128xf32, #tpu.memory_space<vmem>>, vector<1x1x128xf32>
      %277 = vector.shape_cast %276 : vector<1x1x128xf32> to vector<1x128xf32>
      %278 = arith.addf %274, %277 : vector<1x128xf32>
      %c6_184 = arith.constant 6 : index
      %279 = arith.index_cast %198 : i32 to index
      %c0_185 = arith.constant 0 : index
      %280 = vector.load %arg10[%c6_184, %279, %c0_185] : memref<8x256x128xf32, #tpu.memory_space<vmem>>, vector<1x1x128xf32>
      %281 = vector.shape_cast %280 : vector<1x1x128xf32> to vector<1x128xf32>
      %282 = arith.mulf %281, %278 : vector<1x128xf32>
      %c7_186 = arith.constant 7 : index
      %283 = arith.index_cast %198 : i32 to index
      %c0_187 = arith.constant 0 : index
      %284 = vector.load %arg8[%c7_186, %283, %c0_187] : memref<8x256x128xf32, #tpu.memory_space<vmem>>, vector<1x1x128xf32>
      %285 = vector.shape_cast %284 : vector<1x1x128xf32> to vector<1x128xf32>
      %286 = arith.mulf %285, %arg20 : vector<1x128xf32>
      %c7_188 = arith.constant 7 : index
      %287 = arith.index_cast %198 : i32 to index
      %c0_189 = arith.constant 0 : index
      %288 = vector.load %arg9[%c7_188, %287, %c0_189] : memref<8x256x128xf32, #tpu.memory_space<vmem>>, vector<1x1x128xf32>
      %289 = vector.shape_cast %288 : vector<1x1x128xf32> to vector<1x128xf32>
      %290 = arith.addf %286, %289 : vector<1x128xf32>
      %c7_190 = arith.constant 7 : index
      %291 = arith.index_cast %198 : i32 to index
      %c0_191 = arith.constant 0 : index
      %292 = vector.load %arg10[%c7_190, %291, %c0_191] : memref<8x256x128xf32, #tpu.memory_space<vmem>>, vector<1x1x128xf32>
      %293 = vector.shape_cast %292 : vector<1x1x128xf32> to vector<1x128xf32>
      %294 = arith.mulf %293, %290 : vector<1x128xf32>
      %295 = arith.addf %210, %222 : vector<1x128xf32>
      %296 = arith.addf %234, %246 : vector<1x128xf32>
      %297 = arith.addf %258, %270 : vector<1x128xf32>
      %298 = arith.addf %282, %294 : vector<1x128xf32>
      %299 = arith.addf %295, %296 : vector<1x128xf32>
      %300 = arith.addf %297, %298 : vector<1x128xf32>
      %301 = arith.addf %299, %300 : vector<1x128xf32>
      %302 = arith.index_cast %198 : i32 to index
      %c0_192 = arith.constant 0 : index
      %303 = vector.load %arg11[%302, %c0_192] : memref<256x128xf32, #tpu.memory_space<vmem>>, vector<1x128xf32>
      tpu.vector_store %arg11[%302, %c0_192], %301 {strides = array<i32>} : memref<256x128xf32, #tpu.memory_space<vmem>>, vector<1x128xf32>,
      %c1_i32_193 = arith.constant 1 : i32
      %304 = arith.addi %197, %c1_i32_193 : i32
      %c0_194 = arith.constant 0 : index
      %305 = arith.index_cast %304 : i32 to index
      %c0_195 = arith.constant 0 : index
      %306 = vector.load %arg8[%c0_194, %305, %c0_195] : memref<8x256x128xf32, #tpu.memory_space<vmem>>, vector<1x1x128xf32>
      %307 = vector.shape_cast %306 : vector<1x1x128xf32> to vector<1x128xf32>
      %308 = arith.mulf %307, %206 : vector<1x128xf32>
      %c0_196 = arith.constant 0 : index
      %309 = arith.index_cast %304 : i32 to index
      %c0_197 = arith.constant 0 : index
      %310 = vector.load %arg9[%c0_196, %309, %c0_197] : memref<8x256x128xf32, #tpu.memory_space<vmem>>, vector<1x1x128xf32>
      %311 = vector.shape_cast %310 : vector<1x1x128xf32> to vector<1x128xf32>
      %312 = arith.addf %308, %311 : vector<1x128xf32>
      %c0_198 = arith.constant 0 : index
      %313 = arith.index_cast %304 : i32 to index
      %c0_199 = arith.constant 0 : index
      %314 = vector.load %arg10[%c0_198, %313, %c0_199] : memref<8x256x128xf32, #tpu.memory_space<vmem>>, vector<1x1x128xf32>
      %315 = vector.shape_cast %314 : vector<1x1x128xf32> to vector<1x128xf32>
      %316 = arith.mulf %315, %312 : vector<1x128xf32>
      %c1_200 = arith.constant 1 : index
      %317 = arith.index_cast %304 : i32 to index
      %c0_201 = arith.constant 0 : index
      %318 = vector.load %arg8[%c1_200, %317, %c0_201] : memref<8x256x128xf32, #tpu.memory_space<vmem>>, vector<1x1x128xf32>
      %319 = vector.shape_cast %318 : vector<1x1x128xf32> to vector<1x128xf32>
      %320 = arith.mulf %319, %218 : vector<1x128xf32>
      %c1_202 = arith.constant 1 : index
      %321 = arith.index_cast %304 : i32 to index
      %c0_203 = arith.constant 0 : index
      %322 = vector.load %arg9[%c1_202, %321, %c0_203] : memref<8x256x128xf32, #tpu.memory_space<vmem>>, vector<1x1x128xf32>
      %323 = vector.shape_cast %322 : vector<1x1x128xf32> to vector<1x128xf32>
      %324 = arith.addf %320, %323 : vector<1x128xf32>
      %c1_204 = arith.constant 1 : index
      %325 = arith.index_cast %304 : i32 to index
      %c0_205 = arith.constant 0 : index
      %326 = vector.load %arg10[%c1_204, %325, %c0_205] : memref<8x256x128xf32, #tpu.memory_space<vmem>>, vector<1x1x128xf32>
      %327 = vector.shape_cast %326 : vector<1x1x128xf32> to vector<1x128xf32>
      %328 = arith.mulf %327, %324 : vector<1x128xf32>
      %c2_206 = arith.constant 2 : index
      %329 = arith.index_cast %304 : i32 to index
      %c0_207 = arith.constant 0 : index
      %330 = vector.load %arg8[%c2_206, %329, %c0_207] : memref<8x256x128xf32, #tpu.memory_space<vmem>>, vector<1x1x128xf32>
      %331 = vector.shape_cast %330 : vector<1x1x128xf32> to vector<1x128xf32>
      %332 = arith.mulf %331, %230 : vector<1x128xf32>
      %c2_208 = arith.constant 2 : index
      %333 = arith.index_cast %304 : i32 to index
      %c0_209 = arith.constant 0 : index
      %334 = vector.load %arg9[%c2_208, %333, %c0_209] : memref<8x256x128xf32, #tpu.memory_space<vmem>>, vector<1x1x128xf32>
      %335 = vector.shape_cast %334 : vector<1x1x128xf32> to vector<1x128xf32>
      %336 = arith.addf %332, %335 : vector<1x128xf32>
      %c2_210 = arith.constant 2 : index
      %337 = arith.index_cast %304 : i32 to index
      %c0_211 = arith.constant 0 : index
      %338 = vector.load %arg10[%c2_210, %337, %c0_211] : memref<8x256x128xf32, #tpu.memory_space<vmem>>, vector<1x1x128xf32>
      %339 = vector.shape_cast %338 : vector<1x1x128xf32> to vector<1x128xf32>
      %340 = arith.mulf %339, %336 : vector<1x128xf32>
      %c3_212 = arith.constant 3 : index
      %341 = arith.index_cast %304 : i32 to index
      %c0_213 = arith.constant 0 : index
      %342 = vector.load %arg8[%c3_212, %341, %c0_213] : memref<8x256x128xf32, #tpu.memory_space<vmem>>, vector<1x1x128xf32>
      %343 = vector.shape_cast %342 : vector<1x1x128xf32> to vector<1x128xf32>
      %344 = arith.mulf %343, %242 : vector<1x128xf32>
      %c3_214 = arith.constant 3 : index
      %345 = arith.index_cast %304 : i32 to index
      %c0_215 = arith.constant 0 : index
      %346 = vector.load %arg9[%c3_214, %345, %c0_215] : memref<8x256x128xf32, #tpu.memory_space<vmem>>, vector<1x1x128xf32>
      %347 = vector.shape_cast %346 : vector<1x1x128xf32> to vector<1x128xf32>
      %348 = arith.addf %344, %347 : vector<1x128xf32>
      %c3_216 = arith.constant 3 : index
      %349 = arith.index_cast %304 : i32 to index
      %c0_217 = arith.constant 0 : index
      %350 = vector.load %arg10[%c3_216, %349, %c0_217] : memref<8x256x128xf32, #tpu.memory_space<vmem>>, vector<1x1x128xf32>
      %351 = vector.shape_cast %350 : vector<1x1x128xf32> to vector<1x128xf32>
      %352 = arith.mulf %351, %348 : vector<1x128xf32>
      %c4_218 = arith.constant 4 : index
      %353 = arith.index_cast %304 : i32 to index
      %c0_219 = arith.constant 0 : index
      %354 = vector.load %arg8[%c4_218, %353, %c0_219] : memref<8x256x128xf32, #tpu.memory_space<vmem>>, vector<1x1x128xf32>
      %355 = vector.shape_cast %354 : vector<1x1x128xf32> to vector<1x128xf32>
      %356 = arith.mulf %355, %254 : vector<1x128xf32>
      %c4_220 = arith.constant 4 : index
      %357 = arith.index_cast %304 : i32 to index
      %c0_221 = arith.constant 0 : index
      %358 = vector.load %arg9[%c4_220, %357, %c0_221] : memref<8x256x128xf32, #tpu.memory_space<vmem>>, vector<1x1x128xf32>
      %359 = vector.shape_cast %358 : vector<1x1x128xf32> to vector<1x128xf32>
      %360 = arith.addf %356, %359 : vector<1x128xf32>
      %c4_222 = arith.constant 4 : index
      %361 = arith.index_cast %304 : i32 to index
      %c0_223 = arith.constant 0 : index
      %362 = vector.load %arg10[%c4_222, %361, %c0_223] : memref<8x256x128xf32, #tpu.memory_space<vmem>>, vector<1x1x128xf32>
      %363 = vector.shape_cast %362 : vector<1x1x128xf32> to vector<1x128xf32>
      %364 = arith.mulf %363, %360 : vector<1x128xf32>
      %c5_224 = arith.constant 5 : index
      %365 = arith.index_cast %304 : i32 to index
      %c0_225 = arith.constant 0 : index
      %366 = vector.load %arg8[%c5_224, %365, %c0_225] : memref<8x256x128xf32, #tpu.memory_space<vmem>>, vector<1x1x128xf32>
      %367 = vector.shape_cast %366 : vector<1x1x128xf32> to vector<1x128xf32>
      %368 = arith.mulf %367, %266 : vector<1x128xf32>
      %c5_226 = arith.constant 5 : index
      %369 = arith.index_cast %304 : i32 to index
      %c0_227 = arith.constant 0 : index
      %370 = vector.load %arg9[%c5_226, %369, %c0_227] : memref<8x256x128xf32, #tpu.memory_space<vmem>>, vector<1x1x128xf32>
      %371 = vector.shape_cast %370 : vector<1x1x128xf32> to vector<1x128xf32>
      %372 = arith.addf %368, %371 : vector<1x128xf32>
      %c5_228 = arith.constant 5 : index
      %373 = arith.index_cast %304 : i32 to index
      %c0_229 = arith.constant 0 : index
      %374 = vector.load %arg10[%c5_228, %373, %c0_229] : memref<8x256x128xf32, #tpu.memory_space<vmem>>, vector<1x1x128xf32>
      %375 = vector.shape_cast %374 : vector<1x1x128xf32> to vector<1x128xf32>
      %376 = arith.mulf %375, %372 : vector<1x128xf32>
      %c6_230 = arith.constant 6 : index
      %377 = arith.index_cast %304 : i32 to index
      %c0_231 = arith.constant 0 : index
      %378 = vector.load %arg8[%c6_230, %377, %c0_231] : memref<8x256x128xf32, #tpu.memory_space<vmem>>, vector<1x1x128xf32>
      %379 = vector.shape_cast %378 : vector<1x1x128xf32> to vector<1x128xf32>
      %380 = arith.mulf %379, %278 : vector<1x128xf32>
      %c6_232 = arith.constant 6 : index
      %381 = arith.index_cast %304 : i32 to index
      %c0_233 = arith.constant 0 : index
      %382 = vector.load %arg9[%c6_232, %381, %c0_233] : memref<8x256x128xf32, #tpu.memory_space<vmem>>, vector<1x1x128xf32>
      %383 = vector.shape_cast %382 : vector<1x1x128xf32> to vector<1x128xf32>
      %384 = arith.addf %380, %383 : vector<1x128xf32>
      %c6_234 = arith.constant 6 : index
      %385 = arith.index_cast %304 : i32 to index
      %c0_235 = arith.constant 0 : index
      %386 = vector.load %arg10[%c6_234, %385, %c0_235] : memref<8x256x128xf32, #tpu.memory_space<vmem>>, vector<1x1x128xf32>
      %387 = vector.shape_cast %386 : vector<1x1x128xf32> to vector<1x128xf32>
      %388 = arith.mulf %387, %384 : vector<1x128xf32>
      %c7_236 = arith.constant 7 : index
      %389 = arith.index_cast %304 : i32 to index
      %c0_237 = arith.constant 0 : index
      %390 = vector.load %arg8[%c7_236, %389, %c0_237] : memref<8x256x128xf32, #tpu.memory_space<vmem>>, vector<1x1x128xf32>
      %391 = vector.shape_cast %390 : vector<1x1x128xf32> to vector<1x128xf32>
      %392 = arith.mulf %391, %290 : vector<1x128xf32>
      %c7_238 = arith.constant 7 : index
      %393 = arith.index_cast %304 : i32 to index
      %c0_239 = arith.constant 0 : index
      %394 = vector.load %arg9[%c7_238, %393, %c0_239] : memref<8x256x128xf32, #tpu.memory_space<vmem>>, vector<1x1x128xf32>
      %395 = vector.shape_cast %394 : vector<1x1x128xf32> to vector<1x128xf32>
      %396 = arith.addf %392, %395 : vector<1x128xf32>
      %c7_240 = arith.constant 7 : index
      %397 = arith.index_cast %304 : i32 to index
      %c0_241 = arith.constant 0 : index
      %398 = vector.load %arg10[%c7_240, %397, %c0_241] : memref<8x256x128xf32, #tpu.memory_space<vmem>>, vector<1x1x128xf32>
      %399 = vector.shape_cast %398 : vector<1x1x128xf32> to vector<1x128xf32>
      %400 = arith.mulf %399, %396 : vector<1x128xf32>
      %401 = arith.addf %316, %328 : vector<1x128xf32>
      %402 = arith.addf %340, %352 : vector<1x128xf32>
      %403 = arith.addf %364, %376 : vector<1x128xf32>
      %404 = arith.addf %388, %400 : vector<1x128xf32>
      %405 = arith.addf %401, %402 : vector<1x128xf32>
      %406 = arith.addf %403, %404 : vector<1x128xf32>
      %407 = arith.addf %405, %406 : vector<1x128xf32>
      %408 = arith.index_cast %304 : i32 to index
      %c0_242 = arith.constant 0 : index
      %409 = vector.load %arg11[%408, %c0_242] : memref<256x128xf32, #tpu.memory_space<vmem>>, vector<1x128xf32>
      tpu.vector_store %arg11[%408, %c0_242], %407 {strides = array<i32>} : memref<256x128xf32, #tpu.memory_space<vmem>>, vector<1x128xf32>,
      %c2_i32 = arith.constant 2 : i32
      %410 = arith.addi %197, %c2_i32 : i32
      %c0_243 = arith.constant 0 : index
      %411 = arith.index_cast %410 : i32 to index
      %c0_244 = arith.constant 0 : index
      %412 = vector.load %arg8[%c0_243, %411, %c0_244] : memref<8x256x128xf32, #tpu.memory_space<vmem>>, vector<1x1x128xf32>
      %413 = vector.shape_cast %412 : vector<1x1x128xf32> to vector<1x128xf32>
      %414 = arith.mulf %413, %312 : vector<1x128xf32>
      %c0_245 = arith.constant 0 : index
      %415 = arith.index_cast %410 : i32 to index
      %c0_246 = arith.constant 0 : index
      %416 = vector.load %arg9[%c0_245, %415, %c0_246] : memref<8x256x128xf32, #tpu.memory_space<vmem>>, vector<1x1x128xf32>
      %417 = vector.shape_cast %416 : vector<1x1x128xf32> to vector<1x128xf32>
      %418 = arith.addf %414, %417 : vector<1x128xf32>
      %c0_247 = arith.constant 0 : index
      %419 = arith.index_cast %410 : i32 to index
      %c0_248 = arith.constant 0 : index
      %420 = vector.load %arg10[%c0_247, %419, %c0_248] : memref<8x256x128xf32, #tpu.memory_space<vmem>>, vector<1x1x128xf32>
      %421 = vector.shape_cast %420 : vector<1x1x128xf32> to vector<1x128xf32>
      %422 = arith.mulf %421, %418 : vector<1x128xf32>
      %c1_249 = arith.constant 1 : index
      %423 = arith.index_cast %410 : i32 to index
      %c0_250 = arith.constant 0 : index
      %424 = vector.load %arg8[%c1_249, %423, %c0_250] : memref<8x256x128xf32, #tpu.memory_space<vmem>>, vector<1x1x128xf32>
      %425 = vector.shape_cast %424 : vector<1x1x128xf32> to vector<1x128xf32>
      %426 = arith.mulf %425, %324 : vector<1x128xf32>
      %c1_251 = arith.constant 1 : index
      %427 = arith.index_cast %410 : i32 to index
      %c0_252 = arith.constant 0 : index
      %428 = vector.load %arg9[%c1_251, %427, %c0_252] : memref<8x256x128xf32, #tpu.memory_space<vmem>>, vector<1x1x128xf32>
      %429 = vector.shape_cast %428 : vector<1x1x128xf32> to vector<1x128xf32>
      %430 = arith.addf %426, %429 : vector<1x128xf32>
      %c1_253 = arith.constant 1 : index
      %431 = arith.index_cast %410 : i32 to index
      %c0_254 = arith.constant 0 : index
      %432 = vector.load %arg10[%c1_253, %431, %c0_254] : memref<8x256x128xf32, #tpu.memory_space<vmem>>, vector<1x1x128xf32>
      %433 = vector.shape_cast %432 : vector<1x1x128xf32> to vector<1x128xf32>
      %434 = arith.mulf %433, %430 : vector<1x128xf32>
      %c2_255 = arith.constant 2 : index
      %435 = arith.index_cast %410 : i32 to index
      %c0_256 = arith.constant 0 : index
      %436 = vector.load %arg8[%c2_255, %435, %c0_256] : memref<8x256x128xf32, #tpu.memory_space<vmem>>, vector<1x1x128xf32>
      %437 = vector.shape_cast %436 : vector<1x1x128xf32> to vector<1x128xf32>
      %438 = arith.mulf %437, %336 : vector<1x128xf32>
      %c2_257 = arith.constant 2 : index
      %439 = arith.index_cast %410 : i32 to index
      %c0_258 = arith.constant 0 : index
      %440 = vector.load %arg9[%c2_257, %439, %c0_258] : memref<8x256x128xf32, #tpu.memory_space<vmem>>, vector<1x1x128xf32>
      %441 = vector.shape_cast %440 : vector<1x1x128xf32> to vector<1x128xf32>
      %442 = arith.addf %438, %441 : vector<1x128xf32>
      %c2_259 = arith.constant 2 : index
      %443 = arith.index_cast %410 : i32 to index
      %c0_260 = arith.constant 0 : index
      %444 = vector.load %arg10[%c2_259, %443, %c0_260] : memref<8x256x128xf32, #tpu.memory_space<vmem>>, vector<1x1x128xf32>
      %445 = vector.shape_cast %444 : vector<1x1x128xf32> to vector<1x128xf32>
      %446 = arith.mulf %445, %442 : vector<1x128xf32>
      %c3_261 = arith.constant 3 : index
      %447 = arith.index_cast %410 : i32 to index
      %c0_262 = arith.constant 0 : index
      %448 = vector.load %arg8[%c3_261, %447, %c0_262] : memref<8x256x128xf32, #tpu.memory_space<vmem>>, vector<1x1x128xf32>
      %449 = vector.shape_cast %448 : vector<1x1x128xf32> to vector<1x128xf32>
      %450 = arith.mulf %449, %348 : vector<1x128xf32>
      %c3_263 = arith.constant 3 : index
      %451 = arith.index_cast %410 : i32 to index
      %c0_264 = arith.constant 0 : index
      %452 = vector.load %arg9[%c3_263, %451, %c0_264] : memref<8x256x128xf32, #tpu.memory_space<vmem>>, vector<1x1x128xf32>
      %453 = vector.shape_cast %452 : vector<1x1x128xf32> to vector<1x128xf32>
      %454 = arith.addf %450, %453 : vector<1x128xf32>
      %c3_265 = arith.constant 3 : index
      %455 = arith.index_cast %410 : i32 to index
      %c0_266 = arith.constant 0 : index
      %456 = vector.load %arg10[%c3_265, %455, %c0_266] : memref<8x256x128xf32, #tpu.memory_space<vmem>>, vector<1x1x128xf32>
      %457 = vector.shape_cast %456 : vector<1x1x128xf32> to vector<1x128xf32>
      %458 = arith.mulf %457, %454 : vector<1x128xf32>
      %c4_267 = arith.constant 4 : index
      %459 = arith.index_cast %410 : i32 to index
      %c0_268 = arith.constant 0 : index
      %460 = vector.load %arg8[%c4_267, %459, %c0_268] : memref<8x256x128xf32, #tpu.memory_space<vmem>>, vector<1x1x128xf32>
      %461 = vector.shape_cast %460 : vector<1x1x128xf32> to vector<1x128xf32>
      %462 = arith.mulf %461, %360 : vector<1x128xf32>
      %c4_269 = arith.constant 4 : index
      %463 = arith.index_cast %410 : i32 to index
      %c0_270 = arith.constant 0 : index
      %464 = vector.load %arg9[%c4_269, %463, %c0_270] : memref<8x256x128xf32, #tpu.memory_space<vmem>>, vector<1x1x128xf32>
      %465 = vector.shape_cast %464 : vector<1x1x128xf32> to vector<1x128xf32>
      %466 = arith.addf %462, %465 : vector<1x128xf32>
      %c4_271 = arith.constant 4 : index
      %467 = arith.index_cast %410 : i32 to index
      %c0_272 = arith.constant 0 : index
      %468 = vector.load %arg10[%c4_271, %467, %c0_272] : memref<8x256x128xf32, #tpu.memory_space<vmem>>, vector<1x1x128xf32>
      %469 = vector.shape_cast %468 : vector<1x1x128xf32> to vector<1x128xf32>
      %470 = arith.mulf %469, %466 : vector<1x128xf32>
      %c5_273 = arith.constant 5 : index
      %471 = arith.index_cast %410 : i32 to index
      %c0_274 = arith.constant 0 : index
      %472 = vector.load %arg8[%c5_273, %471, %c0_274] : memref<8x256x128xf32, #tpu.memory_space<vmem>>, vector<1x1x128xf32>
      %473 = vector.shape_cast %472 : vector<1x1x128xf32> to vector<1x128xf32>
      %474 = arith.mulf %473, %372 : vector<1x128xf32>
      %c5_275 = arith.constant 5 : index
      %475 = arith.index_cast %410 : i32 to index
      %c0_276 = arith.constant 0 : index
      %476 = vector.load %arg9[%c5_275, %475, %c0_276] : memref<8x256x128xf32, #tpu.memory_space<vmem>>, vector<1x1x128xf32>
      %477 = vector.shape_cast %476 : vector<1x1x128xf32> to vector<1x128xf32>
      %478 = arith.addf %474, %477 : vector<1x128xf32>
      %c5_277 = arith.constant 5 : index
      %479 = arith.index_cast %410 : i32 to index
      %c0_278 = arith.constant 0 : index
      %480 = vector.load %arg10[%c5_277, %479, %c0_278] : memref<8x256x128xf32, #tpu.memory_space<vmem>>, vector<1x1x128xf32>
      %481 = vector.shape_cast %480 : vector<1x1x128xf32> to vector<1x128xf32>
      %482 = arith.mulf %481, %478 : vector<1x128xf32>
      %c6_279 = arith.constant 6 : index
      %483 = arith.index_cast %410 : i32 to index
      %c0_280 = arith.constant 0 : index
      %484 = vector.load %arg8[%c6_279, %483, %c0_280] : memref<8x256x128xf32, #tpu.memory_space<vmem>>, vector<1x1x128xf32>
      %485 = vector.shape_cast %484 : vector<1x1x128xf32> to vector<1x128xf32>
      %486 = arith.mulf %485, %384 : vector<1x128xf32>
      %c6_281 = arith.constant 6 : index
      %487 = arith.index_cast %410 : i32 to index
      %c0_282 = arith.constant 0 : index
      %488 = vector.load %arg9[%c6_281, %487, %c0_282] : memref<8x256x128xf32, #tpu.memory_space<vmem>>, vector<1x1x128xf32>
      %489 = vector.shape_cast %488 : vector<1x1x128xf32> to vector<1x128xf32>
      %490 = arith.addf %486, %489 : vector<1x128xf32>
      %c6_283 = arith.constant 6 : index
      %491 = arith.index_cast %410 : i32 to index
      %c0_284 = arith.constant 0 : index
      %492 = vector.load %arg10[%c6_283, %491, %c0_284] : memref<8x256x128xf32, #tpu.memory_space<vmem>>, vector<1x1x128xf32>
      %493 = vector.shape_cast %492 : vector<1x1x128xf32> to vector<1x128xf32>
      %494 = arith.mulf %493, %490 : vector<1x128xf32>
      %c7_285 = arith.constant 7 : index
      %495 = arith.index_cast %410 : i32 to index
      %c0_286 = arith.constant 0 : index
      %496 = vector.load %arg8[%c7_285, %495, %c0_286] : memref<8x256x128xf32, #tpu.memory_space<vmem>>, vector<1x1x128xf32>
      %497 = vector.shape_cast %496 : vector<1x1x128xf32> to vector<1x128xf32>
      %498 = arith.mulf %497, %396 : vector<1x128xf32>
      %c7_287 = arith.constant 7 : index
      %499 = arith.index_cast %410 : i32 to index
      %c0_288 = arith.constant 0 : index
      %500 = vector.load %arg9[%c7_287, %499, %c0_288] : memref<8x256x128xf32, #tpu.memory_space<vmem>>, vector<1x1x128xf32>
      %501 = vector.shape_cast %500 : vector<1x1x128xf32> to vector<1x128xf32>
      %502 = arith.addf %498, %501 : vector<1x128xf32>
      %c7_289 = arith.constant 7 : index
      %503 = arith.index_cast %410 : i32 to index
      %c0_290 = arith.constant 0 : index
      %504 = vector.load %arg10[%c7_289, %503, %c0_290] : memref<8x256x128xf32, #tpu.memory_space<vmem>>, vector<1x1x128xf32>
      %505 = vector.shape_cast %504 : vector<1x1x128xf32> to vector<1x128xf32>
      %506 = arith.mulf %505, %502 : vector<1x128xf32>
      %507 = arith.addf %422, %434 : vector<1x128xf32>
      %508 = arith.addf %446, %458 : vector<1x128xf32>
      %509 = arith.addf %470, %482 : vector<1x128xf32>
      %510 = arith.addf %494, %506 : vector<1x128xf32>
      %511 = arith.addf %507, %508 : vector<1x128xf32>
      %512 = arith.addf %509, %510 : vector<1x128xf32>
      %513 = arith.addf %511, %512 : vector<1x128xf32>
      %514 = arith.index_cast %410 : i32 to index
      %c0_291 = arith.constant 0 : index
      %515 = vector.load %arg11[%514, %c0_291] : memref<256x128xf32, #tpu.memory_space<vmem>>, vector<1x128xf32>
      tpu.vector_store %arg11[%514, %c0_291], %513 {strides = array<i32>} : memref<256x128xf32, #tpu.memory_space<vmem>>, vector<1x128xf32>,
      %c3_i32 = arith.constant 3 : i32
      %516 = arith.addi %197, %c3_i32 : i32
      %c0_292 = arith.constant 0 : index
      %517 = arith.index_cast %516 : i32 to index
      %c0_293 = arith.constant 0 : index
      %518 = vector.load %arg8[%c0_292, %517, %c0_293] : memref<8x256x128xf32, #tpu.memory_space<vmem>>, vector<1x1x128xf32>
      %519 = vector.shape_cast %518 : vector<1x1x128xf32> to vector<1x128xf32>
      %520 = arith.mulf %519, %418 : vector<1x128xf32>
      %c0_294 = arith.constant 0 : index
      %521 = arith.index_cast %516 : i32 to index
      %c0_295 = arith.constant 0 : index
      %522 = vector.load %arg9[%c0_294, %521, %c0_295] : memref<8x256x128xf32, #tpu.memory_space<vmem>>, vector<1x1x128xf32>
      %523 = vector.shape_cast %522 : vector<1x1x128xf32> to vector<1x128xf32>
      %524 = arith.addf %520, %523 : vector<1x128xf32>
      %c0_296 = arith.constant 0 : index
      %525 = arith.index_cast %516 : i32 to index
      %c0_297 = arith.constant 0 : index
      %526 = vector.load %arg10[%c0_296, %525, %c0_297] : memref<8x256x128xf32, #tpu.memory_space<vmem>>, vector<1x1x128xf32>
      %527 = vector.shape_cast %526 : vector<1x1x128xf32> to vector<1x128xf32>
      %528 = arith.mulf %527, %524 : vector<1x128xf32>
      %c1_298 = arith.constant 1 : index
      %529 = arith.index_cast %516 : i32 to index
      %c0_299 = arith.constant 0 : index
      %530 = vector.load %arg8[%c1_298, %529, %c0_299] : memref<8x256x128xf32, #tpu.memory_space<vmem>>, vector<1x1x128xf32>
      %531 = vector.shape_cast %530 : vector<1x1x128xf32> to vector<1x128xf32>
      %532 = arith.mulf %531, %430 : vector<1x128xf32>
      %c1_300 = arith.constant 1 : index
      %533 = arith.index_cast %516 : i32 to index
      %c0_301 = arith.constant 0 : index
      %534 = vector.load %arg9[%c1_300, %533, %c0_301] : memref<8x256x128xf32, #tpu.memory_space<vmem>>, vector<1x1x128xf32>
      %535 = vector.shape_cast %534 : vector<1x1x128xf32> to vector<1x128xf32>
      %536 = arith.addf %532, %535 : vector<1x128xf32>
      %c1_302 = arith.constant 1 : index
      %537 = arith.index_cast %516 : i32 to index
      %c0_303 = arith.constant 0 : index
      %538 = vector.load %arg10[%c1_302, %537, %c0_303] : memref<8x256x128xf32, #tpu.memory_space<vmem>>, vector<1x1x128xf32>
      %539 = vector.shape_cast %538 : vector<1x1x128xf32> to vector<1x128xf32>
      %540 = arith.mulf %539, %536 : vector<1x128xf32>
      %c2_304 = arith.constant 2 : index
      %541 = arith.index_cast %516 : i32 to index
      %c0_305 = arith.constant 0 : index
      %542 = vector.load %arg8[%c2_304, %541, %c0_305] : memref<8x256x128xf32, #tpu.memory_space<vmem>>, vector<1x1x128xf32>
      %543 = vector.shape_cast %542 : vector<1x1x128xf32> to vector<1x128xf32>
      %544 = arith.mulf %543, %442 : vector<1x128xf32>
      %c2_306 = arith.constant 2 : index
      %545 = arith.index_cast %516 : i32 to index
      %c0_307 = arith.constant 0 : index
      %546 = vector.load %arg9[%c2_306, %545, %c0_307] : memref<8x256x128xf32, #tpu.memory_space<vmem>>, vector<1x1x128xf32>
      %547 = vector.shape_cast %546 : vector<1x1x128xf32> to vector<1x128xf32>
      %548 = arith.addf %544, %547 : vector<1x128xf32>
      %c2_308 = arith.constant 2 : index
      %549 = arith.index_cast %516 : i32 to index
      %c0_309 = arith.constant 0 : index
      %550 = vector.load %arg10[%c2_308, %549, %c0_309] : memref<8x256x128xf32, #tpu.memory_space<vmem>>, vector<1x1x128xf32>
      %551 = vector.shape_cast %550 : vector<1x1x128xf32> to vector<1x128xf32>
      %552 = arith.mulf %551, %548 : vector<1x128xf32>
      %c3_310 = arith.constant 3 : index
      %553 = arith.index_cast %516 : i32 to index
      %c0_311 = arith.constant 0 : index
      %554 = vector.load %arg8[%c3_310, %553, %c0_311] : memref<8x256x128xf32, #tpu.memory_space<vmem>>, vector<1x1x128xf32>
      %555 = vector.shape_cast %554 : vector<1x1x128xf32> to vector<1x128xf32>
      %556 = arith.mulf %555, %454 : vector<1x128xf32>
      %c3_312 = arith.constant 3 : index
      %557 = arith.index_cast %516 : i32 to index
      %c0_313 = arith.constant 0 : index
      %558 = vector.load %arg9[%c3_312, %557, %c0_313] : memref<8x256x128xf32, #tpu.memory_space<vmem>>, vector<1x1x128xf32>
      %559 = vector.shape_cast %558 : vector<1x1x128xf32> to vector<1x128xf32>
      %560 = arith.addf %556, %559 : vector<1x128xf32>
      %c3_314 = arith.constant 3 : index
      %561 = arith.index_cast %516 : i32 to index
      %c0_315 = arith.constant 0 : index
      %562 = vector.load %arg10[%c3_314, %561, %c0_315] : memref<8x256x128xf32, #tpu.memory_space<vmem>>, vector<1x1x128xf32>
      %563 = vector.shape_cast %562 : vector<1x1x128xf32> to vector<1x128xf32>
      %564 = arith.mulf %563, %560 : vector<1x128xf32>
      %c4_316 = arith.constant 4 : index
      %565 = arith.index_cast %516 : i32 to index
      %c0_317 = arith.constant 0 : index
      %566 = vector.load %arg8[%c4_316, %565, %c0_317] : memref<8x256x128xf32, #tpu.memory_space<vmem>>, vector<1x1x128xf32>
      %567 = vector.shape_cast %566 : vector<1x1x128xf32> to vector<1x128xf32>
      %568 = arith.mulf %567, %466 : vector<1x128xf32>
      %c4_318 = arith.constant 4 : index
      %569 = arith.index_cast %516 : i32 to index
      %c0_319 = arith.constant 0 : index
      %570 = vector.load %arg9[%c4_318, %569, %c0_319] : memref<8x256x128xf32, #tpu.memory_space<vmem>>, vector<1x1x128xf32>
      %571 = vector.shape_cast %570 : vector<1x1x128xf32> to vector<1x128xf32>
      %572 = arith.addf %568, %571 : vector<1x128xf32>
      %c4_320 = arith.constant 4 : index
      %573 = arith.index_cast %516 : i32 to index
      %c0_321 = arith.constant 0 : index
      %574 = vector.load %arg10[%c4_320, %573, %c0_321] : memref<8x256x128xf32, #tpu.memory_space<vmem>>, vector<1x1x128xf32>
      %575 = vector.shape_cast %574 : vector<1x1x128xf32> to vector<1x128xf32>
      %576 = arith.mulf %575, %572 : vector<1x128xf32>
      %c5_322 = arith.constant 5 : index
      %577 = arith.index_cast %516 : i32 to index
      %c0_323 = arith.constant 0 : index
      %578 = vector.load %arg8[%c5_322, %577, %c0_323] : memref<8x256x128xf32, #tpu.memory_space<vmem>>, vector<1x1x128xf32>
      %579 = vector.shape_cast %578 : vector<1x1x128xf32> to vector<1x128xf32>
      %580 = arith.mulf %579, %478 : vector<1x128xf32>
      %c5_324 = arith.constant 5 : index
      %581 = arith.index_cast %516 : i32 to index
      %c0_325 = arith.constant 0 : index
      %582 = vector.load %arg9[%c5_324, %581, %c0_325] : memref<8x256x128xf32, #tpu.memory_space<vmem>>, vector<1x1x128xf32>
      %583 = vector.shape_cast %582 : vector<1x1x128xf32> to vector<1x128xf32>
      %584 = arith.addf %580, %583 : vector<1x128xf32>
      %c5_326 = arith.constant 5 : index
      %585 = arith.index_cast %516 : i32 to index
      %c0_327 = arith.constant 0 : index
      %586 = vector.load %arg10[%c5_326, %585, %c0_327] : memref<8x256x128xf32, #tpu.memory_space<vmem>>, vector<1x1x128xf32>
      %587 = vector.shape_cast %586 : vector<1x1x128xf32> to vector<1x128xf32>
      %588 = arith.mulf %587, %584 : vector<1x128xf32>
      %c6_328 = arith.constant 6 : index
      %589 = arith.index_cast %516 : i32 to index
      %c0_329 = arith.constant 0 : index
      %590 = vector.load %arg8[%c6_328, %589, %c0_329] : memref<8x256x128xf32, #tpu.memory_space<vmem>>, vector<1x1x128xf32>
      %591 = vector.shape_cast %590 : vector<1x1x128xf32> to vector<1x128xf32>
      %592 = arith.mulf %591, %490 : vector<1x128xf32>
      %c6_330 = arith.constant 6 : index
      %593 = arith.index_cast %516 : i32 to index
      %c0_331 = arith.constant 0 : index
      %594 = vector.load %arg9[%c6_330, %593, %c0_331] : memref<8x256x128xf32, #tpu.memory_space<vmem>>, vector<1x1x128xf32>
      %595 = vector.shape_cast %594 : vector<1x1x128xf32> to vector<1x128xf32>
      %596 = arith.addf %592, %595 : vector<1x128xf32>
      %c6_332 = arith.constant 6 : index
      %597 = arith.index_cast %516 : i32 to index
      %c0_333 = arith.constant 0 : index
      %598 = vector.load %arg10[%c6_332, %597, %c0_333] : memref<8x256x128xf32, #tpu.memory_space<vmem>>, vector<1x1x128xf32>
      %599 = vector.shape_cast %598 : vector<1x1x128xf32> to vector<1x128xf32>
      %600 = arith.mulf %599, %596 : vector<1x128xf32>
      %c7_334 = arith.constant 7 : index
      %601 = arith.index_cast %516 : i32 to index
      %c0_335 = arith.constant 0 : index
      %602 = vector.load %arg8[%c7_334, %601, %c0_335] : memref<8x256x128xf32, #tpu.memory_space<vmem>>, vector<1x1x128xf32>
      %603 = vector.shape_cast %602 : vector<1x1x128xf32> to vector<1x128xf32>
      %604 = arith.mulf %603, %502 : vector<1x128xf32>
      %c7_336 = arith.constant 7 : index
      %605 = arith.index_cast %516 : i32 to index
      %c0_337 = arith.constant 0 : index
      %606 = vector.load %arg9[%c7_336, %605, %c0_337] : memref<8x256x128xf32, #tpu.memory_space<vmem>>, vector<1x1x128xf32>
      %607 = vector.shape_cast %606 : vector<1x1x128xf32> to vector<1x128xf32>
      %608 = arith.addf %604, %607 : vector<1x128xf32>
      %c7_338 = arith.constant 7 : index
      %609 = arith.index_cast %516 : i32 to index
      %c0_339 = arith.constant 0 : index
      %610 = vector.load %arg10[%c7_338, %609, %c0_339] : memref<8x256x128xf32, #tpu.memory_space<vmem>>, vector<1x1x128xf32>
      %611 = vector.shape_cast %610 : vector<1x1x128xf32> to vector<1x128xf32>
      %612 = arith.mulf %611, %608 : vector<1x128xf32>
      %613 = arith.addf %528, %540 : vector<1x128xf32>
      %614 = arith.addf %552, %564 : vector<1x128xf32>
      %615 = arith.addf %576, %588 : vector<1x128xf32>
      %616 = arith.addf %600, %612 : vector<1x128xf32>
      %617 = arith.addf %613, %614 : vector<1x128xf32>
      %618 = arith.addf %615, %616 : vector<1x128xf32>
      %619 = arith.addf %617, %618 : vector<1x128xf32>
      %620 = arith.index_cast %516 : i32 to index
      %c0_340 = arith.constant 0 : index
      %621 = vector.load %arg11[%620, %c0_340] : memref<256x128xf32, #tpu.memory_space<vmem>>, vector<1x128xf32>
      tpu.vector_store %arg11[%620, %c0_340], %619 {strides = array<i32>} : memref<256x128xf32, #tpu.memory_space<vmem>>, vector<1x128xf32>,
      %c4_i32 = arith.constant 4 : i32
      %622 = arith.addi %197, %c4_i32 : i32
      %c0_341 = arith.constant 0 : index
      %623 = arith.index_cast %622 : i32 to index
      %c0_342 = arith.constant 0 : index
      %624 = vector.load %arg8[%c0_341, %623, %c0_342] : memref<8x256x128xf32, #tpu.memory_space<vmem>>, vector<1x1x128xf32>
      %625 = vector.shape_cast %624 : vector<1x1x128xf32> to vector<1x128xf32>
      %626 = arith.mulf %625, %524 : vector<1x128xf32>
      %c0_343 = arith.constant 0 : index
      %627 = arith.index_cast %622 : i32 to index
      %c0_344 = arith.constant 0 : index
      %628 = vector.load %arg9[%c0_343, %627, %c0_344] : memref<8x256x128xf32, #tpu.memory_space<vmem>>, vector<1x1x128xf32>
      %629 = vector.shape_cast %628 : vector<1x1x128xf32> to vector<1x128xf32>
      %630 = arith.addf %626, %629 : vector<1x128xf32>
      %c0_345 = arith.constant 0 : index
      %631 = arith.index_cast %622 : i32 to index
      %c0_346 = arith.constant 0 : index
      %632 = vector.load %arg10[%c0_345, %631, %c0_346] : memref<8x256x128xf32, #tpu.memory_space<vmem>>, vector<1x1x128xf32>
      %633 = vector.shape_cast %632 : vector<1x1x128xf32> to vector<1x128xf32>
      %634 = arith.mulf %633, %630 : vector<1x128xf32>
      %c1_347 = arith.constant 1 : index
      %635 = arith.index_cast %622 : i32 to index
      %c0_348 = arith.constant 0 : index
      %636 = vector.load %arg8[%c1_347, %635, %c0_348] : memref<8x256x128xf32, #tpu.memory_space<vmem>>, vector<1x1x128xf32>
      %637 = vector.shape_cast %636 : vector<1x1x128xf32> to vector<1x128xf32>
      %638 = arith.mulf %637, %536 : vector<1x128xf32>
      %c1_349 = arith.constant 1 : index
      %639 = arith.index_cast %622 : i32 to index
      %c0_350 = arith.constant 0 : index
      %640 = vector.load %arg9[%c1_349, %639, %c0_350] : memref<8x256x128xf32, #tpu.memory_space<vmem>>, vector<1x1x128xf32>
      %641 = vector.shape_cast %640 : vector<1x1x128xf32> to vector<1x128xf32>
      %642 = arith.addf %638, %641 : vector<1x128xf32>
      %c1_351 = arith.constant 1 : index
      %643 = arith.index_cast %622 : i32 to index
      %c0_352 = arith.constant 0 : index
      %644 = vector.load %arg10[%c1_351, %643, %c0_352] : memref<8x256x128xf32, #tpu.memory_space<vmem>>, vector<1x1x128xf32>
      %645 = vector.shape_cast %644 : vector<1x1x128xf32> to vector<1x128xf32>
      %646 = arith.mulf %645, %642 : vector<1x128xf32>
      %c2_353 = arith.constant 2 : index
      %647 = arith.index_cast %622 : i32 to index
      %c0_354 = arith.constant 0 : index
      %648 = vector.load %arg8[%c2_353, %647, %c0_354] : memref<8x256x128xf32, #tpu.memory_space<vmem>>, vector<1x1x128xf32>
      %649 = vector.shape_cast %648 : vector<1x1x128xf32> to vector<1x128xf32>
      %650 = arith.mulf %649, %548 : vector<1x128xf32>
      %c2_355 = arith.constant 2 : index
      %651 = arith.index_cast %622 : i32 to index
      %c0_356 = arith.constant 0 : index
      %652 = vector.load %arg9[%c2_355, %651, %c0_356] : memref<8x256x128xf32, #tpu.memory_space<vmem>>, vector<1x1x128xf32>
      %653 = vector.shape_cast %652 : vector<1x1x128xf32> to vector<1x128xf32>
      %654 = arith.addf %650, %653 : vector<1x128xf32>
      %c2_357 = arith.constant 2 : index
      %655 = arith.index_cast %622 : i32 to index
      %c0_358 = arith.constant 0 : index
      %656 = vector.load %arg10[%c2_357, %655, %c0_358] : memref<8x256x128xf32, #tpu.memory_space<vmem>>, vector<1x1x128xf32>
      %657 = vector.shape_cast %656 : vector<1x1x128xf32> to vector<1x128xf32>
      %658 = arith.mulf %657, %654 : vector<1x128xf32>
      %c3_359 = arith.constant 3 : index
      %659 = arith.index_cast %622 : i32 to index
      %c0_360 = arith.constant 0 : index
      %660 = vector.load %arg8[%c3_359, %659, %c0_360] : memref<8x256x128xf32, #tpu.memory_space<vmem>>, vector<1x1x128xf32>
      %661 = vector.shape_cast %660 : vector<1x1x128xf32> to vector<1x128xf32>
      %662 = arith.mulf %661, %560 : vector<1x128xf32>
      %c3_361 = arith.constant 3 : index
      %663 = arith.index_cast %622 : i32 to index
      %c0_362 = arith.constant 0 : index
      %664 = vector.load %arg9[%c3_361, %663, %c0_362] : memref<8x256x128xf32, #tpu.memory_space<vmem>>, vector<1x1x128xf32>
      %665 = vector.shape_cast %664 : vector<1x1x128xf32> to vector<1x128xf32>
      %666 = arith.addf %662, %665 : vector<1x128xf32>
      %c3_363 = arith.constant 3 : index
      %667 = arith.index_cast %622 : i32 to index
      %c0_364 = arith.constant 0 : index
      %668 = vector.load %arg10[%c3_363, %667, %c0_364] : memref<8x256x128xf32, #tpu.memory_space<vmem>>, vector<1x1x128xf32>
      %669 = vector.shape_cast %668 : vector<1x1x128xf32> to vector<1x128xf32>
      %670 = arith.mulf %669, %666 : vector<1x128xf32>
      %c4_365 = arith.constant 4 : index
      %671 = arith.index_cast %622 : i32 to index
      %c0_366 = arith.constant 0 : index
      %672 = vector.load %arg8[%c4_365, %671, %c0_366] : memref<8x256x128xf32, #tpu.memory_space<vmem>>, vector<1x1x128xf32>
      %673 = vector.shape_cast %672 : vector<1x1x128xf32> to vector<1x128xf32>
      %674 = arith.mulf %673, %572 : vector<1x128xf32>
      %c4_367 = arith.constant 4 : index
      %675 = arith.index_cast %622 : i32 to index
      %c0_368 = arith.constant 0 : index
      %676 = vector.load %arg9[%c4_367, %675, %c0_368] : memref<8x256x128xf32, #tpu.memory_space<vmem>>, vector<1x1x128xf32>
      %677 = vector.shape_cast %676 : vector<1x1x128xf32> to vector<1x128xf32>
      %678 = arith.addf %674, %677 : vector<1x128xf32>
      %c4_369 = arith.constant 4 : index
      %679 = arith.index_cast %622 : i32 to index
      %c0_370 = arith.constant 0 : index
      %680 = vector.load %arg10[%c4_369, %679, %c0_370] : memref<8x256x128xf32, #tpu.memory_space<vmem>>, vector<1x1x128xf32>
      %681 = vector.shape_cast %680 : vector<1x1x128xf32> to vector<1x128xf32>
      %682 = arith.mulf %681, %678 : vector<1x128xf32>
      %c5_371 = arith.constant 5 : index
      %683 = arith.index_cast %622 : i32 to index
      %c0_372 = arith.constant 0 : index
      %684 = vector.load %arg8[%c5_371, %683, %c0_372] : memref<8x256x128xf32, #tpu.memory_space<vmem>>, vector<1x1x128xf32>
      %685 = vector.shape_cast %684 : vector<1x1x128xf32> to vector<1x128xf32>
      %686 = arith.mulf %685, %584 : vector<1x128xf32>
      %c5_373 = arith.constant 5 : index
      %687 = arith.index_cast %622 : i32 to index
      %c0_374 = arith.constant 0 : index
      %688 = vector.load %arg9[%c5_373, %687, %c0_374] : memref<8x256x128xf32, #tpu.memory_space<vmem>>, vector<1x1x128xf32>
      %689 = vector.shape_cast %688 : vector<1x1x128xf32> to vector<1x128xf32>
      %690 = arith.addf %686, %689 : vector<1x128xf32>
      %c5_375 = arith.constant 5 : index
      %691 = arith.index_cast %622 : i32 to index
      %c0_376 = arith.constant 0 : index
      %692 = vector.load %arg10[%c5_375, %691, %c0_376] : memref<8x256x128xf32, #tpu.memory_space<vmem>>, vector<1x1x128xf32>
      %693 = vector.shape_cast %692 : vector<1x1x128xf32> to vector<1x128xf32>
      %694 = arith.mulf %693, %690 : vector<1x128xf32>
      %c6_377 = arith.constant 6 : index
      %695 = arith.index_cast %622 : i32 to index
      %c0_378 = arith.constant 0 : index
      %696 = vector.load %arg8[%c6_377, %695, %c0_378] : memref<8x256x128xf32, #tpu.memory_space<vmem>>, vector<1x1x128xf32>
      %697 = vector.shape_cast %696 : vector<1x1x128xf32> to vector<1x128xf32>
      %698 = arith.mulf %697, %596 : vector<1x128xf32>
      %c6_379 = arith.constant 6 : index
      %699 = arith.index_cast %622 : i32 to index
      %c0_380 = arith.constant 0 : index
      %700 = vector.load %arg9[%c6_379, %699, %c0_380] : memref<8x256x128xf32, #tpu.memory_space<vmem>>, vector<1x1x128xf32>
      %701 = vector.shape_cast %700 : vector<1x1x128xf32> to vector<1x128xf32>
      %702 = arith.addf %698, %701 : vector<1x128xf32>
      %c6_381 = arith.constant 6 : index
      %703 = arith.index_cast %622 : i32 to index
      %c0_382 = arith.constant 0 : index
      %704 = vector.load %arg10[%c6_381, %703, %c0_382] : memref<8x256x128xf32, #tpu.memory_space<vmem>>, vector<1x1x128xf32>
      %705 = vector.shape_cast %704 : vector<1x1x128xf32> to vector<1x128xf32>
      %706 = arith.mulf %705, %702 : vector<1x128xf32>
      %c7_383 = arith.constant 7 : index
      %707 = arith.index_cast %622 : i32 to index
      %c0_384 = arith.constant 0 : index
      %708 = vector.load %arg8[%c7_383, %707, %c0_384] : memref<8x256x128xf32, #tpu.memory_space<vmem>>, vector<1x1x128xf32>
      %709 = vector.shape_cast %708 : vector<1x1x128xf32> to vector<1x128xf32>
      %710 = arith.mulf %709, %608 : vector<1x128xf32>
      %c7_385 = arith.constant 7 : index
      %711 = arith.index_cast %622 : i32 to index
      %c0_386 = arith.constant 0 : index
      %712 = vector.load %arg9[%c7_385, %711, %c0_386] : memref<8x256x128xf32, #tpu.memory_space<vmem>>, vector<1x1x128xf32>
      %713 = vector.shape_cast %712 : vector<1x1x128xf32> to vector<1x128xf32>
      %714 = arith.addf %710, %713 : vector<1x128xf32>
      %c7_387 = arith.constant 7 : index
      %715 = arith.index_cast %622 : i32 to index
      %c0_388 = arith.constant 0 : index
      %716 = vector.load %arg10[%c7_387, %715, %c0_388] : memref<8x256x128xf32, #tpu.memory_space<vmem>>, vector<1x1x128xf32>
      %717 = vector.shape_cast %716 : vector<1x1x128xf32> to vector<1x128xf32>
      %718 = arith.mulf %717, %714 : vector<1x128xf32>
      %719 = arith.addf %634, %646 : vector<1x128xf32>
      %720 = arith.addf %658, %670 : vector<1x128xf32>
      %721 = arith.addf %682, %694 : vector<1x128xf32>
      %722 = arith.addf %706, %718 : vector<1x128xf32>
      %723 = arith.addf %719, %720 : vector<1x128xf32>
      %724 = arith.addf %721, %722 : vector<1x128xf32>
      %725 = arith.addf %723, %724 : vector<1x128xf32>
      %726 = arith.index_cast %622 : i32 to index
      %c0_389 = arith.constant 0 : index
      %727 = vector.load %arg11[%726, %c0_389] : memref<256x128xf32, #tpu.memory_space<vmem>>, vector<1x128xf32>
      tpu.vector_store %arg11[%726, %c0_389], %725 {strides = array<i32>} : memref<256x128xf32, #tpu.memory_space<vmem>>, vector<1x128xf32>,
      %c5_i32 = arith.constant 5 : i32
      %728 = arith.addi %197, %c5_i32 : i32
      %c0_390 = arith.constant 0 : index
      %729 = arith.index_cast %728 : i32 to index
      %c0_391 = arith.constant 0 : index
      %730 = vector.load %arg8[%c0_390, %729, %c0_391] : memref<8x256x128xf32, #tpu.memory_space<vmem>>, vector<1x1x128xf32>
      %731 = vector.shape_cast %730 : vector<1x1x128xf32> to vector<1x128xf32>
      %732 = arith.mulf %731, %630 : vector<1x128xf32>
      %c0_392 = arith.constant 0 : index
      %733 = arith.index_cast %728 : i32 to index
      %c0_393 = arith.constant 0 : index
      %734 = vector.load %arg9[%c0_392, %733, %c0_393] : memref<8x256x128xf32, #tpu.memory_space<vmem>>, vector<1x1x128xf32>
      %735 = vector.shape_cast %734 : vector<1x1x128xf32> to vector<1x128xf32>
      %736 = arith.addf %732, %735 : vector<1x128xf32>
      %c0_394 = arith.constant 0 : index
      %737 = arith.index_cast %728 : i32 to index
      %c0_395 = arith.constant 0 : index
      %738 = vector.load %arg10[%c0_394, %737, %c0_395] : memref<8x256x128xf32, #tpu.memory_space<vmem>>, vector<1x1x128xf32>
      %739 = vector.shape_cast %738 : vector<1x1x128xf32> to vector<1x128xf32>
      %740 = arith.mulf %739, %736 : vector<1x128xf32>
      %c1_396 = arith.constant 1 : index
      %741 = arith.index_cast %728 : i32 to index
      %c0_397 = arith.constant 0 : index
      %742 = vector.load %arg8[%c1_396, %741, %c0_397] : memref<8x256x128xf32, #tpu.memory_space<vmem>>, vector<1x1x128xf32>
      %743 = vector.shape_cast %742 : vector<1x1x128xf32> to vector<1x128xf32>
      %744 = arith.mulf %743, %642 : vector<1x128xf32>
      %c1_398 = arith.constant 1 : index
      %745 = arith.index_cast %728 : i32 to index
      %c0_399 = arith.constant 0 : index
      %746 = vector.load %arg9[%c1_398, %745, %c0_399] : memref<8x256x128xf32, #tpu.memory_space<vmem>>, vector<1x1x128xf32>
      %747 = vector.shape_cast %746 : vector<1x1x128xf32> to vector<1x128xf32>
      %748 = arith.addf %744, %747 : vector<1x128xf32>
      %c1_400 = arith.constant 1 : index
      %749 = arith.index_cast %728 : i32 to index
      %c0_401 = arith.constant 0 : index
      %750 = vector.load %arg10[%c1_400, %749, %c0_401] : memref<8x256x128xf32, #tpu.memory_space<vmem>>, vector<1x1x128xf32>
      %751 = vector.shape_cast %750 : vector<1x1x128xf32> to vector<1x128xf32>
      %752 = arith.mulf %751, %748 : vector<1x128xf32>
      %c2_402 = arith.constant 2 : index
      %753 = arith.index_cast %728 : i32 to index
      %c0_403 = arith.constant 0 : index
      %754 = vector.load %arg8[%c2_402, %753, %c0_403] : memref<8x256x128xf32, #tpu.memory_space<vmem>>, vector<1x1x128xf32>
      %755 = vector.shape_cast %754 : vector<1x1x128xf32> to vector<1x128xf32>
      %756 = arith.mulf %755, %654 : vector<1x128xf32>
      %c2_404 = arith.constant 2 : index
      %757 = arith.index_cast %728 : i32 to index
      %c0_405 = arith.constant 0 : index
      %758 = vector.load %arg9[%c2_404, %757, %c0_405] : memref<8x256x128xf32, #tpu.memory_space<vmem>>, vector<1x1x128xf32>
      %759 = vector.shape_cast %758 : vector<1x1x128xf32> to vector<1x128xf32>
      %760 = arith.addf %756, %759 : vector<1x128xf32>
      %c2_406 = arith.constant 2 : index
      %761 = arith.index_cast %728 : i32 to index
      %c0_407 = arith.constant 0 : index
      %762 = vector.load %arg10[%c2_406, %761, %c0_407] : memref<8x256x128xf32, #tpu.memory_space<vmem>>, vector<1x1x128xf32>
      %763 = vector.shape_cast %762 : vector<1x1x128xf32> to vector<1x128xf32>
      %764 = arith.mulf %763, %760 : vector<1x128xf32>
      %c3_408 = arith.constant 3 : index
      %765 = arith.index_cast %728 : i32 to index
      %c0_409 = arith.constant 0 : index
      %766 = vector.load %arg8[%c3_408, %765, %c0_409] : memref<8x256x128xf32, #tpu.memory_space<vmem>>, vector<1x1x128xf32>
      %767 = vector.shape_cast %766 : vector<1x1x128xf32> to vector<1x128xf32>
      %768 = arith.mulf %767, %666 : vector<1x128xf32>
      %c3_410 = arith.constant 3 : index
      %769 = arith.index_cast %728 : i32 to index
      %c0_411 = arith.constant 0 : index
      %770 = vector.load %arg9[%c3_410, %769, %c0_411] : memref<8x256x128xf32, #tpu.memory_space<vmem>>, vector<1x1x128xf32>
      %771 = vector.shape_cast %770 : vector<1x1x128xf32> to vector<1x128xf32>
      %772 = arith.addf %768, %771 : vector<1x128xf32>
      %c3_412 = arith.constant 3 : index
      %773 = arith.index_cast %728 : i32 to index
      %c0_413 = arith.constant 0 : index
      %774 = vector.load %arg10[%c3_412, %773, %c0_413] : memref<8x256x128xf32, #tpu.memory_space<vmem>>, vector<1x1x128xf32>
      %775 = vector.shape_cast %774 : vector<1x1x128xf32> to vector<1x128xf32>
      %776 = arith.mulf %775, %772 : vector<1x128xf32>
      %c4_414 = arith.constant 4 : index
      %777 = arith.index_cast %728 : i32 to index
      %c0_415 = arith.constant 0 : index
      %778 = vector.load %arg8[%c4_414, %777, %c0_415] : memref<8x256x128xf32, #tpu.memory_space<vmem>>, vector<1x1x128xf32>
      %779 = vector.shape_cast %778 : vector<1x1x128xf32> to vector<1x128xf32>
      %780 = arith.mulf %779, %678 : vector<1x128xf32>
      %c4_416 = arith.constant 4 : index
      %781 = arith.index_cast %728 : i32 to index
      %c0_417 = arith.constant 0 : index
      %782 = vector.load %arg9[%c4_416, %781, %c0_417] : memref<8x256x128xf32, #tpu.memory_space<vmem>>, vector<1x1x128xf32>
      %783 = vector.shape_cast %782 : vector<1x1x128xf32> to vector<1x128xf32>
      %784 = arith.addf %780, %783 : vector<1x128xf32>
      %c4_418 = arith.constant 4 : index
      %785 = arith.index_cast %728 : i32 to index
      %c0_419 = arith.constant 0 : index
      %786 = vector.load %arg10[%c4_418, %785, %c0_419] : memref<8x256x128xf32, #tpu.memory_space<vmem>>, vector<1x1x128xf32>
      %787 = vector.shape_cast %786 : vector<1x1x128xf32> to vector<1x128xf32>
      %788 = arith.mulf %787, %784 : vector<1x128xf32>
      %c5_420 = arith.constant 5 : index
      %789 = arith.index_cast %728 : i32 to index
      %c0_421 = arith.constant 0 : index
      %790 = vector.load %arg8[%c5_420, %789, %c0_421] : memref<8x256x128xf32, #tpu.memory_space<vmem>>, vector<1x1x128xf32>
      %791 = vector.shape_cast %790 : vector<1x1x128xf32> to vector<1x128xf32>
      %792 = arith.mulf %791, %690 : vector<1x128xf32>
      %c5_422 = arith.constant 5 : index
      %793 = arith.index_cast %728 : i32 to index
      %c0_423 = arith.constant 0 : index
      %794 = vector.load %arg9[%c5_422, %793, %c0_423] : memref<8x256x128xf32, #tpu.memory_space<vmem>>, vector<1x1x128xf32>
      %795 = vector.shape_cast %794 : vector<1x1x128xf32> to vector<1x128xf32>
      %796 = arith.addf %792, %795 : vector<1x128xf32>
      %c5_424 = arith.constant 5 : index
      %797 = arith.index_cast %728 : i32 to index
      %c0_425 = arith.constant 0 : index
      %798 = vector.load %arg10[%c5_424, %797, %c0_425] : memref<8x256x128xf32, #tpu.memory_space<vmem>>, vector<1x1x128xf32>
      %799 = vector.shape_cast %798 : vector<1x1x128xf32> to vector<1x128xf32>
      %800 = arith.mulf %799, %796 : vector<1x128xf32>
      %c6_426 = arith.constant 6 : index
      %801 = arith.index_cast %728 : i32 to index
      %c0_427 = arith.constant 0 : index
      %802 = vector.load %arg8[%c6_426, %801, %c0_427] : memref<8x256x128xf32, #tpu.memory_space<vmem>>, vector<1x1x128xf32>
      %803 = vector.shape_cast %802 : vector<1x1x128xf32> to vector<1x128xf32>
      %804 = arith.mulf %803, %702 : vector<1x128xf32>
      %c6_428 = arith.constant 6 : index
      %805 = arith.index_cast %728 : i32 to index
      %c0_429 = arith.constant 0 : index
      %806 = vector.load %arg9[%c6_428, %805, %c0_429] : memref<8x256x128xf32, #tpu.memory_space<vmem>>, vector<1x1x128xf32>
      %807 = vector.shape_cast %806 : vector<1x1x128xf32> to vector<1x128xf32>
      %808 = arith.addf %804, %807 : vector<1x128xf32>
      %c6_430 = arith.constant 6 : index
      %809 = arith.index_cast %728 : i32 to index
      %c0_431 = arith.constant 0 : index
      %810 = vector.load %arg10[%c6_430, %809, %c0_431] : memref<8x256x128xf32, #tpu.memory_space<vmem>>, vector<1x1x128xf32>
      %811 = vector.shape_cast %810 : vector<1x1x128xf32> to vector<1x128xf32>
      %812 = arith.mulf %811, %808 : vector<1x128xf32>
      %c7_432 = arith.constant 7 : index
      %813 = arith.index_cast %728 : i32 to index
      %c0_433 = arith.constant 0 : index
      %814 = vector.load %arg8[%c7_432, %813, %c0_433] : memref<8x256x128xf32, #tpu.memory_space<vmem>>, vector<1x1x128xf32>
      %815 = vector.shape_cast %814 : vector<1x1x128xf32> to vector<1x128xf32>
      %816 = arith.mulf %815, %714 : vector<1x128xf32>
      %c7_434 = arith.constant 7 : index
      %817 = arith.index_cast %728 : i32 to index
      %c0_435 = arith.constant 0 : index
      %818 = vector.load %arg9[%c7_434, %817, %c0_435] : memref<8x256x128xf32, #tpu.memory_space<vmem>>, vector<1x1x128xf32>
      %819 = vector.shape_cast %818 : vector<1x1x128xf32> to vector<1x128xf32>
      %820 = arith.addf %816, %819 : vector<1x128xf32>
      %c7_436 = arith.constant 7 : index
      %821 = arith.index_cast %728 : i32 to index
      %c0_437 = arith.constant 0 : index
      %822 = vector.load %arg10[%c7_436, %821, %c0_437] : memref<8x256x128xf32, #tpu.memory_space<vmem>>, vector<1x1x128xf32>
      %823 = vector.shape_cast %822 : vector<1x1x128xf32> to vector<1x128xf32>
      %824 = arith.mulf %823, %820 : vector<1x128xf32>
      %825 = arith.addf %740, %752 : vector<1x128xf32>
      %826 = arith.addf %764, %776 : vector<1x128xf32>
      %827 = arith.addf %788, %800 : vector<1x128xf32>
      %828 = arith.addf %812, %824 : vector<1x128xf32>
      %829 = arith.addf %825, %826 : vector<1x128xf32>
      %830 = arith.addf %827, %828 : vector<1x128xf32>
      %831 = arith.addf %829, %830 : vector<1x128xf32>
      %832 = arith.index_cast %728 : i32 to index
      %c0_438 = arith.constant 0 : index
      %833 = vector.load %arg11[%832, %c0_438] : memref<256x128xf32, #tpu.memory_space<vmem>>, vector<1x128xf32>
      tpu.vector_store %arg11[%832, %c0_438], %831 {strides = array<i32>} : memref<256x128xf32, #tpu.memory_space<vmem>>, vector<1x128xf32>,
      %c6_i32 = arith.constant 6 : i32
      %834 = arith.addi %197, %c6_i32 : i32
      %c0_439 = arith.constant 0 : index
      %835 = arith.index_cast %834 : i32 to index
      %c0_440 = arith.constant 0 : index
      %836 = vector.load %arg8[%c0_439, %835, %c0_440] : memref<8x256x128xf32, #tpu.memory_space<vmem>>, vector<1x1x128xf32>
      %837 = vector.shape_cast %836 : vector<1x1x128xf32> to vector<1x128xf32>
      %838 = arith.mulf %837, %736 : vector<1x128xf32>
      %c0_441 = arith.constant 0 : index
      %839 = arith.index_cast %834 : i32 to index
      %c0_442 = arith.constant 0 : index
      %840 = vector.load %arg9[%c0_441, %839, %c0_442] : memref<8x256x128xf32, #tpu.memory_space<vmem>>, vector<1x1x128xf32>
      %841 = vector.shape_cast %840 : vector<1x1x128xf32> to vector<1x128xf32>
      %842 = arith.addf %838, %841 : vector<1x128xf32>
      %c0_443 = arith.constant 0 : index
      %843 = arith.index_cast %834 : i32 to index
      %c0_444 = arith.constant 0 : index
      %844 = vector.load %arg10[%c0_443, %843, %c0_444] : memref<8x256x128xf32, #tpu.memory_space<vmem>>, vector<1x1x128xf32>
      %845 = vector.shape_cast %844 : vector<1x1x128xf32> to vector<1x128xf32>
      %846 = arith.mulf %845, %842 : vector<1x128xf32>
      %c1_445 = arith.constant 1 : index
      %847 = arith.index_cast %834 : i32 to index
      %c0_446 = arith.constant 0 : index
      %848 = vector.load %arg8[%c1_445, %847, %c0_446] : memref<8x256x128xf32, #tpu.memory_space<vmem>>, vector<1x1x128xf32>
      %849 = vector.shape_cast %848 : vector<1x1x128xf32> to vector<1x128xf32>
      %850 = arith.mulf %849, %748 : vector<1x128xf32>
      %c1_447 = arith.constant 1 : index
      %851 = arith.index_cast %834 : i32 to index
      %c0_448 = arith.constant 0 : index
      %852 = vector.load %arg9[%c1_447, %851, %c0_448] : memref<8x256x128xf32, #tpu.memory_space<vmem>>, vector<1x1x128xf32>
      %853 = vector.shape_cast %852 : vector<1x1x128xf32> to vector<1x128xf32>
      %854 = arith.addf %850, %853 : vector<1x128xf32>
      %c1_449 = arith.constant 1 : index
      %855 = arith.index_cast %834 : i32 to index
      %c0_450 = arith.constant 0 : index
      %856 = vector.load %arg10[%c1_449, %855, %c0_450] : memref<8x256x128xf32, #tpu.memory_space<vmem>>, vector<1x1x128xf32>
      %857 = vector.shape_cast %856 : vector<1x1x128xf32> to vector<1x128xf32>
      %858 = arith.mulf %857, %854 : vector<1x128xf32>
      %c2_451 = arith.constant 2 : index
      %859 = arith.index_cast %834 : i32 to index
      %c0_452 = arith.constant 0 : index
      %860 = vector.load %arg8[%c2_451, %859, %c0_452] : memref<8x256x128xf32, #tpu.memory_space<vmem>>, vector<1x1x128xf32>
      %861 = vector.shape_cast %860 : vector<1x1x128xf32> to vector<1x128xf32>
      %862 = arith.mulf %861, %760 : vector<1x128xf32>
      %c2_453 = arith.constant 2 : index
      %863 = arith.index_cast %834 : i32 to index
      %c0_454 = arith.constant 0 : index
      %864 = vector.load %arg9[%c2_453, %863, %c0_454] : memref<8x256x128xf32, #tpu.memory_space<vmem>>, vector<1x1x128xf32>
      %865 = vector.shape_cast %864 : vector<1x1x128xf32> to vector<1x128xf32>
      %866 = arith.addf %862, %865 : vector<1x128xf32>
      %c2_455 = arith.constant 2 : index
      %867 = arith.index_cast %834 : i32 to index
      %c0_456 = arith.constant 0 : index
      %868 = vector.load %arg10[%c2_455, %867, %c0_456] : memref<8x256x128xf32, #tpu.memory_space<vmem>>, vector<1x1x128xf32>
      %869 = vector.shape_cast %868 : vector<1x1x128xf32> to vector<1x128xf32>
      %870 = arith.mulf %869, %866 : vector<1x128xf32>
      %c3_457 = arith.constant 3 : index
      %871 = arith.index_cast %834 : i32 to index
      %c0_458 = arith.constant 0 : index
      %872 = vector.load %arg8[%c3_457, %871, %c0_458] : memref<8x256x128xf32, #tpu.memory_space<vmem>>, vector<1x1x128xf32>
      %873 = vector.shape_cast %872 : vector<1x1x128xf32> to vector<1x128xf32>
      %874 = arith.mulf %873, %772 : vector<1x128xf32>
      %c3_459 = arith.constant 3 : index
      %875 = arith.index_cast %834 : i32 to index
      %c0_460 = arith.constant 0 : index
      %876 = vector.load %arg9[%c3_459, %875, %c0_460] : memref<8x256x128xf32, #tpu.memory_space<vmem>>, vector<1x1x128xf32>
      %877 = vector.shape_cast %876 : vector<1x1x128xf32> to vector<1x128xf32>
      %878 = arith.addf %874, %877 : vector<1x128xf32>
      %c3_461 = arith.constant 3 : index
      %879 = arith.index_cast %834 : i32 to index
      %c0_462 = arith.constant 0 : index
      %880 = vector.load %arg10[%c3_461, %879, %c0_462] : memref<8x256x128xf32, #tpu.memory_space<vmem>>, vector<1x1x128xf32>
      %881 = vector.shape_cast %880 : vector<1x1x128xf32> to vector<1x128xf32>
      %882 = arith.mulf %881, %878 : vector<1x128xf32>
      %c4_463 = arith.constant 4 : index
      %883 = arith.index_cast %834 : i32 to index
      %c0_464 = arith.constant 0 : index
      %884 = vector.load %arg8[%c4_463, %883, %c0_464] : memref<8x256x128xf32, #tpu.memory_space<vmem>>, vector<1x1x128xf32>
      %885 = vector.shape_cast %884 : vector<1x1x128xf32> to vector<1x128xf32>
      %886 = arith.mulf %885, %784 : vector<1x128xf32>
      %c4_465 = arith.constant 4 : index
      %887 = arith.index_cast %834 : i32 to index
      %c0_466 = arith.constant 0 : index
      %888 = vector.load %arg9[%c4_465, %887, %c0_466] : memref<8x256x128xf32, #tpu.memory_space<vmem>>, vector<1x1x128xf32>
      %889 = vector.shape_cast %888 : vector<1x1x128xf32> to vector<1x128xf32>
      %890 = arith.addf %886, %889 : vector<1x128xf32>
      %c4_467 = arith.constant 4 : index
      %891 = arith.index_cast %834 : i32 to index
      %c0_468 = arith.constant 0 : index
      %892 = vector.load %arg10[%c4_467, %891, %c0_468] : memref<8x256x128xf32, #tpu.memory_space<vmem>>, vector<1x1x128xf32>
      %893 = vector.shape_cast %892 : vector<1x1x128xf32> to vector<1x128xf32>
      %894 = arith.mulf %893, %890 : vector<1x128xf32>
      %c5_469 = arith.constant 5 : index
      %895 = arith.index_cast %834 : i32 to index
      %c0_470 = arith.constant 0 : index
      %896 = vector.load %arg8[%c5_469, %895, %c0_470] : memref<8x256x128xf32, #tpu.memory_space<vmem>>, vector<1x1x128xf32>
      %897 = vector.shape_cast %896 : vector<1x1x128xf32> to vector<1x128xf32>
      %898 = arith.mulf %897, %796 : vector<1x128xf32>
      %c5_471 = arith.constant 5 : index
      %899 = arith.index_cast %834 : i32 to index
      %c0_472 = arith.constant 0 : index
      %900 = vector.load %arg9[%c5_471, %899, %c0_472] : memref<8x256x128xf32, #tpu.memory_space<vmem>>, vector<1x1x128xf32>
      %901 = vector.shape_cast %900 : vector<1x1x128xf32> to vector<1x128xf32>
      %902 = arith.addf %898, %901 : vector<1x128xf32>
      %c5_473 = arith.constant 5 : index
      %903 = arith.index_cast %834 : i32 to index
      %c0_474 = arith.constant 0 : index
      %904 = vector.load %arg10[%c5_473, %903, %c0_474] : memref<8x256x128xf32, #tpu.memory_space<vmem>>, vector<1x1x128xf32>
      %905 = vector.shape_cast %904 : vector<1x1x128xf32> to vector<1x128xf32>
      %906 = arith.mulf %905, %902 : vector<1x128xf32>
      %c6_475 = arith.constant 6 : index
      %907 = arith.index_cast %834 : i32 to index
      %c0_476 = arith.constant 0 : index
      %908 = vector.load %arg8[%c6_475, %907, %c0_476] : memref<8x256x128xf32, #tpu.memory_space<vmem>>, vector<1x1x128xf32>
      %909 = vector.shape_cast %908 : vector<1x1x128xf32> to vector<1x128xf32>
      %910 = arith.mulf %909, %808 : vector<1x128xf32>
      %c6_477 = arith.constant 6 : index
      %911 = arith.index_cast %834 : i32 to index
      %c0_478 = arith.constant 0 : index
      %912 = vector.load %arg9[%c6_477, %911, %c0_478] : memref<8x256x128xf32, #tpu.memory_space<vmem>>, vector<1x1x128xf32>
      %913 = vector.shape_cast %912 : vector<1x1x128xf32> to vector<1x128xf32>
      %914 = arith.addf %910, %913 : vector<1x128xf32>
      %c6_479 = arith.constant 6 : index
      %915 = arith.index_cast %834 : i32 to index
      %c0_480 = arith.constant 0 : index
      %916 = vector.load %arg10[%c6_479, %915, %c0_480] : memref<8x256x128xf32, #tpu.memory_space<vmem>>, vector<1x1x128xf32>
      %917 = vector.shape_cast %916 : vector<1x1x128xf32> to vector<1x128xf32>
      %918 = arith.mulf %917, %914 : vector<1x128xf32>
      %c7_481 = arith.constant 7 : index
      %919 = arith.index_cast %834 : i32 to index
      %c0_482 = arith.constant 0 : index
      %920 = vector.load %arg8[%c7_481, %919, %c0_482] : memref<8x256x128xf32, #tpu.memory_space<vmem>>, vector<1x1x128xf32>
      %921 = vector.shape_cast %920 : vector<1x1x128xf32> to vector<1x128xf32>
      %922 = arith.mulf %921, %820 : vector<1x128xf32>
      %c7_483 = arith.constant 7 : index
      %923 = arith.index_cast %834 : i32 to index
      %c0_484 = arith.constant 0 : index
      %924 = vector.load %arg9[%c7_483, %923, %c0_484] : memref<8x256x128xf32, #tpu.memory_space<vmem>>, vector<1x1x128xf32>
      %925 = vector.shape_cast %924 : vector<1x1x128xf32> to vector<1x128xf32>
      %926 = arith.addf %922, %925 : vector<1x128xf32>
      %c7_485 = arith.constant 7 : index
      %927 = arith.index_cast %834 : i32 to index
      %c0_486 = arith.constant 0 : index
      %928 = vector.load %arg10[%c7_485, %927, %c0_486] : memref<8x256x128xf32, #tpu.memory_space<vmem>>, vector<1x1x128xf32>
      %929 = vector.shape_cast %928 : vector<1x1x128xf32> to vector<1x128xf32>
      %930 = arith.mulf %929, %926 : vector<1x128xf32>
      %931 = arith.addf %846, %858 : vector<1x128xf32>
      %932 = arith.addf %870, %882 : vector<1x128xf32>
      %933 = arith.addf %894, %906 : vector<1x128xf32>
      %934 = arith.addf %918, %930 : vector<1x128xf32>
      %935 = arith.addf %931, %932 : vector<1x128xf32>
      %936 = arith.addf %933, %934 : vector<1x128xf32>
      %937 = arith.addf %935, %936 : vector<1x128xf32>
      %938 = arith.index_cast %834 : i32 to index
      %c0_487 = arith.constant 0 : index
      %939 = vector.load %arg11[%938, %c0_487] : memref<256x128xf32, #tpu.memory_space<vmem>>, vector<1x128xf32>
      tpu.vector_store %arg11[%938, %c0_487], %937 {strides = array<i32>} : memref<256x128xf32, #tpu.memory_space<vmem>>, vector<1x128xf32>,
      %c7_i32 = arith.constant 7 : i32
      %940 = arith.addi %197, %c7_i32 : i32
      %c0_488 = arith.constant 0 : index
      %941 = arith.index_cast %940 : i32 to index
      %c0_489 = arith.constant 0 : index
      %942 = vector.load %arg8[%c0_488, %941, %c0_489] : memref<8x256x128xf32, #tpu.memory_space<vmem>>, vector<1x1x128xf32>
      %943 = vector.shape_cast %942 : vector<1x1x128xf32> to vector<1x128xf32>
      %944 = arith.mulf %943, %842 : vector<1x128xf32>
      %c0_490 = arith.constant 0 : index
      %945 = arith.index_cast %940 : i32 to index
      %c0_491 = arith.constant 0 : index
      %946 = vector.load %arg9[%c0_490, %945, %c0_491] : memref<8x256x128xf32, #tpu.memory_space<vmem>>, vector<1x1x128xf32>
      %947 = vector.shape_cast %946 : vector<1x1x128xf32> to vector<1x128xf32>
      %948 = arith.addf %944, %947 : vector<1x128xf32>
      %c0_492 = arith.constant 0 : index
      %949 = arith.index_cast %940 : i32 to index
      %c0_493 = arith.constant 0 : index
      %950 = vector.load %arg10[%c0_492, %949, %c0_493] : memref<8x256x128xf32, #tpu.memory_space<vmem>>, vector<1x1x128xf32>
      %951 = vector.shape_cast %950 : vector<1x1x128xf32> to vector<1x128xf32>
      %952 = arith.mulf %951, %948 : vector<1x128xf32>
      %c1_494 = arith.constant 1 : index
      %953 = arith.index_cast %940 : i32 to index
      %c0_495 = arith.constant 0 : index
      %954 = vector.load %arg8[%c1_494, %953, %c0_495] : memref<8x256x128xf32, #tpu.memory_space<vmem>>, vector<1x1x128xf32>
      %955 = vector.shape_cast %954 : vector<1x1x128xf32> to vector<1x128xf32>
      %956 = arith.mulf %955, %854 : vector<1x128xf32>
      %c1_496 = arith.constant 1 : index
      %957 = arith.index_cast %940 : i32 to index
      %c0_497 = arith.constant 0 : index
      %958 = vector.load %arg9[%c1_496, %957, %c0_497] : memref<8x256x128xf32, #tpu.memory_space<vmem>>, vector<1x1x128xf32>
      %959 = vector.shape_cast %958 : vector<1x1x128xf32> to vector<1x128xf32>
      %960 = arith.addf %956, %959 : vector<1x128xf32>
      %c1_498 = arith.constant 1 : index
      %961 = arith.index_cast %940 : i32 to index
      %c0_499 = arith.constant 0 : index
      %962 = vector.load %arg10[%c1_498, %961, %c0_499] : memref<8x256x128xf32, #tpu.memory_space<vmem>>, vector<1x1x128xf32>
      %963 = vector.shape_cast %962 : vector<1x1x128xf32> to vector<1x128xf32>
      %964 = arith.mulf %963, %960 : vector<1x128xf32>
      %c2_500 = arith.constant 2 : index
      %965 = arith.index_cast %940 : i32 to index
      %c0_501 = arith.constant 0 : index
      %966 = vector.load %arg8[%c2_500, %965, %c0_501] : memref<8x256x128xf32, #tpu.memory_space<vmem>>, vector<1x1x128xf32>
      %967 = vector.shape_cast %966 : vector<1x1x128xf32> to vector<1x128xf32>
      %968 = arith.mulf %967, %866 : vector<1x128xf32>
      %c2_502 = arith.constant 2 : index
      %969 = arith.index_cast %940 : i32 to index
      %c0_503 = arith.constant 0 : index
      %970 = vector.load %arg9[%c2_502, %969, %c0_503] : memref<8x256x128xf32, #tpu.memory_space<vmem>>, vector<1x1x128xf32>
      %971 = vector.shape_cast %970 : vector<1x1x128xf32> to vector<1x128xf32>
      %972 = arith.addf %968, %971 : vector<1x128xf32>
      %c2_504 = arith.constant 2 : index
      %973 = arith.index_cast %940 : i32 to index
      %c0_505 = arith.constant 0 : index
      %974 = vector.load %arg10[%c2_504, %973, %c0_505] : memref<8x256x128xf32, #tpu.memory_space<vmem>>, vector<1x1x128xf32>
      %975 = vector.shape_cast %974 : vector<1x1x128xf32> to vector<1x128xf32>
      %976 = arith.mulf %975, %972 : vector<1x128xf32>
      %c3_506 = arith.constant 3 : index
      %977 = arith.index_cast %940 : i32 to index
      %c0_507 = arith.constant 0 : index
      %978 = vector.load %arg8[%c3_506, %977, %c0_507] : memref<8x256x128xf32, #tpu.memory_space<vmem>>, vector<1x1x128xf32>
      %979 = vector.shape_cast %978 : vector<1x1x128xf32> to vector<1x128xf32>
      %980 = arith.mulf %979, %878 : vector<1x128xf32>
      %c3_508 = arith.constant 3 : index
      %981 = arith.index_cast %940 : i32 to index
      %c0_509 = arith.constant 0 : index
      %982 = vector.load %arg9[%c3_508, %981, %c0_509] : memref<8x256x128xf32, #tpu.memory_space<vmem>>, vector<1x1x128xf32>
      %983 = vector.shape_cast %982 : vector<1x1x128xf32> to vector<1x128xf32>
      %984 = arith.addf %980, %983 : vector<1x128xf32>
      %c3_510 = arith.constant 3 : index
      %985 = arith.index_cast %940 : i32 to index
      %c0_511 = arith.constant 0 : index
      %986 = vector.load %arg10[%c3_510, %985, %c0_511] : memref<8x256x128xf32, #tpu.memory_space<vmem>>, vector<1x1x128xf32>
      %987 = vector.shape_cast %986 : vector<1x1x128xf32> to vector<1x128xf32>
      %988 = arith.mulf %987, %984 : vector<1x128xf32>
      %c4_512 = arith.constant 4 : index
      %989 = arith.index_cast %940 : i32 to index
      %c0_513 = arith.constant 0 : index
      %990 = vector.load %arg8[%c4_512, %989, %c0_513] : memref<8x256x128xf32, #tpu.memory_space<vmem>>, vector<1x1x128xf32>
      %991 = vector.shape_cast %990 : vector<1x1x128xf32> to vector<1x128xf32>
      %992 = arith.mulf %991, %890 : vector<1x128xf32>
      %c4_514 = arith.constant 4 : index
      %993 = arith.index_cast %940 : i32 to index
      %c0_515 = arith.constant 0 : index
      %994 = vector.load %arg9[%c4_514, %993, %c0_515] : memref<8x256x128xf32, #tpu.memory_space<vmem>>, vector<1x1x128xf32>
      %995 = vector.shape_cast %994 : vector<1x1x128xf32> to vector<1x128xf32>
      %996 = arith.addf %992, %995 : vector<1x128xf32>
      %c4_516 = arith.constant 4 : index
      %997 = arith.index_cast %940 : i32 to index
      %c0_517 = arith.constant 0 : index
      %998 = vector.load %arg10[%c4_516, %997, %c0_517] : memref<8x256x128xf32, #tpu.memory_space<vmem>>, vector<1x1x128xf32>
      %999 = vector.shape_cast %998 : vector<1x1x128xf32> to vector<1x128xf32>
      %1000 = arith.mulf %999, %996 : vector<1x128xf32>
      %c5_518 = arith.constant 5 : index
      %1001 = arith.index_cast %940 : i32 to index
      %c0_519 = arith.constant 0 : index
      %1002 = vector.load %arg8[%c5_518, %1001, %c0_519] : memref<8x256x128xf32, #tpu.memory_space<vmem>>, vector<1x1x128xf32>
      %1003 = vector.shape_cast %1002 : vector<1x1x128xf32> to vector<1x128xf32>
      %1004 = arith.mulf %1003, %902 : vector<1x128xf32>
      %c5_520 = arith.constant 5 : index
      %1005 = arith.index_cast %940 : i32 to index
      %c0_521 = arith.constant 0 : index
      %1006 = vector.load %arg9[%c5_520, %1005, %c0_521] : memref<8x256x128xf32, #tpu.memory_space<vmem>>, vector<1x1x128xf32>
      %1007 = vector.shape_cast %1006 : vector<1x1x128xf32> to vector<1x128xf32>
      %1008 = arith.addf %1004, %1007 : vector<1x128xf32>
      %c5_522 = arith.constant 5 : index
      %1009 = arith.index_cast %940 : i32 to index
      %c0_523 = arith.constant 0 : index
      %1010 = vector.load %arg10[%c5_522, %1009, %c0_523] : memref<8x256x128xf32, #tpu.memory_space<vmem>>, vector<1x1x128xf32>
      %1011 = vector.shape_cast %1010 : vector<1x1x128xf32> to vector<1x128xf32>
      %1012 = arith.mulf %1011, %1008 : vector<1x128xf32>
      %c6_524 = arith.constant 6 : index
      %1013 = arith.index_cast %940 : i32 to index
      %c0_525 = arith.constant 0 : index
      %1014 = vector.load %arg8[%c6_524, %1013, %c0_525] : memref<8x256x128xf32, #tpu.memory_space<vmem>>, vector<1x1x128xf32>
      %1015 = vector.shape_cast %1014 : vector<1x1x128xf32> to vector<1x128xf32>
      %1016 = arith.mulf %1015, %914 : vector<1x128xf32>
      %c6_526 = arith.constant 6 : index
      %1017 = arith.index_cast %940 : i32 to index
      %c0_527 = arith.constant 0 : index
      %1018 = vector.load %arg9[%c6_526, %1017, %c0_527] : memref<8x256x128xf32, #tpu.memory_space<vmem>>, vector<1x1x128xf32>
      %1019 = vector.shape_cast %1018 : vector<1x1x128xf32> to vector<1x128xf32>
      %1020 = arith.addf %1016, %1019 : vector<1x128xf32>
      %c6_528 = arith.constant 6 : index
      %1021 = arith.index_cast %940 : i32 to index
      %c0_529 = arith.constant 0 : index
      %1022 = vector.load %arg10[%c6_528, %1021, %c0_529] : memref<8x256x128xf32, #tpu.memory_space<vmem>>, vector<1x1x128xf32>
      %1023 = vector.shape_cast %1022 : vector<1x1x128xf32> to vector<1x128xf32>
      %1024 = arith.mulf %1023, %1020 : vector<1x128xf32>
      %c7_530 = arith.constant 7 : index
      %1025 = arith.index_cast %940 : i32 to index
      %c0_531 = arith.constant 0 : index
      %1026 = vector.load %arg8[%c7_530, %1025, %c0_531] : memref<8x256x128xf32, #tpu.memory_space<vmem>>, vector<1x1x128xf32>
      %1027 = vector.shape_cast %1026 : vector<1x1x128xf32> to vector<1x128xf32>
      %1028 = arith.mulf %1027, %926 : vector<1x128xf32>
      %c7_532 = arith.constant 7 : index
      %1029 = arith.index_cast %940 : i32 to index
      %c0_533 = arith.constant 0 : index
      %1030 = vector.load %arg9[%c7_532, %1029, %c0_533] : memref<8x256x128xf32, #tpu.memory_space<vmem>>, vector<1x1x128xf32>
      %1031 = vector.shape_cast %1030 : vector<1x1x128xf32> to vector<1x128xf32>
      %1032 = arith.addf %1028, %1031 : vector<1x128xf32>
      %c7_534 = arith.constant 7 : index
      %1033 = arith.index_cast %940 : i32 to index
      %c0_535 = arith.constant 0 : index
      %1034 = vector.load %arg10[%c7_534, %1033, %c0_535] : memref<8x256x128xf32, #tpu.memory_space<vmem>>, vector<1x1x128xf32>
      %1035 = vector.shape_cast %1034 : vector<1x1x128xf32> to vector<1x128xf32>
      %1036 = arith.mulf %1035, %1032 : vector<1x128xf32>
      %1037 = arith.addf %952, %964 : vector<1x128xf32>
      %1038 = arith.addf %976, %988 : vector<1x128xf32>
      %1039 = arith.addf %1000, %1012 : vector<1x128xf32>
      %1040 = arith.addf %1024, %1036 : vector<1x128xf32>
      %1041 = arith.addf %1037, %1038 : vector<1x128xf32>
      %1042 = arith.addf %1039, %1040 : vector<1x128xf32>
      %1043 = arith.addf %1041, %1042 : vector<1x128xf32>
      %1044 = arith.index_cast %940 : i32 to index
      %c0_536 = arith.constant 0 : index
      %1045 = vector.load %arg11[%1044, %c0_536] : memref<256x128xf32, #tpu.memory_space<vmem>>, vector<1x128xf32>
      tpu.vector_store %arg11[%1044, %c0_536], %1043 {strides = array<i32>} : memref<256x128xf32, #tpu.memory_space<vmem>>, vector<1x128xf32>,
      scf.yield %948, %960, %972, %984, %996, %1008, %1020, %1032 : vector<1x128xf32>, vector<1x128xf32>, vector<1x128xf32>, vector<1x128xf32>, vector<1x128xf32>, vector<1x128xf32>, vector<1x128xf32>, vector<1x128xf32>
    }
    %c32_i32_136 = arith.constant 32 : i32
    %c0_137 = arith.constant 0 : index
    %c0_138 = arith.constant 0 : index
    %187 = vector.load %arg11[%c0_137, %c0_138] : memref<256x128xf32, #tpu.memory_space<vmem>>, vector<256x128xf32>
    %188 = vector.extract_strided_slice %187 {offsets = [0, 0], sizes = [256, 64], strides = [1, 1]} : vector<256x128xf32> to vector<256x64xf32>
    %189 = vector.extract_strided_slice %187 {offsets = [0, 64], sizes = [256, 64], strides = [1, 1]} : vector<256x128xf32> to vector<256x64xf32>
    %190 = arith.addf %188, %189 : vector<256x64xf32>
    %c0_139 = arith.constant 0 : index
    %c0_140 = arith.constant 0 : index
    %191 = vector.load %arg6[%c0_139, %c0_140] : memref<1x64xf32, #tpu.memory_space<vmem>>, vector<1x64xf32>
    %192 = vector.broadcast %191 : vector<1x64xf32> to vector<256x64xf32>
    %193 = arith.mulf %192, %0 : vector<256x64xf32>
    %194 = arith.addf %190, %193 : vector<256x64xf32>
    %c0_141 = arith.constant 0 : index
    %c0_142 = arith.constant 0 : index
    %195 = vector.load %arg7[%c0_141, %c0_142] : memref<256x64xf32, #tpu.memory_space<vmem>>, vector<256x64xf32>
    tpu.vector_store %arg7[%c0_141, %c0_142], %194 {strides = array<i32>} : memref<256x64xf32, #tpu.memory_space<vmem>>, vector<256x64xf32>,
    return
  }
  func.func @transform_0(%arg0: i32) -> (i32, i32) {
    %c0_i32 = arith.constant 0 : i32
    %c0_i32_0 = arith.constant 0 : i32
    %c0_i32_1 = arith.constant 0 : i32
    return %c0_i32, %c0_i32_0 : i32, i32
  }
  func.func @transform_1(%arg0: i32) -> (i32, i32) {
    %c0_i32 = arith.constant 0 : i32
    %c0_i32_0 = arith.constant 0 : i32
    %c0_i32_1 = arith.constant 0 : i32
    return %c0_i32, %c0_i32_0 : i32, i32
  }
  func.func @transform_2(%arg0: i32) -> (i32, i32) {
    %c0_i32 = arith.constant 0 : i32
    %c0_i32_0 = arith.constant 0 : i32
    %c0_i32_1 = arith.constant 0 : i32
    return %c0_i32, %c0_i32_0 : i32, i32
  }
  func.func @transform_3(%arg0: i32) -> (i32, i32, i32) {
    %c0_i32 = arith.constant 0 : i32
    %c0_i32_0 = arith.constant 0 : i32
    %c0_i32_1 = arith.constant 0 : i32
    %c0_i32_2 = arith.constant 0 : i32
    return %c0_i32, %c0_i32_0, %c0_i32_1 : i32, i32, i32
  }
  func.func @transform_4(%arg0: i32) -> (i32, i32, i32) {
    %c0_i32 = arith.constant 0 : i32
    %c0_i32_0 = arith.constant 0 : i32
    %c0_i32_1 = arith.constant 0 : i32
    %c0_i32_2 = arith.constant 0 : i32
    return %c0_i32, %c0_i32_0, %c0_i32_1 : i32, i32, i32
  }
  func.func @transform_5(%arg0: i32) -> (i32, i32) {
    %c0_i32 = arith.constant 0 : i32
    %c0_i32_0 = arith.constant 0 : i32
    %c0_i32_1 = arith.constant 0 : i32
    return %c0_i32, %c0_i32_0 : i32, i32
  }
  func.func @transform_6(%arg0: i32) -> (i32, i32) {
    %c0_i32 = arith.constant 0 : i32
    %c0_i32_0 = arith.constant 0 : i32
    %c0_i32_1 = arith.constant 0 : i32
    return %c0_i32, %c0_i32_0 : i32, i32
  }
}

module attributes {stable_mosaic.version = 11 : i64} {
  func.func @_epilogue_kernel(%arg0: i32, %arg1: memref<32x128xf32, #tpu.memory_space<vmem>>, %arg2: memref<32x128xf32, #tpu.memory_space<vmem>>, %arg3: memref<1x128xf32, #tpu.memory_space<vmem>>, %arg4: memref<1x128xf32, #tpu.memory_space<vmem>>, %arg5: memref<128x64xf32, #tpu.memory_space<vmem>>, %arg6: memref<32x64xf32, #tpu.memory_space<vmem>>) attributes {dimension_semantics = [#tpu.dimension_semantics<arbitrary>], iteration_bounds = array<i64: 1>, scalar_prefetch = 0 : i64, scratch_operands = 0 : i64, tpu.core_type = #tpu.core_type<tc>, window_params = [{pipeline_mode = #tpu.pipeline_mode<synchronous>, transform_indices = @transform_0, window_bounds = array<i64: 32, 128>}, {pipeline_mode = #tpu.pipeline_mode<synchronous>, transform_indices = @transform_1, window_bounds = array<i64: 32, 128>}, {pipeline_mode = #tpu.pipeline_mode<synchronous>, transform_indices = @transform_2, window_bounds = array<i64: 1, 128>}, {pipeline_mode = #tpu.pipeline_mode<synchronous>, transform_indices = @transform_3, window_bounds = array<i64: 1, 128>}, {pipeline_mode = #tpu.pipeline_mode<synchronous>, transform_indices = @transform_4, window_bounds = array<i64: 128, 64>}, {pipeline_mode = #tpu.pipeline_mode<synchronous>, transform_indices = @transform_5, window_bounds = array<i64: 32, 64>}]} {
    %c0 = arith.constant 0 : index
    %c0_0 = arith.constant 0 : index
    %0 = vector.load %arg1[%c0, %c0_0] : memref<32x128xf32, #tpu.memory_space<vmem>>, vector<32x128xf32>
    %1 = tpu.iota {dimensions = array<i32: 1>} : vector<32x128xi32>
    %c127_i32 = arith.constant 127 : i32
    %2 = tpu.dynamic_rotate %0 by %c127_i32 dim 1 : vector<32x128xf32>, i32 -> vector<32x128xf32>
    %c1_i32 = arith.constant 1 : i32
    %3 = tpu.dynamic_rotate %0 by %c1_i32 dim 1 : vector<32x128xf32>, i32 -> vector<32x128xf32>
    %c1_i32_1 = arith.constant 1 : i32
    %4 = vector.broadcast %c1_i32_1 : i32 to vector<32x128xi32>
    %5 = arith.andi %1, %4 : vector<32x128xi32>
    %c0_i32 = arith.constant 0 : i32
    %6 = vector.broadcast %c0_i32 : i32 to vector<32x128xi32>
    %7 = arith.cmpi eq, %5, %6 : vector<32x128xi32>
    %8 = arith.select %7, %2, %3 : vector<32x128xi1>, vector<32x128xf32>
    %9 = arith.addf %0, %8 : vector<32x128xf32>
    %c126_i32 = arith.constant 126 : i32
    %10 = tpu.dynamic_rotate %9 by %c126_i32 dim 1 : vector<32x128xf32>, i32 -> vector<32x128xf32>
    %c2_i32 = arith.constant 2 : i32
    %11 = tpu.dynamic_rotate %9 by %c2_i32 dim 1 : vector<32x128xf32>, i32 -> vector<32x128xf32>
    %c2_i32_2 = arith.constant 2 : i32
    %12 = vector.broadcast %c2_i32_2 : i32 to vector<32x128xi32>
    %13 = arith.andi %1, %12 : vector<32x128xi32>
    %c0_i32_3 = arith.constant 0 : i32
    %14 = vector.broadcast %c0_i32_3 : i32 to vector<32x128xi32>
    %15 = arith.cmpi eq, %13, %14 : vector<32x128xi32>
    %16 = arith.select %15, %10, %11 : vector<32x128xi1>, vector<32x128xf32>
    %17 = arith.addf %9, %16 : vector<32x128xf32>
    %c124_i32 = arith.constant 124 : i32
    %18 = tpu.dynamic_rotate %17 by %c124_i32 dim 1 : vector<32x128xf32>, i32 -> vector<32x128xf32>
    %c4_i32 = arith.constant 4 : i32
    %19 = tpu.dynamic_rotate %17 by %c4_i32 dim 1 : vector<32x128xf32>, i32 -> vector<32x128xf32>
    %c4_i32_4 = arith.constant 4 : i32
    %20 = vector.broadcast %c4_i32_4 : i32 to vector<32x128xi32>
    %21 = arith.andi %1, %20 : vector<32x128xi32>
    %c0_i32_5 = arith.constant 0 : i32
    %22 = vector.broadcast %c0_i32_5 : i32 to vector<32x128xi32>
    %23 = arith.cmpi eq, %21, %22 : vector<32x128xi32>
    %24 = arith.select %23, %18, %19 : vector<32x128xi1>, vector<32x128xf32>
    %25 = arith.addf %17, %24 : vector<32x128xf32>
    %cst = arith.constant 1.250000e-01 : f32
    %26 = vector.broadcast %cst : f32 to vector<32x128xf32>
    %27 = arith.mulf %25, %26 : vector<32x128xf32>
    %28 = arith.subf %0, %27 : vector<32x128xf32>
    %29 = arith.mulf %28, %28 : vector<32x128xf32>
    %c127_i32_6 = arith.constant 127 : i32
    %30 = tpu.dynamic_rotate %29 by %c127_i32_6 dim 1 : vector<32x128xf32>, i32 -> vector<32x128xf32>
    %c1_i32_7 = arith.constant 1 : i32
    %31 = tpu.dynamic_rotate %29 by %c1_i32_7 dim 1 : vector<32x128xf32>, i32 -> vector<32x128xf32>
    %c1_i32_8 = arith.constant 1 : i32
    %32 = vector.broadcast %c1_i32_8 : i32 to vector<32x128xi32>
    %33 = arith.andi %1, %32 : vector<32x128xi32>
    %c0_i32_9 = arith.constant 0 : i32
    %34 = vector.broadcast %c0_i32_9 : i32 to vector<32x128xi32>
    %35 = arith.cmpi eq, %33, %34 : vector<32x128xi32>
    %36 = arith.select %35, %30, %31 : vector<32x128xi1>, vector<32x128xf32>
    %37 = arith.addf %29, %36 : vector<32x128xf32>
    %c126_i32_10 = arith.constant 126 : i32
    %38 = tpu.dynamic_rotate %37 by %c126_i32_10 dim 1 : vector<32x128xf32>, i32 -> vector<32x128xf32>
    %c2_i32_11 = arith.constant 2 : i32
    %39 = tpu.dynamic_rotate %37 by %c2_i32_11 dim 1 : vector<32x128xf32>, i32 -> vector<32x128xf32>
    %c2_i32_12 = arith.constant 2 : i32
    %40 = vector.broadcast %c2_i32_12 : i32 to vector<32x128xi32>
    %41 = arith.andi %1, %40 : vector<32x128xi32>
    %c0_i32_13 = arith.constant 0 : i32
    %42 = vector.broadcast %c0_i32_13 : i32 to vector<32x128xi32>
    %43 = arith.cmpi eq, %41, %42 : vector<32x128xi32>
    %44 = arith.select %43, %38, %39 : vector<32x128xi1>, vector<32x128xf32>
    %45 = arith.addf %37, %44 : vector<32x128xf32>
    %c124_i32_14 = arith.constant 124 : i32
    %46 = tpu.dynamic_rotate %45 by %c124_i32_14 dim 1 : vector<32x128xf32>, i32 -> vector<32x128xf32>
    %c4_i32_15 = arith.constant 4 : i32
    %47 = tpu.dynamic_rotate %45 by %c4_i32_15 dim 1 : vector<32x128xf32>, i32 -> vector<32x128xf32>
    %c4_i32_16 = arith.constant 4 : i32
    %48 = vector.broadcast %c4_i32_16 : i32 to vector<32x128xi32>
    %49 = arith.andi %1, %48 : vector<32x128xi32>
    %c0_i32_17 = arith.constant 0 : i32
    %50 = vector.broadcast %c0_i32_17 : i32 to vector<32x128xi32>
    %51 = arith.cmpi eq, %49, %50 : vector<32x128xi32>
    %52 = arith.select %51, %46, %47 : vector<32x128xi1>, vector<32x128xf32>
    %53 = arith.addf %45, %52 : vector<32x128xf32>
    %cst_18 = arith.constant 1.250000e-01 : f32
    %54 = vector.broadcast %cst_18 : f32 to vector<32x128xf32>
    %55 = arith.mulf %53, %54 : vector<32x128xf32>
    %cst_19 = arith.constant 9.99999974E-6 : f32
    %56 = vector.broadcast %cst_19 : f32 to vector<32x128xf32>
    %57 = arith.addf %55, %56 : vector<32x128xf32>
    %58 = math.rsqrt %57 : vector<32x128xf32>
    %59 = arith.mulf %28, %58 : vector<32x128xf32>
    %c0_20 = arith.constant 0 : index
    %c0_21 = arith.constant 0 : index
    %60 = vector.load %arg3[%c0_20, %c0_21] : memref<1x128xf32, #tpu.memory_space<vmem>>, vector<1x128xf32>
    %61 = vector.broadcast %60 : vector<1x128xf32> to vector<32x128xf32>
    %62 = arith.mulf %59, %61 : vector<32x128xf32>
    %c0_22 = arith.constant 0 : index
    %c0_23 = arith.constant 0 : index
    %63 = vector.load %arg4[%c0_22, %c0_23] : memref<1x128xf32, #tpu.memory_space<vmem>>, vector<1x128xf32>
    %64 = vector.broadcast %63 : vector<1x128xf32> to vector<32x128xf32>
    %65 = arith.addf %62, %64 : vector<32x128xf32>
    %c0_24 = arith.constant 0 : index
    %c0_25 = arith.constant 0 : index
    %66 = vector.load %arg2[%c0_24, %c0_25] : memref<32x128xf32, #tpu.memory_space<vmem>>, vector<32x128xf32>
    %cst_26 = arith.constant 0.000000e+00 : f32
    %67 = vector.broadcast %cst_26 : f32 to vector<32x128xf32>
    %68 = arith.subf %67, %66 : vector<32x128xf32>
    %69 = math.exp %68 : vector<32x128xf32>
    %cst_27 = arith.constant 1.000000e+00 : f32
    %70 = vector.broadcast %cst_27 : f32 to vector<32x128xf32>
    %71 = arith.addf %70, %69 : vector<32x128xf32>
    %cst_28 = arith.constant 1.000000e+00 : f32
    %72 = vector.broadcast %cst_28 : f32 to vector<32x128xf32>
    %73 = arith.divf %72, %71 : vector<32x128xf32>
    %74 = arith.mulf %66, %73 : vector<32x128xf32>
    %75 = arith.mulf %65, %74 : vector<32x128xf32>
    %c0_29 = arith.constant 0 : index
    %c0_30 = arith.constant 0 : index
    %76 = vector.load %arg5[%c0_29, %c0_30] : memref<128x64xf32, #tpu.memory_space<vmem>>, vector<128x64xf32>
    %cst_31 = arith.constant dense<0.000000e+00> : vector<32x64xf32>
    %77 = tpu.matmul %75, %76, %cst_31 {dimension_numbers = #tpu.dot_dimension_numbers<[1], [0], [0], [1], [0, 0, 1, 1], [], []>} : vector<32x128xf32>, vector<128x64xf32>, vector<32x64xf32> -> vector<32x64xf32>
    %c0_32 = arith.constant 0 : index
    %c0_33 = arith.constant 0 : index
    %78 = vector.load %arg6[%c0_32, %c0_33] : memref<32x64xf32, #tpu.memory_space<vmem>>, vector<32x64xf32>
    tpu.vector_store %arg6[%c0_32, %c0_33], %77 {strides = array<i32>} : memref<32x64xf32, #tpu.memory_space<vmem>>, vector<32x64xf32>,
    return
  }
  func.func @transform_0(%arg0: i32) -> (i32, i32) {
    %c0_i32 = arith.constant 0 : i32
    %c0_i32_0 = arith.constant 0 : i32
    %c0_i32_1 = arith.constant 0 : i32
    return %c0_i32, %c0_i32_0 : i32, i32
  }
  func.func @transform_1(%arg0: i32) -> (i32, i32) {
    %c0_i32 = arith.constant 0 : i32
    %c0_i32_0 = arith.constant 0 : i32
    %c0_i32_1 = arith.constant 0 : i32
    return %c0_i32, %c0_i32_0 : i32, i32
  }
  func.func @transform_2(%arg0: i32) -> (i32, i32) {
    %c0_i32 = arith.constant 0 : i32
    %c0_i32_0 = arith.constant 0 : i32
    %c0_i32_1 = arith.constant 0 : i32
    return %c0_i32, %c0_i32_0 : i32, i32
  }
  func.func @transform_3(%arg0: i32) -> (i32, i32) {
    %c0_i32 = arith.constant 0 : i32
    %c0_i32_0 = arith.constant 0 : i32
    %c0_i32_1 = arith.constant 0 : i32
    return %c0_i32, %c0_i32_0 : i32, i32
  }
  func.func @transform_4(%arg0: i32) -> (i32, i32) {
    %c0_i32 = arith.constant 0 : i32
    %c0_i32_0 = arith.constant 0 : i32
    %c0_i32_1 = arith.constant 0 : i32
    return %c0_i32, %c0_i32_0 : i32, i32
  }
  func.func @transform_5(%arg0: i32) -> (i32, i32) {
    %c0_i32 = arith.constant 0 : i32
    %c0_i32_0 = arith.constant 0 : i32
    %c0_i32_1 = arith.constant 0 : i32
    return %c0_i32, %c0_i32_0 : i32, i32
  }
}

</mosaic_0001>

<llo_original>
// kernel: tile.80
$region0: #{tile.80}
  %s0 = inlined_call_operand.vmem [shape: f32[9,16,8], index: 0, kind: input, shape index: {}]
  %s1 = inlined_call_operand.vmem [shape: f32[9,128], index: 1, kind: output, shape index: {}]
  %s2 = smov 3
  %v3 = vld [vmem:[%s0] ss:$16 sm:%s2]
  %s4 = smov 12
  %v5 = vld [vmem:[%s0] ss:$16 sm:%s4]
  %vm6 = vcmask 1043458
  %v7 = vsel %vm6, %v5, %v3
  %s8 = smov 48
  %v9 = vld [vmem:[%s0] ss:$16 sm:%s8]
  %vm10 = vcmask 1045508
  %v11 = vsel %vm10, %v9, %v7
  %s12 = smov 192
  %v13 = vld [vmem:[%s0] ss:$16 sm:%s12]
  %vm14 = vcmask 1047558
  %v15 = vsel %vm14, %v13, %v11
  %vm16 = vcmask 64512
  %17 = vst.msk [vmem:[%s1] sm:$0xff] %vm16, %v15
  %s18 = scalar_lea.vmem %s0, 128
  %v19 = vld [vmem:[%s18] sm:$0x1]
  %vm20 = vcmask 64512
  %s21 = scalar_lea.vmem %s1, 8
  %22 = vst.msk [vmem:[%s21] sm:$0x1] %vm20, %v19
  %s23 = scalar_lea.vmem %s0, 15
  %s24 = smov 3
  %v25 = vld [vmem:[%s23] ss:$16 sm:%s24]
  %s26 = scalar_lea.vmem %s0, 15
  %s27 = smov 12
  %v28 = vld [vmem:[%s26] ss:$16 sm:%s27]
  %vm29 = vcmask 1043458
  %v30 = vsel %vm29, %v28, %v25
  %s31 = scalar_lea.vmem %s0, 15
  %s32 = smov 48
  %v33 = vld [vmem:[%s31] ss:$16 sm:%s32]
  %vm34 = vcmask 1045508
  %v35 = vsel %vm34, %v33, %v30
  %s36 = scalar_lea.vmem %s0, 15
  %s37 = smov 192
  %v38 = vld [vmem:[%s36] ss:$16 sm:%s37]
  %vm39 = vcmask 1047558
  %v40 = vsel %vm39, %v38, %v35
  %41 = vrot.lane.b32.xlu0 %v40, 120
  %v42 = vpop.permute.xlu0 %41
  %vm43 = vcmask 1048512
  %44 = vst.msk [vmem:[%s1] sm:$0xff] %vm43, %v42
  %s45 = scalar_lea.vmem %s0, 143
  %v46 = vld [vmem:[%s45] sm:$0x1]
  %47 = vrot.lane.b32.xlu0 %v46, 120
  %v48 = vpop.permute.xlu0 %47
  %vm49 = vcmask 1048512
  %s50 = scalar_lea.vmem %s1, 8
  %51 = vst.msk [vmem:[%s50] sm:$0x1] %vm49, %v48
  %s52 = scalar_lea.vmem %s0, 14
  %s53 = smov 3
  %v54 = vld [vmem:[%s52] ss:$16 sm:%s53]
  %s55 = scalar_lea.vmem %s0, 14
  %s56 = smov 12
  %v57 = vld [vmem:[%s55] ss:$16 sm:%s56]
  %vm58 = vcmask 1043458
  %v59 = vsel %vm58, %v57, %v54
  %s60 = scalar_lea.vmem %s0, 14
  %s61 = smov 48
  %v62 = vld [vmem:[%s60] ss:$16 sm:%s61]
  %vm63 = vcmask 1045508
  %v64 = vsel %vm63, %v62, %v59
  %s65 = scalar_lea.vmem %s0, 14
  %s66 = smov 192
  %v67 = vld [vmem:[%s65] ss:$16 sm:%s66]
  %vm68 = vcmask 1047558
  %v69 = vsel %vm68, %v67, %v64
  %70 = vrot.lane.b32.xlu0 %v69, 112
  %v71 = vpop.permute.xlu0 %70
  %vm72 = vcmask 982912
  %73 = vst.msk [vmem:[%s1] sm:$0xff] %vm72, %v71
  %s74 = scalar_lea.vmem %s0, 142
  %v75 = vld [vmem:[%s74] sm:$0x1]
  %76 = vrot.lane.b32.xlu0 %v75, 112
  %v77 = vpop.permute.xlu0 %76
  %vm78 = vcmask 982912
  %s79 = scalar_lea.vmem %s1, 8
  %80 = vst.msk [vmem:[%s79] sm:$0x1] %vm78, %v77
  %s81 = scalar_lea.vmem %s0, 13
  %s82 = smov 3
  %v83 = vld [vmem:[%s81] ss:$16 sm:%s82]
  %s84 = scalar_lea.vmem %s0, 13
  %s85 = smov 12
  %v86 = vld [vmem:[%s84] ss:$16 sm:%s85]
  %vm87 = vcmask 1043458
  %v88 = vsel %vm87, %v86, %v83
  %s89 = scalar_lea.vmem %s0, 13
  %s90 = smov 48
  %v91 = vld [vmem:[%s89] ss:$16 sm:%s90]
  %vm92 = vcmask 1045508
  %v93 = vsel %vm92, %v91, %v88
  %s94 = scalar_lea.vmem %s0, 13
  %s95 = smov 192
  %v96 = vld [vmem:[%s94] ss:$16 sm:%s95]
  %vm97 = vcmask 1047558
  %v98 = vsel %vm97, %v96, %v93
  %99 = vrot.lane.b32.xlu0 %v98, 104
  %v100 = vpop.permute.xlu0 %99
  %vm101 = vcmask 917312
  %102 = vst.msk [vmem:[%s1] sm:$0xff] %vm101, %v100
  %s103 = scalar_lea.vmem %s0, 141
  %v104 = vld [vmem:[%s103] sm:$0x1]
  %105 = vrot.lane.b32.xlu0 %v104, 104
  %v106 = vpop.permute.xlu0 %105
  %vm107 = vcmask 917312
  %s108 = scalar_lea.vmem %s1, 8
  %109 = vst.msk [vmem:[%s108] sm:$0x1] %vm107, %v106
  %s110 = scalar_lea.vmem %s0, 12
  %s111 = smov 3
  %v112 = vld [vmem:[%s110] ss:$16 sm:%s111]
  %s113 = scalar_lea.vmem %s0, 12
  %s114 = smov 12
  %v115 = vld [vmem:[%s113] ss:$16 sm:%s114]
  %vm116 = vcmask 1043458
  %v117 = vsel %vm116, %v115, %v112
  %s118 = scalar_lea.vmem %s0, 12
  %s119 = smov 48
  %v120 = vld [vmem:[%s118] ss:$16 sm:%s119]
  %vm121 = vcmask 1045508
  %v122 = vsel %vm121, %v120, %v117
  %s123 = scalar_lea.vmem %s0, 12
  %s124 = smov 192
  %v125 = vld [vmem:[%s123] ss:$16 sm:%s124]
  %vm126 = vcmask 1047558
  %v127 = vsel %vm126, %v125, %v122
  %128 = vrot.lane.b32.xlu0 %v127, 96
  %v129 = vpop.permute.xlu0 %128
  %vm130 = vcmask 851712
  %131 = vst.msk [vmem:[%s1] sm:$0xff] %vm130, %v129
  %s132 = scalar_lea.vmem %s0, 140
  %v133 = vld [vmem:[%s132] sm:$0x1]
  %134 = vrot.lane.b32.xlu0 %v133, 96
  %v135 = vpop.permute.xlu0 %134
  %vm136 = vcmask 851712
  %s137 = scalar_lea.vmem %s1, 8
  %138 = vst.msk [vmem:[%s137] sm:$0x1] %vm136, %v135
  %s139 = scalar_lea.vmem %s0, 11
  %s140 = smov 3
  %v141 = vld [vmem:[%s139] ss:$16 sm:%s140]
  %s142 = scalar_lea.vmem %s0, 11
  %s143 = smov 12
  %v144 = vld [vmem:[%s142] ss:$16 sm:%s143]
  %vm145 = vcmask 1043458
  %v146 = vsel %vm145, %v144, %v141
  %s147 = scalar_lea.vmem %s0, 11
  %s148 = smov 48
  %v149 = vld [vmem:[%s147] ss:$16 sm:%s148]
  %vm150 = vcmask 1045508
  %v151 = vsel %vm150, %v149, %v146
  %s152 = scalar_lea.vmem %s0, 11
  %s153 = smov 192
  %v154 = vld [vmem:[%s152] ss:$16 sm:%s153]
  %vm155 = vcmask 1047558
  %v156 = vsel %vm155, %v154, %v151
  %157 = vrot.lane.b32.xlu0 %v156, 88
  %v158 = vpop.permute.xlu0 %157
  %vm159 = vcmask 786112
  %160 = vst.msk [vmem:[%s1] sm:$0xff] %vm159, %v158
  %s161 = scalar_lea.vmem %s0, 139
  %v162 = vld [vmem:[%s161] sm:$0x1]
  %163 = vrot.lane.b32.xlu0 %v162, 88
  %v164 = vpop.permute.xlu0 %163
  %vm165 = vcmask 786112
  %s166 = scalar_lea.vmem %s1, 8
  %167 = vst.msk [vmem:[%s166] sm:$0x1] %vm165, %v164
  %s168 = scalar_lea.vmem %s0, 10
  %s169 = smov 3
  %v170 = vld [vmem:[%s168] ss:$16 sm:%s169]
  %s171 = scalar_lea.vmem %s0, 10
  %s172 = smov 12
  %v173 = vld [vmem:[%s171] ss:$16 sm:%s172]
  %vm174 = vcmask 1043458
  %v175 = vsel %vm174, %v173, %v170
  %s176 = scalar_lea.vmem %s0, 10
  %s177 = smov 48
  %v178 = vld [vmem:[%s176] ss:$16 sm:%s177]
  %vm179 = vcmask 1045508
  %v180 = vsel %vm179, %v178, %v175
  %s181 = scalar_lea.vmem %s0, 10
  %s182 = smov 192
  %v183 = vld [vmem:[%s181] ss:$16 sm:%s182]
  %vm184 = vcmask 1047558
  %v185 = vsel %vm184, %v183, %v180
  %186 = vrot.lane.b32.xlu0 %v185, 80
  %v187 = vpop.permute.xlu0 %186
  %vm188 = vcmask 720512
  %189 = vst.msk [vmem:[%s1] sm:$0xff] %vm188, %v187
  %s190 = scalar_lea.vmem %s0, 138
  %v191 = vld [vmem:[%s190] sm:$0x1]
  %192 = vrot.lane.b32.xlu0 %v191, 80
  %v193 = vpop.permute.xlu0 %192
  %vm194 = vcmask 720512
  %s195 = scalar_lea.vmem %s1, 8
  %196 = vst.msk [vmem:[%s195] sm:$0x1] %vm194, %v193
  %s197 = scalar_lea.vmem %s0, 9
  %s198 = smov 3
  %v199 = vld [vmem:[%s197] ss:$16 sm:%s198]
  %s200 = scalar_lea.vmem %s0, 9
  %s201 = smov 12
  %v202 = vld [vmem:[%s200] ss:$16 sm:%s201]
  %vm203 = vcmask 1043458
  %v204 = vsel %vm203, %v202, %v199
  %s205 = scalar_lea.vmem %s0, 9
  %s206 = smov 48
  %v207 = vld [vmem:[%s205] ss:$16 sm:%s206]
  %vm208 = vcmask 1045508
  %v209 = vsel %vm208, %v207, %v204
  %s210 = scalar_lea.vmem %s0, 9
  %s211 = smov 192
  %v212 = vld [vmem:[%s210] ss:$16 sm:%s211]
  %vm213 = vcmask 1047558
  %v214 = vsel %vm213, %v212, %v209
  %215 = vrot.lane.b32.xlu0 %v214, 72
  %v216 = vpop.permute.xlu0 %215
  %vm217 = vcmask 654912
  %218 = vst.msk [vmem:[%s1] sm:$0xff] %vm217, %v216
  %s219 = scalar_lea.vmem %s0, 137
  %v220 = vld [vmem:[%s219] sm:$0x1]
  %221 = vrot.lane.b32.xlu0 %v220, 72
  %v222 = vpop.permute.xlu0 %221
  %vm223 = vcmask 654912
  %s224 = scalar_lea.vmem %s1, 8
  %225 = vst.msk [vmem:[%s224] sm:$0x1] %vm223, %v222
  %s226 = scalar_lea.vmem %s0, 8
  %s227 = smov 3
  %v228 = vld [vmem:[%s226] ss:$16 sm:%s227]
  %s229 = scalar_lea.vmem %s0, 8
  %s230 = smov 12
  %v231 = vld [vmem:[%s229] ss:$16 sm:%s230]
  %vm232 = vcmask 1043458
  %v233 = vsel %vm232, %v231, %v228
  %s234 = scalar_lea.vmem %s0, 8
  %s235 = smov 48
  %v236 = vld [vmem:[%s234] ss:$16 sm:%s235]
  %vm237 = vcmask 1045508
  %v238 = vsel %vm237, %v236, %v233
  %s239 = scalar_lea.vmem %s0, 8
  %s240 = smov 192
  %v241 = vld [vmem:[%s239] ss:$16 sm:%s240]
  %vm242 = vcmask 1047558
  %v243 = vsel %vm242, %v241, %v238
  %244 = vrot.lane.b32.xlu0 %v243, 64
  %v245 = vpop.permute.xlu0 %244
  %vm246 = vcmask 589312
  %247 = vst.msk [vmem:[%s1] sm:$0xff] %vm246, %v245
  %s248 = scalar_lea.vmem %s0, 136
  %v249 = vld [vmem:[%s248] sm:$0x1]
  %250 = vrot.lane.b32.xlu0 %v249, 64
  %v251 = vpop.permute.xlu0 %250
  %vm252 = vcmask 589312
  %s253 = scalar_lea.vmem %s1, 8
  %254 = vst.msk [vmem:[%s253] sm:$0x1] %vm252, %v251
  %s255 = scalar_lea.vmem %s0, 7
  %s256 = smov 3
  %v257 = vld [vmem:[%s255] ss:$16 sm:%s256]
  %s258 = scalar_lea.vmem %s0, 7
  %s259 = smov 12
  %v260 = vld [vmem:[%s258] ss:$16 sm:%s259]
  %vm261 = vcmask 1043458
  %v262 = vsel %vm261, %v260, %v257
  %s263 = scalar_lea.vmem %s0, 7
  %s264 = smov 48
  %v265 = vld [vmem:[%s263] ss:$16 sm:%s264]
  %vm266 = vcmask 1045508
  %v267 = vsel %vm266, %v265, %v262
  %s268 = scalar_lea.vmem %s0, 7
  %s269 = smov 192
  %v270 = vld [vmem:[%s268] ss:$16 sm:%s269]
  %vm271 = vcmask 1047558
  %v272 = vsel %vm271, %v270, %v267
  %273 = vrot.lane.b32.xlu0 %v272, 56
  %v274 = vpop.permute.xlu0 %273
  %vm275 = vcmask 523712
  %276 = vst.msk [vmem:[%s1] sm:$0xff] %vm275, %v274
  %s277 = scalar_lea.vmem %s0, 135
  %v278 = vld [vmem:[%s277] sm:$0x1]
  %279 = vrot.lane.b32.xlu0 %v278, 56
  %v280 = vpop.permute.xlu0 %279
  %vm281 = vcmask 523712
  %s282 = scalar_lea.vmem %s1, 8
  %283 = vst.msk [vmem:[%s282] sm:$0x1] %vm281, %v280
  %s284 = scalar_lea.vmem %s0, 6
  %s285 = smov 3
  %v286 = vld [vmem:[%s284] ss:$16 sm:%s285]
  %s287 = scalar_lea.vmem %s0, 6
  %s288 = smov 12
  %v289 = vld [vmem:[%s287] ss:$16 sm:%s288]
  %vm290 = vcmask 1043458
  %v291 = vsel %vm290, %v289, %v286
  %s292 = scalar_lea.vmem %s0, 6
  %s293 = smov 48
  %v294 = vld [vmem:[%s292] ss:$16 sm:%s293]
  %vm295 = vcmask 1045508
  %v296 = vsel %vm295, %v294, %v291
  %s297 = scalar_lea.vmem %s0, 6
  %s298 = smov 192
  %v299 = vld [vmem:[%s297] ss:$16 sm:%s298]
  %vm300 = vcmask 1047558
  %v301 = vsel %vm300, %v299, %v296
  %302 = vrot.lane.b32.xlu0 %v301, 48
  %v303 = vpop.permute.xlu0 %302
  %vm304 = vcmask 458112
  %305 = vst.msk [vmem:[%s1] sm:$0xff] %vm304, %v303
  %s306 = scalar_lea.vmem %s0, 134
  %v307 = vld [vmem:[%s306] sm:$0x1]
  %308 = vrot.lane.b32.xlu0 %v307, 48
  %v309 = vpop.permute.xlu0 %308
  %vm310 = vcmask 458112
  %s311 = scalar_lea.vmem %s1, 8
  %312 = vst.msk [vmem:[%s311] sm:$0x1] %vm310, %v309
  %s313 = scalar_lea.vmem %s0, 5
  %s314 = smov 3
  %v315 = vld [vmem:[%s313] ss:$16 sm:%s314]
  %s316 = scalar_lea.vmem %s0, 5
  %s317 = smov 12
  %v318 = vld [vmem:[%s316] ss:$16 sm:%s317]
  %vm319 = vcmask 1043458
  %v320 = vsel %vm319, %v318, %v315
  %s321 = scalar_lea.vmem %s0, 5
  %s322 = smov 48
  %v323 = vld [vmem:[%s321] ss:$16 sm:%s322]
  %vm324 = vcmask 1045508
  %v325 = vsel %vm324, %v323, %v320
  %s326 = scalar_lea.vmem %s0, 5
  %s327 = smov 192
  %v328 = vld [vmem:[%s326] ss:$16 sm:%s327]
  %vm329 = vcmask 1047558
  %v330 = vsel %vm329, %v328, %v325
  %331 = vrot.lane.b32.xlu0 %v330, 40
  %v332 = vpop.permute.xlu0 %331
  %vm333 = vcmask 392512
  %334 = vst.msk [vmem:[%s1] sm:$0xff] %vm333, %v332
  %s335 = scalar_lea.vmem %s0, 133
  %v336 = vld [vmem:[%s335] sm:$0x1]
  %337 = vrot.lane.b32.xlu0 %v336, 40
  %v338 = vpop.permute.xlu0 %337
  %vm339 = vcmask 392512
  %s340 = scalar_lea.vmem %s1, 8
  %341 = vst.msk [vmem:[%s340] sm:$0x1] %vm339, %v338
  %s342 = scalar_lea.vmem %s0, 4
  %s343 = smov 3
  %v344 = vld [vmem:[%s342] ss:$16 sm:%s343]
  %s345 = scalar_lea.vmem %s0, 4
  %s346 = smov 12
  %v347 = vld [vmem:[%s345] ss:$16 sm:%s346]
  %vm348 = vcmask 1043458
  %v349 = vsel %vm348, %v347, %v344
  %s350 = scalar_lea.vmem %s0, 4
  %s351 = smov 48
  %v352 = vld [vmem:[%s350] ss:$16 sm:%s351]
  %vm353 = vcmask 1045508
  %v354 = vsel %vm353, %v352, %v349
  %s355 = scalar_lea.vmem %s0, 4
  %s356 = smov 192
  %v357 = vld [vmem:[%s355] ss:$16 sm:%s356]
  %vm358 = vcmask 1047558
  %v359 = vsel %vm358, %v357, %v354
  %360 = vrot.lane.b32.xlu0 %v359, 32
  %v361 = vpop.permute.xlu0 %360
  %vm362 = vcmask 326912
  %363 = vst.msk [vmem:[%s1] sm:$0xff] %vm362, %v361
  %s364 = scalar_lea.vmem %s0, 132
  %v365 = vld [vmem:[%s364] sm:$0x1]
  %366 = vrot.lane.b32.xlu0 %v365, 32
  %v367 = vpop.permute.xlu0 %366
  %vm368 = vcmask 326912
  %s369 = scalar_lea.vmem %s1, 8
  %370 = vst.msk [vmem:[%s369] sm:$0x1] %vm368, %v367
  %s371 = scalar_lea.vmem %s0, 3
  %s372 = smov 3
  %v373 = vld [vmem:[%s371] ss:$16 sm:%s372]
  %s374 = scalar_lea.vmem %s0, 3
  %s375 = smov 12
  %v376 = vld [vmem:[%s374] ss:$16 sm:%s375]
  %vm377 = vcmask 1043458
  %v378 = vsel %vm377, %v376, %v373
  %s379 = scalar_lea.vmem %s0, 3
  %s380 = smov 48
  %v381 = vld [vmem:[%s379] ss:$16 sm:%s380]
  %vm382 = vcmask 1045508
  %v383 = vsel %vm382, %v381, %v378
  %s384 = scalar_lea.vmem %s0, 3
  %s385 = smov 192
  %v386 = vld [vmem:[%s384] ss:$16 sm:%s385]
  %vm387 = vcmask 1047558
  %v388 = vsel %vm387, %v386, %v383
  %389 = vrot.lane.b32.xlu0 %v388, 24
  %v390 = vpop.permute.xlu0 %389
  %vm391 = vcmask 261312
  %392 = vst.msk [vmem:[%s1] sm:$0xff] %vm391, %v390
  %s393 = scalar_lea.vmem %s0, 131
  %v394 = vld [vmem:[%s393] sm:$0x1]
  %395 = vrot.lane.b32.xlu0 %v394, 24
  %v396 = vpop.permute.xlu0 %395
  %vm397 = vcmask 261312
  %s398 = scalar_lea.vmem %s1, 8
  %399 = vst.msk [vmem:[%s398] sm:$0x1] %vm397, %v396
  %s400 = scalar_lea.vmem %s0, 2
  %s401 = smov 3
  %v402 = vld [vmem:[%s400] ss:$16 sm:%s401]
  %s403 = scalar_lea.vmem %s0, 2
  %s404 = smov 12
  %v405 = vld [vmem:[%s403] ss:$16 sm:%s404]
  %vm406 = vcmask 1043458
  %v407 = vsel %vm406, %v405, %v402
  %s408 = scalar_lea.vmem %s0, 2
  %s409 = smov 48
  %v410 = vld [vmem:[%s408] ss:$16 sm:%s409]
  %vm411 = vcmask 1045508
  %v412 = vsel %vm411, %v410, %v407
  %s413 = scalar_lea.vmem %s0, 2
  %s414 = smov 192
  %v415 = vld [vmem:[%s413] ss:$16 sm:%s414]
  %vm416 = vcmask 1047558
  %v417 = vsel %vm416, %v415, %v412
  %418 = vrot.lane.b32.xlu0 %v417, 16
  %v419 = vpop.permute.xlu0 %418
  %vm420 = vcmask 195712
  %421 = vst.msk [vmem:[%s1] sm:$0xff] %vm420, %v419
  %s422 = scalar_lea.vmem %s0, 130
  %v423 = vld [vmem:[%s422] sm:$0x1]
  %424 = vrot.lane.b32.xlu0 %v423, 16
  %v425 = vpop.permute.xlu0 %424
  %vm426 = vcmask 195712
  %s427 = scalar_lea.vmem %s1, 8
  %428 = vst.msk [vmem:[%s427] sm:$0x1] %vm426, %v425
  %s429 = scalar_lea.vmem %s0, 1
  %s430 = smov 3
  %v431 = vld [vmem:[%s429] ss:$16 sm:%s430]
  %s432 = scalar_lea.vmem %s0, 1
  %s433 = smov 12
  %v434 = vld [vmem:[%s432] ss:$16 sm:%s433]
  %vm435 = vcmask 1043458
  %v436 = vsel %vm435, %v434, %v431
  %s437 = scalar_lea.vmem %s0, 1
  %s438 = smov 48
  %v439 = vld [vmem:[%s437] ss:$16 sm:%s438]
  %vm440 = vcmask 1045508
  %v441 = vsel %vm440, %v439, %v436
  %s442 = scalar_lea.vmem %s0, 1
  %s443 = smov 192
  %v444 = vld [vmem:[%s442] ss:$16 sm:%s443]
  %vm445 = vcmask 1047558
  %v446 = vsel %vm445, %v444, %v441
  %447 = vrot.lane.b32.xlu0 %v446, 8
  %v448 = vpop.permute.xlu0 %447
  %vm449 = vcmask 130112
  %450 = vst.msk [vmem:[%s1] sm:$0xff] %vm449, %v448
  %s451 = scalar_lea.vmem %s0, 129
  %v452 = vld [vmem:[%s451] sm:$0x1]
  %453 = vrot.lane.b32.xlu0 %v452, 8
  %v454 = vpop.permute.xlu0 %453
  %vm455 = vcmask 130112
  %s456 = scalar_lea.vmem %s1, 8
  %457 = vst.msk [vmem:[%s456] sm:$0x1] %vm455, %v454

// kernel: tile.84
$region0: #{tile.84}
  #allocation0 [shape = 's32[1]{0}', space=sflag, size = 0x4, scoped, tag = 'scoped memory for tile.84']
  %s0 = inlined_call_operand.vmem [shape: f32[8], index: 0, kind: input, shape index: {}]
  %s1 = inlined_call_operand.vmem [shape: f32[16,8], index: 1, kind: output, shape index: {}]
  // Predicated region
  $region2: #{tile.84} parent=0 // pred_check
    _
  $region3: #{tile.84} parent=0 // pred_check_branch
    %3 = sbr.rel (0) target = $region5
  $region4: #{tile.84} parent=0 // pred_region
    _
  $region5: #{tile.84} parent=0 // pred_fallthru
    _
  %v4 = vld [vmem:[%s0] ss:$0 sm:$0xff]
  %5 = vst [vmem:[%s1] sm:$0xff] %v4
  %s6 = scalar_lea.vmem %s1, 8
  %7 = vst [vmem:[%s6] sm:$0xff] %v4

// kernel: tile.85
$region0: #{tile.85}
  %s0 = inlined_call_operand.vmem [shape: f32[16,8], index: 0, kind: input, shape index: {}]
  %s1 = inlined_call_operand.vmem [shape: f32[1,128], index: 1, kind: output, shape index: {}]
  $region1: #{tile.85} parent=0
    #allocation0 [shape = 'u8[4096]{0}', space=vmem, size = 0x1000, scoped, tag = 'scoped mem for output reshape']
    %v2 = vld [vmem:[%s0] sm:$0x1]
    %vm3 = vcmask 64512
    %4 = vst.msk [vmem:[#allocation0] sm:$0x1] %vm3, %v2
    %s5 = scalar_lea.vmem %s0, 15
    %v6 = vld [vmem:[%s5] sm:$0x1]
    %7 = vrot.lane.b32.xlu0 %v6, 120
    %v8 = vpop.permute.xlu0 %7
    %vm9 = vcmask 1048512
    %10 = vst.msk [vmem:[#allocation0] sm:$0x1] %vm9, %v8
    %s11 = scalar_lea.vmem %s0, 14
    %v12 = vld [vmem:[%s11] sm:$0x1]
    %13 = vrot.lane.b32.xlu0 %v12, 112
    %v14 = vpop.permute.xlu0 %13
    %vm15 = vcmask 982912
    %16 = vst.msk [vmem:[#allocation0] sm:$0x1] %vm15, %v14
    %s17 = scalar_lea.vmem %s0, 13
    %v18 = vld [vmem:[%s17] sm:$0x1]
    %19 = vrot.lane.b32.xlu0 %v18, 104
    %v20 = vpop.permute.xlu0 %19
    %vm21 = vcmask 917312
    %22 = vst.msk [vmem:[#allocation0] sm:$0x1] %vm21, %v20
    %s23 = scalar_lea.vmem %s0, 12
    %v24 = vld [vmem:[%s23] sm:$0x1]
    %25 = vrot.lane.b32.xlu0 %v24, 96
    %v26 = vpop.permute.xlu0 %25
    %vm27 = vcmask 851712
    %28 = vst.msk [vmem:[#allocation0] sm:$0x1] %vm27, %v26
    %s29 = scalar_lea.vmem %s0, 11
    %v30 = vld [vmem:[%s29] sm:$0x1]
    %31 = vrot.lane.b32.xlu0 %v30, 88
    %v32 = vpop.permute.xlu0 %31
    %vm33 = vcmask 786112
    %34 = vst.msk [vmem:[#allocation0] sm:$0x1] %vm33, %v32
    %s35 = scalar_lea.vmem %s0, 10
    %v36 = vld [vmem:[%s35] sm:$0x1]
    %37 = vrot.lane.b32.xlu0 %v36, 80
    %v38 = vpop.permute.xlu0 %37
    %vm39 = vcmask 720512
    %40 = vst.msk [vmem:[#allocation0] sm:$0x1] %vm39, %v38
    %s41 = scalar_lea.vmem %s0, 9
    %v42 = vld [vmem:[%s41] sm:$0x1]
    %43 = vrot.lane.b32.xlu0 %v42, 72
    %v44 = vpop.permute.xlu0 %43
    %vm45 = vcmask 654912
    %46 = vst.msk [vmem:[#allocation0] sm:$0x1] %vm45, %v44
    %s47 = scalar_lea.vmem %s0, 8
    %v48 = vld [vmem:[%s47] sm:$0x1]
    %49 = vrot.lane.b32.xlu0 %v48, 64
    %v50 = vpop.permute.xlu0 %49
    %vm51 = vcmask 589312
    %52 = vst.msk [vmem:[#allocation0] sm:$0x1] %vm51, %v50
    %s53 = scalar_lea.vmem %s0, 7
    %v54 = vld [vmem:[%s53] sm:$0x1]
    %55 = vrot.lane.b32.xlu0 %v54, 56
    %v56 = vpop.permute.xlu0 %55
    %vm57 = vcmask 523712
    %58 = vst.msk [vmem:[#allocation0] sm:$0x1] %vm57, %v56
    %s59 = scalar_lea.vmem %s0, 6
    %v60 = vld [vmem:[%s59] sm:$0x1]
    %61 = vrot.lane.b32.xlu0 %v60, 48
    %v62 = vpop.permute.xlu0 %61
    %vm63 = vcmask 458112
    %64 = vst.msk [vmem:[#allocation0] sm:$0x1] %vm63, %v62
    %s65 = scalar_lea.vmem %s0, 5
    %v66 = vld [vmem:[%s65] sm:$0x1]
    %67 = vrot.lane.b32.xlu0 %v66, 40
    %v68 = vpop.permute.xlu0 %67
    %vm69 = vcmask 392512
    %70 = vst.msk [vmem:[#allocation0] sm:$0x1] %vm69, %v68
    %s71 = scalar_lea.vmem %s0, 4
    %v72 = vld [vmem:[%s71] sm:$0x1]
    %73 = vrot.lane.b32.xlu0 %v72, 32
    %v74 = vpop.permute.xlu0 %73
    %vm75 = vcmask 326912
    %76 = vst.msk [vmem:[#allocation0] sm:$0x1] %vm75, %v74
    %s77 = scalar_lea.vmem %s0, 3
    %v78 = vld [vmem:[%s77] sm:$0x1]
    %79 = vrot.lane.b32.xlu0 %v78, 24
    %v80 = vpop.permute.xlu0 %79
    %vm81 = vcmask 261312
    %82 = vst.msk [vmem:[#allocation0] sm:$0x1] %vm81, %v80
    %s83 = scalar_lea.vmem %s0, 2
    %v84 = vld [vmem:[%s83] sm:$0x1]
    %85 = vrot.lane.b32.xlu0 %v84, 16
    %v86 = vpop.permute.xlu0 %85
    %vm87 = vcmask 195712
    %88 = vst.msk [vmem:[#allocation0] sm:$0x1] %vm87, %v86
    %s89 = scalar_lea.vmem %s0, 1
    %v90 = vld [vmem:[%s89] sm:$0x1]
    %91 = vrot.lane.b32.xlu0 %v90, 8
    %v92 = vpop.permute.xlu0 %91
    %vm93 = vcmask 130112
    %94 = vst.msk [vmem:[#allocation0] sm:$0x1] %vm93, %v92
    %s96 = ssub.s32 2, 1
    %v97 = vld [vmem:[#allocation0] sm:%s96]
    %s99 = ssub.s32 2, 1
    %100 = vst [vmem:[%s1] sm:%s99] %v97

// kernel: ss2d_forward.3
$region0: #{ss2d_forward.3}
  #allocation0 [shape = 'u32[]', space=smem, size = 0x4, offset = 0x4, fixed_abs, tag = 'smem constant byte address 0x4 - core index']
  #allocation1 [shape = 'u32[72,128]{1,0:T(1,128)}', space=vmem, size = 0x9000, scoped, tag = 'internal scratch']
  %s0 = inlined_call_operand.vmem [shape: f32[32,64], index: 0, kind: input, shape index: {}]
  %s1 = inlined_call_operand.vmem [shape: f32[64,256], index: 1, kind: input, shape index: {}]
  %s2 = inlined_call_operand.vmem [shape: f32[9,128], index: 2, kind: input, shape index: {}]
  %s3 = inlined_call_operand.vmem [shape: f32[1,128], index: 3, kind: input, shape index: {}]
  %s4 = inlined_call_operand.vmem [shape: f32[32,128], index: 4, kind: output, shape index: {0}]
  %s5 = inlined_call_operand.vmem [shape: f32[32,128], index: 5, kind: output, shape index: {1}]
  %6 = xla_tuple %s4, %s5
  %s7 = sld [smem:[#allocation0]]
  $region34: #{ss2d_forward.3} parent=0
    _
  %s9 = ssub.s32 1, %s7
  %s10 = scalar_select 0, %s9, %s7
  // Predicated region
  $region2: #{ss2d_forward.3} parent=0 // pred_check
    _
  $region3: #{ss2d_forward.3} parent=0 // pred_check_branch
    %12 = sbr.rel (0) target = $region5
  $region4: #{ss2d_forward.3} parent=0 // pred_region
    _
  $region5: #{ss2d_forward.3} parent=0 // pred_fallthru
    _
  // Predicated region
  $region6: #{ss2d_forward.3} parent=0 // pred_check
    _
  $region7: #{ss2d_forward.3} parent=0 // pred_check_branch
    %14 = sbr.rel (0) target = $region9
  $region8: #{ss2d_forward.3} parent=0 // pred_region
    _
  $region9: #{ss2d_forward.3} parent=0 // pred_fallthru
    _
  // Predicated region
  $region10: #{ss2d_forward.3} parent=0 // pred_check
    _
  $region11: #{ss2d_forward.3} parent=0 // pred_check_branch
    %16 = sbr.rel (0) target = $region13
  $region12: #{ss2d_forward.3} parent=0 // pred_region
    _
  $region13: #{ss2d_forward.3} parent=0 // pred_fallthru
    _
  // Predicated region
  $region14: #{ss2d_forward.3} parent=0 // pred_check
    _
  $region15: #{ss2d_forward.3} parent=0 // pred_check_branch
    %18 = sbr.rel (0) target = $region17
  $region16: #{ss2d_forward.3} parent=0 // pred_region
    _
  $region17: #{ss2d_forward.3} parent=0 // pred_fallthru
    _
  %v19 = vld [vmem:[%s0] sm:$0xff]
  %v20 = vld [vmem:[%s0 + $0x8] sm:$0xff]
  %v21 = vld [vmem:[%s0 + $0x10] sm:$0xff]
  %v22 = vld [vmem:[%s0 + $0x18] sm:$0xff]
  %v23 = vld [vmem:[%s1] sm:$0xff]
  %v24 = vld [vmem:[%s1 + $0x8] sm:$0xff]
  %v25 = vld [vmem:[%s1 + $0x10] sm:$0xff]
  %v26 = vld [vmem:[%s1 + $0x18] sm:$0xff]
  %v27 = vld [vmem:[%s1 + $0x20] sm:$0xff]
  %v28 = vld [vmem:[%s1 + $0x28] sm:$0xff]
  %v29 = vld [vmem:[%s1 + $0x30] sm:$0xff]
  %v30 = vld [vmem:[%s1 + $0x38] sm:$0xff]
  %v31 = vld [vmem:[%s1 + $0x40] sm:$0xff]
  %v32 = vld [vmem:[%s1 + $0x48] sm:$0xff]
  %v33 = vld [vmem:[%s1 + $0x50] sm:$0xff]
  %v34 = vld [vmem:[%s1 + $0x58] sm:$0xff]
  %v35 = vld [vmem:[%s1 + $0x60] sm:$0xff]
  %v36 = vld [vmem:[%s1 + $0x68] sm:$0xff]
  %v37 = vld [vmem:[%s1 + $0x70] sm:$0xff]
  %v38 = vld [vmem:[%s1 + $0x78] sm:$0xff]
  %vm39 = vcmask 523264
  %v41 = vsel %vm39, %v19, 0
  %v44 = vsel %vm39, %v20, 0
  %v47 = vsel %vm39, %v21, 0
  %v50 = vsel %vm39, %v22, 0
  %52 = vmatpush.msra.mxu0 0.0
  %53 = vmatpush.msra.mxu0 0.0
  %54 = vmatpush.msra.mxu0 0.0
  %55 = vmatpush.msra.mxu0 0.0
  %56 = vmatpush.msra.mxu0 0.0
  %57 = vmatpush.msra.mxu0 0.0
  %58 = vmatpush.msra.mxu0 0.0
  %59 = vmatpush.msra.mxu0 0.0
  %60 = vmatpush.msra.mxu0 %v37
  %61 = vmatpush.msra.mxu0 %v35
  %62 = vmatpush.msra.mxu0 %v33
  %63 = vmatpush.msra.mxu0 %v31
  %64 = vmatpush.msra.mxu0 %v29
  %65 = vmatpush.msra.mxu0 %v27
  %66 = vmatpush.msra.mxu0 %v25
  %67 = vmatpush.msra.mxu0 %v23
  %68 = vmatmul.f32.gmra.mxu0 %v41
  %v69 = vpop.f32.mrf.mxu0
  %v70 = vadd.f32 0.0, %v69
  %71 = vmatmul.f32.gmra.mxu0 %v44
  %v72 = vpop.f32.mrf.mxu0
  %v73 = vadd.f32 0.0, %v72
  %74 = vmatmul.f32.gmra.mxu0 %v47
  %v75 = vpop.f32.mrf.mxu0
  %v76 = vadd.f32 0.0, %v75
  %77 = vmatmul.f32.gmra.mxu0 %v50
  %v78 = vpop.f32.mrf.mxu0
  %v79 = vadd.f32 0.0, %v78
  %80 = vdwg.mxu0
  %81 = vmatpush.msra.mxu0 0.0
  %82 = vmatpush.msra.mxu0 0.0
  %83 = vmatpush.msra.mxu0 0.0
  %84 = vmatpush.msra.mxu0 0.0
  %85 = vmatpush.msra.mxu0 0.0
  %86 = vmatpush.msra.mxu0 0.0
  %87 = vmatpush.msra.mxu0 0.0
  %88 = vmatpush.msra.mxu0 0.0
  %89 = vmatpush.msra.mxu0 %v38
  %90 = vmatpush.msra.mxu0 %v36
  %91 = vmatpush.msra.mxu0 %v34
  %92 = vmatpush.msra.mxu0 %v32
  %93 = vmatpush.msra.mxu0 %v30
  %94 = vmatpush.msra.mxu0 %v28
  %95 = vmatpush.msra.mxu0 %v26
  %96 = vmatpush.msra.mxu0 %v24
  %97 = vmatmul.f32.gmra.mxu0 %v41
  %v98 = vpop.f32.mrf.mxu0
  %v99 = vadd.f32 0.0, %v98
  %100 = vmatmul.f32.gmra.mxu0 %v44
  %v101 = vpop.f32.mrf.mxu0
  %v102 = vadd.f32 0.0, %v101
  %103 = vmatmul.f32.gmra.mxu0 %v47
  %v104 = vpop.f32.mrf.mxu0
  %v105 = vadd.f32 0.0, %v104
  %106 = vmatmul.f32.gmra.mxu0 %v50
  %v107 = vpop.f32.mrf.mxu0
  %v108 = vadd.f32 0.0, %v107
  %109 = vdwg.mxu0
  %110 = vst [vmem:[%s5] sm:$0xff] %v99
  %111 = vst [vmem:[%s5 + $0x8] sm:$0xff] %v102
  %112 = vst [vmem:[%s5 + $0x10] sm:$0xff] %v105
  %113 = vst [vmem:[%s5 + $0x18] sm:$0xff] %v108
  %v114 = vlaneseq
  %v115 = vshrl.u32 %v114, 7
  %v116 = vadd.s32 %v115, 8
  %v117 = vadd.s32 %v115, 16
  %v118 = vadd.s32 %v115, 24
  %v119 = vlaneseq
  %v120 = vand.u32 %v119, 127
  %v121 = vand.u32 %v115, 15
  %v122 = vand.u32 %v116, 15
  %v123 = vand.u32 %v117, 15
  %v124 = vand.u32 %v118, 15
  %v125 = vshra.s32 %v120, 3
  %v126 = vrot.slane %v70, 7
  %v127 = vrot.slane %v73, 7
  %v128 = vrot.slane %v76, 7
  %v129 = vrot.slane %v79, 7
  %vm130 = vcmp.lt.s32.totalorder %v115, 1
  %v131 = vsel %vm130, %v128, %v129
  %v132 = vsel %vm130, %v127, %v128
  %v133 = vsel %vm130, %v126, %v127
  %v134 = vsel %vm130, %v129, %v126
  %135 = vrot.lane.b32.xlu0 %v134, 8
  %v136 = vpop.permute.xlu0 %135
  %137 = vrot.lane.b32.xlu0 %v133, 8
  %v138 = vpop.permute.xlu0 %137
  %139 = vrot.lane.b32.xlu0 %v132, 8
  %v140 = vpop.permute.xlu0 %139
  %141 = vrot.lane.b32.xlu0 %v131, 8
  %v142 = vpop.permute.xlu0 %141
  %vm143 = vcmp.ge.s32.totalorder %v121, 1
  %vm144 = vcmp.ge.s32.totalorder %v122, 1
  %vm145 = vcmp.ge.s32.totalorder %v123, 1
  %vm146 = vcmp.ge.s32.totalorder %v124, 1
  %vm147 = vcmp.ge.s32.totalorder %v125, 1
  %vm148 = vmand %vm143, %vm147
  %vm149 = vmand %vm144, %vm147
  %vm150 = vmand %vm145, %vm147
  %vm151 = vmand %vm146, %vm147
  %v152 = vsel %vm148, %v136, 0.0
  %v153 = vsel %vm149, %v138, 0.0
  %v154 = vsel %vm150, %v140, 0.0
  %v155 = vsel %vm151, %v142, 0.0
  %v156 = vld [vmem:[%s2] sm:$0x1]
  %v157 = vperm.slane %v156, 0
  %v158 = vmul.f32 %v152, %v157
  %v159 = vmul.f32 %v153, %v157
  %v160 = vmul.f32 %v154, %v157
  %v161 = vmul.f32 %v155, %v157
  %v162 = vadd.f32 %v158, 0.0
  %v163 = vadd.f32 %v159, 0.0
  %v164 = vadd.f32 %v160, 0.0
  %v165 = vadd.f32 %v161, 0.0
  %v166 = vsel %vm143, %v134, 0.0
  %v167 = vsel %vm144, %v133, 0.0
  %v168 = vsel %vm145, %v132, 0.0
  %v169 = vsel %vm146, %v131, 0.0
  %v170 = vld [vmem:[%s2 + $0x1] sm:$0x1]
  %v171 = vperm.slane %v170, 0
  %v172 = vmul.f32 %v166, %v171
  %v173 = vmul.f32 %v167, %v171
  %v174 = vmul.f32 %v168, %v171
  %v175 = vmul.f32 %v169, %v171
  %v176 = vadd.f32 %v162, %v172
  %v177 = vadd.f32 %v163, %v173
  %v178 = vadd.f32 %v164, %v174
  %v179 = vadd.f32 %v165, %v175
  %180 = vrot.lane.b32.xlu0 %v134, 120
  %v181 = vpop.permute.xlu0 %180
  %182 = vrot.lane.b32.xlu0 %v133, 120
  %v183 = vpop.permute.xlu0 %182
  %184 = vrot.lane.b32.xlu0 %v132, 120
  %v185 = vpop.permute.xlu0 %184
  %186 = vrot.lane.b32.xlu0 %v131, 120
  %v187 = vpop.permute.xlu0 %186
  %vm188 = vcmp.le.s32.totalorder %v125, 14
  %vm189 = vmand %vm143, %vm188
  %vm190 = vmand %vm144, %vm188
  %vm191 = vmand %vm145, %vm188
  %vm192 = vmand %vm146, %vm188
  %v193 = vsel %vm189, %v181, 0.0
  %v194 = vsel %vm190, %v183, 0.0
  %v195 = vsel %vm191, %v185, 0.0
  %v196 = vsel %vm192, %v187, 0.0
  %v197 = vld [vmem:[%s2 + $0x2] sm:$0x1]
  %v198 = vperm.slane %v197, 0
  %v199 = vmul.f32 %v193, %v198
  %v200 = vmul.f32 %v194, %v198
  %v201 = vmul.f32 %v195, %v198
  %v202 = vmul.f32 %v196, %v198
  %v203 = vadd.f32 %v176, %v199
  %v204 = vadd.f32 %v177, %v200
  %v205 = vadd.f32 %v178, %v201
  %v206 = vadd.f32 %v179, %v202
  %207 = vrot.lane.b32.xlu0 %v70, 8
  %v208 = vpop.permute.xlu0 %207
  %209 = vrot.lane.b32.xlu0 %v73, 8
  %v210 = vpop.permute.xlu0 %209
  %211 = vrot.lane.b32.xlu0 %v76, 8
  %v212 = vpop.permute.xlu0 %211
  %213 = vrot.lane.b32.xlu0 %v79, 8
  %v214 = vpop.permute.xlu0 %213
  %v215 = vsel %vm147, %v208, 0.0
  %v216 = vsel %vm147, %v210, 0.0
  %v217 = vsel %vm147, %v212, 0.0
  %v218 = vsel %vm147, %v214, 0.0
  %v219 = vld [vmem:[%s2 + $0x3] sm:$0x1]
  %v220 = vperm.slane %v219, 0
  %v221 = vmul.f32 %v215, %v220
  %v222 = vmul.f32 %v216, %v220
  %v223 = vmul.f32 %v217, %v220
  %v224 = vmul.f32 %v218, %v220
  %v225 = vadd.f32 %v203, %v221
  %v226 = vadd.f32 %v204, %v222
  %v227 = vadd.f32 %v205, %v223
  %v228 = vadd.f32 %v206, %v224
  %v229 = vld [vmem:[%s2 + $0x4] sm:$0x1]
  %v230 = vperm.slane %v229, 0
  %v231 = vmul.f32 %v70, %v230
  %v232 = vmul.f32 %v73, %v230
  %v233 = vmul.f32 %v76, %v230
  %v234 = vmul.f32 %v79, %v230
  %v235 = vadd.f32 %v225, %v231
  %v236 = vadd.f32 %v226, %v232
  %v237 = vadd.f32 %v227, %v233
  %v238 = vadd.f32 %v228, %v234
  %239 = vrot.lane.b32.xlu0 %v70, 120
  %v240 = vpop.permute.xlu0 %239
  %241 = vrot.lane.b32.xlu0 %v73, 120
  %v242 = vpop.permute.xlu0 %241
  %243 = vrot.lane.b32.xlu0 %v76, 120
  %v244 = vpop.permute.xlu0 %243
  %245 = vrot.lane.b32.xlu0 %v79, 120
  %v246 = vpop.permute.xlu0 %245
  %v247 = vsel %vm188, %v240, 0.0
  %v248 = vsel %vm188, %v242, 0.0
  %v249 = vsel %vm188, %v244, 0.0
  %v250 = vsel %vm188, %v246, 0.0
  %v251 = vld [vmem:[%s2 + $0x5] sm:$0x1]
  %v252 = vperm.slane %v251, 0
  %v253 = vmul.f32 %v247, %v252
  %v254 = vmul.f32 %v248, %v252
  %v255 = vmul.f32 %v249, %v252
  %v256 = vmul.f32 %v250, %v252
  %v257 = vadd.f32 %v235, %v253
  %v258 = vadd.f32 %v236, %v254
  %v259 = vadd.f32 %v237, %v255
  %v260 = vadd.f32 %v238, %v256
  %v261 = vrot.slane %v70, 1
  %v262 = vrot.slane %v73, 1
  %v263 = vrot.slane %v76, 1
  %v264 = vrot.slane %v79, 1
  %vm265 = vcmp.lt.s32.totalorder %v115, 7
  %v266 = vsel %vm265, %v263, %v264
  %v267 = vsel %vm265, %v262, %v263
  %v268 = vsel %vm265, %v261, %v262
  %v269 = vsel %vm265, %v264, %v261
  %270 = vrot.lane.b32.xlu0 %v268, 8
  %v271 = vpop.permute.xlu0 %270
  %272 = vrot.lane.b32.xlu0 %v267, 8
  %v273 = vpop.permute.xlu0 %272
  %274 = vrot.lane.b32.xlu0 %v266, 8
  %v275 = vpop.permute.xlu0 %274
  %276 = vrot.lane.b32.xlu0 %v269, 8
  %v277 = vpop.permute.xlu0 %276
  %vm278 = vcmp.le.s32.totalorder %v121, 14
  %vm279 = vcmp.le.s32.totalorder %v122, 14
  %vm280 = vcmp.le.s32.totalorder %v123, 14
  %vm281 = vcmp.le.s32.totalorder %v124, 14
  %vm282 = vmand %vm278, %vm147
  %vm283 = vmand %vm279, %vm147
  %vm284 = vmand %vm280, %vm147
  %vm285 = vmand %vm281, %vm147
  %v286 = vsel %vm282, %v271, 0.0
  %v287 = vsel %vm283, %v273, 0.0
  %v288 = vsel %vm284, %v275, 0.0
  %v289 = vsel %vm285, %v277, 0.0
  %v290 = vld [vmem:[%s2 + $0x6] sm:$0x1]
  %v291 = vperm.slane %v290, 0
  %v292 = vmul.f32 %v286, %v291
  %v293 = vmul.f32 %v287, %v291
  %v294 = vmul.f32 %v288, %v291
  %v295 = vmul.f32 %v289, %v291
  %v296 = vadd.f32 %v257, %v292
  %v297 = vadd.f32 %v258, %v293
  %v298 = vadd.f32 %v259, %v294
  %v299 = vadd.f32 %v260, %v295
  %v300 = vsel %vm278, %v268, 0.0
  %v301 = vsel %vm279, %v267, 0.0
  %v302 = vsel %vm280, %v266, 0.0
  %v303 = vsel %vm281, %v269, 0.0
  %v304 = vld [vmem:[%s2 + $0x7] sm:$0x1]
  %v305 = vperm.slane %v304, 0
  %v306 = vmul.f32 %v300, %v305
  %v307 = vmul.f32 %v301, %v305
  %v308 = vmul.f32 %v302, %v305
  %v309 = vmul.f32 %v303, %v305
  %v310 = vadd.f32 %v296, %v306
  %v311 = vadd.f32 %v297, %v307
  %v312 = vadd.f32 %v298, %v308
  %v313 = vadd.f32 %v299, %v309
  %314 = vrot.lane.b32.xlu0 %v268, 120
  %v315 = vpop.permute.xlu0 %314
  %316 = vrot.lane.b32.xlu0 %v267, 120
  %v317 = vpop.permute.xlu0 %316
  %318 = vrot.lane.b32.xlu0 %v266, 120
  %v319 = vpop.permute.xlu0 %318
  %320 = vrot.lane.b32.xlu0 %v269, 120
  %v321 = vpop.permute.xlu0 %320
  %vm322 = vmand %vm278, %vm188
  %vm323 = vmand %vm279, %vm188
  %vm324 = vmand %vm280, %vm188
  %vm325 = vmand %vm281, %vm188
  %v326 = vsel %vm322, %v315, 0.0
  %v327 = vsel %vm323, %v317, 0.0
  %v328 = vsel %vm324, %v319, 0.0
  %v329 = vsel %vm325, %v321, 0.0
  %v330 = vld [vmem:[%s2 + $0x8] sm:$0x1]
  %v331 = vperm.slane %v330, 0
  %v332 = vmul.f32 %v326, %v331
  %v333 = vmul.f32 %v327, %v331
  %v334 = vmul.f32 %v328, %v331
  %v335 = vmul.f32 %v329, %v331
  %v336 = vadd.f32 %v310, %v332
  %v337 = vadd.f32 %v311, %v333
  %v338 = vadd.f32 %v312, %v334
  %v339 = vadd.f32 %v313, %v335
  %v340 = vld [vmem:[%s3] sm:$0x1]
  %v342 = vperm.slane %v340, 0
  %v344 = vadd.f32 %v336, %v342
  %v345 = vadd.f32 %v337, %v342
  %v346 = vadd.f32 %v338, %v342
  %v347 = vadd.f32 %v339, %v342
  %v348 = vsub.f32 0.0, %v344
  %v349 = vsub.f32 0.0, %v345
  %v350 = vsub.f32 0.0, %v346
  %v351 = vsub.f32 0.0, %v347
  %v352 = vmul.f32 %v348, 1.442695
  %v353 = vpow.pop %v352
  %v354 = vmul.f32 %v349, 1.442695
  %v355 = vpow.pop %v354
  %v356 = vmul.f32 %v350, 1.442695
  %v357 = vpow.pop %v356
  %v358 = vmul.f32 %v351, 1.442695
  %v359 = vpow.pop %v358
  %v360 = vadd.f32 %v353, 1.0
  %v361 = vadd.f32 %v355, 1.0
  %v362 = vadd.f32 %v357, 1.0
  %v363 = vadd.f32 %v359, 1.0
  %v364 = vrcp.pop %v360
  %v365 = vmul.f32 %v360, %v364
  %v366 = vsub.f32 1.0, %v365
  %v367 = vmul.f32 %v364, %v366
  %v368 = vadd.f32 %v364, %v367
  %vm369 = vweird.f32 %v360
  %vm370 = vweird.f32 %v364
  %vm371 = vmor %vm369, %vm370
  %v372 = vsel %vm371, %v364, %v368
  %v373 = vand.u32 2147483647, %v360
  %vm374 = vcmp.eq.f32.partialorder %v373, 8.507059e+37
  %v375 = vand.u32 %v360, 2147483648
  %v376 = vor.u32 1.1754944e-38, %v375
  %v377 = vsel %vm374, %v376, %v372
  %v378 = vmul.f32 1.0, %v377
  %v379 = vrcp.pop %v361
  %v380 = vmul.f32 %v361, %v379
  %v381 = vsub.f32 1.0, %v380
  %v382 = vmul.f32 %v379, %v381
  %v383 = vadd.f32 %v379, %v382
  %vm384 = vweird.f32 %v361
  %vm385 = vweird.f32 %v379
  %vm386 = vmor %vm384, %vm385
  %v387 = vsel %vm386, %v379, %v383
  %v388 = vand.u32 2147483647, %v361
  %vm389 = vcmp.eq.f32.partialorder %v388, 8.507059e+37
  %v390 = vand.u32 %v361, 2147483648
  %v391 = vor.u32 1.1754944e-38, %v390
  %v392 = vsel %vm389, %v391, %v387
  %v393 = vmul.f32 1.0, %v392
  %v394 = vrcp.pop %v362
  %v395 = vmul.f32 %v362, %v394
  %v396 = vsub.f32 1.0, %v395
  %v397 = vmul.f32 %v394, %v396
  %v398 = vadd.f32 %v394, %v397
  %vm399 = vweird.f32 %v362
  %vm400 = vweird.f32 %v394
  %vm401 = vmor %vm399, %vm400
  %v402 = vsel %vm401, %v394, %v398
  %v403 = vand.u32 2147483647, %v362
  %vm404 = vcmp.eq.f32.partialorder %v403, 8.507059e+37
  %v405 = vand.u32 %v362, 2147483648
  %v406 = vor.u32 1.1754944e-38, %v405
  %v407 = vsel %vm404, %v406, %v402
  %v408 = vmul.f32 1.0, %v407
  %v409 = vrcp.pop %v363
  %v410 = vmul.f32 %v363, %v409
  %v411 = vsub.f32 1.0, %v410
  %v412 = vmul.f32 %v409, %v411
  %v413 = vadd.f32 %v409, %v412
  %vm414 = vweird.f32 %v363
  %vm415 = vweird.f32 %v409
  %vm416 = vmor %vm414, %vm415
  %v417 = vsel %vm416, %v409, %v413
  %v418 = vand.u32 2147483647, %v363
  %vm419 = vcmp.eq.f32.partialorder %v418, 8.507059e+37
  %v420 = vand.u32 %v363, 2147483648
  %v421 = vor.u32 1.1754944e-38, %v420
  %v422 = vsel %vm419, %v421, %v417
  %v423 = vmul.f32 1.0, %v422
  %v424 = vmul.f32 %v344, %v378
  %v425 = vmul.f32 %v345, %v393
  %v426 = vmul.f32 %v346, %v408
  %v427 = vmul.f32 %v347, %v423
  %428 = vst [vmem:[%s4] sm:$0xff] %v424
  %429 = vst [vmem:[%s4 + $0x8] sm:$0xff] %v425
  %430 = vst [vmem:[%s4 + $0x10] sm:$0xff] %v426
  %431 = vst [vmem:[%s4 + $0x18] sm:$0xff] %v427
  // Predicated region
  $region18: #{ss2d_forward.3} parent=0 // pred_check
    _
  $region19: #{ss2d_forward.3} parent=0 // pred_check_branch
    %433 = sbr.rel (0) target = $region21
  $region20: #{ss2d_forward.3} parent=0 // pred_region
    _
  $region21: #{ss2d_forward.3} parent=0 // pred_fallthru
    _
  // Predicated region
  $region22: #{ss2d_forward.3} parent=0 // pred_check
    _
  $region23: #{ss2d_forward.3} parent=0 // pred_check_branch
    %435 = sbr.rel (0) target = $region25
  $region24: #{ss2d_forward.3} parent=0 // pred_region
    _
  $region25: #{ss2d_forward.3} parent=0 // pred_fallthru
    _
  // Predicated region
  $region26: #{ss2d_forward.3} parent=0 // pred_check
    _
  $region27: #{ss2d_forward.3} parent=0 // pred_check_branch
    %437 = sbr.rel (0) target = $region29
  $region28: #{ss2d_forward.3} parent=0 // pred_region
    _
  $region29: #{ss2d_forward.3} parent=0 // pred_fallthru
    _
  // Predicated region
  $region30: #{ss2d_forward.3} parent=0 // pred_check
    _
  $region31: #{ss2d_forward.3} parent=0 // pred_check_branch
    %439 = sbr.rel (0) target = $region33
  $region32: #{ss2d_forward.3} parent=0 // pred_region
    _
  $region33: #{ss2d_forward.3} parent=0 // pred_fallthru
    _

// kernel: tile.71
$region0: #{tile.71}
  %s0 = inlined_call_operand.vmem [shape: f32[16,2,32], index: 0, kind: input, shape index: {}]
  %s1 = inlined_call_operand.vmem [shape: f32[16,64], index: 1, kind: output, shape index: {}]
  $region1: #{tile.71} parent=0
    #allocation0 [shape = 'u8[65536]{0}', space=vmem, size = 0x10000, scoped, tag = 'scoped mem for input reshape']
    %s3 = ssub.s32 4, 1
    %s4 = scalar_lea.vmem %s0, 30
    %v5 = vld [vmem:[%s4] sm:%s3]
    %s6 = scalar_lea.vmem [#allocation0], 120
    %7 = vst [vmem:[%s6] sm:%s3] %v5
    %s8 = scalar_lea.vmem %s0, 28
    %v9 = vld [vmem:[%s8] sm:%s3]
    %s10 = scalar_lea.vmem [#allocation0], 112
    %11 = vst [vmem:[%s10] sm:%s3] %v9
    %s12 = scalar_lea.vmem %s0, 26
    %v13 = vld [vmem:[%s12] sm:%s3]
    %s14 = scalar_lea.vmem [#allocation0], 104
    %15 = vst [vmem:[%s14] sm:%s3] %v13
    %s16 = scalar_lea.vmem %s0, 24
    %v17 = vld [vmem:[%s16] sm:%s3]
    %s18 = scalar_lea.vmem [#allocation0], 96
    %19 = vst [vmem:[%s18] sm:%s3] %v17
    %s20 = scalar_lea.vmem %s0, 22
    %v21 = vld [vmem:[%s20] sm:%s3]
    %s22 = scalar_lea.vmem [#allocation0], 88
    %23 = vst [vmem:[%s22] sm:%s3] %v21
    %s24 = scalar_lea.vmem %s0, 20
    %v25 = vld [vmem:[%s24] sm:%s3]
    %s26 = scalar_lea.vmem [#allocation0], 80
    %27 = vst [vmem:[%s26] sm:%s3] %v25
    %s28 = scalar_lea.vmem %s0, 18
    %v29 = vld [vmem:[%s28] sm:%s3]
    %s30 = scalar_lea.vmem [#allocation0], 72
    %31 = vst [vmem:[%s30] sm:%s3] %v29
    %s32 = scalar_lea.vmem %s0, 16
    %v33 = vld [vmem:[%s32] sm:%s3]
    %s34 = scalar_lea.vmem [#allocation0], 64
    %35 = vst [vmem:[%s34] sm:%s3] %v33
    %s36 = scalar_lea.vmem %s0, 14
    %v37 = vld [vmem:[%s36] sm:%s3]
    %s38 = scalar_lea.vmem [#allocation0], 56
    %39 = vst [vmem:[%s38] sm:%s3] %v37
    %s40 = scalar_lea.vmem %s0, 12
    %v41 = vld [vmem:[%s40] sm:%s3]
    %s42 = scalar_lea.vmem [#allocation0], 48
    %43 = vst [vmem:[%s42] sm:%s3] %v41
    %s44 = scalar_lea.vmem %s0, 10
    %v45 = vld [vmem:[%s44] sm:%s3]
    %s46 = scalar_lea.vmem [#allocation0], 40
    %47 = vst [vmem:[%s46] sm:%s3] %v45
    %s48 = scalar_lea.vmem %s0, 8
    %v49 = vld [vmem:[%s48] sm:%s3]
    %s50 = scalar_lea.vmem [#allocation0], 32
    %51 = vst [vmem:[%s50] sm:%s3] %v49
    %s52 = scalar_lea.vmem %s0, 6
    %v53 = vld [vmem:[%s52] sm:%s3]
    %s54 = scalar_lea.vmem [#allocation0], 24
    %55 = vst [vmem:[%s54] sm:%s3] %v53
    %s56 = scalar_lea.vmem %s0, 4
    %v57 = vld [vmem:[%s56] sm:%s3]
    %s58 = scalar_lea.vmem [#allocation0], 16
    %59 = vst [vmem:[%s58] sm:%s3] %v57
    %s60 = scalar_lea.vmem %s0, 2
    %v61 = vld [vmem:[%s60] sm:%s3]
    %s62 = scalar_lea.vmem [#allocation0], 8
    %63 = vst [vmem:[%s62] sm:%s3] %v61
    %v64 = vld [vmem:[%s0] sm:%s3]
    %65 = vst [vmem:[#allocation0] sm:%s3] %v64
    %v66 = vld [vmem:[#allocation0] ss:$8 sm:$0xf]
    %v67 = vld [vmem:[#allocation0] ss:$8 sm:$0xf0]
    %vm68 = vcmask 1047556
    %v69 = vsel %vm68, %v67, %v66
    %vm70 = vcmask 261120
    %71 = vst.msk [vmem:[%s1] sm:$0xff] %vm70, %v69
    %s72 = scalar_lea.vmem [#allocation0], 64
    %v73 = vld [vmem:[%s72] ss:$8 sm:$0xf]
    %s74 = scalar_lea.vmem [#allocation0], 64
    %v75 = vld [vmem:[%s74] ss:$8 sm:$0xf0]
    %vm76 = vcmask 1047556
    %v77 = vsel %vm76, %v75, %v73
    %vm78 = vcmask 261120
    %s79 = scalar_lea.vmem %s1, 8
    %80 = vst.msk [vmem:[%s79] sm:$0xff] %vm78, %v77
    %s81 = scalar_lea.vmem [#allocation0], 1
    %v82 = vld [vmem:[%s81] ss:$8 sm:$0xf]
    %s83 = scalar_lea.vmem [#allocation0], 1
    %v84 = vld [vmem:[%s83] ss:$8 sm:$0xf0]
    %vm85 = vcmask 1047556
    %v86 = vsel %vm85, %v84, %v82
    %87 = vrot.lane.b32.xlu0 %v86, 32
    %v88 = vpop.permute.xlu0 %87
    %vm89 = vcmask 523520
    %90 = vst.msk [vmem:[%s1] sm:$0xff] %vm89, %v88
    %s91 = scalar_lea.vmem [#allocation0], 65
    %v92 = vld [vmem:[%s91] ss:$8 sm:$0xf]
    %s93 = scalar_lea.vmem [#allocation0], 65
    %v94 = vld [vmem:[%s93] ss:$8 sm:$0xf0]
    %vm95 = vcmask 1047556
    %v96 = vsel %vm95, %v94, %v92
    %97 = vrot.lane.b32.xlu0 %v96, 32
    %v98 = vpop.permute.xlu0 %97
    %vm99 = vcmask 523520
    %s100 = scalar_lea.vmem %s1, 8
    %101 = vst.msk [vmem:[%s100] sm:$0xff] %vm99, %v98

// kernel: tile.54
$region0: #{tile.54}
  %s0 = inlined_call_operand.vmem [shape: f32[4,8], index: 0, kind: input, shape index: {}]
  %s1 = inlined_call_operand.vmem [shape: f32[32], index: 1, kind: output, shape index: {}]
  $region1: #{tile.54} parent=0
    #allocation0 [shape = 'u8[4096]{0}', space=vmem, size = 0x1000, scoped, tag = 'scoped mem for output reshape']
    #allocation1 [shape = 'u8[4096]{0}', space=vmem, size = 0x1000, scoped, tag = 'scoped mem for input reshape']
    %s3 = ssub.s32 16, 1
    %v4 = vld [vmem:[%s0] sm:%s3]
    %5 = vst [vmem:[#allocation1] sm:%s3] %v4
    %v6 = vld [vmem:[#allocation1] sm:$0x1]
    %vm7 = vcmask 64512
    %8 = vst.msk [vmem:[#allocation0] sm:$0x1] %vm7, %v6
    %s9 = scalar_lea.vmem [#allocation1], 3
    %v10 = vld [vmem:[%s9] sm:$0x1]
    %11 = vrot.lane.b32.xlu0 %v10, 24
    %v12 = vpop.permute.xlu0 %11
    %vm13 = vcmask 261312
    %14 = vst.msk [vmem:[#allocation0] sm:$0x1] %vm13, %v12
    %s15 = scalar_lea.vmem [#allocation1], 2
    %v16 = vld [vmem:[%s15] sm:$0x1]
    %17 = vrot.lane.b32.xlu0 %v16, 16
    %v18 = vpop.permute.xlu0 %17
    %vm19 = vcmask 195712
    %20 = vst.msk [vmem:[#allocation0] sm:$0x1] %vm19, %v18
    %s21 = scalar_lea.vmem [#allocation1], 1
    %v22 = vld [vmem:[%s21] sm:$0x1]
    %23 = vrot.lane.b32.xlu0 %v22, 8
    %v24 = vpop.permute.xlu0 %23
    %vm25 = vcmask 130112
    %26 = vst.msk [vmem:[#allocation0] sm:$0x1] %vm25, %v24
    %s28 = ssub.s32 2, 1
    %v29 = vld [vmem:[#allocation0] sm:%s28]
    %s31 = ssub.s32 2, 1
    %32 = vst [vmem:[%s1] sm:%s31] %v29

// kernel: tile.55
$region0: #{tile.55}
  #allocation0 [shape = 's32[1]{0}', space=sflag, size = 0x4, scoped, tag = 'scoped memory for tile.55']
  %s0 = inlined_call_operand.vmem [shape: f32[32], index: 0, kind: input, shape index: {}]
  %s1 = inlined_call_operand.vmem [shape: f32[2,32], index: 1, kind: output, shape index: {}]
  // Predicated region
  $region2: #{tile.55} parent=0 // pred_check
    _
  $region3: #{tile.55} parent=0 // pred_check_branch
    %3 = sbr.rel (0) target = $region5
  $region4: #{tile.55} parent=0 // pred_region
    _
  $region5: #{tile.55} parent=0 // pred_fallthru
    _
  %v4 = vld [vmem:[%s0] ss:$0 sm:$0xff]
  %5 = vst [vmem:[%s1] sm:$0x3] %v4

// kernel: tile.56
$region0: #{tile.56}
  %s0 = inlined_call_operand.vmem [shape: f32[2,32], index: 0, kind: input, shape index: {}]
  %s1 = inlined_call_operand.vmem [shape: f32[1,64], index: 1, kind: output, shape index: {}]
  $region1: #{tile.56} parent=0
    #allocation0 [shape = 'u8[4096]{0}', space=vmem, size = 0x1000, scoped, tag = 'scoped mem for output reshape']
    #allocation1 [shape = 'u8[4096]{0}', space=vmem, size = 0x1000, scoped, tag = 'scoped mem for input reshape']
    %s3 = ssub.s32 4, 1
    %v4 = vld [vmem:[%s0] sm:%s3]
    %5 = vst [vmem:[#allocation1] sm:%s3] %v4
    %v6 = vld [vmem:[#allocation1] sm:$0x1]
    %vm7 = vcmask 261120
    %8 = vst.msk [vmem:[#allocation0] sm:$0x1] %vm7, %v6
    %s9 = scalar_lea.vmem [#allocation1], 1
    %v10 = vld [vmem:[%s9] sm:$0x1]
    %11 = vrot.lane.b32.xlu0 %v10, 32
    %v12 = vpop.permute.xlu0 %11
    %vm13 = vcmask 523520
    %14 = vst.msk [vmem:[#allocation0] sm:$0x1] %vm13, %v12
    %s16 = ssub.s32 2, 1
    %v17 = vld [vmem:[#allocation0] sm:%s16]
    %s19 = ssub.s32 2, 1
    %20 = vst [vmem:[%s1] sm:%s19] %v17

// kernel: squeeze.72
$region0: #{squeeze.72}
  %s0 = inlined_call_operand.vmem [shape: f32[2,1,256,8], index: 0, kind: input, shape index: {}]
  %s1 = inlined_call_operand.vmem [shape: f32[2,16,16,8], index: 1, kind: output, shape index: {}]
  %v2 = vld [vmem:[%s0] sm:$0xff]
  %vm3 = vcmask 130048
  %4 = vst.msk [vmem:[%s1] ss:$16 sm:$0x3] %vm3, %v2
  %5 = vst.msk [vmem:[%s1] ss:$16 sm:$0xc] %vm3, %v2
  %6 = vst.msk [vmem:[%s1] ss:$16 sm:$0x30] %vm3, %v2
  %7 = vst.msk [vmem:[%s1] ss:$16 sm:$0xc0] %vm3, %v2
  %s8 = scalar_lea.vmem %s0, 8
  %v9 = vld [vmem:[%s8] sm:$0xff]
  %vm10 = vcmask 130048
  %s11 = scalar_lea.vmem %s1, 8
  %12 = vst.msk [vmem:[%s11] ss:$16 sm:$0x3] %vm10, %v9
  %s13 = scalar_lea.vmem %s1, 8
  %14 = vst.msk [vmem:[%s13] ss:$16 sm:$0xc] %vm10, %v9
  %s15 = scalar_lea.vmem %s1, 8
  %16 = vst.msk [vmem:[%s15] ss:$16 sm:$0x30] %vm10, %v9
  %s17 = scalar_lea.vmem %s1, 8
  %18 = vst.msk [vmem:[%s17] ss:$16 sm:$0xc0] %vm10, %v9
  %s19 = scalar_lea.vmem %s0, 16
  %v20 = vld [vmem:[%s19] sm:$0xff]
  %vm21 = vcmask 130048
  %s22 = scalar_lea.vmem %s1, 128
  %23 = vst.msk [vmem:[%s22] ss:$16 sm:$0x3] %vm21, %v20
  %s24 = scalar_lea.vmem %s1, 128
  %25 = vst.msk [vmem:[%s24] ss:$16 sm:$0xc] %vm21, %v20
  %s26 = scalar_lea.vmem %s1, 128
  %27 = vst.msk [vmem:[%s26] ss:$16 sm:$0x30] %vm21, %v20
  %s28 = scalar_lea.vmem %s1, 128
  %29 = vst.msk [vmem:[%s28] ss:$16 sm:$0xc0] %vm21, %v20
  %s30 = scalar_lea.vmem %s0, 24
  %v31 = vld [vmem:[%s30] sm:$0xff]
  %vm32 = vcmask 130048
  %s33 = scalar_lea.vmem %s1, 136
  %34 = vst.msk [vmem:[%s33] ss:$16 sm:$0x3] %vm32, %v31
  %s35 = scalar_lea.vmem %s1, 136
  %36 = vst.msk [vmem:[%s35] ss:$16 sm:$0xc] %vm32, %v31
  %s37 = scalar_lea.vmem %s1, 136
  %38 = vst.msk [vmem:[%s37] ss:$16 sm:$0x30] %vm32, %v31
  %s39 = scalar_lea.vmem %s1, 136
  %40 = vst.msk [vmem:[%s39] ss:$16 sm:$0xc0] %vm32, %v31
  %v41 = vld.sshfl [vmem:[%s0] sm:$0xff pattern:$0xb3a29180]
  %42 = vrot.lane.b32.xlu0 %v41, 112
  %v43 = vpop.permute.xlu0 %42
  %vm44 = vcmask 130048
  %s45 = scalar_lea.vmem %s1, 1
  %46 = vst.msk [vmem:[%s45] ss:$8 sm:$0xf] %vm44, %v43
  %s47 = scalar_lea.vmem %s1, 1
  %48 = vst.msk [vmem:[%s47] ss:$8 sm:$0xf0] %vm44, %v43
  %s49 = scalar_lea.vmem %s0, 4
  %v50 = vld.sshfl [vmem:[%s49] sm:$0xff pattern:$0xb3a29180]
  %51 = vrot.lane.b32.xlu0 %v50, 112
  %v52 = vpop.permute.xlu0 %51
  %vm53 = vcmask 130048
  %s54 = scalar_lea.vmem %s1, 65
  %55 = vst.msk [vmem:[%s54] ss:$8 sm:$0xf] %vm53, %v52
  %s56 = scalar_lea.vmem %s1, 65
  %57 = vst.msk [vmem:[%s56] ss:$8 sm:$0xf0] %vm53, %v52
  %s58 = scalar_lea.vmem %s0, 16
  %v59 = vld.sshfl [vmem:[%s58] sm:$0xff pattern:$0xb3a29180]
  %60 = vrot.lane.b32.xlu0 %v59, 112
  %v61 = vpop.permute.xlu0 %60
  %vm62 = vcmask 130048
  %s63 = scalar_lea.vmem %s1, 129
  %64 = vst.msk [vmem:[%s63] ss:$8 sm:$0xf] %vm62, %v61
  %s65 = scalar_lea.vmem %s1, 129
  %66 = vst.msk [vmem:[%s65] ss:$8 sm:$0xf0] %vm62, %v61
  %s67 = scalar_lea.vmem %s0, 20
  %v68 = vld.sshfl [vmem:[%s67] sm:$0xff pattern:$0xb3a29180]
  %69 = vrot.lane.b32.xlu0 %v68, 112
  %v70 = vpop.permute.xlu0 %69
  %vm71 = vcmask 130048
  %s72 = scalar_lea.vmem %s1, 193
  %73 = vst.msk [vmem:[%s72] ss:$8 sm:$0xf] %vm71, %v70
  %s74 = scalar_lea.vmem %s1, 193
  %75 = vst.msk [vmem:[%s74] ss:$8 sm:$0xf0] %vm71, %v70
  %v76 = vld.sshfl [vmem:[%s0] sm:$0xff pattern:$0xb3a29180]
  %77 = vrot.lane.b32.xlu0 %v76, 96
  %v78 = vpop.permute.xlu0 %77
  %vm79 = vcmask 130048
  %s80 = scalar_lea.vmem %s1, 2
  %81 = vst.msk [vmem:[%s80] ss:$8 sm:$0xf] %vm79, %v78
  %s82 = scalar_lea.vmem %s1, 2
  %83 = vst.msk [vmem:[%s82] ss:$8 sm:$0xf0] %vm79, %v78
  %s84 = scalar_lea.vmem %s0, 4
  %v85 = vld.sshfl [vmem:[%s84] sm:$0xff pattern:$0xb3a29180]
  %86 = vrot.lane.b32.xlu0 %v85, 96
  %v87 = vpop.permute.xlu0 %86
  %vm88 = vcmask 130048
  %s89 = scalar_lea.vmem %s1, 66
  %90 = vst.msk [vmem:[%s89] ss:$8 sm:$0xf] %vm88, %v87
  %s91 = scalar_lea.vmem %s1, 66
  %92 = vst.msk [vmem:[%s91] ss:$8 sm:$0xf0] %vm88, %v87
  %s93 = scalar_lea.vmem %s0, 16
  %v94 = vld.sshfl [vmem:[%s93] sm:$0xff pattern:$0xb3a29180]
  %95 = vrot.lane.b32.xlu0 %v94, 96
  %v96 = vpop.permute.xlu0 %95
  %vm97 = vcmask 130048
  %s98 = scalar_lea.vmem %s1, 130
  %99 = vst.msk [vmem:[%s98] ss:$8 sm:$0xf] %vm97, %v96
  %s100 = scalar_lea.vmem %s1, 130
  %101 = vst.msk [vmem:[%s100] ss:$8 sm:$0xf0] %vm97, %v96
  %s102 = scalar_lea.vmem %s0, 20
  %v103 = vld.sshfl [vmem:[%s102] sm:$0xff pattern:$0xb3a29180]
  %104 = vrot.lane.b32.xlu0 %v103, 96
  %v105 = vpop.permute.xlu0 %104
  %vm106 = vcmask 130048
  %s107 = scalar_lea.vmem %s1, 194
  %108 = vst.msk [vmem:[%s107] ss:$8 sm:$0xf] %vm106, %v105
  %s109 = scalar_lea.vmem %s1, 194
  %110 = vst.msk [vmem:[%s109] ss:$8 sm:$0xf0] %vm106, %v105
  %v111 = vld.sshfl [vmem:[%s0] sm:$0xff pattern:$0xb3a29180]
  %112 = vrot.lane.b32.xlu0 %v111, 80
  %v113 = vpop.permute.xlu0 %112
  %vm114 = vcmask 130048
  %s115 = scalar_lea.vmem %s1, 3
  %116 = vst.msk [vmem:[%s115] ss:$8 sm:$0xf] %vm114, %v113
  %s117 = scalar_lea.vmem %s1, 3
  %118 = vst.msk [vmem:[%s117] ss:$8 sm:$0xf0] %vm114, %v113
  %s119 = scalar_lea.vmem %s0, 4
  %v120 = vld.sshfl [vmem:[%s119] sm:$0xff pattern:$0xb3a29180]
  %121 = vrot.lane.b32.xlu0 %v120, 80
  %v122 = vpop.permute.xlu0 %121
  %vm123 = vcmask 130048
  %s124 = scalar_lea.vmem %s1, 67
  %125 = vst.msk [vmem:[%s124] ss:$8 sm:$0xf] %vm123, %v122
  %s126 = scalar_lea.vmem %s1, 67
  %127 = vst.msk [vmem:[%s126] ss:$8 sm:$0xf0] %vm123, %v122
  %s128 = scalar_lea.vmem %s0, 16
  %v129 = vld.sshfl [vmem:[%s128] sm:$0xff pattern:$0xb3a29180]
  %130 = vrot.lane.b32.xlu0 %v129, 80
  %v131 = vpop.permute.xlu0 %130
  %vm132 = vcmask 130048
  %s133 = scalar_lea.vmem %s1, 131
  %134 = vst.msk [vmem:[%s133] ss:$8 sm:$0xf] %vm132, %v131
  %s135 = scalar_lea.vmem %s1, 131
  %136 = vst.msk [vmem:[%s135] ss:$8 sm:$0xf0] %vm132, %v131
  %s137 = scalar_lea.vmem %s0, 20
  %v138 = vld.sshfl [vmem:[%s137] sm:$0xff pattern:$0xb3a29180]
  %139 = vrot.lane.b32.xlu0 %v138, 80
  %v140 = vpop.permute.xlu0 %139
  %vm141 = vcmask 130048
  %s142 = scalar_lea.vmem %s1, 195
  %143 = vst.msk [vmem:[%s142] ss:$8 sm:$0xf] %vm141, %v140
  %s144 = scalar_lea.vmem %s1, 195
  %145 = vst.msk [vmem:[%s144] ss:$8 sm:$0xf0] %vm141, %v140
  %v146 = vld.sshfl [vmem:[%s0] sm:$0xff pattern:$0xb3a29180]
  %147 = vrot.lane.b32.xlu0 %v146, 64
  %v148 = vpop.permute.xlu0 %147
  %vm149 = vcmask 130048
  %s150 = scalar_lea.vmem %s1, 4
  %151 = vst.msk [vmem:[%s150] ss:$8 sm:$0xf] %vm149, %v148
  %s152 = scalar_lea.vmem %s1, 4
  %153 = vst.msk [vmem:[%s152] ss:$8 sm:$0xf0] %vm149, %v148
  %s154 = scalar_lea.vmem %s0, 4
  %v155 = vld.sshfl [vmem:[%s154] sm:$0xff pattern:$0xb3a29180]
  %156 = vrot.lane.b32.xlu0 %v155, 64
  %v157 = vpop.permute.xlu0 %156
  %vm158 = vcmask 130048
  %s159 = scalar_lea.vmem %s1, 68
  %160 = vst.msk [vmem:[%s159] ss:$8 sm:$0xf] %vm158, %v157
  %s161 = scalar_lea.vmem %s1, 68
  %162 = vst.msk [vmem:[%s161] ss:$8 sm:$0xf0] %vm158, %v157
  %s163 = scalar_lea.vmem %s0, 16
  %v164 = vld.sshfl [vmem:[%s163] sm:$0xff pattern:$0xb3a29180]
  %165 = vrot.lane.b32.xlu0 %v164, 64
  %v166 = vpop.permute.xlu0 %165
  %vm167 = vcmask 130048
  %s168 = scalar_lea.vmem %s1, 132
  %169 = vst.msk [vmem:[%s168] ss:$8 sm:$0xf] %vm167, %v166
  %s170 = scalar_lea.vmem %s1, 132
  %171 = vst.msk [vmem:[%s170] ss:$8 sm:$0xf0] %vm167, %v166
  %s172 = scalar_lea.vmem %s0, 20
  %v173 = vld.sshfl [vmem:[%s172] sm:$0xff pattern:$0xb3a29180]
  %174 = vrot.lane.b32.xlu0 %v173, 64
  %v175 = vpop.permute.xlu0 %174
  %vm176 = vcmask 130048
  %s177 = scalar_lea.vmem %s1, 196
  %178 = vst.msk [vmem:[%s177] ss:$8 sm:$0xf] %vm176, %v175
  %s179 = scalar_lea.vmem %s1, 196
  %180 = vst.msk [vmem:[%s179] ss:$8 sm:$0xf0] %vm176, %v175
  %v181 = vld.sshfl [vmem:[%s0] sm:$0xff pattern:$0xb3a29180]
  %182 = vrot.lane.b32.xlu0 %v181, 48
  %v183 = vpop.permute.xlu0 %182
  %vm184 = vcmask 130048
  %s185 = scalar_lea.vmem %s1, 5
  %186 = vst.msk [vmem:[%s185] ss:$8 sm:$0xf] %vm184, %v183
  %s187 = scalar_lea.vmem %s1, 5
  %188 = vst.msk [vmem:[%s187] ss:$8 sm:$0xf0] %vm184, %v183
  %s189 = scalar_lea.vmem %s0, 4
  %v190 = vld.sshfl [vmem:[%s189] sm:$0xff pattern:$0xb3a29180]
  %191 = vrot.lane.b32.xlu0 %v190, 48
  %v192 = vpop.permute.xlu0 %191
  %vm193 = vcmask 130048
  %s194 = scalar_lea.vmem %s1, 69
  %195 = vst.msk [vmem:[%s194] ss:$8 sm:$0xf] %vm193, %v192
  %s196 = scalar_lea.vmem %s1, 69
  %197 = vst.msk [vmem:[%s196] ss:$8 sm:$0xf0] %vm193, %v192
  %s198 = scalar_lea.vmem %s0, 16
  %v199 = vld.sshfl [vmem:[%s198] sm:$0xff pattern:$0xb3a29180]
  %200 = vrot.lane.b32.xlu0 %v199, 48
  %v201 = vpop.permute.xlu0 %200
  %vm202 = vcmask 130048
  %s203 = scalar_lea.vmem %s1, 133
  %204 = vst.msk [vmem:[%s203] ss:$8 sm:$0xf] %vm202, %v201
  %s205 = scalar_lea.vmem %s1, 133
  %206 = vst.msk [vmem:[%s205] ss:$8 sm:$0xf0] %vm202, %v201
  %s207 = scalar_lea.vmem %s0, 20
  %v208 = vld.sshfl [vmem:[%s207] sm:$0xff pattern:$0xb3a29180]
  %209 = vrot.lane.b32.xlu0 %v208, 48
  %v210 = vpop.permute.xlu0 %209
  %vm211 = vcmask 130048
  %s212 = scalar_lea.vmem %s1, 197
  %213 = vst.msk [vmem:[%s212] ss:$8 sm:$0xf] %vm211, %v210
  %s214 = scalar_lea.vmem %s1, 197
  %215 = vst.msk [vmem:[%s214] ss:$8 sm:$0xf0] %vm211, %v210
  %v216 = vld.sshfl [vmem:[%s0] sm:$0xff pattern:$0xb3a29180]
  %217 = vrot.lane.b32.xlu0 %v216, 32
  %v218 = vpop.permute.xlu0 %217
  %vm219 = vcmask 130048
  %s220 = scalar_lea.vmem %s1, 6
  %221 = vst.msk [vmem:[%s220] ss:$8 sm:$0xf] %vm219, %v218
  %s222 = scalar_lea.vmem %s1, 6
  %223 = vst.msk [vmem:[%s222] ss:$8 sm:$0xf0] %vm219, %v218
  %s224 = scalar_lea.vmem %s0, 4
  %v225 = vld.sshfl [vmem:[%s224] sm:$0xff pattern:$0xb3a29180]
  %226 = vrot.lane.b32.xlu0 %v225, 32
  %v227 = vpop.permute.xlu0 %226
  %vm228 = vcmask 130048
  %s229 = scalar_lea.vmem %s1, 70
  %230 = vst.msk [vmem:[%s229] ss:$8 sm:$0xf] %vm228, %v227
  %s231 = scalar_lea.vmem %s1, 70
  %232 = vst.msk [vmem:[%s231] ss:$8 sm:$0xf0] %vm228, %v227
  %s233 = scalar_lea.vmem %s0, 16
  %v234 = vld.sshfl [vmem:[%s233] sm:$0xff pattern:$0xb3a29180]
  %235 = vrot.lane.b32.xlu0 %v234, 32
  %v236 = vpop.permute.xlu0 %235
  %vm237 = vcmask 130048
  %s238 = scalar_lea.vmem %s1, 134
  %239 = vst.msk [vmem:[%s238] ss:$8 sm:$0xf] %vm237, %v236
  %s240 = scalar_lea.vmem %s1, 134
  %241 = vst.msk [vmem:[%s240] ss:$8 sm:$0xf0] %vm237, %v236
  %s242 = scalar_lea.vmem %s0, 20
  %v243 = vld.sshfl [vmem:[%s242] sm:$0xff pattern:$0xb3a29180]
  %244 = vrot.lane.b32.xlu0 %v243, 32
  %v245 = vpop.permute.xlu0 %244
  %vm246 = vcmask 130048
  %s247 = scalar_lea.vmem %s1, 198
  %248 = vst.msk [vmem:[%s247] ss:$8 sm:$0xf] %vm246, %v245
  %s249 = scalar_lea.vmem %s1, 198
  %250 = vst.msk [vmem:[%s249] ss:$8 sm:$0xf0] %vm246, %v245
  %v251 = vld.sshfl [vmem:[%s0] sm:$0xff pattern:$0xb3a29180]
  %252 = vrot.lane.b32.xlu0 %v251, 16
  %v253 = vpop.permute.xlu0 %252
  %vm254 = vcmask 130048
  %s255 = scalar_lea.vmem %s1, 7
  %256 = vst.msk [vmem:[%s255] ss:$8 sm:$0xf] %vm254, %v253
  %s257 = scalar_lea.vmem %s1, 7
  %258 = vst.msk [vmem:[%s257] ss:$8 sm:$0xf0] %vm254, %v253
  %s259 = scalar_lea.vmem %s0, 4
  %v260 = vld.sshfl [vmem:[%s259] sm:$0xff pattern:$0xb3a29180]
  %261 = vrot.lane.b32.xlu0 %v260, 16
  %v262 = vpop.permute.xlu0 %261
  %vm263 = vcmask 130048
  %s264 = scalar_lea.vmem %s1, 71
  %265 = vst.msk [vmem:[%s264] ss:$8 sm:$0xf] %vm263, %v262
  %s266 = scalar_lea.vmem %s1, 71
  %267 = vst.msk [vmem:[%s266] ss:$8 sm:$0xf0] %vm263, %v262
  %s268 = scalar_lea.vmem %s0, 16
  %v269 = vld.sshfl [vmem:[%s268] sm:$0xff pattern:$0xb3a29180]
  %270 = vrot.lane.b32.xlu0 %v269, 16
  %v271 = vpop.permute.xlu0 %270
  %vm272 = vcmask 130048
  %s273 = scalar_lea.vmem %s1, 135
  %274 = vst.msk [vmem:[%s273] ss:$8 sm:$0xf] %vm272, %v271
  %s275 = scalar_lea.vmem %s1, 135
  %276 = vst.msk [vmem:[%s275] ss:$8 sm:$0xf0] %vm272, %v271
  %s277 = scalar_lea.vmem %s0, 20
  %v278 = vld.sshfl [vmem:[%s277] sm:$0xff pattern:$0xb3a29180]
  %279 = vrot.lane.b32.xlu0 %v278, 16
  %v280 = vpop.permute.xlu0 %279
  %vm281 = vcmask 130048
  %s282 = scalar_lea.vmem %s1, 199
  %283 = vst.msk [vmem:[%s282] ss:$8 sm:$0xf] %vm281, %v280
  %s284 = scalar_lea.vmem %s1, 199
  %285 = vst.msk [vmem:[%s284] ss:$8 sm:$0xf0] %vm281, %v280

// kernel: ss2d_forward.5
$region0: #{ss2d_forward.5}
  #allocation0 [shape = 'u32[]', space=smem, size = 0x4, offset = 0x4, fixed_abs, tag = 'smem constant byte address 0x4 - core index']
  #allocation1 [shape = 'u32[72,128]{1,0:T(1,128)}', space=vmem, size = 0x9000, scoped, tag = 'internal scratch']
  %s0 = inlined_call_operand.vmem [shape: f32[32,128], index: 0, kind: input, shape index: {}]
  %s1 = inlined_call_operand.vmem [shape: f32[32,128], index: 1, kind: input, shape index: {}]
  %s2 = inlined_call_operand.vmem [shape: f32[1,128], index: 2, kind: input, shape index: {}]
  %s3 = inlined_call_operand.vmem [shape: f32[1,128], index: 3, kind: input, shape index: {}]
  %s4 = inlined_call_operand.vmem [shape: f32[128,64], index: 4, kind: input, shape index: {}]
  %s5 = inlined_call_operand.vmem [shape: f32[32,64], index: 5, kind: output, shape index: {}]
  %s6 = sld [smem:[#allocation0]]
  $region30: #{ss2d_forward.5} parent=0
    _
  %s8 = ssub.s32 1, %s6
  %s9 = scalar_select 0, %s8, %s6
  // Predicated region
  $region2: #{ss2d_forward.5} parent=0 // pred_check
    _
  $region3: #{ss2d_forward.5} parent=0 // pred_check_branch
    %11 = sbr.rel (0) target = $region5
  $region4: #{ss2d_forward.5} parent=0 // pred_region
    _
  $region5: #{ss2d_forward.5} parent=0 // pred_fallthru
    _
  // Predicated region
  $region6: #{ss2d_forward.5} parent=0 // pred_check
    _
  $region7: #{ss2d_forward.5} parent=0 // pred_check_branch
    %13 = sbr.rel (0) target = $region9
  $region8: #{ss2d_forward.5} parent=0 // pred_region
    _
  $region9: #{ss2d_forward.5} parent=0 // pred_fallthru
    _
  // Predicated region
  $region10: #{ss2d_forward.5} parent=0 // pred_check
    _
  $region11: #{ss2d_forward.5} parent=0 // pred_check_branch
    %15 = sbr.rel (0) target = $region13
  $region12: #{ss2d_forward.5} parent=0 // pred_region
    _
  $region13: #{ss2d_forward.5} parent=0 // pred_fallthru
    _
  // Predicated region
  $region14: #{ss2d_forward.5} parent=0 // pred_check
    _
  $region15: #{ss2d_forward.5} parent=0 // pred_check_branch
    %17 = sbr.rel (0) target = $region17
  $region16: #{ss2d_forward.5} parent=0 // pred_region
    _
  $region17: #{ss2d_forward.5} parent=0 // pred_fallthru
    _
  // Predicated region
  $region18: #{ss2d_forward.5} parent=0 // pred_check
    _
  $region19: #{ss2d_forward.5} parent=0 // pred_check_branch
    %19 = sbr.rel (0) target = $region21
  $region20: #{ss2d_forward.5} parent=0 // pred_region
    _
  $region21: #{ss2d_forward.5} parent=0 // pred_fallthru
    _
  %v20 = vld [vmem:[%s0] sm:$0xff]
  %v21 = vld [vmem:[%s0 + $0x8] sm:$0xff]
  %v22 = vld [vmem:[%s0 + $0x10] sm:$0xff]
  %v23 = vld [vmem:[%s0 + $0x18] sm:$0xff]
  %v24 = vlaneseq
  %v25 = vand.u32 %v24, 127
  %26 = vrot.lane.b32.xlu0 %v20, 127
  %v27 = vpop.permute.xlu0 %26
  %28 = vrot.lane.b32.xlu0 %v21, 127
  %v29 = vpop.permute.xlu0 %28
  %30 = vrot.lane.b32.xlu0 %v22, 127
  %v31 = vpop.permute.xlu0 %30
  %32 = vrot.lane.b32.xlu0 %v23, 127
  %v33 = vpop.permute.xlu0 %32
  %34 = vrot.lane.b32.xlu0 %v20, 1
  %v35 = vpop.permute.xlu0 %34
  %36 = vrot.lane.b32.xlu0 %v21, 1
  %v37 = vpop.permute.xlu0 %36
  %38 = vrot.lane.b32.xlu0 %v22, 1
  %v39 = vpop.permute.xlu0 %38
  %40 = vrot.lane.b32.xlu0 %v23, 1
  %v41 = vpop.permute.xlu0 %40
  %v42 = vand.u32 %v25, 1
  %vm43 = vcmp.eq.s32.totalorder %v42, 0
  %v44 = vsel %vm43, %v27, %v35
  %v45 = vsel %vm43, %v29, %v37
  %v46 = vsel %vm43, %v31, %v39
  %v47 = vsel %vm43, %v33, %v41
  %v48 = vadd.f32 %v20, %v44
  %v49 = vadd.f32 %v21, %v45
  %v50 = vadd.f32 %v22, %v46
  %v51 = vadd.f32 %v23, %v47
  %52 = vrot.lane.b32.xlu0 %v48, 126
  %v53 = vpop.permute.xlu0 %52
  %54 = vrot.lane.b32.xlu0 %v49, 126
  %v55 = vpop.permute.xlu0 %54
  %56 = vrot.lane.b32.xlu0 %v50, 126
  %v57 = vpop.permute.xlu0 %56
  %58 = vrot.lane.b32.xlu0 %v51, 126
  %v59 = vpop.permute.xlu0 %58
  %60 = vrot.lane.b32.xlu0 %v48, 2
  %v61 = vpop.permute.xlu0 %60
  %62 = vrot.lane.b32.xlu0 %v49, 2
  %v63 = vpop.permute.xlu0 %62
  %64 = vrot.lane.b32.xlu0 %v50, 2
  %v65 = vpop.permute.xlu0 %64
  %66 = vrot.lane.b32.xlu0 %v51, 2
  %v67 = vpop.permute.xlu0 %66
  %v68 = vand.u32 %v25, 2
  %vm69 = vcmp.eq.s32.totalorder %v68, 0
  %v70 = vsel %vm69, %v53, %v61
  %v71 = vsel %vm69, %v55, %v63
  %v72 = vsel %vm69, %v57, %v65
  %v73 = vsel %vm69, %v59, %v67
  %v74 = vadd.f32 %v48, %v70
  %v75 = vadd.f32 %v49, %v71
  %v76 = vadd.f32 %v50, %v72
  %v77 = vadd.f32 %v51, %v73
  %78 = vrot.lane.b32.xlu0 %v74, 124
  %v79 = vpop.permute.xlu0 %78
  %80 = vrot.lane.b32.xlu0 %v75, 124
  %v81 = vpop.permute.xlu0 %80
  %82 = vrot.lane.b32.xlu0 %v76, 124
  %v83 = vpop.permute.xlu0 %82
  %84 = vrot.lane.b32.xlu0 %v77, 124
  %v85 = vpop.permute.xlu0 %84
  %86 = vrot.lane.b32.xlu0 %v74, 4
  %v87 = vpop.permute.xlu0 %86
  %88 = vrot.lane.b32.xlu0 %v75, 4
  %v89 = vpop.permute.xlu0 %88
  %90 = vrot.lane.b32.xlu0 %v76, 4
  %v91 = vpop.permute.xlu0 %90
  %92 = vrot.lane.b32.xlu0 %v77, 4
  %v93 = vpop.permute.xlu0 %92
  %v94 = vand.u32 %v25, 4
  %vm95 = vcmp.eq.s32.totalorder %v94, 0
  %v96 = vsel %vm95, %v79, %v87
  %v97 = vsel %vm95, %v81, %v89
  %v98 = vsel %vm95, %v83, %v91
  %v99 = vsel %vm95, %v85, %v93
  %v100 = vadd.f32 %v74, %v96
  %v101 = vadd.f32 %v75, %v97
  %v102 = vadd.f32 %v76, %v98
  %v103 = vadd.f32 %v77, %v99
  %v104 = vmul.f32 %v100, 0.125
  %v105 = vmul.f32 %v101, 0.125
  %v106 = vmul.f32 %v102, 0.125
  %v107 = vmul.f32 %v103, 0.125
  %v108 = vsub.f32 %v20, %v104
  %v109 = vsub.f32 %v21, %v105
  %v110 = vsub.f32 %v22, %v106
  %v111 = vsub.f32 %v23, %v107
  %v112 = vmul.f32 %v108, %v108
  %v113 = vmul.f32 %v109, %v109
  %v114 = vmul.f32 %v110, %v110
  %v115 = vmul.f32 %v111, %v111
  %116 = vrot.lane.b32.xlu0 %v112, 127
  %v117 = vpop.permute.xlu0 %116
  %118 = vrot.lane.b32.xlu0 %v113, 127
  %v119 = vpop.permute.xlu0 %118
  %120 = vrot.lane.b32.xlu0 %v114, 127
  %v121 = vpop.permute.xlu0 %120
  %122 = vrot.lane.b32.xlu0 %v115, 127
  %v123 = vpop.permute.xlu0 %122
  %124 = vrot.lane.b32.xlu0 %v112, 1
  %v125 = vpop.permute.xlu0 %124
  %126 = vrot.lane.b32.xlu0 %v113, 1
  %v127 = vpop.permute.xlu0 %126
  %128 = vrot.lane.b32.xlu0 %v114, 1
  %v129 = vpop.permute.xlu0 %128
  %130 = vrot.lane.b32.xlu0 %v115, 1
  %v131 = vpop.permute.xlu0 %130
  %v132 = vsel %vm43, %v117, %v125
  %v133 = vsel %vm43, %v119, %v127
  %v134 = vsel %vm43, %v121, %v129
  %v135 = vsel %vm43, %v123, %v131
  %v136 = vadd.f32 %v112, %v132
  %v137 = vadd.f32 %v113, %v133
  %v138 = vadd.f32 %v114, %v134
  %v139 = vadd.f32 %v115, %v135
  %140 = vrot.lane.b32.xlu0 %v136, 126
  %v141 = vpop.permute.xlu0 %140
  %142 = vrot.lane.b32.xlu0 %v137, 126
  %v143 = vpop.permute.xlu0 %142
  %144 = vrot.lane.b32.xlu0 %v138, 126
  %v145 = vpop.permute.xlu0 %144
  %146 = vrot.lane.b32.xlu0 %v139, 126
  %v147 = vpop.permute.xlu0 %146
  %148 = vrot.lane.b32.xlu0 %v136, 2
  %v149 = vpop.permute.xlu0 %148
  %150 = vrot.lane.b32.xlu0 %v137, 2
  %v151 = vpop.permute.xlu0 %150
  %152 = vrot.lane.b32.xlu0 %v138, 2
  %v153 = vpop.permute.xlu0 %152
  %154 = vrot.lane.b32.xlu0 %v139, 2
  %v155 = vpop.permute.xlu0 %154
  %v156 = vsel %vm69, %v141, %v149
  %v157 = vsel %vm69, %v143, %v151
  %v158 = vsel %vm69, %v145, %v153
  %v159 = vsel %vm69, %v147, %v155
  %v160 = vadd.f32 %v136, %v156
  %v161 = vadd.f32 %v137, %v157
  %v162 = vadd.f32 %v138, %v158
  %v163 = vadd.f32 %v139, %v159
  %164 = vrot.lane.b32.xlu0 %v160, 124
  %v165 = vpop.permute.xlu0 %164
  %166 = vrot.lane.b32.xlu0 %v161, 124
  %v167 = vpop.permute.xlu0 %166
  %168 = vrot.lane.b32.xlu0 %v162, 124
  %v169 = vpop.permute.xlu0 %168
  %170 = vrot.lane.b32.xlu0 %v163, 124
  %v171 = vpop.permute.xlu0 %170
  %172 = vrot.lane.b32.xlu0 %v160, 4
  %v173 = vpop.permute.xlu0 %172
  %174 = vrot.lane.b32.xlu0 %v161, 4
  %v175 = vpop.permute.xlu0 %174
  %176 = vrot.lane.b32.xlu0 %v162, 4
  %v177 = vpop.permute.xlu0 %176
  %178 = vrot.lane.b32.xlu0 %v163, 4
  %v179 = vpop.permute.xlu0 %178
  %v180 = vsel %vm95, %v165, %v173
  %v181 = vsel %vm95, %v167, %v175
  %v182 = vsel %vm95, %v169, %v177
  %v183 = vsel %vm95, %v171, %v179
  %v184 = vadd.f32 %v160, %v180
  %v185 = vadd.f32 %v161, %v181
  %v186 = vadd.f32 %v162, %v182
  %v187 = vadd.f32 %v163, %v183
  %v188 = vmul.f32 %v184, 0.125
  %v189 = vmul.f32 %v185, 0.125
  %v190 = vmul.f32 %v186, 0.125
  %v191 = vmul.f32 %v187, 0.125
  %v192 = vadd.f32 %v188, 1e-05
  %v193 = vadd.f32 %v189, 1e-05
  %v194 = vadd.f32 %v190, 1e-05
  %v195 = vadd.f32 %v191, 1e-05
  %v196 = vrsqrt.pop %v192
  %v197 = vmul.f32 %v196, %v192
  %v198 = vmul.f32 %v197, %v196
  %v199 = vmul.f32 0.5, %v198
  %v200 = vsub.f32 1.5, %v199
  %v201 = vmul.f32 %v196, %v200
  %vm202 = vweird.f32 %v192
  %vm203 = vweird.f32 %v196
  %vm204 = vmor %vm202, %vm203
  %v205 = vsel %vm204, %v196, %v201
  %v206 = vrsqrt.pop %v193
  %v207 = vmul.f32 %v206, %v193
  %v208 = vmul.f32 %v207, %v206
  %v209 = vmul.f32 0.5, %v208
  %v210 = vsub.f32 1.5, %v209
  %v211 = vmul.f32 %v206, %v210
  %vm212 = vweird.f32 %v193
  %vm213 = vweird.f32 %v206
  %vm214 = vmor %vm212, %vm213
  %v215 = vsel %vm214, %v206, %v211
  %v216 = vrsqrt.pop %v194
  %v217 = vmul.f32 %v216, %v194
  %v218 = vmul.f32 %v217, %v216
  %v219 = vmul.f32 0.5, %v218
  %v220 = vsub.f32 1.5, %v219
  %v221 = vmul.f32 %v216, %v220
  %vm222 = vweird.f32 %v194
  %vm223 = vweird.f32 %v216
  %vm224 = vmor %vm222, %vm223
  %v225 = vsel %vm224, %v216, %v221
  %v226 = vrsqrt.pop %v195
  %v227 = vmul.f32 %v226, %v195
  %v228 = vmul.f32 %v227, %v226
  %v229 = vmul.f32 0.5, %v228
  %v230 = vsub.f32 1.5, %v229
  %v231 = vmul.f32 %v226, %v230
  %vm232 = vweird.f32 %v195
  %vm233 = vweird.f32 %v226
  %vm234 = vmor %vm232, %vm233
  %v235 = vsel %vm234, %v226, %v231
  %v236 = vmul.f32 %v108, %v205
  %v237 = vmul.f32 %v109, %v215
  %v238 = vmul.f32 %v110, %v225
  %v239 = vmul.f32 %v111, %v235
  %v240 = vld [vmem:[%s2] sm:$0x1]
  %v242 = vperm.slane %v240, 0
  %v244 = vmul.f32 %v236, %v242
  %v245 = vmul.f32 %v237, %v242
  %v246 = vmul.f32 %v238, %v242
  %v247 = vmul.f32 %v239, %v242
  %v248 = vld [vmem:[%s3] sm:$0x1]
  %v250 = vperm.slane %v248, 0
  %v252 = vadd.f32 %v244, %v250
  %v253 = vadd.f32 %v245, %v250
  %v254 = vadd.f32 %v246, %v250
  %v255 = vadd.f32 %v247, %v250
  %v256 = vld [vmem:[%s1] sm:$0xff]
  %v257 = vld [vmem:[%s1 + $0x8] sm:$0xff]
  %v258 = vld [vmem:[%s1 + $0x10] sm:$0xff]
  %v259 = vld [vmem:[%s1 + $0x18] sm:$0xff]
  %v260 = vsub.f32 0.0, %v256
  %v261 = vsub.f32 0.0, %v257
  %v262 = vsub.f32 0.0, %v258
  %v263 = vsub.f32 0.0, %v259
  %v264 = vmul.f32 %v260, 1.442695
  %v265 = vpow.pop %v264
  %v266 = vmul.f32 %v261, 1.442695
  %v267 = vpow.pop %v266
  %v268 = vmul.f32 %v262, 1.442695
  %v269 = vpow.pop %v268
  %v270 = vmul.f32 %v263, 1.442695
  %v271 = vpow.pop %v270
  %v272 = vadd.f32 %v265, 1.0
  %v273 = vadd.f32 %v267, 1.0
  %v274 = vadd.f32 %v269, 1.0
  %v275 = vadd.f32 %v271, 1.0
  %v276 = vrcp.pop %v272
  %v277 = vmul.f32 %v272, %v276
  %v278 = vsub.f32 1.0, %v277
  %v279 = vmul.f32 %v276, %v278
  %v280 = vadd.f32 %v276, %v279
  %vm281 = vweird.f32 %v272
  %vm282 = vweird.f32 %v276
  %vm283 = vmor %vm281, %vm282
  %v284 = vsel %vm283, %v276, %v280
  %v285 = vand.u32 2147483647, %v272
  %vm286 = vcmp.eq.f32.partialorder %v285, 8.507059e+37
  %v287 = vand.u32 %v272, 2147483648
  %v288 = vor.u32 1.1754944e-38, %v287
  %v289 = vsel %vm286, %v288, %v284
  %v290 = vmul.f32 1.0, %v289
  %v291 = vrcp.pop %v273
  %v292 = vmul.f32 %v273, %v291
  %v293 = vsub.f32 1.0, %v292
  %v294 = vmul.f32 %v291, %v293
  %v295 = vadd.f32 %v291, %v294
  %vm296 = vweird.f32 %v273
  %vm297 = vweird.f32 %v291
  %vm298 = vmor %vm296, %vm297
  %v299 = vsel %vm298, %v291, %v295
  %v300 = vand.u32 2147483647, %v273
  %vm301 = vcmp.eq.f32.partialorder %v300, 8.507059e+37
  %v302 = vand.u32 %v273, 2147483648
  %v303 = vor.u32 1.1754944e-38, %v302
  %v304 = vsel %vm301, %v303, %v299
  %v305 = vmul.f32 1.0, %v304
  %v306 = vrcp.pop %v274
  %v307 = vmul.f32 %v274, %v306
  %v308 = vsub.f32 1.0, %v307
  %v309 = vmul.f32 %v306, %v308
  %v310 = vadd.f32 %v306, %v309
  %vm311 = vweird.f32 %v274
  %vm312 = vweird.f32 %v306
  %vm313 = vmor %vm311, %vm312
  %v314 = vsel %vm313, %v306, %v310
  %v315 = vand.u32 2147483647, %v274
  %vm316 = vcmp.eq.f32.partialorder %v315, 8.507059e+37
  %v317 = vand.u32 %v274, 2147483648
  %v318 = vor.u32 1.1754944e-38, %v317
  %v319 = vsel %vm316, %v318, %v314
  %v320 = vmul.f32 1.0, %v319
  %v321 = vrcp.pop %v275
  %v322 = vmul.f32 %v275, %v321
  %v323 = vsub.f32 1.0, %v322
  %v324 = vmul.f32 %v321, %v323
  %v325 = vadd.f32 %v321, %v324
  %vm326 = vweird.f32 %v275
  %vm327 = vweird.f32 %v321
  %vm328 = vmor %vm326, %vm327
  %v329 = vsel %vm328, %v321, %v325
  %v330 = vand.u32 2147483647, %v275
  %vm331 = vcmp.eq.f32.partialorder %v330, 8.507059e+37
  %v332 = vand.u32 %v275, 2147483648
  %v333 = vor.u32 1.1754944e-38, %v332
  %v334 = vsel %vm331, %v333, %v329
  %v335 = vmul.f32 1.0, %v334
  %v336 = vmul.f32 %v256, %v290
  %v337 = vmul.f32 %v257, %v305
  %v338 = vmul.f32 %v258, %v320
  %v339 = vmul.f32 %v259, %v335
  %v340 = vmul.f32 %v252, %v336
  %v341 = vmul.f32 %v253, %v337
  %v342 = vmul.f32 %v254, %v338
  %v343 = vmul.f32 %v255, %v339
  %v344 = vld [vmem:[%s4] sm:$0xff]
  %v345 = vld [vmem:[%s4 + $0x8] sm:$0xff]
  %v346 = vld [vmem:[%s4 + $0x10] sm:$0xff]
  %v347 = vld [vmem:[%s4 + $0x18] sm:$0xff]
  %v348 = vld [vmem:[%s4 + $0x20] sm:$0xff]
  %v349 = vld [vmem:[%s4 + $0x28] sm:$0xff]
  %v350 = vld [vmem:[%s4 + $0x30] sm:$0xff]
  %v351 = vld [vmem:[%s4 + $0x38] sm:$0xff]
  %v352 = vld [vmem:[%s4 + $0x40] sm:$0xff]
  %v353 = vld [vmem:[%s4 + $0x48] sm:$0xff]
  %v354 = vld [vmem:[%s4 + $0x50] sm:$0xff]
  %v355 = vld [vmem:[%s4 + $0x58] sm:$0xff]
  %v356 = vld [vmem:[%s4 + $0x60] sm:$0xff]
  %v357 = vld [vmem:[%s4 + $0x68] sm:$0xff]
  %v358 = vld [vmem:[%s4 + $0x70] sm:$0xff]
  %v359 = vld [vmem:[%s4 + $0x78] sm:$0xff]
  %360 = vmatpush.msra.mxu0 %v359
  %361 = vmatpush.msra.mxu0 %v358
  %362 = vmatpush.msra.mxu0 %v357
  %363 = vmatpush.msra.mxu0 %v356
  %364 = vmatpush.msra.mxu0 %v355
  %365 = vmatpush.msra.mxu0 %v354
  %366 = vmatpush.msra.mxu0 %v353
  %367 = vmatpush.msra.mxu0 %v352
  %368 = vmatpush.msra.mxu0 %v351
  %369 = vmatpush.msra.mxu0 %v350
  %370 = vmatpush.msra.mxu0 %v349
  %371 = vmatpush.msra.mxu0 %v348
  %372 = vmatpush.msra.mxu0 %v347
  %373 = vmatpush.msra.mxu0 %v346
  %374 = vmatpush.msra.mxu0 %v345
  %375 = vmatpush.msra.mxu0 %v344
  %376 = vmatmul.f32.gmra.mxu0 %v340
  %v377 = vpop.f32.mrf.mxu0
  %v378 = vadd.f32 0.0, %v377
  %379 = vmatmul.f32.gmra.mxu0 %v341
  %v380 = vpop.f32.mrf.mxu0
  %v381 = vadd.f32 0.0, %v380
  %382 = vmatmul.f32.gmra.mxu0 %v342
  %v383 = vpop.f32.mrf.mxu0
  %v384 = vadd.f32 0.0, %v383
  %385 = vmatmul.f32.gmra.mxu0 %v343
  %v386 = vpop.f32.mrf.mxu0
  %v387 = vadd.f32 0.0, %v386
  %388 = vdwg.mxu0
  %vm389 = vcmask 523264
  %390 = vst.msk [vmem:[%s5] sm:$0xff] %vm389, %v378
  %391 = vst.msk [vmem:[%s5 + $0x8] sm:$0xff] %vm389, %v381
  %392 = vst.msk [vmem:[%s5 + $0x10] sm:$0xff] %vm389, %v384
  %393 = vst.msk [vmem:[%s5 + $0x18] sm:$0xff] %vm389, %v387
  // Predicated region
  $region22: #{ss2d_forward.5} parent=0 // pred_check
    _
  $region23: #{ss2d_forward.5} parent=0 // pred_check_branch
    %395 = sbr.rel (0) target = $region25
  $region24: #{ss2d_forward.5} parent=0 // pred_region
    _
  $region25: #{ss2d_forward.5} parent=0 // pred_fallthru
    _
  // Predicated region
  $region26: #{ss2d_forward.5} parent=0 // pred_check
    _
  $region27: #{ss2d_forward.5} parent=0 // pred_check_branch
    %397 = sbr.rel (0) target = $region29
  $region28: #{ss2d_forward.5} parent=0 // pred_region
    _
  $region29: #{ss2d_forward.5} parent=0 // pred_fallthru
    _

// kernel: ss2d_forward.4
$region0: #{ss2d_forward.4}
  #allocation0 [shape = 'u32[]', space=smem, size = 0x4, offset = 0x4, fixed_abs, tag = 'smem constant byte address 0x4 - core index']
  #allocation1 [shape = 'u32[72,128]{1,0:T(1,128)}', space=vmem, size = 0x9000, scoped, tag = 'internal scratch']
  #allocation2 [shape = 'f32[8,256,128]{2,1,0:T(8,128)}', space=vmem, size = 0x100000, scoped, tag = 'scratch operand']
  #allocation3 [shape = 'f32[8,256,128]{2,1,0:T(8,128)}', space=vmem, size = 0x100000, scoped, tag = 'scratch operand']
  #allocation4 [shape = 'f32[8,256,128]{2,1,0:T(8,128)}', space=vmem, size = 0x100000, scoped, tag = 'scratch operand']
  #allocation5 [shape = 'f32[256,128]{1,0:T(8,128)}', space=vmem, size = 0x20000, scoped, tag = 'scratch operand']
  %s0 = inlined_call_operand.vmem [shape: f32[256,64], index: 0, kind: input, shape index: {}]
  %s1 = inlined_call_operand.vmem [shape: f32[64,64], index: 1, kind: input, shape index: {}]
  %s2 = inlined_call_operand.vmem [shape: f32[1,64], index: 2, kind: input, shape index: {}]
  %s3 = inlined_call_operand.vmem [shape: f32[8,64,256], index: 3, kind: input, shape index: {}]
  %s4 = inlined_call_operand.vmem [shape: f32[8,1,128], index: 4, kind: input, shape index: {}]
  %s5 = inlined_call_operand.vmem [shape: f32[1,64], index: 5, kind: input, shape index: {}]
  %s6 = inlined_call_operand.vmem [shape: f32[256,64], index: 6, kind: output, shape index: {}]
  %s7 = sld [smem:[#allocation0]]
  $region41: #{ss2d_forward.4} parent=0
    _
  %s9 = ssub.s32 1, %s7
  %s10 = scalar_select 0, %s9, %s7
  // Predicated region
  $region2: #{ss2d_forward.4} parent=0 // pred_check
    _
  $region3: #{ss2d_forward.4} parent=0 // pred_check_branch
    %12 = sbr.rel (0) target = $region5
  $region4: #{ss2d_forward.4} parent=0 // pred_region
    _
  $region5: #{ss2d_forward.4} parent=0 // pred_fallthru
    _
  // Predicated region
  $region6: #{ss2d_forward.4} parent=0 // pred_check
    _
  $region7: #{ss2d_forward.4} parent=0 // pred_check_branch
    %14 = sbr.rel (0) target = $region9
  $region8: #{ss2d_forward.4} parent=0 // pred_region
    _
  $region9: #{ss2d_forward.4} parent=0 // pred_fallthru
    _
  // Predicated region
  $region10: #{ss2d_forward.4} parent=0 // pred_check
    _
  $region11: #{ss2d_forward.4} parent=0 // pred_check_branch
    %16 = sbr.rel (0) target = $region13
  $region12: #{ss2d_forward.4} parent=0 // pred_region
    _
  $region13: #{ss2d_forward.4} parent=0 // pred_fallthru
    _
  // Predicated region
  $region14: #{ss2d_forward.4} parent=0 // pred_check
    _
  $region15: #{ss2d_forward.4} parent=0 // pred_check_branch
    %18 = sbr.rel (0) target = $region17
  $region16: #{ss2d_forward.4} parent=0 // pred_region
    _
  $region17: #{ss2d_forward.4} parent=0 // pred_fallthru
    _
  // Predicated region
  $region18: #{ss2d_forward.4} parent=0 // pred_check
    _
  $region19: #{ss2d_forward.4} parent=0 // pred_check_branch
    %20 = sbr.rel (0) target = $region21
  $region20: #{ss2d_forward.4} parent=0 // pred_region
    _
  $region21: #{ss2d_forward.4} parent=0 // pred_fallthru
    _
  // Predicated region
  $region22: #{ss2d_forward.4} parent=0 // pred_check
    _
  $region23: #{ss2d_forward.4} parent=0 // pred_check_branch
    %22 = sbr.rel (0) target = $region25
  $region24: #{ss2d_forward.4} parent=0 // pred_region
    _
  $region25: #{ss2d_forward.4} parent=0 // pred_fallthru
    _
  %v23 = vld [vmem:[%s0] sm:$0xff]
  %v24 = vld [vmem:[%s0 + $0x8] sm:$0xff]
  %v25 = vld [vmem:[%s0 + $0x10] sm:$0xff]
  %v26 = vld [vmem:[%s0 + $0x18] sm:$0xff]
  %v27 = vld [vmem:[%s0 + $0x20] sm:$0xff]
  %v28 = vld [vmem:[%s0 + $0x28] sm:$0xff]
  %v29 = vld [vmem:[%s0 + $0x30] sm:$0xff]
  %v30 = vld [vmem:[%s0 + $0x38] sm:$0xff]
  %v31 = vld [vmem:[%s0 + $0x40] sm:$0xff]
  %v32 = vld [vmem:[%s0 + $0x48] sm:$0xff]
  %v33 = vld [vmem:[%s0 + $0x50] sm:$0xff]
  %v34 = vld [vmem:[%s0 + $0x58] sm:$0xff]
  %v35 = vld [vmem:[%s0 + $0x60] sm:$0xff]
  %v36 = vld [vmem:[%s0 + $0x68] sm:$0xff]
  %v37 = vld [vmem:[%s0 + $0x70] sm:$0xff]
  %v38 = vld [vmem:[%s0 + $0x78] sm:$0xff]
  %v39 = vld [vmem:[%s0 + $0x80] sm:$0xff]
  %v40 = vld [vmem:[%s0 + $0x88] sm:$0xff]
  %v41 = vld [vmem:[%s0 + $0x90] sm:$0xff]
  %v42 = vld [vmem:[%s0 + $0x98] sm:$0xff]
  %v43 = vld [vmem:[%s0 + $0xa0] sm:$0xff]
  %v44 = vld [vmem:[%s0 + $0xa8] sm:$0xff]
  %v45 = vld [vmem:[%s0 + $0xb0] sm:$0xff]
  %v46 = vld [vmem:[%s0 + $0xb8] sm:$0xff]
  %v47 = vld [vmem:[%s0 + $0xc0] sm:$0xff]
  %v48 = vld [vmem:[%s0 + $0xc8] sm:$0xff]
  %v49 = vld [vmem:[%s0 + $0xd0] sm:$0xff]
  %v50 = vld [vmem:[%s0 + $0xd8] sm:$0xff]
  %v51 = vld [vmem:[%s0 + $0xe0] sm:$0xff]
  %v52 = vld [vmem:[%s0 + $0xe8] sm:$0xff]
  %v53 = vld [vmem:[%s0 + $0xf0] sm:$0xff]
  %v54 = vld [vmem:[%s0 + $0xf8] sm:$0xff]
  %v55 = vld [vmem:[%s1] sm:$0xff]
  %v56 = vld [vmem:[%s1 + $0x8] sm:$0xff]
  %v57 = vld [vmem:[%s1 + $0x10] sm:$0xff]
  %v58 = vld [vmem:[%s1 + $0x18] sm:$0xff]
  %v59 = vld [vmem:[%s1 + $0x20] sm:$0xff]
  %v60 = vld [vmem:[%s1 + $0x28] sm:$0xff]
  %v61 = vld [vmem:[%s1 + $0x30] sm:$0xff]
  %v62 = vld [vmem:[%s1 + $0x38] sm:$0xff]
  %v63 = vld [vmem:[%s2] sm:$0x1]
  %v65 = vperm.slane %v63, 0
  %vm67 = vcmask 523264
  %v69 = vsel %vm67, %v23, 0
  %v72 = vsel %vm67, %v24, 0
  %v75 = vsel %vm67, %v25, 0
  %v78 = vsel %vm67, %v26, 0
  %v81 = vsel %vm67, %v27, 0
  %v84 = vsel %vm67, %v28, 0
  %v87 = vsel %vm67, %v29, 0
  %v90 = vsel %vm67, %v30, 0
  %v93 = vsel %vm67, %v31, 0
  %v96 = vsel %vm67, %v32, 0
  %v99 = vsel %vm67, %v33, 0
  %v102 = vsel %vm67, %v34, 0
  %v105 = vsel %vm67, %v35, 0
  %v108 = vsel %vm67, %v36, 0
  %v111 = vsel %vm67, %v37, 0
  %v114 = vsel %vm67, %v38, 0
  %v117 = vsel %vm67, %v39, 0
  %v120 = vsel %vm67, %v40, 0
  %v123 = vsel %vm67, %v41, 0
  %v126 = vsel %vm67, %v42, 0
  %v129 = vsel %vm67, %v43, 0
  %v132 = vsel %vm67, %v44, 0
  %v135 = vsel %vm67, %v45, 0
  %v138 = vsel %vm67, %v46, 0
  %v141 = vsel %vm67, %v47, 0
  %v144 = vsel %vm67, %v48, 0
  %v147 = vsel %vm67, %v49, 0
  %v150 = vsel %vm67, %v50, 0
  %v153 = vsel %vm67, %v51, 0
  %v156 = vsel %vm67, %v52, 0
  %v159 = vsel %vm67, %v53, 0
  %v162 = vsel %vm67, %v54, 0
  %164 = vmatpush.msra.mxu0 0.0
  %165 = vmatpush.msra.mxu0 0.0
  %166 = vmatpush.msra.mxu0 0.0
  %167 = vmatpush.msra.mxu0 0.0
  %168 = vmatpush.msra.mxu0 0.0
  %169 = vmatpush.msra.mxu0 0.0
  %170 = vmatpush.msra.mxu0 0.0
  %171 = vmatpush.msra.mxu0 0.0
  %172 = vmatpush.msra.mxu0 %v62
  %173 = vmatpush.msra.mxu0 %v61
  %174 = vmatpush.msra.mxu0 %v60
  %175 = vmatpush.msra.mxu0 %v59
  %176 = vmatpush.msra.mxu0 %v58
  %177 = vmatpush.msra.mxu0 %v57
  %178 = vmatpush.msra.mxu0 %v56
  %179 = vmatpush.msra.mxu0 %v55
  %180 = vmatmul.f32.gmra.mxu0 %v69
  %v181 = vpop.f32.mrf.mxu0
  %v182 = vadd.f32 %v65, %v181
  %183 = vmatmul.f32.gmra.mxu0 %v72
  %v184 = vpop.f32.mrf.mxu0
  %v185 = vadd.f32 %v65, %v184
  %186 = vmatmul.f32.gmra.mxu0 %v75
  %v187 = vpop.f32.mrf.mxu0
  %v188 = vadd.f32 %v65, %v187
  %189 = vmatmul.f32.gmra.mxu0 %v78
  %v190 = vpop.f32.mrf.mxu0
  %v191 = vadd.f32 %v65, %v190
  %192 = vmatmul.f32.gmra.mxu0 %v81
  %v193 = vpop.f32.mrf.mxu0
  %v194 = vadd.f32 %v65, %v193
  %195 = vmatmul.f32.gmra.mxu0 %v84
  %v196 = vpop.f32.mrf.mxu0
  %v197 = vadd.f32 %v65, %v196
  %198 = vmatmul.f32.gmra.mxu0 %v87
  %v199 = vpop.f32.mrf.mxu0
  %v200 = vadd.f32 %v65, %v199
  %201 = vmatmul.f32.gmra.mxu0 %v90
  %v202 = vpop.f32.mrf.mxu0
  %v203 = vadd.f32 %v65, %v202
  %204 = vmatmul.f32.gmra.mxu0 %v93
  %v205 = vpop.f32.mrf.mxu0
  %v206 = vadd.f32 %v65, %v205
  %207 = vmatmul.f32.gmra.mxu0 %v96
  %v208 = vpop.f32.mrf.mxu0
  %v209 = vadd.f32 %v65, %v208
  %210 = vmatmul.f32.gmra.mxu0 %v99
  %v211 = vpop.f32.mrf.mxu0
  %v212 = vadd.f32 %v65, %v211
  %213 = vmatmul.f32.gmra.mxu0 %v102
  %v214 = vpop.f32.mrf.mxu0
  %v215 = vadd.f32 %v65, %v214
  %216 = vmatmul.f32.gmra.mxu0 %v105
  %v217 = vpop.f32.mrf.mxu0
  %v218 = vadd.f32 %v65, %v217
  %219 = vmatmul.f32.gmra.mxu0 %v108
  %v220 = vpop.f32.mrf.mxu0
  %v221 = vadd.f32 %v65, %v220
  %222 = vmatmul.f32.gmra.mxu0 %v111
  %v223 = vpop.f32.mrf.mxu0
  %v224 = vadd.f32 %v65, %v223
  %225 = vmatmul.f32.gmra.mxu0 %v114
  %v226 = vpop.f32.mrf.mxu0
  %v227 = vadd.f32 %v65, %v226
  %228 = vmatmul.f32.gmra.mxu0 %v117
  %v229 = vpop.f32.mrf.mxu0
  %v230 = vadd.f32 %v65, %v229
  %231 = vmatmul.f32.gmra.mxu0 %v120
  %v232 = vpop.f32.mrf.mxu0
  %v233 = vadd.f32 %v65, %v232
  %234 = vmatmul.f32.gmra.mxu0 %v123
  %v235 = vpop.f32.mrf.mxu0
  %v236 = vadd.f32 %v65, %v235
  %237 = vmatmul.f32.gmra.mxu0 %v126
  %v238 = vpop.f32.mrf.mxu0
  %v239 = vadd.f32 %v65, %v238
  %240 = vmatmul.f32.gmra.mxu0 %v129
  %v241 = vpop.f32.mrf.mxu0
  %v242 = vadd.f32 %v65, %v241
  %243 = vmatmul.f32.gmra.mxu0 %v132
  %v244 = vpop.f32.mrf.mxu0
  %v245 = vadd.f32 %v65, %v244
  %246 = vmatmul.f32.gmra.mxu0 %v135
  %v247 = vpop.f32.mrf.mxu0
  %v248 = vadd.f32 %v65, %v247
  %249 = vmatmul.f32.gmra.mxu0 %v138
  %v250 = vpop.f32.mrf.mxu0
  %v251 = vadd.f32 %v65, %v250
  %252 = vmatmul.f32.gmra.mxu0 %v141
  %v253 = vpop.f32.mrf.mxu0
  %v254 = vadd.f32 %v65, %v253
  %255 = vmatmul.f32.gmra.mxu0 %v144
  %v256 = vpop.f32.mrf.mxu0
  %v257 = vadd.f32 %v65, %v256
  %258 = vmatmul.f32.gmra.mxu0 %v147
  %v259 = vpop.f32.mrf.mxu0
  %v260 = vadd.f32 %v65, %v259
  %261 = vmatmul.f32.gmra.mxu0 %v150
  %v262 = vpop.f32.mrf.mxu0
  %v263 = vadd.f32 %v65, %v262
  %264 = vmatmul.f32.gmra.mxu0 %v153
  %v265 = vpop.f32.mrf.mxu0
  %v266 = vadd.f32 %v65, %v265
  %267 = vmatmul.f32.gmra.mxu0 %v156
  %v268 = vpop.f32.mrf.mxu0
  %v269 = vadd.f32 %v65, %v268
  %270 = vmatmul.f32.gmra.mxu0 %v159
  %v271 = vpop.f32.mrf.mxu0
  %v272 = vadd.f32 %v65, %v271
  %273 = vmatmul.f32.gmra.mxu0 %v162
  %v274 = vpop.f32.mrf.mxu0
  %v275 = vadd.f32 %v65, %v274
  %276 = vdwg.mxu0
  %v277 = vmax.f32 %v182, 0.0
  %v278 = vmax.f32 %v185, 0.0
  %v279 = vmax.f32 %v188, 0.0
  %v280 = vmax.f32 %v191, 0.0
  %v281 = vmax.f32 %v194, 0.0
  %v282 = vmax.f32 %v197, 0.0
  %v283 = vmax.f32 %v200, 0.0
  %v284 = vmax.f32 %v203, 0.0
  %v285 = vmax.f32 %v206, 0.0
  %v286 = vmax.f32 %v209, 0.0
  %v287 = vmax.f32 %v212, 0.0
  %v288 = vmax.f32 %v215, 0.0
  %v289 = vmax.f32 %v218, 0.0
  %v290 = vmax.f32 %v221, 0.0
  %v291 = vmax.f32 %v224, 0.0
  %v292 = vmax.f32 %v227, 0.0
  %v293 = vmax.f32 %v230, 0.0
  %v294 = vmax.f32 %v233, 0.0
  %v295 = vmax.f32 %v236, 0.0
  %v296 = vmax.f32 %v239, 0.0
  %v297 = vmax.f32 %v242, 0.0
  %v298 = vmax.f32 %v245, 0.0
  %v299 = vmax.f32 %v248, 0.0
  %v300 = vmax.f32 %v251, 0.0
  %v301 = vmax.f32 %v254, 0.0
  %v302 = vmax.f32 %v257, 0.0
  %v303 = vmax.f32 %v260, 0.0
  %v304 = vmax.f32 %v263, 0.0
  %v305 = vmax.f32 %v266, 0.0
  %v306 = vmax.f32 %v269, 0.0
  %v307 = vmax.f32 %v272, 0.0
  %v308 = vmax.f32 %v275, 0.0
  %v309 = vand.u32 2147483647, %v182
  %v310 = vand.u32 2147483647, %v185
  %v311 = vand.u32 2147483647, %v188
  %v312 = vand.u32 2147483647, %v191
  %v313 = vand.u32 2147483647, %v194
  %v314 = vand.u32 2147483647, %v197
  %v315 = vand.u32 2147483647, %v200
  %v316 = vand.u32 2147483647, %v203
  %v317 = vand.u32 2147483647, %v206
  %v318 = vand.u32 2147483647, %v209
  %v319 = vand.u32 2147483647, %v212
  %v320 = vand.u32 2147483647, %v215
  %v321 = vand.u32 2147483647, %v218
  %v322 = vand.u32 2147483647, %v221
  %v323 = vand.u32 2147483647, %v224
  %v324 = vand.u32 2147483647, %v227
  %v325 = vand.u32 2147483647, %v230
  %v326 = vand.u32 2147483647, %v233
  %v327 = vand.u32 2147483647, %v236
  %v328 = vand.u32 2147483647, %v239
  %v329 = vand.u32 2147483647, %v242
  %v330 = vand.u32 2147483647, %v245
  %v331 = vand.u32 2147483647, %v248
  %v332 = vand.u32 2147483647, %v251
  %v333 = vand.u32 2147483647, %v254
  %v334 = vand.u32 2147483647, %v257
  %v335 = vand.u32 2147483647, %v260
  %v336 = vand.u32 2147483647, %v263
  %v337 = vand.u32 2147483647, %v266
  %v338 = vand.u32 2147483647, %v269
  %v339 = vand.u32 2147483647, %v272
  %v340 = vand.u32 2147483647, %v275
  %v341 = vsub.f32 0.0, %v309
  %v342 = vsub.f32 0.0, %v310
  %v343 = vsub.f32 0.0, %v311
  %v344 = vsub.f32 0.0, %v312
  %v345 = vsub.f32 0.0, %v313
  %v346 = vsub.f32 0.0, %v314
  %v347 = vsub.f32 0.0, %v315
  %v348 = vsub.f32 0.0, %v316
  %v349 = vsub.f32 0.0, %v317
  %v350 = vsub.f32 0.0, %v318
  %v351 = vsub.f32 0.0, %v319
  %v352 = vsub.f32 0.0, %v320
  %v353 = vsub.f32 0.0, %v321
  %v354 = vsub.f32 0.0, %v322
  %v355 = vsub.f32 0.0, %v323
  %v356 = vsub.f32 0.0, %v324
  %v357 = vsub.f32 0.0, %v325
  %v358 = vsub.f32 0.0, %v326
  %v359 = vsub.f32 0.0, %v327
  %v360 = vsub.f32 0.0, %v328
  %v361 = vsub.f32 0.0, %v329
  %v362 = vsub.f32 0.0, %v330
  %v363 = vsub.f32 0.0, %v331
  %v364 = vsub.f32 0.0, %v332
  %v365 = vsub.f32 0.0, %v333
  %v366 = vsub.f32 0.0, %v334
  %v367 = vsub.f32 0.0, %v335
  %v368 = vsub.f32 0.0, %v336
  %v369 = vsub.f32 0.0, %v337
  %v370 = vsub.f32 0.0, %v338
  %v371 = vsub.f32 0.0, %v339
  %v372 = vsub.f32 0.0, %v340
  %v373 = vmul.f32 %v341, 1.442695
  %v374 = vpow.pop %v373
  %v375 = vmul.f32 %v342, 1.442695
  %v376 = vpow.pop %v375
  %v377 = vmul.f32 %v343, 1.442695
  %v378 = vpow.pop %v377
  %v379 = vmul.f32 %v344, 1.442695
  %v380 = vpow.pop %v379
  %v381 = vmul.f32 %v345, 1.442695
  %v382 = vpow.pop %v381
  %v383 = vmul.f32 %v346, 1.442695
  %v384 = vpow.pop %v383
  %v385 = vmul.f32 %v347, 1.442695
  %v386 = vpow.pop %v385
  %v387 = vmul.f32 %v348, 1.442695
  %v388 = vpow.pop %v387
  %v389 = vmul.f32 %v349, 1.442695
  %v390 = vpow.pop %v389
  %v391 = vmul.f32 %v350, 1.442695
  %v392 = vpow.pop %v391
  %v393 = vmul.f32 %v351, 1.442695
  %v394 = vpow.pop %v393
  %v395 = vmul.f32 %v352, 1.442695
  %v396 = vpow.pop %v395
  %v397 = vmul.f32 %v353, 1.442695
  %v398 = vpow.pop %v397
  %v399 = vmul.f32 %v354, 1.442695
  %v400 = vpow.pop %v399
  %v401 = vmul.f32 %v355, 1.442695
  %v402 = vpow.pop %v401
  %v403 = vmul.f32 %v356, 1.442695
  %v404 = vpow.pop %v403
  %v405 = vmul.f32 %v357, 1.442695
  %v406 = vpow.pop %v405
  %v407 = vmul.f32 %v358, 1.442695
  %v408 = vpow.pop %v407
  %v409 = vmul.f32 %v359, 1.442695
  %v410 = vpow.pop %v409
  %v411 = vmul.f32 %v360, 1.442695
  %v412 = vpow.pop %v411
  %v413 = vmul.f32 %v361, 1.442695
  %v414 = vpow.pop %v413
  %v415 = vmul.f32 %v362, 1.442695
  %v416 = vpow.pop %v415
  %v417 = vmul.f32 %v363, 1.442695
  %v418 = vpow.pop %v417
  %v419 = vmul.f32 %v364, 1.442695
  %v420 = vpow.pop %v419
  %v421 = vmul.f32 %v365, 1.442695
  %v422 = vpow.pop %v421
  %v423 = vmul.f32 %v366, 1.442695
  %v424 = vpow.pop %v423
  %v425 = vmul.f32 %v367, 1.442695
  %v426 = vpow.pop %v425
  %v427 = vmul.f32 %v368, 1.442695
  %v428 = vpow.pop %v427
  %v429 = vmul.f32 %v369, 1.442695
  %v430 = vpow.pop %v429
  %v431 = vmul.f32 %v370, 1.442695
  %v432 = vpow.pop %v431
  %v433 = vmul.f32 %v371, 1.442695
  %v434 = vpow.pop %v433
  %v435 = vmul.f32 %v372, 1.442695
  %v436 = vpow.pop %v435
  %v437 = vadd.f32 %v374, 1.0
  %v438 = vlog2.pop %v437
  %v439 = vmul.f32 %v438, 0.6931472
  %v440 = vmul.f32 -0.5, %v374
  %v441 = vadd.f32 %v440, 1.0
  %v442 = vmul.f32 %v441, %v374
  %v443 = vand.u32 2147483647, %v374
  %vm444 = vcmp.lt.f32.partialorder %v443, 0.0004427343
  %v445 = vsel %vm444, %v442, %v439
  %v446 = vadd.f32 %v376, 1.0
  %v447 = vlog2.pop %v446
  %v448 = vmul.f32 %v447, 0.6931472
  %v449 = vmul.f32 -0.5, %v376
  %v450 = vadd.f32 %v449, 1.0
  %v451 = vmul.f32 %v450, %v376
  %v452 = vand.u32 2147483647, %v376
  %vm453 = vcmp.lt.f32.partialorder %v452, 0.0004427343
  %v454 = vsel %vm453, %v451, %v448
  %v455 = vadd.f32 %v378, 1.0
  %v456 = vlog2.pop %v455
  %v457 = vmul.f32 %v456, 0.6931472
  %v458 = vmul.f32 -0.5, %v378
  %v459 = vadd.f32 %v458, 1.0
  %v460 = vmul.f32 %v459, %v378
  %v461 = vand.u32 2147483647, %v378
  %vm462 = vcmp.lt.f32.partialorder %v461, 0.0004427343
  %v463 = vsel %vm462, %v460, %v457
  %v464 = vadd.f32 %v380, 1.0
  %v465 = vlog2.pop %v464
  %v466 = vmul.f32 %v465, 0.6931472
  %v467 = vmul.f32 -0.5, %v380
  %v468 = vadd.f32 %v467, 1.0
  %v469 = vmul.f32 %v468, %v380
  %v470 = vand.u32 2147483647, %v380
  %vm471 = vcmp.lt.f32.partialorder %v470, 0.0004427343
  %v472 = vsel %vm471, %v469, %v466
  %v473 = vadd.f32 %v382, 1.0
  %v474 = vlog2.pop %v473
  %v475 = vmul.f32 %v474, 0.6931472
  %v476 = vmul.f32 -0.5, %v382
  %v477 = vadd.f32 %v476, 1.0
  %v478 = vmul.f32 %v477, %v382
  %v479 = vand.u32 2147483647, %v382
  %vm480 = vcmp.lt.f32.partialorder %v479, 0.0004427343
  %v481 = vsel %vm480, %v478, %v475
  %v482 = vadd.f32 %v384, 1.0
  %v483 = vlog2.pop %v482
  %v484 = vmul.f32 %v483, 0.6931472
  %v485 = vmul.f32 -0.5, %v384
  %v486 = vadd.f32 %v485, 1.0
  %v487 = vmul.f32 %v486, %v384
  %v488 = vand.u32 2147483647, %v384
  %vm489 = vcmp.lt.f32.partialorder %v488, 0.0004427343
  %v490 = vsel %vm489, %v487, %v484
  %v491 = vadd.f32 %v386, 1.0
  %v492 = vlog2.pop %v491
  %v493 = vmul.f32 %v492, 0.6931472
  %v494 = vmul.f32 -0.5, %v386
  %v495 = vadd.f32 %v494, 1.0
  %v496 = vmul.f32 %v495, %v386
  %v497 = vand.u32 2147483647, %v386
  %vm498 = vcmp.lt.f32.partialorder %v497, 0.0004427343
  %v499 = vsel %vm498, %v496, %v493
  %v500 = vadd.f32 %v388, 1.0
  %v501 = vlog2.pop %v500
  %v502 = vmul.f32 %v501, 0.6931472
  %v503 = vmul.f32 -0.5, %v388
  %v504 = vadd.f32 %v503, 1.0
  %v505 = vmul.f32 %v504, %v388
  %v506 = vand.u32 2147483647, %v388
  %vm507 = vcmp.lt.f32.partialorder %v506, 0.0004427343
  %v508 = vsel %vm507, %v505, %v502
  %v509 = vadd.f32 %v390, 1.0
  %v510 = vlog2.pop %v509
  %v511 = vmul.f32 %v510, 0.6931472
  %v512 = vmul.f32 -0.5, %v390
  %v513 = vadd.f32 %v512, 1.0
  %v514 = vmul.f32 %v513, %v390
  %v515 = vand.u32 2147483647, %v390
  %vm516 = vcmp.lt.f32.partialorder %v515, 0.0004427343
  %v517 = vsel %vm516, %v514, %v511
  %v518 = vadd.f32 %v392, 1.0
  %v519 = vlog2.pop %v518
  %v520 = vmul.f32 %v519, 0.6931472
  %v521 = vmul.f32 -0.5, %v392
  %v522 = vadd.f32 %v521, 1.0
  %v523 = vmul.f32 %v522, %v392
  %v524 = vand.u32 2147483647, %v392
  %vm525 = vcmp.lt.f32.partialorder %v524, 0.0004427343
  %v526 = vsel %vm525, %v523, %v520
  %v527 = vadd.f32 %v394, 1.0
  %v528 = vlog2.pop %v527
  %v529 = vmul.f32 %v528, 0.6931472
  %v530 = vmul.f32 -0.5, %v394
  %v531 = vadd.f32 %v530, 1.0
  %v532 = vmul.f32 %v531, %v394
  %v533 = vand.u32 2147483647, %v394
  %vm534 = vcmp.lt.f32.partialorder %v533, 0.0004427343
  %v535 = vsel %vm534, %v532, %v529
  %v536 = vadd.f32 %v396, 1.0
  %v537 = vlog2.pop %v536
  %v538 = vmul.f32 %v537, 0.6931472
  %v539 = vmul.f32 -0.5, %v396
  %v540 = vadd.f32 %v539, 1.0
  %v541 = vmul.f32 %v540, %v396
  %v542 = vand.u32 2147483647, %v396
  %vm543 = vcmp.lt.f32.partialorder %v542, 0.0004427343
  %v544 = vsel %vm543, %v541, %v538
  %v545 = vadd.f32 %v398, 1.0
  %v546 = vlog2.pop %v545
  %v547 = vmul.f32 %v546, 0.6931472
  %v548 = vmul.f32 -0.5, %v398
  %v549 = vadd.f32 %v548, 1.0
  %v550 = vmul.f32 %v549, %v398
  %v551 = vand.u32 2147483647, %v398
  %vm552 = vcmp.lt.f32.partialorder %v551, 0.0004427343
  %v553 = vsel %vm552, %v550, %v547
  %v554 = vadd.f32 %v400, 1.0
  %v555 = vlog2.pop %v554
  %v556 = vmul.f32 %v555, 0.6931472
  %v557 = vmul.f32 -0.5, %v400
  %v558 = vadd.f32 %v557, 1.0
  %v559 = vmul.f32 %v558, %v400
  %v560 = vand.u32 2147483647, %v400
  %vm561 = vcmp.lt.f32.partialorder %v560, 0.0004427343
  %v562 = vsel %vm561, %v559, %v556
  %v563 = vadd.f32 %v402, 1.0
  %v564 = vlog2.pop %v563
  %v565 = vmul.f32 %v564, 0.6931472
  %v566 = vmul.f32 -0.5, %v402
  %v567 = vadd.f32 %v566, 1.0
  %v568 = vmul.f32 %v567, %v402
  %v569 = vand.u32 2147483647, %v402
  %vm570 = vcmp.lt.f32.partialorder %v569, 0.0004427343
  %v571 = vsel %vm570, %v568, %v565
  %v572 = vadd.f32 %v404, 1.0
  %v573 = vlog2.pop %v572
  %v574 = vmul.f32 %v573, 0.6931472
  %v575 = vmul.f32 -0.5, %v404
  %v576 = vadd.f32 %v575, 1.0
  %v577 = vmul.f32 %v576, %v404
  %v578 = vand.u32 2147483647, %v404
  %vm579 = vcmp.lt.f32.partialorder %v578, 0.0004427343
  %v580 = vsel %vm579, %v577, %v574
  %v581 = vadd.f32 %v406, 1.0
  %v582 = vlog2.pop %v581
  %v583 = vmul.f32 %v582, 0.6931472
  %v584 = vmul.f32 -0.5, %v406
  %v585 = vadd.f32 %v584, 1.0
  %v586 = vmul.f32 %v585, %v406
  %v587 = vand.u32 2147483647, %v406
  %vm588 = vcmp.lt.f32.partialorder %v587, 0.0004427343
  %v589 = vsel %vm588, %v586, %v583
  %v590 = vadd.f32 %v408, 1.0
  %v591 = vlog2.pop %v590
  %v592 = vmul.f32 %v591, 0.6931472
  %v593 = vmul.f32 -0.5, %v408
  %v594 = vadd.f32 %v593, 1.0
  %v595 = vmul.f32 %v594, %v408
  %v596 = vand.u32 2147483647, %v408
  %vm597 = vcmp.lt.f32.partialorder %v596, 0.0004427343
  %v598 = vsel %vm597, %v595, %v592
  %v599 = vadd.f32 %v410, 1.0
  %v600 = vlog2.pop %v599
  %v601 = vmul.f32 %v600, 0.6931472
  %v602 = vmul.f32 -0.5, %v410
  %v603 = vadd.f32 %v602, 1.0
  %v604 = vmul.f32 %v603, %v410
  %v605 = vand.u32 2147483647, %v410
  %vm606 = vcmp.lt.f32.partialorder %v605, 0.0004427343
  %v607 = vsel %vm606, %v604, %v601
  %v608 = vadd.f32 %v412, 1.0
  %v609 = vlog2.pop %v608
  %v610 = vmul.f32 %v609, 0.6931472
  %v611 = vmul.f32 -0.5, %v412
  %v612 = vadd.f32 %v611, 1.0
  %v613 = vmul.f32 %v612, %v412
  %v614 = vand.u32 2147483647, %v412
  %vm615 = vcmp.lt.f32.partialorder %v614, 0.0004427343
  %v616 = vsel %vm615, %v613, %v610
  %v617 = vadd.f32 %v414, 1.0
  %v618 = vlog2.pop %v617
  %v619 = vmul.f32 %v618, 0.6931472
  %v620 = vmul.f32 -0.5, %v414
  %v621 = vadd.f32 %v620, 1.0
  %v622 = vmul.f32 %v621, %v414
  %v623 = vand.u32 2147483647, %v414
  %vm624 = vcmp.lt.f32.partialorder %v623, 0.0004427343
  %v625 = vsel %vm624, %v622, %v619
  %v626 = vadd.f32 %v416, 1.0
  %v627 = vlog2.pop %v626
  %v628 = vmul.f32 %v627, 0.6931472
  %v629 = vmul.f32 -0.5, %v416
  %v630 = vadd.f32 %v629, 1.0
  %v631 = vmul.f32 %v630, %v416
  %v632 = vand.u32 2147483647, %v416
  %vm633 = vcmp.lt.f32.partialorder %v632, 0.0004427343
  %v634 = vsel %vm633, %v631, %v628
  %v635 = vadd.f32 %v418, 1.0
  %v636 = vlog2.pop %v635
  %v637 = vmul.f32 %v636, 0.6931472
  %v638 = vmul.f32 -0.5, %v418
  %v639 = vadd.f32 %v638, 1.0
  %v640 = vmul.f32 %v639, %v418
  %v641 = vand.u32 2147483647, %v418
  %vm642 = vcmp.lt.f32.partialorder %v641, 0.0004427343
  %v643 = vsel %vm642, %v640, %v637
  %v644 = vadd.f32 %v420, 1.0
  %v645 = vlog2.pop %v644
  %v646 = vmul.f32 %v645, 0.6931472
  %v647 = vmul.f32 -0.5, %v420
  %v648 = vadd.f32 %v647, 1.0
  %v649 = vmul.f32 %v648, %v420
  %v650 = vand.u32 2147483647, %v420
  %vm651 = vcmp.lt.f32.partialorder %v650, 0.0004427343
  %v652 = vsel %vm651, %v649, %v646
  %v653 = vadd.f32 %v422, 1.0
  %v654 = vlog2.pop %v653
  %v655 = vmul.f32 %v654, 0.6931472
  %v656 = vmul.f32 -0.5, %v422
  %v657 = vadd.f32 %v656, 1.0
  %v658 = vmul.f32 %v657, %v422
  %v659 = vand.u32 2147483647, %v422
  %vm660 = vcmp.lt.f32.partialorder %v659, 0.0004427343
  %v661 = vsel %vm660, %v658, %v655
  %v662 = vadd.f32 %v424, 1.0
  %v663 = vlog2.pop %v662
  %v664 = vmul.f32 %v663, 0.6931472
  %v665 = vmul.f32 -0.5, %v424
  %v666 = vadd.f32 %v665, 1.0
  %v667 = vmul.f32 %v666, %v424
  %v668 = vand.u32 2147483647, %v424
  %vm669 = vcmp.lt.f32.partialorder %v668, 0.0004427343
  %v670 = vsel %vm669, %v667, %v664
  %v671 = vadd.f32 %v426, 1.0
  %v672 = vlog2.pop %v671
  %v673 = vmul.f32 %v672, 0.6931472
  %v674 = vmul.f32 -0.5, %v426
  %v675 = vadd.f32 %v674, 1.0
  %v676 = vmul.f32 %v675, %v426
  %v677 = vand.u32 2147483647, %v426
  %vm678 = vcmp.lt.f32.partialorder %v677, 0.0004427343
  %v679 = vsel %vm678, %v676, %v673
  %v680 = vadd.f32 %v428, 1.0
  %v681 = vlog2.pop %v680
  %v682 = vmul.f32 %v681, 0.6931472
  %v683 = vmul.f32 -0.5, %v428
  %v684 = vadd.f32 %v683, 1.0
  %v685 = vmul.f32 %v684, %v428
  %v686 = vand.u32 2147483647, %v428
  %vm687 = vcmp.lt.f32.partialorder %v686, 0.0004427343
  %v688 = vsel %vm687, %v685, %v682
  %v689 = vadd.f32 %v430, 1.0
  %v690 = vlog2.pop %v689
  %v691 = vmul.f32 %v690, 0.6931472
  %v692 = vmul.f32 -0.5, %v430
  %v693 = vadd.f32 %v692, 1.0
  %v694 = vmul.f32 %v693, %v430
  %v695 = vand.u32 2147483647, %v430
  %vm696 = vcmp.lt.f32.partialorder %v695, 0.0004427343
  %v697 = vsel %vm696, %v694, %v691
  %v698 = vadd.f32 %v432, 1.0
  %v699 = vlog2.pop %v698
  %v700 = vmul.f32 %v699, 0.6931472
  %v701 = vmul.f32 -0.5, %v432
  %v702 = vadd.f32 %v701, 1.0
  %v703 = vmul.f32 %v702, %v432
  %v704 = vand.u32 2147483647, %v432
  %vm705 = vcmp.lt.f32.partialorder %v704, 0.0004427343
  %v706 = vsel %vm705, %v703, %v700
  %v707 = vadd.f32 %v434, 1.0
  %v708 = vlog2.pop %v707
  %v709 = vmul.f32 %v708, 0.6931472
  %v710 = vmul.f32 -0.5, %v434
  %v711 = vadd.f32 %v710, 1.0
  %v712 = vmul.f32 %v711, %v434
  %v713 = vand.u32 2147483647, %v434
  %vm714 = vcmp.lt.f32.partialorder %v713, 0.0004427343
  %v715 = vsel %vm714, %v712, %v709
  %v716 = vadd.f32 %v436, 1.0
  %v717 = vlog2.pop %v716
  %v718 = vmul.f32 %v717, 0.6931472
  %v719 = vmul.f32 -0.5, %v436
  %v720 = vadd.f32 %v719, 1.0
  %v721 = vmul.f32 %v720, %v436
  %v722 = vand.u32 2147483647, %v436
  %vm723 = vcmp.lt.f32.partialorder %v722, 0.0004427343
  %v724 = vsel %vm723, %v721, %v718
  %v725 = vadd.f32 %v277, %v445
  %v726 = vadd.f32 %v278, %v454
  %v727 = vadd.f32 %v279, %v463
  %v728 = vadd.f32 %v280, %v472
  %v729 = vadd.f32 %v281, %v481
  %v730 = vadd.f32 %v282, %v490
  %v731 = vadd.f32 %v283, %v499
  %v732 = vadd.f32 %v284, %v508
  %v733 = vadd.f32 %v285, %v517
  %v734 = vadd.f32 %v286, %v526
  %v735 = vadd.f32 %v287, %v535
  %v736 = vadd.f32 %v288, %v544
  %v737 = vadd.f32 %v289, %v553
  %v738 = vadd.f32 %v290, %v562
  %v739 = vadd.f32 %v291, %v571
  %v740 = vadd.f32 %v292, %v580
  %v741 = vadd.f32 %v293, %v589
  %v742 = vadd.f32 %v294, %v598
  %v743 = vadd.f32 %v295, %v607
  %v744 = vadd.f32 %v296, %v616
  %v745 = vadd.f32 %v297, %v625
  %v746 = vadd.f32 %v298, %v634
  %v747 = vadd.f32 %v299, %v643
  %v748 = vadd.f32 %v300, %v652
  %v749 = vadd.f32 %v301, %v661
  %v750 = vadd.f32 %v302, %v670
  %v751 = vadd.f32 %v303, %v679
  %v752 = vadd.f32 %v304, %v688
  %v753 = vadd.f32 %v305, %v697
  %v754 = vadd.f32 %v306, %v706
  %v755 = vadd.f32 %v307, %v715
  %v756 = vadd.f32 %v308, %v724
  %v757 = vmul.f32 %v725, %v23
  %v758 = vmul.f32 %v726, %v24
  %v759 = vmul.f32 %v727, %v25
  %v760 = vmul.f32 %v728, %v26
  %v761 = vmul.f32 %v729, %v27
  %v762 = vmul.f32 %v730, %v28
  %v763 = vmul.f32 %v731, %v29
  %v764 = vmul.f32 %v732, %v30
  %v765 = vmul.f32 %v733, %v31
  %v766 = vmul.f32 %v734, %v32
  %v767 = vmul.f32 %v735, %v33
  %v768 = vmul.f32 %v736, %v34
  %v769 = vmul.f32 %v737, %v35
  %v770 = vmul.f32 %v738, %v36
  %v771 = vmul.f32 %v739, %v37
  %v772 = vmul.f32 %v740, %v38
  %v773 = vmul.f32 %v741, %v39
  %v774 = vmul.f32 %v742, %v40
  %v775 = vmul.f32 %v743, %v41
  %v776 = vmul.f32 %v744, %v42
  %v777 = vmul.f32 %v745, %v43
  %v778 = vmul.f32 %v746, %v44
  %v779 = vmul.f32 %v747, %v45
  %v780 = vmul.f32 %v748, %v46
  %v781 = vmul.f32 %v749, %v47
  %v782 = vmul.f32 %v750, %v48
  %v783 = vmul.f32 %v751, %v49
  %v784 = vmul.f32 %v752, %v50
  %v785 = vmul.f32 %v753, %v51
  %v786 = vmul.f32 %v754, %v52
  %v787 = vmul.f32 %v755, %v53
  %v788 = vmul.f32 %v756, %v54
  %821 = vrot.lane.b32.xlu0 %v725, 64
  %v822 = vpop.permute.xlu0 %821
  %823 = vrot.lane.b32.xlu0 %v726, 64
  %v824 = vpop.permute.xlu0 %823
  %825 = vrot.lane.b32.xlu0 %v727, 64
  %v826 = vpop.permute.xlu0 %825
  %827 = vrot.lane.b32.xlu0 %v728, 64
  %v828 = vpop.permute.xlu0 %827
  %829 = vrot.lane.b32.xlu0 %v729, 64
  %v830 = vpop.permute.xlu0 %829
  %831 = vrot.lane.b32.xlu0 %v730, 64
  %v832 = vpop.permute.xlu0 %831
  %833 = vrot.lane.b32.xlu0 %v731, 64
  %v834 = vpop.permute.xlu0 %833
  %835 = vrot.lane.b32.xlu0 %v732, 64
  %v836 = vpop.permute.xlu0 %835
  %837 = vrot.lane.b32.xlu0 %v733, 64
  %v838 = vpop.permute.xlu0 %837
  %839 = vrot.lane.b32.xlu0 %v734, 64
  %v840 = vpop.permute.xlu0 %839
  %841 = vrot.lane.b32.xlu0 %v735, 64
  %v842 = vpop.permute.xlu0 %841
  %843 = vrot.lane.b32.xlu0 %v736, 64
  %v844 = vpop.permute.xlu0 %843
  %845 = vrot.lane.b32.xlu0 %v737, 64
  %v846 = vpop.permute.xlu0 %845
  %847 = vrot.lane.b32.xlu0 %v738, 64
  %v848 = vpop.permute.xlu0 %847
  %849 = vrot.lane.b32.xlu0 %v739, 64
  %v850 = vpop.permute.xlu0 %849
  %851 = vrot.lane.b32.xlu0 %v740, 64
  %v852 = vpop.permute.xlu0 %851
  %853 = vrot.lane.b32.xlu0 %v741, 64
  %v854 = vpop.permute.xlu0 %853
  %855 = vrot.lane.b32.xlu0 %v742, 64
  %v856 = vpop.permute.xlu0 %855
  %857 = vrot.lane.b32.xlu0 %v743, 64
  %v858 = vpop.permute.xlu0 %857
  %859 = vrot.lane.b32.xlu0 %v744, 64
  %v860 = vpop.permute.xlu0 %859
  %861 = vrot.lane.b32.xlu0 %v745, 64
  %v862 = vpop.permute.xlu0 %861
  %863 = vrot.lane.b32.xlu0 %v746, 64
  %v864 = vpop.permute.xlu0 %863
  %865 = vrot.lane.b32.xlu0 %v747, 64
  %v866 = vpop.permute.xlu0 %865
  %867 = vrot.lane.b32.xlu0 %v748, 64
  %v868 = vpop.permute.xlu0 %867
  %869 = vrot.lane.b32.xlu0 %v749, 64
  %v870 = vpop.permute.xlu0 %869
  %871 = vrot.lane.b32.xlu0 %v750, 64
  %v872 = vpop.permute.xlu0 %871
  %873 = vrot.lane.b32.xlu0 %v751, 64
  %v874 = vpop.permute.xlu0 %873
  %875 = vrot.lane.b32.xlu0 %v752, 64
  %v876 = vpop.permute.xlu0 %875
  %877 = vrot.lane.b32.xlu0 %v753, 64
  %v878 = vpop.permute.xlu0 %877
  %879 = vrot.lane.b32.xlu0 %v754, 64
  %v880 = vpop.permute.xlu0 %879
  %881 = vrot.lane.b32.xlu0 %v755, 64
  %v882 = vpop.permute.xlu0 %881
  %883 = vrot.lane.b32.xlu0 %v756, 64
  %v884 = vpop.permute.xlu0 %883
  %v917 = vsel %vm67, %v725, %v822
  %v918 = vsel %vm67, %v726, %v824
  %v919 = vsel %vm67, %v727, %v826
  %v920 = vsel %vm67, %v728, %v828
  %v921 = vsel %vm67, %v729, %v830
  %v922 = vsel %vm67, %v730, %v832
  %v923 = vsel %vm67, %v731, %v834
  %v924 = vsel %vm67, %v732, %v836
  %v925 = vsel %vm67, %v733, %v838
  %v926 = vsel %vm67, %v734, %v840
  %v927 = vsel %vm67, %v735, %v842
  %v928 = vsel %vm67, %v736, %v844
  %v929 = vsel %vm67, %v737, %v846
  %v930 = vsel %vm67, %v738, %v848
  %v931 = vsel %vm67, %v739, %v850
  %v932 = vsel %vm67, %v740, %v852
  %v933 = vsel %vm67, %v741, %v854
  %v934 = vsel %vm67, %v742, %v856
  %v935 = vsel %vm67, %v743, %v858
  %v936 = vsel %vm67, %v744, %v860
  %v937 = vsel %vm67, %v745, %v862
  %v938 = vsel %vm67, %v746, %v864
  %v939 = vsel %vm67, %v747, %v866
  %v940 = vsel %vm67, %v748, %v868
  %v941 = vsel %vm67, %v749, %v870
  %v942 = vsel %vm67, %v750, %v872
  %v943 = vsel %vm67, %v751, %v874
  %v944 = vsel %vm67, %v752, %v876
  %v945 = vsel %vm67, %v753, %v878
  %v946 = vsel %vm67, %v754, %v880
  %v947 = vsel %vm67, %v755, %v882
  %v948 = vsel %vm67, %v756, %v884
  %981 = vrot.lane.b32.xlu0 %v757, 64
  %v982 = vpop.permute.xlu0 %981
  %983 = vrot.lane.b32.xlu0 %v758, 64
  %v984 = vpop.permute.xlu0 %983
  %985 = vrot.lane.b32.xlu0 %v759, 64
  %v986 = vpop.permute.xlu0 %985
  %987 = vrot.lane.b32.xlu0 %v760, 64
  %v988 = vpop.permute.xlu0 %987
  %989 = vrot.lane.b32.xlu0 %v761, 64
  %v990 = vpop.permute.xlu0 %989
  %991 = vrot.lane.b32.xlu0 %v762, 64
  %v992 = vpop.permute.xlu0 %991
  %993 = vrot.lane.b32.xlu0 %v763, 64
  %v994 = vpop.permute.xlu0 %993
  %995 = vrot.lane.b32.xlu0 %v764, 64
  %v996 = vpop.permute.xlu0 %995
  %997 = vrot.lane.b32.xlu0 %v765, 64
  %v998 = vpop.permute.xlu0 %997
  %999 = vrot.lane.b32.xlu0 %v766, 64
  %v1000 = vpop.permute.xlu0 %999
  %1001 = vrot.lane.b32.xlu0 %v767, 64
  %v1002 = vpop.permute.xlu0 %1001
  %1003 = vrot.lane.b32.xlu0 %v768, 64
  %v1004 = vpop.permute.xlu0 %1003
  %1005 = vrot.lane.b32.xlu0 %v769, 64
  %v1006 = vpop.permute.xlu0 %1005
  %1007 = vrot.lane.b32.xlu0 %v770, 64
  %v1008 = vpop.permute.xlu0 %1007
  %1009 = vrot.lane.b32.xlu0 %v771, 64
  %v1010 = vpop.permute.xlu0 %1009
  %1011 = vrot.lane.b32.xlu0 %v772, 64
  %v1012 = vpop.permute.xlu0 %1011
  %1013 = vrot.lane.b32.xlu0 %v773, 64
  %v1014 = vpop.permute.xlu0 %1013
  %1015 = vrot.lane.b32.xlu0 %v774, 64
  %v1016 = vpop.permute.xlu0 %1015
  %1017 = vrot.lane.b32.xlu0 %v775, 64
  %v1018 = vpop.permute.xlu0 %1017
  %1019 = vrot.lane.b32.xlu0 %v776, 64
  %v1020 = vpop.permute.xlu0 %1019
  %1021 = vrot.lane.b32.xlu0 %v777, 64
  %v1022 = vpop.permute.xlu0 %1021
  %1023 = vrot.lane.b32.xlu0 %v778, 64
  %v1024 = vpop.permute.xlu0 %1023
  %1025 = vrot.lane.b32.xlu0 %v779, 64
  %v1026 = vpop.permute.xlu0 %1025
  %1027 = vrot.lane.b32.xlu0 %v780, 64
  %v1028 = vpop.permute.xlu0 %1027
  %1029 = vrot.lane.b32.xlu0 %v781, 64
  %v1030 = vpop.permute.xlu0 %1029
  %1031 = vrot.lane.b32.xlu0 %v782, 64
  %v1032 = vpop.permute.xlu0 %1031
  %1033 = vrot.lane.b32.xlu0 %v783, 64
  %v1034 = vpop.permute.xlu0 %1033
  %1035 = vrot.lane.b32.xlu0 %v784, 64
  %v1036 = vpop.permute.xlu0 %1035
  %1037 = vrot.lane.b32.xlu0 %v785, 64
  %v1038 = vpop.permute.xlu0 %1037
  %1039 = vrot.lane.b32.xlu0 %v786, 64
  %v1040 = vpop.permute.xlu0 %1039
  %1041 = vrot.lane.b32.xlu0 %v787, 64
  %v1042 = vpop.permute.xlu0 %1041
  %1043 = vrot.lane.b32.xlu0 %v788, 64
  %v1044 = vpop.permute.xlu0 %1043
  %v1077 = vsel %vm67, %v757, %v982
  %v1078 = vsel %vm67, %v758, %v984
  %v1079 = vsel %vm67, %v759, %v986
  %v1080 = vsel %vm67, %v760, %v988
  %v1081 = vsel %vm67, %v761, %v990
  %v1082 = vsel %vm67, %v762, %v992
  %v1083 = vsel %vm67, %v763, %v994
  %v1084 = vsel %vm67, %v764, %v996
  %v1085 = vsel %vm67, %v765, %v998
  %v1086 = vsel %vm67, %v766, %v1000
  %v1087 = vsel %vm67, %v767, %v1002
  %v1088 = vsel %vm67, %v768, %v1004
  %v1089 = vsel %vm67, %v769, %v1006
  %v1090 = vsel %vm67, %v770, %v1008
  %v1091 = vsel %vm67, %v771, %v1010
  %v1092 = vsel %vm67, %v772, %v1012
  %v1093 = vsel %vm67, %v773, %v1014
  %v1094 = vsel %vm67, %v774, %v1016
  %v1095 = vsel %vm67, %v775, %v1018
  %v1096 = vsel %vm67, %v776, %v1020
  %v1097 = vsel %vm67, %v777, %v1022
  %v1098 = vsel %vm67, %v778, %v1024
  %v1099 = vsel %vm67, %v779, %v1026
  %v1100 = vsel %vm67, %v780, %v1028
  %v1101 = vsel %vm67, %v781, %v1030
  %v1102 = vsel %vm67, %v782, %v1032
  %v1103 = vsel %vm67, %v783, %v1034
  %v1104 = vsel %vm67, %v784, %v1036
  %v1105 = vsel %vm67, %v785, %v1038
  %v1106 = vsel %vm67, %v786, %v1040
  %v1107 = vsel %vm67, %v787, %v1042
  %v1108 = vsel %vm67, %v788, %v1044
  %v1109 = vld [vmem:[%s3] sm:$0xff]
  %v1110 = vld [vmem:[%s3 + $0x8] sm:$0xff]
  %v1111 = vld [vmem:[%s3 + $0x10] sm:$0xff]
  %v1112 = vld [vmem:[%s3 + $0x18] sm:$0xff]
  %v1113 = vld [vmem:[%s3 + $0x20] sm:$0xff]
  %v1114 = vld [vmem:[%s3 + $0x28] sm:$0xff]
  %v1115 = vld [vmem:[%s3 + $0x30] sm:$0xff]
  %v1116 = vld [vmem:[%s3 + $0x38] sm:$0xff]
  %v1117 = vld [vmem:[%s3 + $0x40] sm:$0xff]
  %v1118 = vld [vmem:[%s3 + $0x48] sm:$0xff]
  %v1119 = vld [vmem:[%s3 + $0x50] sm:$0xff]
  %v1120 = vld [vmem:[%s3 + $0x58] sm:$0xff]
  %v1121 = vld [vmem:[%s3 + $0x60] sm:$0xff]
  %v1122 = vld [vmem:[%s3 + $0x68] sm:$0xff]
  %v1123 = vld [vmem:[%s3 + $0x70] sm:$0xff]
  %v1124 = vld [vmem:[%s3 + $0x78] sm:$0xff]
  %1125 = vmatpush.msra.mxu0 0.0
  %1126 = vmatpush.msra.mxu0 0.0
  %1127 = vmatpush.msra.mxu0 0.0
  %1128 = vmatpush.msra.mxu0 0.0
  %1129 = vmatpush.msra.mxu0 0.0
  %1130 = vmatpush.msra.mxu0 0.0
  %1131 = vmatpush.msra.mxu0 0.0
  %1132 = vmatpush.msra.mxu0 0.0
  %1133 = vmatpush.msra.mxu0 %v1123
  %1134 = vmatpush.msra.mxu0 %v1121
  %1135 = vmatpush.msra.mxu0 %v1119
  %1136 = vmatpush.msra.mxu0 %v1117
  %1137 = vmatpush.msra.mxu0 %v1115
  %1138 = vmatpush.msra.mxu0 %v1113
  %1139 = vmatpush.msra.mxu0 %v1111
  %1140 = vmatpush.msra.mxu0 %v1109
  %1141 = vmatmul.f32.gmra.mxu0 %v69
  %v1142 = vpop.f32.mrf.mxu0
  %v1143 = vadd.f32 0.0, %v1142
  %1144 = vmatmul.f32.gmra.mxu0 %v72
  %v1145 = vpop.f32.mrf.mxu0
  %v1146 = vadd.f32 0.0, %v1145
  %1147 = vmatmul.f32.gmra.mxu0 %v75
  %v1148 = vpop.f32.mrf.mxu0
  %v1149 = vadd.f32 0.0, %v1148
  %1150 = vmatmul.f32.gmra.mxu0 %v78
  %v1151 = vpop.f32.mrf.mxu0
  %v1152 = vadd.f32 0.0, %v1151
  %1153 = vmatmul.f32.gmra.mxu0 %v81
  %v1154 = vpop.f32.mrf.mxu0
  %v1155 = vadd.f32 0.0, %v1154
  %1156 = vmatmul.f32.gmra.mxu0 %v84
  %v1157 = vpop.f32.mrf.mxu0
  %v1158 = vadd.f32 0.0, %v1157
  %1159 = vmatmul.f32.gmra.mxu0 %v87
  %v1160 = vpop.f32.mrf.mxu0
  %v1161 = vadd.f32 0.0, %v1160
  %1162 = vmatmul.f32.gmra.mxu0 %v90
  %v1163 = vpop.f32.mrf.mxu0
  %v1164 = vadd.f32 0.0, %v1163
  %1165 = vmatmul.f32.gmra.mxu0 %v93
  %v1166 = vpop.f32.mrf.mxu0
  %v1167 = vadd.f32 0.0, %v1166
  %1168 = vmatmul.f32.gmra.mxu0 %v96
  %v1169 = vpop.f32.mrf.mxu0
  %v1170 = vadd.f32 0.0, %v1169
  %1171 = vmatmul.f32.gmra.mxu0 %v99
  %v1172 = vpop.f32.mrf.mxu0
  %v1173 = vadd.f32 0.0, %v1172
  %1174 = vmatmul.f32.gmra.mxu0 %v102
  %v1175 = vpop.f32.mrf.mxu0
  %v1176 = vadd.f32 0.0, %v1175
  %1177 = vmatmul.f32.gmra.mxu0 %v105
  %v1178 = vpop.f32.mrf.mxu0
  %v1179 = vadd.f32 0.0, %v1178
  %1180 = vmatmul.f32.gmra.mxu0 %v108
  %v1181 = vpop.f32.mrf.mxu0
  %v1182 = vadd.f32 0.0, %v1181
  %1183 = vmatmul.f32.gmra.mxu0 %v111
  %v1184 = vpop.f32.mrf.mxu0
  %v1185 = vadd.f32 0.0, %v1184
  %1186 = vmatmul.f32.gmra.mxu0 %v114
  %v1187 = vpop.f32.mrf.mxu0
  %v1188 = vadd.f32 0.0, %v1187
  %1189 = vmatmul.f32.gmra.mxu0 %v117
  %v1190 = vpop.f32.mrf.mxu0
  %v1191 = vadd.f32 0.0, %v1190
  %1192 = vmatmul.f32.gmra.mxu0 %v120
  %v1193 = vpop.f32.mrf.mxu0
  %v1194 = vadd.f32 0.0, %v1193
  %1195 = vmatmul.f32.gmra.mxu0 %v123
  %v1196 = vpop.f32.mrf.mxu0
  %v1197 = vadd.f32 0.0, %v1196
  %1198 = vmatmul.f32.gmra.mxu0 %v126
  %v1199 = vpop.f32.mrf.mxu0
  %v1200 = vadd.f32 0.0, %v1199
  %1201 = vmatmul.f32.gmra.mxu0 %v129
  %v1202 = vpop.f32.mrf.mxu0
  %v1203 = vadd.f32 0.0, %v1202
  %1204 = vmatmul.f32.gmra.mxu0 %v132
  %v1205 = vpop.f32.mrf.mxu0
  %v1206 = vadd.f32 0.0, %v1205
  %1207 = vmatmul.f32.gmra.mxu0 %v135
  %v1208 = vpop.f32.mrf.mxu0
  %v1209 = vadd.f32 0.0, %v1208
  %1210 = vmatmul.f32.gmra.mxu0 %v138
  %v1211 = vpop.f32.mrf.mxu0
  %v1212 = vadd.f32 0.0, %v1211
  %1213 = vmatmul.f32.gmra.mxu0 %v141
  %v1214 = vpop.f32.mrf.mxu0
  %v1215 = vadd.f32 0.0, %v1214
  %1216 = vmatmul.f32.gmra.mxu0 %v144
  %v1217 = vpop.f32.mrf.mxu0
  %v1218 = vadd.f32 0.0, %v1217
  %1219 = vmatmul.f32.gmra.mxu0 %v147
  %v1220 = vpop.f32.mrf.mxu0
  %v1221 = vadd.f32 0.0, %v1220
  %1222 = vmatmul.f32.gmra.mxu0 %v150
  %v1223 = vpop.f32.mrf.mxu0
  %v1224 = vadd.f32 0.0, %v1223
  %1225 = vmatmul.f32.gmra.mxu0 %v153
  %v1226 = vpop.f32.mrf.mxu0
  %v1227 = vadd.f32 0.0, %v1226
  %1228 = vmatmul.f32.gmra.mxu0 %v156
  %v1229 = vpop.f32.mrf.mxu0
  %v1230 = vadd.f32 0.0, %v1229
  %1231 = vmatmul.f32.gmra.mxu0 %v159
  %v1232 = vpop.f32.mrf.mxu0
  %v1233 = vadd.f32 0.0, %v1232
  %1234 = vmatmul.f32.gmra.mxu0 %v162
  %v1235 = vpop.f32.mrf.mxu0
  %v1236 = vadd.f32 0.0, %v1235
  %1237 = vdwg.mxu0
  %1238 = vmatpush.msra.mxu0 0.0
  %1239 = vmatpush.msra.mxu0 0.0
  %1240 = vmatpush.msra.mxu0 0.0
  %1241 = vmatpush.msra.mxu0 0.0
  %1242 = vmatpush.msra.mxu0 0.0
  %1243 = vmatpush.msra.mxu0 0.0
  %1244 = vmatpush.msra.mxu0 0.0
  %1245 = vmatpush.msra.mxu0 0.0
  %1246 = vmatpush.msra.mxu0 %v1124
  %1247 = vmatpush.msra.mxu0 %v1122
  %1248 = vmatpush.msra.mxu0 %v1120
  %1249 = vmatpush.msra.mxu0 %v1118
  %1250 = vmatpush.msra.mxu0 %v1116
  %1251 = vmatpush.msra.mxu0 %v1114
  %1252 = vmatpush.msra.mxu0 %v1112
  %1253 = vmatpush.msra.mxu0 %v1110
  %1254 = vmatmul.f32.gmra.mxu0 %v69
  %v1255 = vpop.f32.mrf.mxu0
  %v1256 = vadd.f32 0.0, %v1255
  %1257 = vmatmul.f32.gmra.mxu0 %v72
  %v1258 = vpop.f32.mrf.mxu0
  %v1259 = vadd.f32 0.0, %v1258
  %1260 = vmatmul.f32.gmra.mxu0 %v75
  %v1261 = vpop.f32.mrf.mxu0
  %v1262 = vadd.f32 0.0, %v1261
  %1263 = vmatmul.f32.gmra.mxu0 %v78
  %v1264 = vpop.f32.mrf.mxu0
  %v1265 = vadd.f32 0.0, %v1264
  %1266 = vmatmul.f32.gmra.mxu0 %v81
  %v1267 = vpop.f32.mrf.mxu0
  %v1268 = vadd.f32 0.0, %v1267
  %1269 = vmatmul.f32.gmra.mxu0 %v84
  %v1270 = vpop.f32.mrf.mxu0
  %v1271 = vadd.f32 0.0, %v1270
  %1272 = vmatmul.f32.gmra.mxu0 %v87
  %v1273 = vpop.f32.mrf.mxu0
  %v1274 = vadd.f32 0.0, %v1273
  %1275 = vmatmul.f32.gmra.mxu0 %v90
  %v1276 = vpop.f32.mrf.mxu0
  %v1277 = vadd.f32 0.0, %v1276
  %1278 = vmatmul.f32.gmra.mxu0 %v93
  %v1279 = vpop.f32.mrf.mxu0
  %v1280 = vadd.f32 0.0, %v1279
  %1281 = vmatmul.f32.gmra.mxu0 %v96
  %v1282 = vpop.f32.mrf.mxu0
  %v1283 = vadd.f32 0.0, %v1282
  %1284 = vmatmul.f32.gmra.mxu0 %v99
  %v1285 = vpop.f32.mrf.mxu0
  %v1286 = vadd.f32 0.0, %v1285
  %1287 = vmatmul.f32.gmra.mxu0 %v102
  %v1288 = vpop.f32.mrf.mxu0
  %v1289 = vadd.f32 0.0, %v1288
  %1290 = vmatmul.f32.gmra.mxu0 %v105
  %v1291 = vpop.f32.mrf.mxu0
  %v1292 = vadd.f32 0.0, %v1291
  %1293 = vmatmul.f32.gmra.mxu0 %v108
  %v1294 = vpop.f32.mrf.mxu0
  %v1295 = vadd.f32 0.0, %v1294
  %1296 = vmatmul.f32.gmra.mxu0 %v111
  %v1297 = vpop.f32.mrf.mxu0
  %v1298 = vadd.f32 0.0, %v1297
  %1299 = vmatmul.f32.gmra.mxu0 %v114
  %v1300 = vpop.f32.mrf.mxu0
  %v1301 = vadd.f32 0.0, %v1300
  %1302 = vmatmul.f32.gmra.mxu0 %v117
  %v1303 = vpop.f32.mrf.mxu0
  %v1304 = vadd.f32 0.0, %v1303
  %1305 = vmatmul.f32.gmra.mxu0 %v120
  %v1306 = vpop.f32.mrf.mxu0
  %v1307 = vadd.f32 0.0, %v1306
  %1308 = vmatmul.f32.gmra.mxu0 %v123
  %v1309 = vpop.f32.mrf.mxu0
  %v1310 = vadd.f32 0.0, %v1309
  %1311 = vmatmul.f32.gmra.mxu0 %v126
  %v1312 = vpop.f32.mrf.mxu0
  %v1313 = vadd.f32 0.0, %v1312
  %1314 = vmatmul.f32.gmra.mxu0 %v129
  %v1315 = vpop.f32.mrf.mxu0
  %v1316 = vadd.f32 0.0, %v1315
  %1317 = vmatmul.f32.gmra.mxu0 %v132
  %v1318 = vpop.f32.mrf.mxu0
  %v1319 = vadd.f32 0.0, %v1318
  %1320 = vmatmul.f32.gmra.mxu0 %v135
  %v1321 = vpop.f32.mrf.mxu0
  %v1322 = vadd.f32 0.0, %v1321
  %1323 = vmatmul.f32.gmra.mxu0 %v138
  %v1324 = vpop.f32.mrf.mxu0
  %v1325 = vadd.f32 0.0, %v1324
  %1326 = vmatmul.f32.gmra.mxu0 %v141
  %v1327 = vpop.f32.mrf.mxu0
  %v1328 = vadd.f32 0.0, %v1327
  %1329 = vmatmul.f32.gmra.mxu0 %v144
  %v1330 = vpop.f32.mrf.mxu0
  %v1331 = vadd.f32 0.0, %v1330
  %1332 = vmatmul.f32.gmra.mxu0 %v147
  %v1333 = vpop.f32.mrf.mxu0
  %v1334 = vadd.f32 0.0, %v1333
  %1335 = vmatmul.f32.gmra.mxu0 %v150
  %v1336 = vpop.f32.mrf.mxu0
  %v1337 = vadd.f32 0.0, %v1336
  %1338 = vmatmul.f32.gmra.mxu0 %v153
  %v1339 = vpop.f32.mrf.mxu0
  %v1340 = vadd.f32 0.0, %v1339
  %1341 = vmatmul.f32.gmra.mxu0 %v156
  %v1342 = vpop.f32.mrf.mxu0
  %v1343 = vadd.f32 0.0, %v1342
  %1344 = vmatmul.f32.gmra.mxu0 %v159
  %v1345 = vpop.f32.mrf.mxu0
  %v1346 = vadd.f32 0.0, %v1345
  %1347 = vmatmul.f32.gmra.mxu0 %v162
  %v1348 = vpop.f32.mrf.mxu0
  %v1349 = vadd.f32 0.0, %v1348
  %1350 = vdwg.mxu0
  %v1351 = vld [vmem:[%s4] sm:$0x1]
  %v1353 = vperm.slane %v1351, 0
  %v1355 = vmul.f32 %v917, %v1353
  %v1356 = vmul.f32 %v918, %v1353
  %v1357 = vmul.f32 %v919, %v1353
  %v1358 = vmul.f32 %v920, %v1353
  %v1359 = vmul.f32 %v921, %v1353
  %v1360 = vmul.f32 %v922, %v1353
  %v1361 = vmul.f32 %v923, %v1353
  %v1362 = vmul.f32 %v924, %v1353
  %v1363 = vmul.f32 %v925, %v1353
  %v1364 = vmul.f32 %v926, %v1353
  %v1365 = vmul.f32 %v927, %v1353
  %v1366 = vmul.f32 %v928, %v1353
  %v1367 = vmul.f32 %v929, %v1353
  %v1368 = vmul.f32 %v930, %v1353
  %v1369 = vmul.f32 %v931, %v1353
  %v1370 = vmul.f32 %v932, %v1353
  %v1371 = vmul.f32 %v933, %v1353
  %v1372 = vmul.f32 %v934, %v1353
  %v1373 = vmul.f32 %v935, %v1353
  %v1374 = vmul.f32 %v936, %v1353
  %v1375 = vmul.f32 %v937, %v1353
  %v1376 = vmul.f32 %v938, %v1353
  %v1377 = vmul.f32 %v939, %v1353
  %v1378 = vmul.f32 %v940, %v1353
  %v1379 = vmul.f32 %v941, %v1353
  %v1380 = vmul.f32 %v942, %v1353
  %v1381 = vmul.f32 %v943, %v1353
  %v1382 = vmul.f32 %v944, %v1353
  %v1383 = vmul.f32 %v945, %v1353
  %v1384 = vmul.f32 %v946, %v1353
  %v1385 = vmul.f32 %v947, %v1353
  %v1386 = vmul.f32 %v948, %v1353
  %v1387 = vmul.f32 %v1355, 1.442695
  %v1388 = vpow.pop %v1387
  %v1389 = vmul.f32 %v1356, 1.442695
  %v1390 = vpow.pop %v1389
  %v1391 = vmul.f32 %v1357, 1.442695
  %v1392 = vpow.pop %v1391
  %v1393 = vmul.f32 %v1358, 1.442695
  %v1394 = vpow.pop %v1393
  %v1395 = vmul.f32 %v1359, 1.442695
  %v1396 = vpow.pop %v1395
  %v1397 = vmul.f32 %v1360, 1.442695
  %v1398 = vpow.pop %v1397
  %v1399 = vmul.f32 %v1361, 1.442695
  %v1400 = vpow.pop %v1399
  %v1401 = vmul.f32 %v1362, 1.442695
  %v1402 = vpow.pop %v1401
  %v1403 = vmul.f32 %v1363, 1.442695
  %v1404 = vpow.pop %v1403
  %v1405 = vmul.f32 %v1364, 1.442695
  %v1406 = vpow.pop %v1405
  %v1407 = vmul.f32 %v1365, 1.442695
  %v1408 = vpow.pop %v1407
  %v1409 = vmul.f32 %v1366, 1.442695
  %v1410 = vpow.pop %v1409
  %v1411 = vmul.f32 %v1367, 1.442695
  %v1412 = vpow.pop %v1411
  %v1413 = vmul.f32 %v1368, 1.442695
  %v1414 = vpow.pop %v1413
  %v1415 = vmul.f32 %v1369, 1.442695
  %v1416 = vpow.pop %v1415
  %v1417 = vmul.f32 %v1370, 1.442695
  %v1418 = vpow.pop %v1417
  %v1419 = vmul.f32 %v1371, 1.442695
  %v1420 = vpow.pop %v1419
  %v1421 = vmul.f32 %v1372, 1.442695
  %v1422 = vpow.pop %v1421
  %v1423 = vmul.f32 %v1373, 1.442695
  %v1424 = vpow.pop %v1423
  %v1425 = vmul.f32 %v1374, 1.442695
  %v1426 = vpow.pop %v1425
  %v1427 = vmul.f32 %v1375, 1.442695
  %v1428 = vpow.pop %v1427
  %v1429 = vmul.f32 %v1376, 1.442695
  %v1430 = vpow.pop %v1429
  %v1431 = vmul.f32 %v1377, 1.442695
  %v1432 = vpow.pop %v1431
  %v1433 = vmul.f32 %v1378, 1.442695
  %v1434 = vpow.pop %v1433
  %v1435 = vmul.f32 %v1379, 1.442695
  %v1436 = vpow.pop %v1435
  %v1437 = vmul.f32 %v1380, 1.442695
  %v1438 = vpow.pop %v1437
  %v1439 = vmul.f32 %v1381, 1.442695
  %v1440 = vpow.pop %v1439
  %v1441 = vmul.f32 %v1382, 1.442695
  %v1442 = vpow.pop %v1441
  %v1443 = vmul.f32 %v1383, 1.442695
  %v1444 = vpow.pop %v1443
  %v1445 = vmul.f32 %v1384, 1.442695
  %v1446 = vpow.pop %v1445
  %v1447 = vmul.f32 %v1385, 1.442695
  %v1448 = vpow.pop %v1447
  %v1449 = vmul.f32 %v1386, 1.442695
  %v1450 = vpow.pop %v1449
  %1451 = vst [vmem:[#allocation2] sm:$0xff] %v1388
  %1452 = vst [vmem:[#allocation2 + $0x8] sm:$0xff] %v1390
  %1453 = vst [vmem:[#allocation2 + $0x10] sm:$0xff] %v1392
  %1454 = vst [vmem:[#allocation2 + $0x18] sm:$0xff] %v1394
  %1455 = vst [vmem:[#allocation2 + $0x20] sm:$0xff] %v1396
  %1456 = vst [vmem:[#allocation2 + $0x28] sm:$0xff] %v1398
  %1457 = vst [vmem:[#allocation2 + $0x30] sm:$0xff] %v1400
  %1458 = vst [vmem:[#allocation2 + $0x38] sm:$0xff] %v1402
  %1459 = vst [vmem:[#allocation2 + $0x40] sm:$0xff] %v1404
  %1460 = vst [vmem:[#allocation2 + $0x48] sm:$0xff] %v1406
  %1461 = vst [vmem:[#allocation2 + $0x50] sm:$0xff] %v1408
  %1462 = vst [vmem:[#allocation2 + $0x58] sm:$0xff] %v1410
  %1463 = vst [vmem:[#allocation2 + $0x60] sm:$0xff] %v1412
  %1464 = vst [vmem:[#allocation2 + $0x68] sm:$0xff] %v1414
  %1465 = vst [vmem:[#allocation2 + $0x70] sm:$0xff] %v1416
  %1466 = vst [vmem:[#allocation2 + $0x78] sm:$0xff] %v1418
  %1467 = vst [vmem:[#allocation2 + $0x80] sm:$0xff] %v1420
  %1468 = vst [vmem:[#allocation2 + $0x88] sm:$0xff] %v1422
  %1469 = vst [vmem:[#allocation2 + $0x90] sm:$0xff] %v1424
  %1470 = vst [vmem:[#allocation2 + $0x98] sm:$0xff] %v1426
  %1471 = vst [vmem:[#allocation2 + $0xa0] sm:$0xff] %v1428
  %1472 = vst [vmem:[#allocation2 + $0xa8] sm:$0xff] %v1430
  %1473 = vst [vmem:[#allocation2 + $0xb0] sm:$0xff] %v1432
  %1474 = vst [vmem:[#allocation2 + $0xb8] sm:$0xff] %v1434
  %1475 = vst [vmem:[#allocation2 + $0xc0] sm:$0xff] %v1436
  %1476 = vst [vmem:[#allocation2 + $0xc8] sm:$0xff] %v1438
  %1477 = vst [vmem:[#allocation2 + $0xd0] sm:$0xff] %v1440
  %1478 = vst [vmem:[#allocation2 + $0xd8] sm:$0xff] %v1442
  %1479 = vst [vmem:[#allocation2 + $0xe0] sm:$0xff] %v1444
  %1480 = vst [vmem:[#allocation2 + $0xe8] sm:$0xff] %v1446
  %1481 = vst [vmem:[#allocation2 + $0xf0] sm:$0xff] %v1448
  %1482 = vst [vmem:[#allocation2 + $0xf8] sm:$0xff] %v1450
  %v1483 = vmul.f32 %v1077, %v1143
  %v1484 = vmul.f32 %v1078, %v1146
  %v1485 = vmul.f32 %v1079, %v1149
  %v1486 = vmul.f32 %v1080, %v1152
  %v1487 = vmul.f32 %v1081, %v1155
  %v1488 = vmul.f32 %v1082, %v1158
  %v1489 = vmul.f32 %v1083, %v1161
  %v1490 = vmul.f32 %v1084, %v1164
  %v1491 = vmul.f32 %v1085, %v1167
  %v1492 = vmul.f32 %v1086, %v1170
  %v1493 = vmul.f32 %v1087, %v1173
  %v1494 = vmul.f32 %v1088, %v1176
  %v1495 = vmul.f32 %v1089, %v1179
  %v1496 = vmul.f32 %v1090, %v1182
  %v1497 = vmul.f32 %v1091, %v1185
  %v1498 = vmul.f32 %v1092, %v1188
  %v1499 = vmul.f32 %v1093, %v1191
  %v1500 = vmul.f32 %v1094, %v1194
  %v1501 = vmul.f32 %v1095, %v1197
  %v1502 = vmul.f32 %v1096, %v1200
  %v1503 = vmul.f32 %v1097, %v1203
  %v1504 = vmul.f32 %v1098, %v1206
  %v1505 = vmul.f32 %v1099, %v1209
  %v1506 = vmul.f32 %v1100, %v1212
  %v1507 = vmul.f32 %v1101, %v1215
  %v1508 = vmul.f32 %v1102, %v1218
  %v1509 = vmul.f32 %v1103, %v1221
  %v1510 = vmul.f32 %v1104, %v1224
  %v1511 = vmul.f32 %v1105, %v1227
  %v1512 = vmul.f32 %v1106, %v1230
  %v1513 = vmul.f32 %v1107, %v1233
  %v1514 = vmul.f32 %v1108, %v1236
  %1515 = vst [vmem:[#allocation3] sm:$0xff] %v1483
  %1516 = vst [vmem:[#allocation3 + $0x8] sm:$0xff] %v1484
  %1517 = vst [vmem:[#allocation3 + $0x10] sm:$0xff] %v1485
  %1518 = vst [vmem:[#allocation3 + $0x18] sm:$0xff] %v1486
  %1519 = vst [vmem:[#allocation3 + $0x20] sm:$0xff] %v1487
  %1520 = vst [vmem:[#allocation3 + $0x28] sm:$0xff] %v1488
  %1521 = vst [vmem:[#allocation3 + $0x30] sm:$0xff] %v1489
  %1522 = vst [vmem:[#allocation3 + $0x38] sm:$0xff] %v1490
  %1523 = vst [vmem:[#allocation3 + $0x40] sm:$0xff] %v1491
  %1524 = vst [vmem:[#allocation3 + $0x48] sm:$0xff] %v1492
  %1525 = vst [vmem:[#allocation3 + $0x50] sm:$0xff] %v1493
  %1526 = vst [vmem:[#allocation3 + $0x58] sm:$0xff] %v1494
  %1527 = vst [vmem:[#allocation3 + $0x60] sm:$0xff] %v1495
  %1528 = vst [vmem:[#allocation3 + $0x68] sm:$0xff] %v1496
  %1529 = vst [vmem:[#allocation3 + $0x70] sm:$0xff] %v1497
  %1530 = vst [vmem:[#allocation3 + $0x78] sm:$0xff] %v1498
  %1531 = vst [vmem:[#allocation3 + $0x80] sm:$0xff] %v1499
  %1532 = vst [vmem:[#allocation3 + $0x88] sm:$0xff] %v1500
  %1533 = vst [vmem:[#allocation3 + $0x90] sm:$0xff] %v1501
  %1534 = vst [vmem:[#allocation3 + $0x98] sm:$0xff] %v1502
  %1535 = vst [vmem:[#allocation3 + $0xa0] sm:$0xff] %v1503
  %1536 = vst [vmem:[#allocation3 + $0xa8] sm:$0xff] %v1504
  %1537 = vst [vmem:[#allocation3 + $0xb0] sm:$0xff] %v1505
  %1538 = vst [vmem:[#allocation3 + $0xb8] sm:$0xff] %v1506
  %1539 = vst [vmem:[#allocation3 + $0xc0] sm:$0xff] %v1507
  %1540 = vst [vmem:[#allocation3 + $0xc8] sm:$0xff] %v1508
  %1541 = vst [vmem:[#allocation3 + $0xd0] sm:$0xff] %v1509
  %1542 = vst [vmem:[#allocation3 + $0xd8] sm:$0xff] %v1510
  %1543 = vst [vmem:[#allocation3 + $0xe0] sm:$0xff] %v1511
  %1544 = vst [vmem:[#allocation3 + $0xe8] sm:$0xff] %v1512
  %1545 = vst [vmem:[#allocation3 + $0xf0] sm:$0xff] %v1513
  %1546 = vst [vmem:[#allocation3 + $0xf8] sm:$0xff] %v1514
  %1547 = vst [vmem:[#allocation4] sm:$0xff] %v1256
  %1548 = vst [vmem:[#allocation4 + $0x8] sm:$0xff] %v1259
  %1549 = vst [vmem:[#allocation4 + $0x10] sm:$0xff] %v1262
  %1550 = vst [vmem:[#allocation4 + $0x18] sm:$0xff] %v1265
  %1551 = vst [vmem:[#allocation4 + $0x20] sm:$0xff] %v1268
  %1552 = vst [vmem:[#allocation4 + $0x28] sm:$0xff] %v1271
  %1553 = vst [vmem:[#allocation4 + $0x30] sm:$0xff] %v1274
  %1554 = vst [vmem:[#allocation4 + $0x38] sm:$0xff] %v1277
  %1555 = vst [vmem:[#allocation4 + $0x40] sm:$0xff] %v1280
  %1556 = vst [vmem:[#allocation4 + $0x48] sm:$0xff] %v1283
  %1557 = vst [vmem:[#allocation4 + $0x50] sm:$0xff] %v1286
  %1558 = vst [vmem:[#allocation4 + $0x58] sm:$0xff] %v1289
  %1559 = vst [vmem:[#allocation4 + $0x60] sm:$0xff] %v1292
  %1560 = vst [vmem:[#allocation4 + $0x68] sm:$0xff] %v1295
  %1561 = vst [vmem:[#allocation4 + $0x70] sm:$0xff] %v1298
  %1562 = vst [vmem:[#allocation4 + $0x78] sm:$0xff] %v1301
  %1563 = vst [vmem:[#allocation4 + $0x80] sm:$0xff] %v1304
  %1564 = vst [vmem:[#allocation4 + $0x88] sm:$0xff] %v1307
  %1565 = vst [vmem:[#allocation4 + $0x90] sm:$0xff] %v1310
  %1566 = vst [vmem:[#allocation4 + $0x98] sm:$0xff] %v1313
  %1567 = vst [vmem:[#allocation4 + $0xa0] sm:$0xff] %v1316
  %1568 = vst [vmem:[#allocation4 + $0xa8] sm:$0xff] %v1319
  %1569 = vst [vmem:[#allocation4 + $0xb0] sm:$0xff] %v1322
  %1570 = vst [vmem:[#allocation4 + $0xb8] sm:$0xff] %v1325
  %1571 = vst [vmem:[#allocation4 + $0xc0] sm:$0xff] %v1328
  %1572 = vst [vmem:[#allocation4 + $0xc8] sm:$0xff] %v1331
  %1573 = vst [vmem:[#allocation4 + $0xd0] sm:$0xff] %v1334
  %1574 = vst [vmem:[#allocation4 + $0xd8] sm:$0xff] %v1337
  %1575 = vst [vmem:[#allocation4 + $0xe0] sm:$0xff] %v1340
  %1576 = vst [vmem:[#allocation4 + $0xe8] sm:$0xff] %v1343
  %1577 = vst [vmem:[#allocation4 + $0xf0] sm:$0xff] %v1346
  %1578 = vst [vmem:[#allocation4 + $0xf8] sm:$0xff] %v1349
  %s1579 = scalar_lea.vmem %s3, 128
  %v1580 = vld [vmem:[%s1579] sm:$0xff]
  %v1581 = vld [vmem:[%s1579 + $0x8] sm:$0xff]
  %v1582 = vld [vmem:[%s1579 + $0x10] sm:$0xff]
  %v1583 = vld [vmem:[%s1579 + $0x18] sm:$0xff]
  %v1584 = vld [vmem:[%s1579 + $0x20] sm:$0xff]
  %v1585 = vld [vmem:[%s1579 + $0x28] sm:$0xff]
  %v1586 = vld [vmem:[%s1579 + $0x30] sm:$0xff]
  %v1587 = vld [vmem:[%s1579 + $0x38] sm:$0xff]
  %v1588 = vld [vmem:[%s1579 + $0x40] sm:$0xff]
  %v1589 = vld [vmem:[%s1579 + $0x48] sm:$0xff]
  %v1590 = vld [vmem:[%s1579 + $0x50] sm:$0xff]
  %v1591 = vld [vmem:[%s1579 + $0x58] sm:$0xff]
  %v1592 = vld [vmem:[%s1579 + $0x60] sm:$0xff]
  %v1593 = vld [vmem:[%s1579 + $0x68] sm:$0xff]
  %v1594 = vld [vmem:[%s1579 + $0x70] sm:$0xff]
  %v1595 = vld [vmem:[%s1579 + $0x78] sm:$0xff]
  %1596 = vmatpush.msra.mxu0 0.0
  %1597 = vmatpush.msra.mxu0 0.0
  %1598 = vmatpush.msra.mxu0 0.0
  %1599 = vmatpush.msra.mxu0 0.0
  %1600 = vmatpush.msra.mxu0 0.0
  %1601 = vmatpush.msra.mxu0 0.0
  %1602 = vmatpush.msra.mxu0 0.0
  %1603 = vmatpush.msra.mxu0 0.0
  %1604 = vmatpush.msra.mxu0 %v1594
  %1605 = vmatpush.msra.mxu0 %v1592
  %1606 = vmatpush.msra.mxu0 %v1590
  %1607 = vmatpush.msra.mxu0 %v1588
  %1608 = vmatpush.msra.mxu0 %v1586
  %1609 = vmatpush.msra.mxu0 %v1584
  %1610 = vmatpush.msra.mxu0 %v1582
  %1611 = vmatpush.msra.mxu0 %v1580
  %1612 = vmatmul.f32.gmra.mxu0 %v69
  %v1613 = vpop.f32.mrf.mxu0
  %v1614 = vadd.f32 0.0, %v1613
  %1615 = vmatmul.f32.gmra.mxu0 %v72
  %v1616 = vpop.f32.mrf.mxu0
  %v1617 = vadd.f32 0.0, %v1616
  %1618 = vmatmul.f32.gmra.mxu0 %v75
  %v1619 = vpop.f32.mrf.mxu0
  %v1620 = vadd.f32 0.0, %v1619
  %1621 = vmatmul.f32.gmra.mxu0 %v78
  %v1622 = vpop.f32.mrf.mxu0
  %v1623 = vadd.f32 0.0, %v1622
  %1624 = vmatmul.f32.gmra.mxu0 %v81
  %v1625 = vpop.f32.mrf.mxu0
  %v1626 = vadd.f32 0.0, %v1625
  %1627 = vmatmul.f32.gmra.mxu0 %v84
  %v1628 = vpop.f32.mrf.mxu0
  %v1629 = vadd.f32 0.0, %v1628
  %1630 = vmatmul.f32.gmra.mxu0 %v87
  %v1631 = vpop.f32.mrf.mxu0
  %v1632 = vadd.f32 0.0, %v1631
  %1633 = vmatmul.f32.gmra.mxu0 %v90
  %v1634 = vpop.f32.mrf.mxu0
  %v1635 = vadd.f32 0.0, %v1634
  %1636 = vmatmul.f32.gmra.mxu0 %v93
  %v1637 = vpop.f32.mrf.mxu0
  %v1638 = vadd.f32 0.0, %v1637
  %1639 = vmatmul.f32.gmra.mxu0 %v96
  %v1640 = vpop.f32.mrf.mxu0
  %v1641 = vadd.f32 0.0, %v1640
  %1642 = vmatmul.f32.gmra.mxu0 %v99
  %v1643 = vpop.f32.mrf.mxu0
  %v1644 = vadd.f32 0.0, %v1643
  %1645 = vmatmul.f32.gmra.mxu0 %v102
  %v1646 = vpop.f32.mrf.mxu0
  %v1647 = vadd.f32 0.0, %v1646
  %1648 = vmatmul.f32.gmra.mxu0 %v105
  %v1649 = vpop.f32.mrf.mxu0
  %v1650 = vadd.f32 0.0, %v1649
  %1651 = vmatmul.f32.gmra.mxu0 %v108
  %v1652 = vpop.f32.mrf.mxu0
  %v1653 = vadd.f32 0.0, %v1652
  %1654 = vmatmul.f32.gmra.mxu0 %v111
  %v1655 = vpop.f32.mrf.mxu0
  %v1656 = vadd.f32 0.0, %v1655
  %1657 = vmatmul.f32.gmra.mxu0 %v114
  %v1658 = vpop.f32.mrf.mxu0
  %v1659 = vadd.f32 0.0, %v1658
  %1660 = vmatmul.f32.gmra.mxu0 %v117
  %v1661 = vpop.f32.mrf.mxu0
  %v1662 = vadd.f32 0.0, %v1661
  %1663 = vmatmul.f32.gmra.mxu0 %v120
  %v1664 = vpop.f32.mrf.mxu0
  %v1665 = vadd.f32 0.0, %v1664
  %1666 = vmatmul.f32.gmra.mxu0 %v123
  %v1667 = vpop.f32.mrf.mxu0
  %v1668 = vadd.f32 0.0, %v1667
  %1669 = vmatmul.f32.gmra.mxu0 %v126
  %v1670 = vpop.f32.mrf.mxu0
  %v1671 = vadd.f32 0.0, %v1670
  %1672 = vmatmul.f32.gmra.mxu0 %v129
  %v1673 = vpop.f32.mrf.mxu0
  %v1674 = vadd.f32 0.0, %v1673
  %1675 = vmatmul.f32.gmra.mxu0 %v132
  %v1676 = vpop.f32.mrf.mxu0
  %v1677 = vadd.f32 0.0, %v1676
  %1678 = vmatmul.f32.gmra.mxu0 %v135
  %v1679 = vpop.f32.mrf.mxu0
  %v1680 = vadd.f32 0.0, %v1679
  %1681 = vmatmul.f32.gmra.mxu0 %v138
  %v1682 = vpop.f32.mrf.mxu0
  %v1683 = vadd.f32 0.0, %v1682
  %1684 = vmatmul.f32.gmra.mxu0 %v141
  %v1685 = vpop.f32.mrf.mxu0
  %v1686 = vadd.f32 0.0, %v1685
  %1687 = vmatmul.f32.gmra.mxu0 %v144
  %v1688 = vpop.f32.mrf.mxu0
  %v1689 = vadd.f32 0.0, %v1688
  %1690 = vmatmul.f32.gmra.mxu0 %v147
  %v1691 = vpop.f32.mrf.mxu0
  %v1692 = vadd.f32 0.0, %v1691
  %1693 = vmatmul.f32.gmra.mxu0 %v150
  %v1694 = vpop.f32.mrf.mxu0
  %v1695 = vadd.f32 0.0, %v1694
  %1696 = vmatmul.f32.gmra.mxu0 %v153
  %v1697 = vpop.f32.mrf.mxu0
  %v1698 = vadd.f32 0.0, %v1697
  %1699 = vmatmul.f32.gmra.mxu0 %v156
  %v1700 = vpop.f32.mrf.mxu0
  %v1701 = vadd.f32 0.0, %v1700
  %1702 = vmatmul.f32.gmra.mxu0 %v159
  %v1703 = vpop.f32.mrf.mxu0
  %v1704 = vadd.f32 0.0, %v1703
  %1705 = vmatmul.f32.gmra.mxu0 %v162
  %v1706 = vpop.f32.mrf.mxu0
  %v1707 = vadd.f32 0.0, %v1706
  %1708 = vdwg.mxu0
  %1709 = vmatpush.msra.mxu0 0.0
  %1710 = vmatpush.msra.mxu0 0.0
  %1711 = vmatpush.msra.mxu0 0.0
  %1712 = vmatpush.msra.mxu0 0.0
  %1713 = vmatpush.msra.mxu0 0.0
  %1714 = vmatpush.msra.mxu0 0.0
  %1715 = vmatpush.msra.mxu0 0.0
  %1716 = vmatpush.msra.mxu0 0.0
  %1717 = vmatpush.msra.mxu0 %v1595
  %1718 = vmatpush.msra.mxu0 %v1593
  %1719 = vmatpush.msra.mxu0 %v1591
  %1720 = vmatpush.msra.mxu0 %v1589
  %1721 = vmatpush.msra.mxu0 %v1587
  %1722 = vmatpush.msra.mxu0 %v1585
  %1723 = vmatpush.msra.mxu0 %v1583
  %1724 = vmatpush.msra.mxu0 %v1581
  %1725 = vmatmul.f32.gmra.mxu0 %v69
  %v1726 = vpop.f32.mrf.mxu0
  %v1727 = vadd.f32 0.0, %v1726
  %1728 = vmatmul.f32.gmra.mxu0 %v72
  %v1729 = vpop.f32.mrf.mxu0
  %v1730 = vadd.f32 0.0, %v1729
  %1731 = vmatmul.f32.gmra.mxu0 %v75
  %v1732 = vpop.f32.mrf.mxu0
  %v1733 = vadd.f32 0.0, %v1732
  %1734 = vmatmul.f32.gmra.mxu0 %v78
  %v1735 = vpop.f32.mrf.mxu0
  %v1736 = vadd.f32 0.0, %v1735
  %1737 = vmatmul.f32.gmra.mxu0 %v81
  %v1738 = vpop.f32.mrf.mxu0
  %v1739 = vadd.f32 0.0, %v1738
  %1740 = vmatmul.f32.gmra.mxu0 %v84
  %v1741 = vpop.f32.mrf.mxu0
  %v1742 = vadd.f32 0.0, %v1741
  %1743 = vmatmul.f32.gmra.mxu0 %v87
  %v1744 = vpop.f32.mrf.mxu0
  %v1745 = vadd.f32 0.0, %v1744
  %1746 = vmatmul.f32.gmra.mxu0 %v90
  %v1747 = vpop.f32.mrf.mxu0
  %v1748 = vadd.f32 0.0, %v1747
  %1749 = vmatmul.f32.gmra.mxu0 %v93
  %v1750 = vpop.f32.mrf.mxu0
  %v1751 = vadd.f32 0.0, %v1750
  %1752 = vmatmul.f32.gmra.mxu0 %v96
  %v1753 = vpop.f32.mrf.mxu0
  %v1754 = vadd.f32 0.0, %v1753
  %1755 = vmatmul.f32.gmra.mxu0 %v99
  %v1756 = vpop.f32.mrf.mxu0
  %v1757 = vadd.f32 0.0, %v1756
  %1758 = vmatmul.f32.gmra.mxu0 %v102
  %v1759 = vpop.f32.mrf.mxu0
  %v1760 = vadd.f32 0.0, %v1759
  %1761 = vmatmul.f32.gmra.mxu0 %v105
  %v1762 = vpop.f32.mrf.mxu0
  %v1763 = vadd.f32 0.0, %v1762
  %1764 = vmatmul.f32.gmra.mxu0 %v108
  %v1765 = vpop.f32.mrf.mxu0
  %v1766 = vadd.f32 0.0, %v1765
  %1767 = vmatmul.f32.gmra.mxu0 %v111
  %v1768 = vpop.f32.mrf.mxu0
  %v1769 = vadd.f32 0.0, %v1768
  %1770 = vmatmul.f32.gmra.mxu0 %v114
  %v1771 = vpop.f32.mrf.mxu0
  %v1772 = vadd.f32 0.0, %v1771
  %1773 = vmatmul.f32.gmra.mxu0 %v117
  %v1774 = vpop.f32.mrf.mxu0
  %v1775 = vadd.f32 0.0, %v1774
  %1776 = vmatmul.f32.gmra.mxu0 %v120
  %v1777 = vpop.f32.mrf.mxu0
  %v1778 = vadd.f32 0.0, %v1777
  %1779 = vmatmul.f32.gmra.mxu0 %v123
  %v1780 = vpop.f32.mrf.mxu0
  %v1781 = vadd.f32 0.0, %v1780
  %1782 = vmatmul.f32.gmra.mxu0 %v126
  %v1783 = vpop.f32.mrf.mxu0
  %v1784 = vadd.f32 0.0, %v1783
  %1785 = vmatmul.f32.gmra.mxu0 %v129
  %v1786 = vpop.f32.mrf.mxu0
  %v1787 = vadd.f32 0.0, %v1786
  %1788 = vmatmul.f32.gmra.mxu0 %v132
  %v1789 = vpop.f32.mrf.mxu0
  %v1790 = vadd.f32 0.0, %v1789
  %1791 = vmatmul.f32.gmra.mxu0 %v135
  %v1792 = vpop.f32.mrf.mxu0
  %v1793 = vadd.f32 0.0, %v1792
  %1794 = vmatmul.f32.gmra.mxu0 %v138
  %v1795 = vpop.f32.mrf.mxu0
  %v1796 = vadd.f32 0.0, %v1795
  %1797 = vmatmul.f32.gmra.mxu0 %v141
  %v1798 = vpop.f32.mrf.mxu0
  %v1799 = vadd.f32 0.0, %v1798
  %1800 = vmatmul.f32.gmra.mxu0 %v144
  %v1801 = vpop.f32.mrf.mxu0
  %v1802 = vadd.f32 0.0, %v1801
  %1803 = vmatmul.f32.gmra.mxu0 %v147
  %v1804 = vpop.f32.mrf.mxu0
  %v1805 = vadd.f32 0.0, %v1804
  %1806 = vmatmul.f32.gmra.mxu0 %v150
  %v1807 = vpop.f32.mrf.mxu0
  %v1808 = vadd.f32 0.0, %v1807
  %1809 = vmatmul.f32.gmra.mxu0 %v153
  %v1810 = vpop.f32.mrf.mxu0
  %v1811 = vadd.f32 0.0, %v1810
  %1812 = vmatmul.f32.gmra.mxu0 %v156
  %v1813 = vpop.f32.mrf.mxu0
  %v1814 = vadd.f32 0.0, %v1813
  %1815 = vmatmul.f32.gmra.mxu0 %v159
  %v1816 = vpop.f32.mrf.mxu0
  %v1817 = vadd.f32 0.0, %v1816
  %1818 = vmatmul.f32.gmra.mxu0 %v162
  %v1819 = vpop.f32.mrf.mxu0
  %v1820 = vadd.f32 0.0, %v1819
  %1821 = vdwg.mxu0
  %s1822 = scalar_lea.vmem %s4, 1
  %v1823 = vld [vmem:[%s1822] sm:$0x1]
  %v1825 = vperm.slane %v1823, 0
  %v1827 = vmul.f32 %v917, %v1825
  %v1828 = vmul.f32 %v918, %v1825
  %v1829 = vmul.f32 %v919, %v1825
  %v1830 = vmul.f32 %v920, %v1825
  %v1831 = vmul.f32 %v921, %v1825
  %v1832 = vmul.f32 %v922, %v1825
  %v1833 = vmul.f32 %v923, %v1825
  %v1834 = vmul.f32 %v924, %v1825
  %v1835 = vmul.f32 %v925, %v1825
  %v1836 = vmul.f32 %v926, %v1825
  %v1837 = vmul.f32 %v927, %v1825
  %v1838 = vmul.f32 %v928, %v1825
  %v1839 = vmul.f32 %v929, %v1825
  %v1840 = vmul.f32 %v930, %v1825
  %v1841 = vmul.f32 %v931, %v1825
  %v1842 = vmul.f32 %v932, %v1825
  %v1843 = vmul.f32 %v933, %v1825
  %v1844 = vmul.f32 %v934, %v1825
  %v1845 = vmul.f32 %v935, %v1825
  %v1846 = vmul.f32 %v936, %v1825
  %v1847 = vmul.f32 %v937, %v1825
  %v1848 = vmul.f32 %v938, %v1825
  %v1849 = vmul.f32 %v939, %v1825
  %v1850 = vmul.f32 %v940, %v1825
  %v1851 = vmul.f32 %v941, %v1825
  %v1852 = vmul.f32 %v942, %v1825
  %v1853 = vmul.f32 %v943, %v1825
  %v1854 = vmul.f32 %v944, %v1825
  %v1855 = vmul.f32 %v945, %v1825
  %v1856 = vmul.f32 %v946, %v1825
  %v1857 = vmul.f32 %v947, %v1825
  %v1858 = vmul.f32 %v948, %v1825
  %v1859 = vmul.f32 %v1827, 1.442695
  %v1860 = vpow.pop %v1859
  %v1861 = vmul.f32 %v1828, 1.442695
  %v1862 = vpow.pop %v1861
  %v1863 = vmul.f32 %v1829, 1.442695
  %v1864 = vpow.pop %v1863
  %v1865 = vmul.f32 %v1830, 1.442695
  %v1866 = vpow.pop %v1865
  %v1867 = vmul.f32 %v1831, 1.442695
  %v1868 = vpow.pop %v1867
  %v1869 = vmul.f32 %v1832, 1.442695
  %v1870 = vpow.pop %v1869
  %v1871 = vmul.f32 %v1833, 1.442695
  %v1872 = vpow.pop %v1871
  %v1873 = vmul.f32 %v1834, 1.442695
  %v1874 = vpow.pop %v1873
  %v1875 = vmul.f32 %v1835, 1.442695
  %v1876 = vpow.pop %v1875
  %v1877 = vmul.f32 %v1836, 1.442695
  %v1878 = vpow.pop %v1877
  %v1879 = vmul.f32 %v1837, 1.442695
  %v1880 = vpow.pop %v1879
  %v1881 = vmul.f32 %v1838, 1.442695
  %v1882 = vpow.pop %v1881
  %v1883 = vmul.f32 %v1839, 1.442695
  %v1884 = vpow.pop %v1883
  %v1885 = vmul.f32 %v1840, 1.442695
  %v1886 = vpow.pop %v1885
  %v1887 = vmul.f32 %v1841, 1.442695
  %v1888 = vpow.pop %v1887
  %v1889 = vmul.f32 %v1842, 1.442695
  %v1890 = vpow.pop %v1889
  %v1891 = vmul.f32 %v1843, 1.442695
  %v1892 = vpow.pop %v1891
  %v1893 = vmul.f32 %v1844, 1.442695
  %v1894 = vpow.pop %v1893
  %v1895 = vmul.f32 %v1845, 1.442695
  %v1896 = vpow.pop %v1895
  %v1897 = vmul.f32 %v1846, 1.442695
  %v1898 = vpow.pop %v1897
  %v1899 = vmul.f32 %v1847, 1.442695
  %v1900 = vpow.pop %v1899
  %v1901 = vmul.f32 %v1848, 1.442695
  %v1902 = vpow.pop %v1901
  %v1903 = vmul.f32 %v1849, 1.442695
  %v1904 = vpow.pop %v1903
  %v1905 = vmul.f32 %v1850, 1.442695
  %v1906 = vpow.pop %v1905
  %v1907 = vmul.f32 %v1851, 1.442695
  %v1908 = vpow.pop %v1907
  %v1909 = vmul.f32 %v1852, 1.442695
  %v1910 = vpow.pop %v1909
  %v1911 = vmul.f32 %v1853, 1.442695
  %v1912 = vpow.pop %v1911
  %v1913 = vmul.f32 %v1854, 1.442695
  %v1914 = vpow.pop %v1913
  %v1915 = vmul.f32 %v1855, 1.442695
  %v1916 = vpow.pop %v1915
  %v1917 = vmul.f32 %v1856, 1.442695
  %v1918 = vpow.pop %v1917
  %v1919 = vmul.f32 %v1857, 1.442695
  %v1920 = vpow.pop %v1919
  %v1921 = vmul.f32 %v1858, 1.442695
  %v1922 = vpow.pop %v1921
  %s1923 = scalar_lea.vmem [#allocation2], 256
  %1924 = vst [vmem:[%s1923] sm:$0xff] %v1860
  %1925 = vst [vmem:[%s1923 + $0x8] sm:$0xff] %v1862
  %1926 = vst [vmem:[%s1923 + $0x10] sm:$0xff] %v1864
  %1927 = vst [vmem:[%s1923 + $0x18] sm:$0xff] %v1866
  %1928 = vst [vmem:[%s1923 + $0x20] sm:$0xff] %v1868
  %1929 = vst [vmem:[%s1923 + $0x28] sm:$0xff] %v1870
  %1930 = vst [vmem:[%s1923 + $0x30] sm:$0xff] %v1872
  %1931 = vst [vmem:[%s1923 + $0x38] sm:$0xff] %v1874
  %1932 = vst [vmem:[%s1923 + $0x40] sm:$0xff] %v1876
  %1933 = vst [vmem:[%s1923 + $0x48] sm:$0xff] %v1878
  %1934 = vst [vmem:[%s1923 + $0x50] sm:$0xff] %v1880
  %1935 = vst [vmem:[%s1923 + $0x58] sm:$0xff] %v1882
  %1936 = vst [vmem:[%s1923 + $0x60] sm:$0xff] %v1884
  %1937 = vst [vmem:[%s1923 + $0x68] sm:$0xff] %v1886
  %1938 = vst [vmem:[%s1923 + $0x70] sm:$0xff] %v1888
  %1939 = vst [vmem:[%s1923 + $0x78] sm:$0xff] %v1890
  %1940 = vst [vmem:[%s1923 + $0x80] sm:$0xff] %v1892
  %1941 = vst [vmem:[%s1923 + $0x88] sm:$0xff] %v1894
  %1942 = vst [vmem:[%s1923 + $0x90] sm:$0xff] %v1896
  %1943 = vst [vmem:[%s1923 + $0x98] sm:$0xff] %v1898
  %1944 = vst [vmem:[%s1923 + $0xa0] sm:$0xff] %v1900
  %1945 = vst [vmem:[%s1923 + $0xa8] sm:$0xff] %v1902
  %1946 = vst [vmem:[%s1923 + $0xb0] sm:$0xff] %v1904
  %1947 = vst [vmem:[%s1923 + $0xb8] sm:$0xff] %v1906
  %1948 = vst [vmem:[%s1923 + $0xc0] sm:$0xff] %v1908
  %1949 = vst [vmem:[%s1923 + $0xc8] sm:$0xff] %v1910
  %1950 = vst [vmem:[%s1923 + $0xd0] sm:$0xff] %v1912
  %1951 = vst [vmem:[%s1923 + $0xd8] sm:$0xff] %v1914
  %1952 = vst [vmem:[%s1923 + $0xe0] sm:$0xff] %v1916
  %1953 = vst [vmem:[%s1923 + $0xe8] sm:$0xff] %v1918
  %1954 = vst [vmem:[%s1923 + $0xf0] sm:$0xff] %v1920
  %1955 = vst [vmem:[%s1923 + $0xf8] sm:$0xff] %v1922
  %v1956 = vmul.f32 %v1077, %v1614
  %v1957 = vmul.f32 %v1078, %v1617
  %v1958 = vmul.f32 %v1079, %v1620
  %v1959 = vmul.f32 %v1080, %v1623
  %v1960 = vmul.f32 %v1081, %v1626
  %v1961 = vmul.f32 %v1082, %v1629
  %v1962 = vmul.f32 %v1083, %v1632
  %v1963 = vmul.f32 %v1084, %v1635
  %v1964 = vmul.f32 %v1085, %v1638
  %v1965 = vmul.f32 %v1086, %v1641
  %v1966 = vmul.f32 %v1087, %v1644
  %v1967 = vmul.f32 %v1088, %v1647
  %v1968 = vmul.f32 %v1089, %v1650
  %v1969 = vmul.f32 %v1090, %v1653
  %v1970 = vmul.f32 %v1091, %v1656
  %v1971 = vmul.f32 %v1092, %v1659
  %v1972 = vmul.f32 %v1093, %v1662
  %v1973 = vmul.f32 %v1094, %v1665
  %v1974 = vmul.f32 %v1095, %v1668
  %v1975 = vmul.f32 %v1096, %v1671
  %v1976 = vmul.f32 %v1097, %v1674
  %v1977 = vmul.f32 %v1098, %v1677
  %v1978 = vmul.f32 %v1099, %v1680
  %v1979 = vmul.f32 %v1100, %v1683
  %v1980 = vmul.f32 %v1101, %v1686
  %v1981 = vmul.f32 %v1102, %v1689
  %v1982 = vmul.f32 %v1103, %v1692
  %v1983 = vmul.f32 %v1104, %v1695
  %v1984 = vmul.f32 %v1105, %v1698
  %v1985 = vmul.f32 %v1106, %v1701
  %v1986 = vmul.f32 %v1107, %v1704
  %v1987 = vmul.f32 %v1108, %v1707
  %s1988 = scalar_lea.vmem [#allocation3], 256
  %1989 = vst [vmem:[%s1988] sm:$0xff] %v1956
  %1990 = vst [vmem:[%s1988 + $0x8] sm:$0xff] %v1957
  %1991 = vst [vmem:[%s1988 + $0x10] sm:$0xff] %v1958
  %1992 = vst [vmem:[%s1988 + $0x18] sm:$0xff] %v1959
  %1993 = vst [vmem:[%s1988 + $0x20] sm:$0xff] %v1960
  %1994 = vst [vmem:[%s1988 + $0x28] sm:$0xff] %v1961
  %1995 = vst [vmem:[%s1988 + $0x30] sm:$0xff] %v1962
  %1996 = vst [vmem:[%s1988 + $0x38] sm:$0xff] %v1963
  %1997 = vst [vmem:[%s1988 + $0x40] sm:$0xff] %v1964
  %1998 = vst [vmem:[%s1988 + $0x48] sm:$0xff] %v1965
  %1999 = vst [vmem:[%s1988 + $0x50] sm:$0xff] %v1966
  %2000 = vst [vmem:[%s1988 + $0x58] sm:$0xff] %v1967
  %2001 = vst [vmem:[%s1988 + $0x60] sm:$0xff] %v1968
  %2002 = vst [vmem:[%s1988 + $0x68] sm:$0xff] %v1969
  %2003 = vst [vmem:[%s1988 + $0x70] sm:$0xff] %v1970
  %2004 = vst [vmem:[%s1988 + $0x78] sm:$0xff] %v1971
  %2005 = vst [vmem:[%s1988 + $0x80] sm:$0xff] %v1972
  %2006 = vst [vmem:[%s1988 + $0x88] sm:$0xff] %v1973
  %2007 = vst [vmem:[%s1988 + $0x90] sm:$0xff] %v1974
  %2008 = vst [vmem:[%s1988 + $0x98] sm:$0xff] %v1975
  %2009 = vst [vmem:[%s1988 + $0xa0] sm:$0xff] %v1976
  %2010 = vst [vmem:[%s1988 + $0xa8] sm:$0xff] %v1977
  %2011 = vst [vmem:[%s1988 + $0xb0] sm:$0xff] %v1978
  %2012 = vst [vmem:[%s1988 + $0xb8] sm:$0xff] %v1979
  %2013 = vst [vmem:[%s1988 + $0xc0] sm:$0xff] %v1980
  %2014 = vst [vmem:[%s1988 + $0xc8] sm:$0xff] %v1981
  %2015 = vst [vmem:[%s1988 + $0xd0] sm:$0xff] %v1982
  %2016 = vst [vmem:[%s1988 + $0xd8] sm:$0xff] %v1983
  %2017 = vst [vmem:[%s1988 + $0xe0] sm:$0xff] %v1984
  %2018 = vst [vmem:[%s1988 + $0xe8] sm:$0xff] %v1985
  %2019 = vst [vmem:[%s1988 + $0xf0] sm:$0xff] %v1986
  %2020 = vst [vmem:[%s1988 + $0xf8] sm:$0xff] %v1987
  %s2021 = scalar_lea.vmem [#allocation4], 256
  %2022 = vst [vmem:[%s2021] sm:$0xff] %v1727
  %2023 = vst [vmem:[%s2021 + $0x8] sm:$0xff] %v1730
  %2024 = vst [vmem:[%s2021 + $0x10] sm:$0xff] %v1733
  %2025 = vst [vmem:[%s2021 + $0x18] sm:$0xff] %v1736
  %2026 = vst [vmem:[%s2021 + $0x20] sm:$0xff] %v1739
  %2027 = vst [vmem:[%s2021 + $0x28] sm:$0xff] %v1742
  %2028 = vst [vmem:[%s2021 + $0x30] sm:$0xff] %v1745
  %2029 = vst [vmem:[%s2021 + $0x38] sm:$0xff] %v1748
  %2030 = vst [vmem:[%s2021 + $0x40] sm:$0xff] %v1751
  %2031 = vst [vmem:[%s2021 + $0x48] sm:$0xff] %v1754
  %2032 = vst [vmem:[%s2021 + $0x50] sm:$0xff] %v1757
  %2033 = vst [vmem:[%s2021 + $0x58] sm:$0xff] %v1760
  %2034 = vst [vmem:[%s2021 + $0x60] sm:$0xff] %v1763
  %2035 = vst [vmem:[%s2021 + $0x68] sm:$0xff] %v1766
  %2036 = vst [vmem:[%s2021 + $0x70] sm:$0xff] %v1769
  %2037 = vst [vmem:[%s2021 + $0x78] sm:$0xff] %v1772
  %2038 = vst [vmem:[%s2021 + $0x80] sm:$0xff] %v1775
  %2039 = vst [vmem:[%s2021 + $0x88] sm:$0xff] %v1778
  %2040 = vst [vmem:[%s2021 + $0x90] sm:$0xff] %v1781
  %2041 = vst [vmem:[%s2021 + $0x98] sm:$0xff] %v1784
  %2042 = vst [vmem:[%s2021 + $0xa0] sm:$0xff] %v1787
  %2043 = vst [vmem:[%s2021 + $0xa8] sm:$0xff] %v1790
  %2044 = vst [vmem:[%s2021 + $0xb0] sm:$0xff] %v1793
  %2045 = vst [vmem:[%s2021 + $0xb8] sm:$0xff] %v1796
  %2046 = vst [vmem:[%s2021 + $0xc0] sm:$0xff] %v1799
  %2047 = vst [vmem:[%s2021 + $0xc8] sm:$0xff] %v1802
  %2048 = vst [vmem:[%s2021 + $0xd0] sm:$0xff] %v1805
  %2049 = vst [vmem:[%s2021 + $0xd8] sm:$0xff] %v1808
  %2050 = vst [vmem:[%s2021 + $0xe0] sm:$0xff] %v1811
  %2051 = vst [vmem:[%s2021 + $0xe8] sm:$0xff] %v1814
  %2052 = vst [vmem:[%s2021 + $0xf0] sm:$0xff] %v1817
  %2053 = vst [vmem:[%s2021 + $0xf8] sm:$0xff] %v1820
  %s2054 = scalar_lea.vmem %s3, 256
  %v2055 = vld [vmem:[%s2054] sm:$0xff]
  %v2056 = vld [vmem:[%s2054 + $0x8] sm:$0xff]
  %v2057 = vld [vmem:[%s2054 + $0x10] sm:$0xff]
  %v2058 = vld [vmem:[%s2054 + $0x18] sm:$0xff]
  %v2059 = vld [vmem:[%s2054 + $0x20] sm:$0xff]
  %v2060 = vld [vmem:[%s2054 + $0x28] sm:$0xff]
  %v2061 = vld [vmem:[%s2054 + $0x30] sm:$0xff]
  %v2062 = vld [vmem:[%s2054 + $0x38] sm:$0xff]
  %v2063 = vld [vmem:[%s2054 + $0x40] sm:$0xff]
  %v2064 = vld [vmem:[%s2054 + $0x48] sm:$0xff]
  %v2065 = vld [vmem:[%s2054 + $0x50] sm:$0xff]
  %v2066 = vld [vmem:[%s2054 + $0x58] sm:$0xff]
  %v2067 = vld [vmem:[%s2054 + $0x60] sm:$0xff]
  %v2068 = vld [vmem:[%s2054 + $0x68] sm:$0xff]
  %v2069 = vld [vmem:[%s2054 + $0x70] sm:$0xff]
  %v2070 = vld [vmem:[%s2054 + $0x78] sm:$0xff]
  %2071 = vmatpush.msra.mxu0 0.0
  %2072 = vmatpush.msra.mxu0 0.0
  %2073 = vmatpush.msra.mxu0 0.0
  %2074 = vmatpush.msra.mxu0 0.0
  %2075 = vmatpush.msra.mxu0 0.0
  %2076 = vmatpush.msra.mxu0 0.0
  %2077 = vmatpush.msra.mxu0 0.0
  %2078 = vmatpush.msra.mxu0 0.0
  %2079 = vmatpush.msra.mxu0 %v2069
  %2080 = vmatpush.msra.mxu0 %v2067
  %2081 = vmatpush.msra.mxu0 %v2065
  %2082 = vmatpush.msra.mxu0 %v2063
  %2083 = vmatpush.msra.mxu0 %v2061
  %2084 = vmatpush.msra.mxu0 %v2059
  %2085 = vmatpush.msra.mxu0 %v2057
  %2086 = vmatpush.msra.mxu0 %v2055
  %2087 = vmatmul.f32.gmra.mxu0 %v69
  %v2088 = vpop.f32.mrf.mxu0
  %v2089 = vadd.f32 0.0, %v2088
  %2090 = vmatmul.f32.gmra.mxu0 %v72
  %v2091 = vpop.f32.mrf.mxu0
  %v2092 = vadd.f32 0.0, %v2091
  %2093 = vmatmul.f32.gmra.mxu0 %v75
  %v2094 = vpop.f32.mrf.mxu0
  %v2095 = vadd.f32 0.0, %v2094
  %2096 = vmatmul.f32.gmra.mxu0 %v78
  %v2097 = vpop.f32.mrf.mxu0
  %v2098 = vadd.f32 0.0, %v2097
  %2099 = vmatmul.f32.gmra.mxu0 %v81
  %v2100 = vpop.f32.mrf.mxu0
  %v2101 = vadd.f32 0.0, %v2100
  %2102 = vmatmul.f32.gmra.mxu0 %v84
  %v2103 = vpop.f32.mrf.mxu0
  %v2104 = vadd.f32 0.0, %v2103
  %2105 = vmatmul.f32.gmra.mxu0 %v87
  %v2106 = vpop.f32.mrf.mxu0
  %v2107 = vadd.f32 0.0, %v2106
  %2108 = vmatmul.f32.gmra.mxu0 %v90
  %v2109 = vpop.f32.mrf.mxu0
  %v2110 = vadd.f32 0.0, %v2109
  %2111 = vmatmul.f32.gmra.mxu0 %v93
  %v2112 = vpop.f32.mrf.mxu0
  %v2113 = vadd.f32 0.0, %v2112
  %2114 = vmatmul.f32.gmra.mxu0 %v96
  %v2115 = vpop.f32.mrf.mxu0
  %v2116 = vadd.f32 0.0, %v2115
  %2117 = vmatmul.f32.gmra.mxu0 %v99
  %v2118 = vpop.f32.mrf.mxu0
  %v2119 = vadd.f32 0.0, %v2118
  %2120 = vmatmul.f32.gmra.mxu0 %v102
  %v2121 = vpop.f32.mrf.mxu0
  %v2122 = vadd.f32 0.0, %v2121
  %2123 = vmatmul.f32.gmra.mxu0 %v105
  %v2124 = vpop.f32.mrf.mxu0
  %v2125 = vadd.f32 0.0, %v2124
  %2126 = vmatmul.f32.gmra.mxu0 %v108
  %v2127 = vpop.f32.mrf.mxu0
  %v2128 = vadd.f32 0.0, %v2127
  %2129 = vmatmul.f32.gmra.mxu0 %v111
  %v2130 = vpop.f32.mrf.mxu0
  %v2131 = vadd.f32 0.0, %v2130
  %2132 = vmatmul.f32.gmra.mxu0 %v114
  %v2133 = vpop.f32.mrf.mxu0
  %v2134 = vadd.f32 0.0, %v2133
  %2135 = vmatmul.f32.gmra.mxu0 %v117
  %v2136 = vpop.f32.mrf.mxu0
  %v2137 = vadd.f32 0.0, %v2136
  %2138 = vmatmul.f32.gmra.mxu0 %v120
  %v2139 = vpop.f32.mrf.mxu0
  %v2140 = vadd.f32 0.0, %v2139
  %2141 = vmatmul.f32.gmra.mxu0 %v123
  %v2142 = vpop.f32.mrf.mxu0
  %v2143 = vadd.f32 0.0, %v2142
  %2144 = vmatmul.f32.gmra.mxu0 %v126
  %v2145 = vpop.f32.mrf.mxu0
  %v2146 = vadd.f32 0.0, %v2145
  %2147 = vmatmul.f32.gmra.mxu0 %v129
  %v2148 = vpop.f32.mrf.mxu0
  %v2149 = vadd.f32 0.0, %v2148
  %2150 = vmatmul.f32.gmra.mxu0 %v132
  %v2151 = vpop.f32.mrf.mxu0
  %v2152 = vadd.f32 0.0, %v2151
  %2153 = vmatmul.f32.gmra.mxu0 %v135
  %v2154 = vpop.f32.mrf.mxu0
  %v2155 = vadd.f32 0.0, %v2154
  %2156 = vmatmul.f32.gmra.mxu0 %v138
  %v2157 = vpop.f32.mrf.mxu0
  %v2158 = vadd.f32 0.0, %v2157
  %2159 = vmatmul.f32.gmra.mxu0 %v141
  %v2160 = vpop.f32.mrf.mxu0
  %v2161 = vadd.f32 0.0, %v2160
  %2162 = vmatmul.f32.gmra.mxu0 %v144
  %v2163 = vpop.f32.mrf.mxu0
  %v2164 = vadd.f32 0.0, %v2163
  %2165 = vmatmul.f32.gmra.mxu0 %v147
  %v2166 = vpop.f32.mrf.mxu0
  %v2167 = vadd.f32 0.0, %v2166
  %2168 = vmatmul.f32.gmra.mxu0 %v150
  %v2169 = vpop.f32.mrf.mxu0
  %v2170 = vadd.f32 0.0, %v2169
  %2171 = vmatmul.f32.gmra.mxu0 %v153
  %v2172 = vpop.f32.mrf.mxu0
  %v2173 = vadd.f32 0.0, %v2172
  %2174 = vmatmul.f32.gmra.mxu0 %v156
  %v2175 = vpop.f32.mrf.mxu0
  %v2176 = vadd.f32 0.0, %v2175
  %2177 = vmatmul.f32.gmra.mxu0 %v159
  %v2178 = vpop.f32.mrf.mxu0
  %v2179 = vadd.f32 0.0, %v2178
  %2180 = vmatmul.f32.gmra.mxu0 %v162
  %v2181 = vpop.f32.mrf.mxu0
  %v2182 = vadd.f32 0.0, %v2181
  %2183 = vdwg.mxu0
  %2184 = vmatpush.msra.mxu0 0.0
  %2185 = vmatpush.msra.mxu0 0.0
  %2186 = vmatpush.msra.mxu0 0.0
  %2187 = vmatpush.msra.mxu0 0.0
  %2188 = vmatpush.msra.mxu0 0.0
  %2189 = vmatpush.msra.mxu0 0.0
  %2190 = vmatpush.msra.mxu0 0.0
  %2191 = vmatpush.msra.mxu0 0.0
  %2192 = vmatpush.msra.mxu0 %v2070
  %2193 = vmatpush.msra.mxu0 %v2068
  %2194 = vmatpush.msra.mxu0 %v2066
  %2195 = vmatpush.msra.mxu0 %v2064
  %2196 = vmatpush.msra.mxu0 %v2062
  %2197 = vmatpush.msra.mxu0 %v2060
  %2198 = vmatpush.msra.mxu0 %v2058
  %2199 = vmatpush.msra.mxu0 %v2056
  %2200 = vmatmul.f32.gmra.mxu0 %v69
  %v2201 = vpop.f32.mrf.mxu0
  %v2202 = vadd.f32 0.0, %v2201
  %2203 = vmatmul.f32.gmra.mxu0 %v72
  %v2204 = vpop.f32.mrf.mxu0
  %v2205 = vadd.f32 0.0, %v2204
  %2206 = vmatmul.f32.gmra.mxu0 %v75
  %v2207 = vpop.f32.mrf.mxu0
  %v2208 = vadd.f32 0.0, %v2207
  %2209 = vmatmul.f32.gmra.mxu0 %v78
  %v2210 = vpop.f32.mrf.mxu0
  %v2211 = vadd.f32 0.0, %v2210
  %2212 = vmatmul.f32.gmra.mxu0 %v81
  %v2213 = vpop.f32.mrf.mxu0
  %v2214 = vadd.f32 0.0, %v2213
  %2215 = vmatmul.f32.gmra.mxu0 %v84
  %v2216 = vpop.f32.mrf.mxu0
  %v2217 = vadd.f32 0.0, %v2216
  %2218 = vmatmul.f32.gmra.mxu0 %v87
  %v2219 = vpop.f32.mrf.mxu0
  %v2220 = vadd.f32 0.0, %v2219
  %2221 = vmatmul.f32.gmra.mxu0 %v90
  %v2222 = vpop.f32.mrf.mxu0
  %v2223 = vadd.f32 0.0, %v2222
  %2224 = vmatmul.f32.gmra.mxu0 %v93
  %v2225 = vpop.f32.mrf.mxu0
  %v2226 = vadd.f32 0.0, %v2225
  %2227 = vmatmul.f32.gmra.mxu0 %v96
  %v2228 = vpop.f32.mrf.mxu0
  %v2229 = vadd.f32 0.0, %v2228
  %2230 = vmatmul.f32.gmra.mxu0 %v99
  %v2231 = vpop.f32.mrf.mxu0
  %v2232 = vadd.f32 0.0, %v2231
  %2233 = vmatmul.f32.gmra.mxu0 %v102
  %v2234 = vpop.f32.mrf.mxu0
  %v2235 = vadd.f32 0.0, %v2234
  %2236 = vmatmul.f32.gmra.mxu0 %v105
  %v2237 = vpop.f32.mrf.mxu0
  %v2238 = vadd.f32 0.0, %v2237
  %2239 = vmatmul.f32.gmra.mxu0 %v108
  %v2240 = vpop.f32.mrf.mxu0
  %v2241 = vadd.f32 0.0, %v2240
  %2242 = vmatmul.f32.gmra.mxu0 %v111
  %v2243 = vpop.f32.mrf.mxu0
  %v2244 = vadd.f32 0.0, %v2243
  %2245 = vmatmul.f32.gmra.mxu0 %v114
  %v2246 = vpop.f32.mrf.mxu0
  %v2247 = vadd.f32 0.0, %v2246
  %2248 = vmatmul.f32.gmra.mxu0 %v117
  %v2249 = vpop.f32.mrf.mxu0
  %v2250 = vadd.f32 0.0, %v2249
  %2251 = vmatmul.f32.gmra.mxu0 %v120
  %v2252 = vpop.f32.mrf.mxu0
  %v2253 = vadd.f32 0.0, %v2252
  %2254 = vmatmul.f32.gmra.mxu0 %v123
  %v2255 = vpop.f32.mrf.mxu0
  %v2256 = vadd.f32 0.0, %v2255
  %2257 = vmatmul.f32.gmra.mxu0 %v126
  %v2258 = vpop.f32.mrf.mxu0
  %v2259 = vadd.f32 0.0, %v2258
  %2260 = vmatmul.f32.gmra.mxu0 %v129
  %v2261 = vpop.f32.mrf.mxu0
  %v2262 = vadd.f32 0.0, %v2261
  %2263 = vmatmul.f32.gmra.mxu0 %v132
  %v2264 = vpop.f32.mrf.mxu0
  %v2265 = vadd.f32 0.0, %v2264
  %2266 = vmatmul.f32.gmra.mxu0 %v135
  %v2267 = vpop.f32.mrf.mxu0
  %v2268 = vadd.f32 0.0, %v2267
  %2269 = vmatmul.f32.gmra.mxu0 %v138
  %v2270 = vpop.f32.mrf.mxu0
  %v2271 = vadd.f32 0.0, %v2270
  %2272 = vmatmul.f32.gmra.mxu0 %v141
  %v2273 = vpop.f32.mrf.mxu0
  %v2274 = vadd.f32 0.0, %v2273
  %2275 = vmatmul.f32.gmra.mxu0 %v144
  %v2276 = vpop.f32.mrf.mxu0
  %v2277 = vadd.f32 0.0, %v2276
  %2278 = vmatmul.f32.gmra.mxu0 %v147
  %v2279 = vpop.f32.mrf.mxu0
  %v2280 = vadd.f32 0.0, %v2279
  %2281 = vmatmul.f32.gmra.mxu0 %v150
  %v2282 = vpop.f32.mrf.mxu0
  %v2283 = vadd.f32 0.0, %v2282
  %2284 = vmatmul.f32.gmra.mxu0 %v153
  %v2285 = vpop.f32.mrf.mxu0
  %v2286 = vadd.f32 0.0, %v2285
  %2287 = vmatmul.f32.gmra.mxu0 %v156
  %v2288 = vpop.f32.mrf.mxu0
  %v2289 = vadd.f32 0.0, %v2288
  %2290 = vmatmul.f32.gmra.mxu0 %v159
  %v2291 = vpop.f32.mrf.mxu0
  %v2292 = vadd.f32 0.0, %v2291
  %2293 = vmatmul.f32.gmra.mxu0 %v162
  %v2294 = vpop.f32.mrf.mxu0
  %v2295 = vadd.f32 0.0, %v2294
  %2296 = vdwg.mxu0
  %s2297 = scalar_lea.vmem %s4, 2
  %v2298 = vld [vmem:[%s2297] sm:$0x1]
  %v2300 = vperm.slane %v2298, 0
  %v2302 = vmul.f32 %v917, %v2300
  %v2303 = vmul.f32 %v918, %v2300
  %v2304 = vmul.f32 %v919, %v2300
  %v2305 = vmul.f32 %v920, %v2300
  %v2306 = vmul.f32 %v921, %v2300
  %v2307 = vmul.f32 %v922, %v2300
  %v2308 = vmul.f32 %v923, %v2300
  %v2309 = vmul.f32 %v924, %v2300
  %v2310 = vmul.f32 %v925, %v2300
  %v2311 = vmul.f32 %v926, %v2300
  %v2312 = vmul.f32 %v927, %v2300
  %v2313 = vmul.f32 %v928, %v2300
  %v2314 = vmul.f32 %v929, %v2300
  %v2315 = vmul.f32 %v930, %v2300
  %v2316 = vmul.f32 %v931, %v2300
  %v2317 = vmul.f32 %v932, %v2300
  %v2318 = vmul.f32 %v933, %v2300
  %v2319 = vmul.f32 %v934, %v2300
  %v2320 = vmul.f32 %v935, %v2300
  %v2321 = vmul.f32 %v936, %v2300
  %v2322 = vmul.f32 %v937, %v2300
  %v2323 = vmul.f32 %v938, %v2300
  %v2324 = vmul.f32 %v939, %v2300
  %v2325 = vmul.f32 %v940, %v2300
  %v2326 = vmul.f32 %v941, %v2300
  %v2327 = vmul.f32 %v942, %v2300
  %v2328 = vmul.f32 %v943, %v2300
  %v2329 = vmul.f32 %v944, %v2300
  %v2330 = vmul.f32 %v945, %v2300
  %v2331 = vmul.f32 %v946, %v2300
  %v2332 = vmul.f32 %v947, %v2300
  %v2333 = vmul.f32 %v948, %v2300
  %v2334 = vmul.f32 %v2302, 1.442695
  %v2335 = vpow.pop %v2334
  %v2336 = vmul.f32 %v2303, 1.442695
  %v2337 = vpow.pop %v2336
  %v2338 = vmul.f32 %v2304, 1.442695
  %v2339 = vpow.pop %v2338
  %v2340 = vmul.f32 %v2305, 1.442695
  %v2341 = vpow.pop %v2340
  %v2342 = vmul.f32 %v2306, 1.442695
  %v2343 = vpow.pop %v2342
  %v2344 = vmul.f32 %v2307, 1.442695
  %v2345 = vpow.pop %v2344
  %v2346 = vmul.f32 %v2308, 1.442695
  %v2347 = vpow.pop %v2346
  %v2348 = vmul.f32 %v2309, 1.442695
  %v2349 = vpow.pop %v2348
  %v2350 = vmul.f32 %v2310, 1.442695
  %v2351 = vpow.pop %v2350
  %v2352 = vmul.f32 %v2311, 1.442695
  %v2353 = vpow.pop %v2352
  %v2354 = vmul.f32 %v2312, 1.442695
  %v2355 = vpow.pop %v2354
  %v2356 = vmul.f32 %v2313, 1.442695
  %v2357 = vpow.pop %v2356
  %v2358 = vmul.f32 %v2314, 1.442695
  %v2359 = vpow.pop %v2358
  %v2360 = vmul.f32 %v2315, 1.442695
  %v2361 = vpow.pop %v2360
  %v2362 = vmul.f32 %v2316, 1.442695
  %v2363 = vpow.pop %v2362
  %v2364 = vmul.f32 %v2317, 1.442695
  %v2365 = vpow.pop %v2364
  %v2366 = vmul.f32 %v2318, 1.442695
  %v2367 = vpow.pop %v2366
  %v2368 = vmul.f32 %v2319, 1.442695
  %v2369 = vpow.pop %v2368
  %v2370 = vmul.f32 %v2320, 1.442695
  %v2371 = vpow.pop %v2370
  %v2372 = vmul.f32 %v2321, 1.442695
  %v2373 = vpow.pop %v2372
  %v2374 = vmul.f32 %v2322, 1.442695
  %v2375 = vpow.pop %v2374
  %v2376 = vmul.f32 %v2323, 1.442695
  %v2377 = vpow.pop %v2376
  %v2378 = vmul.f32 %v2324, 1.442695
  %v2379 = vpow.pop %v2378
  %v2380 = vmul.f32 %v2325, 1.442695
  %v2381 = vpow.pop %v2380
  %v2382 = vmul.f32 %v2326, 1.442695
  %v2383 = vpow.pop %v2382
  %v2384 = vmul.f32 %v2327, 1.442695
  %v2385 = vpow.pop %v2384
  %v2386 = vmul.f32 %v2328, 1.442695
  %v2387 = vpow.pop %v2386
  %v2388 = vmul.f32 %v2329, 1.442695
  %v2389 = vpow.pop %v2388
  %v2390 = vmul.f32 %v2330, 1.442695
  %v2391 = vpow.pop %v2390
  %v2392 = vmul.f32 %v2331, 1.442695
  %v2393 = vpow.pop %v2392
  %v2394 = vmul.f32 %v2332, 1.442695
  %v2395 = vpow.pop %v2394
  %v2396 = vmul.f32 %v2333, 1.442695
  %v2397 = vpow.pop %v2396
  %s2398 = scalar_lea.vmem [#allocation2], 512
  %2399 = vst [vmem:[%s2398] sm:$0xff] %v2335
  %2400 = vst [vmem:[%s2398 + $0x8] sm:$0xff] %v2337
  %2401 = vst [vmem:[%s2398 + $0x10] sm:$0xff] %v2339
  %2402 = vst [vmem:[%s2398 + $0x18] sm:$0xff] %v2341
  %2403 = vst [vmem:[%s2398 + $0x20] sm:$0xff] %v2343
  %2404 = vst [vmem:[%s2398 + $0x28] sm:$0xff] %v2345
  %2405 = vst [vmem:[%s2398 + $0x30] sm:$0xff] %v2347
  %2406 = vst [vmem:[%s2398 + $0x38] sm:$0xff] %v2349
  %2407 = vst [vmem:[%s2398 + $0x40] sm:$0xff] %v2351
  %2408 = vst [vmem:[%s2398 + $0x48] sm:$0xff] %v2353
  %2409 = vst [vmem:[%s2398 + $0x50] sm:$0xff] %v2355
  %2410 = vst [vmem:[%s2398 + $0x58] sm:$0xff] %v2357
  %2411 = vst [vmem:[%s2398 + $0x60] sm:$0xff] %v2359
  %2412 = vst [vmem:[%s2398 + $0x68] sm:$0xff] %v2361
  %2413 = vst [vmem:[%s2398 + $0x70] sm:$0xff] %v2363
  %2414 = vst [vmem:[%s2398 + $0x78] sm:$0xff] %v2365
  %2415 = vst [vmem:[%s2398 + $0x80] sm:$0xff] %v2367
  %2416 = vst [vmem:[%s2398 + $0x88] sm:$0xff] %v2369
  %2417 = vst [vmem:[%s2398 + $0x90] sm:$0xff] %v2371
  %2418 = vst [vmem:[%s2398 + $0x98] sm:$0xff] %v2373
  %2419 = vst [vmem:[%s2398 + $0xa0] sm:$0xff] %v2375
  %2420 = vst [vmem:[%s2398 + $0xa8] sm:$0xff] %v2377
  %2421 = vst [vmem:[%s2398 + $0xb0] sm:$0xff] %v2379
  %2422 = vst [vmem:[%s2398 + $0xb8] sm:$0xff] %v2381
  %2423 = vst [vmem:[%s2398 + $0xc0] sm:$0xff] %v2383
  %2424 = vst [vmem:[%s2398 + $0xc8] sm:$0xff] %v2385
  %2425 = vst [vmem:[%s2398 + $0xd0] sm:$0xff] %v2387
  %2426 = vst [vmem:[%s2398 + $0xd8] sm:$0xff] %v2389
  %2427 = vst [vmem:[%s2398 + $0xe0] sm:$0xff] %v2391
  %2428 = vst [vmem:[%s2398 + $0xe8] sm:$0xff] %v2393
  %2429 = vst [vmem:[%s2398 + $0xf0] sm:$0xff] %v2395
  %2430 = vst [vmem:[%s2398 + $0xf8] sm:$0xff] %v2397
  %v2431 = vmul.f32 %v1077, %v2089
  %v2432 = vmul.f32 %v1078, %v2092
  %v2433 = vmul.f32 %v1079, %v2095
  %v2434 = vmul.f32 %v1080, %v2098
  %v2435 = vmul.f32 %v1081, %v2101
  %v2436 = vmul.f32 %v1082, %v2104
  %v2437 = vmul.f32 %v1083, %v2107
  %v2438 = vmul.f32 %v1084, %v2110
  %v2439 = vmul.f32 %v1085, %v2113
  %v2440 = vmul.f32 %v1086, %v2116
  %v2441 = vmul.f32 %v1087, %v2119
  %v2442 = vmul.f32 %v1088, %v2122
  %v2443 = vmul.f32 %v1089, %v2125
  %v2444 = vmul.f32 %v1090, %v2128
  %v2445 = vmul.f32 %v1091, %v2131
  %v2446 = vmul.f32 %v1092, %v2134
  %v2447 = vmul.f32 %v1093, %v2137
  %v2448 = vmul.f32 %v1094, %v2140
  %v2449 = vmul.f32 %v1095, %v2143
  %v2450 = vmul.f32 %v1096, %v2146
  %v2451 = vmul.f32 %v1097, %v2149
  %v2452 = vmul.f32 %v1098, %v2152
  %v2453 = vmul.f32 %v1099, %v2155
  %v2454 = vmul.f32 %v1100, %v2158
  %v2455 = vmul.f32 %v1101, %v2161
  %v2456 = vmul.f32 %v1102, %v2164
  %v2457 = vmul.f32 %v1103, %v2167
  %v2458 = vmul.f32 %v1104, %v2170
  %v2459 = vmul.f32 %v1105, %v2173
  %v2460 = vmul.f32 %v1106, %v2176
  %v2461 = vmul.f32 %v1107, %v2179
  %v2462 = vmul.f32 %v1108, %v2182
  %s2463 = scalar_lea.vmem [#allocation3], 512
  %2464 = vst [vmem:[%s2463] sm:$0xff] %v2431
  %2465 = vst [vmem:[%s2463 + $0x8] sm:$0xff] %v2432
  %2466 = vst [vmem:[%s2463 + $0x10] sm:$0xff] %v2433
  %2467 = vst [vmem:[%s2463 + $0x18] sm:$0xff] %v2434
  %2468 = vst [vmem:[%s2463 + $0x20] sm:$0xff] %v2435
  %2469 = vst [vmem:[%s2463 + $0x28] sm:$0xff] %v2436
  %2470 = vst [vmem:[%s2463 + $0x30] sm:$0xff] %v2437
  %2471 = vst [vmem:[%s2463 + $0x38] sm:$0xff] %v2438
  %2472 = vst [vmem:[%s2463 + $0x40] sm:$0xff] %v2439
  %2473 = vst [vmem:[%s2463 + $0x48] sm:$0xff] %v2440
  %2474 = vst [vmem:[%s2463 + $0x50] sm:$0xff] %v2441
  %2475 = vst [vmem:[%s2463 + $0x58] sm:$0xff] %v2442
  %2476 = vst [vmem:[%s2463 + $0x60] sm:$0xff] %v2443
  %2477 = vst [vmem:[%s2463 + $0x68] sm:$0xff] %v2444
  %2478 = vst [vmem:[%s2463 + $0x70] sm:$0xff] %v2445
  %2479 = vst [vmem:[%s2463 + $0x78] sm:$0xff] %v2446
  %2480 = vst [vmem:[%s2463 + $0x80] sm:$0xff] %v2447
  %2481 = vst [vmem:[%s2463 + $0x88] sm:$0xff] %v2448
  %2482 = vst [vmem:[%s2463 + $0x90] sm:$0xff] %v2449
  %2483 = vst [vmem:[%s2463 + $0x98] sm:$0xff] %v2450
  %2484 = vst [vmem:[%s2463 + $0xa0] sm:$0xff] %v2451
  %2485 = vst [vmem:[%s2463 + $0xa8] sm:$0xff] %v2452
  %2486 = vst [vmem:[%s2463 + $0xb0] sm:$0xff] %v2453
  %2487 = vst [vmem:[%s2463 + $0xb8] sm:$0xff] %v2454
  %2488 = vst [vmem:[%s2463 + $0xc0] sm:$0xff] %v2455
  %2489 = vst [vmem:[%s2463 + $0xc8] sm:$0xff] %v2456
  %2490 = vst [vmem:[%s2463 + $0xd0] sm:$0xff] %v2457
  %2491 = vst [vmem:[%s2463 + $0xd8] sm:$0xff] %v2458
  %2492 = vst [vmem:[%s2463 + $0xe0] sm:$0xff] %v2459
  %2493 = vst [vmem:[%s2463 + $0xe8] sm:$0xff] %v2460
  %2494 = vst [vmem:[%s2463 + $0xf0] sm:$0xff] %v2461
  %2495 = vst [vmem:[%s2463 + $0xf8] sm:$0xff] %v2462
  %s2496 = scalar_lea.vmem [#allocation4], 512
  %2497 = vst [vmem:[%s2496] sm:$0xff] %v2202
  %2498 = vst [vmem:[%s2496 + $0x8] sm:$0xff] %v2205
  %2499 = vst [vmem:[%s2496 + $0x10] sm:$0xff] %v2208
  %2500 = vst [vmem:[%s2496 + $0x18] sm:$0xff] %v2211
  %2501 = vst [vmem:[%s2496 + $0x20] sm:$0xff] %v2214
  %2502 = vst [vmem:[%s2496 + $0x28] sm:$0xff] %v2217
  %2503 = vst [vmem:[%s2496 + $0x30] sm:$0xff] %v2220
  %2504 = vst [vmem:[%s2496 + $0x38] sm:$0xff] %v2223
  %2505 = vst [vmem:[%s2496 + $0x40] sm:$0xff] %v2226
  %2506 = vst [vmem:[%s2496 + $0x48] sm:$0xff] %v2229
  %2507 = vst [vmem:[%s2496 + $0x50] sm:$0xff] %v2232
  %2508 = vst [vmem:[%s2496 + $0x58] sm:$0xff] %v2235
  %2509 = vst [vmem:[%s2496 + $0x60] sm:$0xff] %v2238
  %2510 = vst [vmem:[%s2496 + $0x68] sm:$0xff] %v2241
  %2511 = vst [vmem:[%s2496 + $0x70] sm:$0xff] %v2244
  %2512 = vst [vmem:[%s2496 + $0x78] sm:$0xff] %v2247
  %2513 = vst [vmem:[%s2496 + $0x80] sm:$0xff] %v2250
  %2514 = vst [vmem:[%s2496 + $0x88] sm:$0xff] %v2253
  %2515 = vst [vmem:[%s2496 + $0x90] sm:$0xff] %v2256
  %2516 = vst [vmem:[%s2496 + $0x98] sm:$0xff] %v2259
  %2517 = vst [vmem:[%s2496 + $0xa0] sm:$0xff] %v2262
  %2518 = vst [vmem:[%s2496 + $0xa8] sm:$0xff] %v2265
  %2519 = vst [vmem:[%s2496 + $0xb0] sm:$0xff] %v2268
  %2520 = vst [vmem:[%s2496 + $0xb8] sm:$0xff] %v2271
  %2521 = vst [vmem:[%s2496 + $0xc0] sm:$0xff] %v2274
  %2522 = vst [vmem:[%s2496 + $0xc8] sm:$0xff] %v2277
  %2523 = vst [vmem:[%s2496 + $0xd0] sm:$0xff] %v2280
  %2524 = vst [vmem:[%s2496 + $0xd8] sm:$0xff] %v2283
  %2525 = vst [vmem:[%s2496 + $0xe0] sm:$0xff] %v2286
  %2526 = vst [vmem:[%s2496 + $0xe8] sm:$0xff] %v2289
  %2527 = vst [vmem:[%s2496 + $0xf0] sm:$0xff] %v2292
  %2528 = vst [vmem:[%s2496 + $0xf8] sm:$0xff] %v2295
  %s2529 = scalar_lea.vmem %s3, 384
  %v2530 = vld [vmem:[%s2529] sm:$0xff]
  %v2531 = vld [vmem:[%s2529 + $0x8] sm:$0xff]
  %v2532 = vld [vmem:[%s2529 + $0x10] sm:$0xff]
  %v2533 = vld [vmem:[%s2529 + $0x18] sm:$0xff]
  %v2534 = vld [vmem:[%s2529 + $0x20] sm:$0xff]
  %v2535 = vld [vmem:[%s2529 + $0x28] sm:$0xff]
  %v2536 = vld [vmem:[%s2529 + $0x30] sm:$0xff]
  %v2537 = vld [vmem:[%s2529 + $0x38] sm:$0xff]
  %v2538 = vld [vmem:[%s2529 + $0x40] sm:$0xff]
  %v2539 = vld [vmem:[%s2529 + $0x48] sm:$0xff]
  %v2540 = vld [vmem:[%s2529 + $0x50] sm:$0xff]
  %v2541 = vld [vmem:[%s2529 + $0x58] sm:$0xff]
  %v2542 = vld [vmem:[%s2529 + $0x60] sm:$0xff]
  %v2543 = vld [vmem:[%s2529 + $0x68] sm:$0xff]
  %v2544 = vld [vmem:[%s2529 + $0x70] sm:$0xff]
  %v2545 = vld [vmem:[%s2529 + $0x78] sm:$0xff]
  %2546 = vmatpush.msra.mxu0 0.0
  %2547 = vmatpush.msra.mxu0 0.0
  %2548 = vmatpush.msra.mxu0 0.0
  %2549 = vmatpush.msra.mxu0 0.0
  %2550 = vmatpush.msra.mxu0 0.0
  %2551 = vmatpush.msra.mxu0 0.0
  %2552 = vmatpush.msra.mxu0 0.0
  %2553 = vmatpush.msra.mxu0 0.0
  %2554 = vmatpush.msra.mxu0 %v2544
  %2555 = vmatpush.msra.mxu0 %v2542
  %2556 = vmatpush.msra.mxu0 %v2540
  %2557 = vmatpush.msra.mxu0 %v2538
  %2558 = vmatpush.msra.mxu0 %v2536
  %2559 = vmatpush.msra.mxu0 %v2534
  %2560 = vmatpush.msra.mxu0 %v2532
  %2561 = vmatpush.msra.mxu0 %v2530
  %2562 = vmatmul.f32.gmra.mxu0 %v69
  %v2563 = vpop.f32.mrf.mxu0
  %v2564 = vadd.f32 0.0, %v2563
  %2565 = vmatmul.f32.gmra.mxu0 %v72
  %v2566 = vpop.f32.mrf.mxu0
  %v2567 = vadd.f32 0.0, %v2566
  %2568 = vmatmul.f32.gmra.mxu0 %v75
  %v2569 = vpop.f32.mrf.mxu0
  %v2570 = vadd.f32 0.0, %v2569
  %2571 = vmatmul.f32.gmra.mxu0 %v78
  %v2572 = vpop.f32.mrf.mxu0
  %v2573 = vadd.f32 0.0, %v2572
  %2574 = vmatmul.f32.gmra.mxu0 %v81
  %v2575 = vpop.f32.mrf.mxu0
  %v2576 = vadd.f32 0.0, %v2575
  %2577 = vmatmul.f32.gmra.mxu0 %v84
  %v2578 = vpop.f32.mrf.mxu0
  %v2579 = vadd.f32 0.0, %v2578
  %2580 = vmatmul.f32.gmra.mxu0 %v87
  %v2581 = vpop.f32.mrf.mxu0
  %v2582 = vadd.f32 0.0, %v2581
  %2583 = vmatmul.f32.gmra.mxu0 %v90
  %v2584 = vpop.f32.mrf.mxu0
  %v2585 = vadd.f32 0.0, %v2584
  %2586 = vmatmul.f32.gmra.mxu0 %v93
  %v2587 = vpop.f32.mrf.mxu0
  %v2588 = vadd.f32 0.0, %v2587
  %2589 = vmatmul.f32.gmra.mxu0 %v96
  %v2590 = vpop.f32.mrf.mxu0
  %v2591 = vadd.f32 0.0, %v2590
  %2592 = vmatmul.f32.gmra.mxu0 %v99
  %v2593 = vpop.f32.mrf.mxu0
  %v2594 = vadd.f32 0.0, %v2593
  %2595 = vmatmul.f32.gmra.mxu0 %v102
  %v2596 = vpop.f32.mrf.mxu0
  %v2597 = vadd.f32 0.0, %v2596
  %2598 = vmatmul.f32.gmra.mxu0 %v105
  %v2599 = vpop.f32.mrf.mxu0
  %v2600 = vadd.f32 0.0, %v2599
  %2601 = vmatmul.f32.gmra.mxu0 %v108
  %v2602 = vpop.f32.mrf.mxu0
  %v2603 = vadd.f32 0.0, %v2602
  %2604 = vmatmul.f32.gmra.mxu0 %v111
  %v2605 = vpop.f32.mrf.mxu0
  %v2606 = vadd.f32 0.0, %v2605
  %2607 = vmatmul.f32.gmra.mxu0 %v114
  %v2608 = vpop.f32.mrf.mxu0
  %v2609 = vadd.f32 0.0, %v2608
  %2610 = vmatmul.f32.gmra.mxu0 %v117
  %v2611 = vpop.f32.mrf.mxu0
  %v2612 = vadd.f32 0.0, %v2611
  %2613 = vmatmul.f32.gmra.mxu0 %v120
  %v2614 = vpop.f32.mrf.mxu0
  %v2615 = vadd.f32 0.0, %v2614
  %2616 = vmatmul.f32.gmra.mxu0 %v123
  %v2617 = vpop.f32.mrf.mxu0
  %v2618 = vadd.f32 0.0, %v2617
  %2619 = vmatmul.f32.gmra.mxu0 %v126
  %v2620 = vpop.f32.mrf.mxu0
  %v2621 = vadd.f32 0.0, %v2620
  %2622 = vmatmul.f32.gmra.mxu0 %v129
  %v2623 = vpop.f32.mrf.mxu0
  %v2624 = vadd.f32 0.0, %v2623
  %2625 = vmatmul.f32.gmra.mxu0 %v132
  %v2626 = vpop.f32.mrf.mxu0
  %v2627 = vadd.f32 0.0, %v2626
  %2628 = vmatmul.f32.gmra.mxu0 %v135
  %v2629 = vpop.f32.mrf.mxu0
  %v2630 = vadd.f32 0.0, %v2629
  %2631 = vmatmul.f32.gmra.mxu0 %v138
  %v2632 = vpop.f32.mrf.mxu0
  %v2633 = vadd.f32 0.0, %v2632
  %2634 = vmatmul.f32.gmra.mxu0 %v141
  %v2635 = vpop.f32.mrf.mxu0
  %v2636 = vadd.f32 0.0, %v2635
  %2637 = vmatmul.f32.gmra.mxu0 %v144
  %v2638 = vpop.f32.mrf.mxu0
  %v2639 = vadd.f32 0.0, %v2638
  %2640 = vmatmul.f32.gmra.mxu0 %v147
  %v2641 = vpop.f32.mrf.mxu0
  %v2642 = vadd.f32 0.0, %v2641
  %2643 = vmatmul.f32.gmra.mxu0 %v150
  %v2644 = vpop.f32.mrf.mxu0
  %v2645 = vadd.f32 0.0, %v2644
  %2646 = vmatmul.f32.gmra.mxu0 %v153
  %v2647 = vpop.f32.mrf.mxu0
  %v2648 = vadd.f32 0.0, %v2647
  %2649 = vmatmul.f32.gmra.mxu0 %v156
  %v2650 = vpop.f32.mrf.mxu0
  %v2651 = vadd.f32 0.0, %v2650
  %2652 = vmatmul.f32.gmra.mxu0 %v159
  %v2653 = vpop.f32.mrf.mxu0
  %v2654 = vadd.f32 0.0, %v2653
  %2655 = vmatmul.f32.gmra.mxu0 %v162
  %v2656 = vpop.f32.mrf.mxu0
  %v2657 = vadd.f32 0.0, %v2656
  %2658 = vdwg.mxu0
  %2659 = vmatpush.msra.mxu0 0.0
  %2660 = vmatpush.msra.mxu0 0.0
  %2661 = vmatpush.msra.mxu0 0.0
  %2662 = vmatpush.msra.mxu0 0.0
  %2663 = vmatpush.msra.mxu0 0.0
  %2664 = vmatpush.msra.mxu0 0.0
  %2665 = vmatpush.msra.mxu0 0.0
  %2666 = vmatpush.msra.mxu0 0.0
  %2667 = vmatpush.msra.mxu0 %v2545
  %2668 = vmatpush.msra.mxu0 %v2543
  %2669 = vmatpush.msra.mxu0 %v2541
  %2670 = vmatpush.msra.mxu0 %v2539
  %2671 = vmatpush.msra.mxu0 %v2537
  %2672 = vmatpush.msra.mxu0 %v2535
  %2673 = vmatpush.msra.mxu0 %v2533
  %2674 = vmatpush.msra.mxu0 %v2531
  %2675 = vmatmul.f32.gmra.mxu0 %v69
  %v2676 = vpop.f32.mrf.mxu0
  %v2677 = vadd.f32 0.0, %v2676
  %2678 = vmatmul.f32.gmra.mxu0 %v72
  %v2679 = vpop.f32.mrf.mxu0
  %v2680 = vadd.f32 0.0, %v2679
  %2681 = vmatmul.f32.gmra.mxu0 %v75
  %v2682 = vpop.f32.mrf.mxu0
  %v2683 = vadd.f32 0.0, %v2682
  %2684 = vmatmul.f32.gmra.mxu0 %v78
  %v2685 = vpop.f32.mrf.mxu0
  %v2686 = vadd.f32 0.0, %v2685
  %2687 = vmatmul.f32.gmra.mxu0 %v81
  %v2688 = vpop.f32.mrf.mxu0
  %v2689 = vadd.f32 0.0, %v2688
  %2690 = vmatmul.f32.gmra.mxu0 %v84
  %v2691 = vpop.f32.mrf.mxu0
  %v2692 = vadd.f32 0.0, %v2691
  %2693 = vmatmul.f32.gmra.mxu0 %v87
  %v2694 = vpop.f32.mrf.mxu0
  %v2695 = vadd.f32 0.0, %v2694
  %2696 = vmatmul.f32.gmra.mxu0 %v90
  %v2697 = vpop.f32.mrf.mxu0
  %v2698 = vadd.f32 0.0, %v2697
  %2699 = vmatmul.f32.gmra.mxu0 %v93
  %v2700 = vpop.f32.mrf.mxu0
  %v2701 = vadd.f32 0.0, %v2700
  %2702 = vmatmul.f32.gmra.mxu0 %v96
  %v2703 = vpop.f32.mrf.mxu0
  %v2704 = vadd.f32 0.0, %v2703
  %2705 = vmatmul.f32.gmra.mxu0 %v99
  %v2706 = vpop.f32.mrf.mxu0
  %v2707 = vadd.f32 0.0, %v2706
  %2708 = vmatmul.f32.gmra.mxu0 %v102
  %v2709 = vpop.f32.mrf.mxu0
  %v2710 = vadd.f32 0.0, %v2709
  %2711 = vmatmul.f32.gmra.mxu0 %v105
  %v2712 = vpop.f32.mrf.mxu0
  %v2713 = vadd.f32 0.0, %v2712
  %2714 = vmatmul.f32.gmra.mxu0 %v108
  %v2715 = vpop.f32.mrf.mxu0
  %v2716 = vadd.f32 0.0, %v2715
  %2717 = vmatmul.f32.gmra.mxu0 %v111
  %v2718 = vpop.f32.mrf.mxu0
  %v2719 = vadd.f32 0.0, %v2718
  %2720 = vmatmul.f32.gmra.mxu0 %v114
  %v2721 = vpop.f32.mrf.mxu0
  %v2722 = vadd.f32 0.0, %v2721
  %2723 = vmatmul.f32.gmra.mxu0 %v117
  %v2724 = vpop.f32.mrf.mxu0
  %v2725 = vadd.f32 0.0, %v2724
  %2726 = vmatmul.f32.gmra.mxu0 %v120
  %v2727 = vpop.f32.mrf.mxu0
  %v2728 = vadd.f32 0.0, %v2727
  %2729 = vmatmul.f32.gmra.mxu0 %v123
  %v2730 = vpop.f32.mrf.mxu0
  %v2731 = vadd.f32 0.0, %v2730
  %2732 = vmatmul.f32.gmra.mxu0 %v126
  %v2733 = vpop.f32.mrf.mxu0
  %v2734 = vadd.f32 0.0, %v2733
  %2735 = vmatmul.f32.gmra.mxu0 %v129
  %v2736 = vpop.f32.mrf.mxu0
  %v2737 = vadd.f32 0.0, %v2736
  %2738 = vmatmul.f32.gmra.mxu0 %v132
  %v2739 = vpop.f32.mrf.mxu0
  %v2740 = vadd.f32 0.0, %v2739
  %2741 = vmatmul.f32.gmra.mxu0 %v135
  %v2742 = vpop.f32.mrf.mxu0
  %v2743 = vadd.f32 0.0, %v2742
  %2744 = vmatmul.f32.gmra.mxu0 %v138
  %v2745 = vpop.f32.mrf.mxu0
  %v2746 = vadd.f32 0.0, %v2745
  %2747 = vmatmul.f32.gmra.mxu0 %v141
  %v2748 = vpop.f32.mrf.mxu0
  %v2749 = vadd.f32 0.0, %v2748
  %2750 = vmatmul.f32.gmra.mxu0 %v144
  %v2751 = vpop.f32.mrf.mxu0
  %v2752 = vadd.f32 0.0, %v2751
  %2753 = vmatmul.f32.gmra.mxu0 %v147
  %v2754 = vpop.f32.mrf.mxu0
  %v2755 = vadd.f32 0.0, %v2754
  %2756 = vmatmul.f32.gmra.mxu0 %v150
  %v2757 = vpop.f32.mrf.mxu0
  %v2758 = vadd.f32 0.0, %v2757
  %2759 = vmatmul.f32.gmra.mxu0 %v153
  %v2760 = vpop.f32.mrf.mxu0
  %v2761 = vadd.f32 0.0, %v2760
  %2762 = vmatmul.f32.gmra.mxu0 %v156
  %v2763 = vpop.f32.mrf.mxu0
  %v2764 = vadd.f32 0.0, %v2763
  %2765 = vmatmul.f32.gmra.mxu0 %v159
  %v2766 = vpop.f32.mrf.mxu0
  %v2767 = vadd.f32 0.0, %v2766
  %2768 = vmatmul.f32.gmra.mxu0 %v162
  %v2769 = vpop.f32.mrf.mxu0
  %v2770 = vadd.f32 0.0, %v2769
  %2771 = vdwg.mxu0
  %s2772 = scalar_lea.vmem %s4, 3
  %v2773 = vld [vmem:[%s2772] sm:$0x1]
  %v2775 = vperm.slane %v2773, 0
  %v2777 = vmul.f32 %v917, %v2775
  %v2778 = vmul.f32 %v918, %v2775
  %v2779 = vmul.f32 %v919, %v2775
  %v2780 = vmul.f32 %v920, %v2775
  %v2781 = vmul.f32 %v921, %v2775
  %v2782 = vmul.f32 %v922, %v2775
  %v2783 = vmul.f32 %v923, %v2775
  %v2784 = vmul.f32 %v924, %v2775
  %v2785 = vmul.f32 %v925, %v2775
  %v2786 = vmul.f32 %v926, %v2775
  %v2787 = vmul.f32 %v927, %v2775
  %v2788 = vmul.f32 %v928, %v2775
  %v2789 = vmul.f32 %v929, %v2775
  %v2790 = vmul.f32 %v930, %v2775
  %v2791 = vmul.f32 %v931, %v2775
  %v2792 = vmul.f32 %v932, %v2775
  %v2793 = vmul.f32 %v933, %v2775
  %v2794 = vmul.f32 %v934, %v2775
  %v2795 = vmul.f32 %v935, %v2775
  %v2796 = vmul.f32 %v936, %v2775
  %v2797 = vmul.f32 %v937, %v2775
  %v2798 = vmul.f32 %v938, %v2775
  %v2799 = vmul.f32 %v939, %v2775
  %v2800 = vmul.f32 %v940, %v2775
  %v2801 = vmul.f32 %v941, %v2775
  %v2802 = vmul.f32 %v942, %v2775
  %v2803 = vmul.f32 %v943, %v2775
  %v2804 = vmul.f32 %v944, %v2775
  %v2805 = vmul.f32 %v945, %v2775
  %v2806 = vmul.f32 %v946, %v2775
  %v2807 = vmul.f32 %v947, %v2775
  %v2808 = vmul.f32 %v948, %v2775
  %v2809 = vmul.f32 %v2777, 1.442695
  %v2810 = vpow.pop %v2809
  %v2811 = vmul.f32 %v2778, 1.442695
  %v2812 = vpow.pop %v2811
  %v2813 = vmul.f32 %v2779, 1.442695
  %v2814 = vpow.pop %v2813
  %v2815 = vmul.f32 %v2780, 1.442695
  %v2816 = vpow.pop %v2815
  %v2817 = vmul.f32 %v2781, 1.442695
  %v2818 = vpow.pop %v2817
  %v2819 = vmul.f32 %v2782, 1.442695
  %v2820 = vpow.pop %v2819
  %v2821 = vmul.f32 %v2783, 1.442695
  %v2822 = vpow.pop %v2821
  %v2823 = vmul.f32 %v2784, 1.442695
  %v2824 = vpow.pop %v2823
  %v2825 = vmul.f32 %v2785, 1.442695
  %v2826 = vpow.pop %v2825
  %v2827 = vmul.f32 %v2786, 1.442695
  %v2828 = vpow.pop %v2827
  %v2829 = vmul.f32 %v2787, 1.442695
  %v2830 = vpow.pop %v2829
  %v2831 = vmul.f32 %v2788, 1.442695
  %v2832 = vpow.pop %v2831
  %v2833 = vmul.f32 %v2789, 1.442695
  %v2834 = vpow.pop %v2833
  %v2835 = vmul.f32 %v2790, 1.442695
  %v2836 = vpow.pop %v2835
  %v2837 = vmul.f32 %v2791, 1.442695
  %v2838 = vpow.pop %v2837
  %v2839 = vmul.f32 %v2792, 1.442695
  %v2840 = vpow.pop %v2839
  %v2841 = vmul.f32 %v2793, 1.442695
  %v2842 = vpow.pop %v2841
  %v2843 = vmul.f32 %v2794, 1.442695
  %v2844 = vpow.pop %v2843
  %v2845 = vmul.f32 %v2795, 1.442695
  %v2846 = vpow.pop %v2845
  %v2847 = vmul.f32 %v2796, 1.442695
  %v2848 = vpow.pop %v2847
  %v2849 = vmul.f32 %v2797, 1.442695
  %v2850 = vpow.pop %v2849
  %v2851 = vmul.f32 %v2798, 1.442695
  %v2852 = vpow.pop %v2851
  %v2853 = vmul.f32 %v2799, 1.442695
  %v2854 = vpow.pop %v2853
  %v2855 = vmul.f32 %v2800, 1.442695
  %v2856 = vpow.pop %v2855
  %v2857 = vmul.f32 %v2801, 1.442695
  %v2858 = vpow.pop %v2857
  %v2859 = vmul.f32 %v2802, 1.442695
  %v2860 = vpow.pop %v2859
  %v2861 = vmul.f32 %v2803, 1.442695
  %v2862 = vpow.pop %v2861
  %v2863 = vmul.f32 %v2804, 1.442695
  %v2864 = vpow.pop %v2863
  %v2865 = vmul.f32 %v2805, 1.442695
  %v2866 = vpow.pop %v2865
  %v2867 = vmul.f32 %v2806, 1.442695
  %v2868 = vpow.pop %v2867
  %v2869 = vmul.f32 %v2807, 1.442695
  %v2870 = vpow.pop %v2869
  %v2871 = vmul.f32 %v2808, 1.442695
  %v2872 = vpow.pop %v2871
  %s2873 = scalar_lea.vmem [#allocation2], 768
  %2874 = vst [vmem:[%s2873] sm:$0xff] %v2810
  %2875 = vst [vmem:[%s2873 + $0x8] sm:$0xff] %v2812
  %2876 = vst [vmem:[%s2873 + $0x10] sm:$0xff] %v2814
  %2877 = vst [vmem:[%s2873 + $0x18] sm:$0xff] %v2816
  %2878 = vst [vmem:[%s2873 + $0x20] sm:$0xff] %v2818
  %2879 = vst [vmem:[%s2873 + $0x28] sm:$0xff] %v2820
  %2880 = vst [vmem:[%s2873 + $0x30] sm:$0xff] %v2822
  %2881 = vst [vmem:[%s2873 + $0x38] sm:$0xff] %v2824
  %2882 = vst [vmem:[%s2873 + $0x40] sm:$0xff] %v2826
  %2883 = vst [vmem:[%s2873 + $0x48] sm:$0xff] %v2828
  %2884 = vst [vmem:[%s2873 + $0x50] sm:$0xff] %v2830
  %2885 = vst [vmem:[%s2873 + $0x58] sm:$0xff] %v2832
  %2886 = vst [vmem:[%s2873 + $0x60] sm:$0xff] %v2834
  %2887 = vst [vmem:[%s2873 + $0x68] sm:$0xff] %v2836
  %2888 = vst [vmem:[%s2873 + $0x70] sm:$0xff] %v2838
  %2889 = vst [vmem:[%s2873 + $0x78] sm:$0xff] %v2840
  %2890 = vst [vmem:[%s2873 + $0x80] sm:$0xff] %v2842
  %2891 = vst [vmem:[%s2873 + $0x88] sm:$0xff] %v2844
  %2892 = vst [vmem:[%s2873 + $0x90] sm:$0xff] %v2846
  %2893 = vst [vmem:[%s2873 + $0x98] sm:$0xff] %v2848
  %2894 = vst [vmem:[%s2873 + $0xa0] sm:$0xff] %v2850
  %2895 = vst [vmem:[%s2873 + $0xa8] sm:$0xff] %v2852
  %2896 = vst [vmem:[%s2873 + $0xb0] sm:$0xff] %v2854
  %2897 = vst [vmem:[%s2873 + $0xb8] sm:$0xff] %v2856
  %2898 = vst [vmem:[%s2873 + $0xc0] sm:$0xff] %v2858
  %2899 = vst [vmem:[%s2873 + $0xc8] sm:$0xff] %v2860
  %2900 = vst [vmem:[%s2873 + $0xd0] sm:$0xff] %v2862
  %2901 = vst [vmem:[%s2873 + $0xd8] sm:$0xff] %v2864
  %2902 = vst [vmem:[%s2873 + $0xe0] sm:$0xff] %v2866
  %2903 = vst [vmem:[%s2873 + $0xe8] sm:$0xff] %v2868
  %2904 = vst [vmem:[%s2873 + $0xf0] sm:$0xff] %v2870
  %2905 = vst [vmem:[%s2873 + $0xf8] sm:$0xff] %v2872
  %v2906 = vmul.f32 %v1077, %v2564
  %v2907 = vmul.f32 %v1078, %v2567
  %v2908 = vmul.f32 %v1079, %v2570
  %v2909 = vmul.f32 %v1080, %v2573
  %v2910 = vmul.f32 %v1081, %v2576
  %v2911 = vmul.f32 %v1082, %v2579
  %v2912 = vmul.f32 %v1083, %v2582
  %v2913 = vmul.f32 %v1084, %v2585
  %v2914 = vmul.f32 %v1085, %v2588
  %v2915 = vmul.f32 %v1086, %v2591
  %v2916 = vmul.f32 %v1087, %v2594
  %v2917 = vmul.f32 %v1088, %v2597
  %v2918 = vmul.f32 %v1089, %v2600
  %v2919 = vmul.f32 %v1090, %v2603
  %v2920 = vmul.f32 %v1091, %v2606
  %v2921 = vmul.f32 %v1092, %v2609
  %v2922 = vmul.f32 %v1093, %v2612
  %v2923 = vmul.f32 %v1094, %v2615
  %v2924 = vmul.f32 %v1095, %v2618
  %v2925 = vmul.f32 %v1096, %v2621
  %v2926 = vmul.f32 %v1097, %v2624
  %v2927 = vmul.f32 %v1098, %v2627
  %v2928 = vmul.f32 %v1099, %v2630
  %v2929 = vmul.f32 %v1100, %v2633
  %v2930 = vmul.f32 %v1101, %v2636
  %v2931 = vmul.f32 %v1102, %v2639
  %v2932 = vmul.f32 %v1103, %v2642
  %v2933 = vmul.f32 %v1104, %v2645
  %v2934 = vmul.f32 %v1105, %v2648
  %v2935 = vmul.f32 %v1106, %v2651
  %v2936 = vmul.f32 %v1107, %v2654
  %v2937 = vmul.f32 %v1108, %v2657
  %s2938 = scalar_lea.vmem [#allocation3], 768
  %2939 = vst [vmem:[%s2938] sm:$0xff] %v2906
  %2940 = vst [vmem:[%s2938 + $0x8] sm:$0xff] %v2907
  %2941 = vst [vmem:[%s2938 + $0x10] sm:$0xff] %v2908
  %2942 = vst [vmem:[%s2938 + $0x18] sm:$0xff] %v2909
  %2943 = vst [vmem:[%s2938 + $0x20] sm:$0xff] %v2910
  %2944 = vst [vmem:[%s2938 + $0x28] sm:$0xff] %v2911
  %2945 = vst [vmem:[%s2938 + $0x30] sm:$0xff] %v2912
  %2946 = vst [vmem:[%s2938 + $0x38] sm:$0xff] %v2913
  %2947 = vst [vmem:[%s2938 + $0x40] sm:$0xff] %v2914
  %2948 = vst [vmem:[%s2938 + $0x48] sm:$0xff] %v2915
  %2949 = vst [vmem:[%s2938 + $0x50] sm:$0xff] %v2916
  %2950 = vst [vmem:[%s2938 + $0x58] sm:$0xff] %v2917
  %2951 = vst [vmem:[%s2938 + $0x60] sm:$0xff] %v2918
  %2952 = vst [vmem:[%s2938 + $0x68] sm:$0xff] %v2919
  %2953 = vst [vmem:[%s2938 + $0x70] sm:$0xff] %v2920
  %2954 = vst [vmem:[%s2938 + $0x78] sm:$0xff] %v2921
  %2955 = vst [vmem:[%s2938 + $0x80] sm:$0xff] %v2922
  %2956 = vst [vmem:[%s2938 + $0x88] sm:$0xff] %v2923
  %2957 = vst [vmem:[%s2938 + $0x90] sm:$0xff] %v2924
  %2958 = vst [vmem:[%s2938 + $0x98] sm:$0xff] %v2925
  %2959 = vst [vmem:[%s2938 + $0xa0] sm:$0xff] %v2926
  %2960 = vst [vmem:[%s2938 + $0xa8] sm:$0xff] %v2927
  %2961 = vst [vmem:[%s2938 + $0xb0] sm:$0xff] %v2928
  %2962 = vst [vmem:[%s2938 + $0xb8] sm:$0xff] %v2929
  %2963 = vst [vmem:[%s2938 + $0xc0] sm:$0xff] %v2930
  %2964 = vst [vmem:[%s2938 + $0xc8] sm:$0xff] %v2931
  %2965 = vst [vmem:[%s2938 + $0xd0] sm:$0xff] %v2932
  %2966 = vst [vmem:[%s2938 + $0xd8] sm:$0xff] %v2933
  %2967 = vst [vmem:[%s2938 + $0xe0] sm:$0xff] %v2934
  %2968 = vst [vmem:[%s2938 + $0xe8] sm:$0xff] %v2935
  %2969 = vst [vmem:[%s2938 + $0xf0] sm:$0xff] %v2936
  %2970 = vst [vmem:[%s2938 + $0xf8] sm:$0xff] %v2937
  %s2971 = scalar_lea.vmem [#allocation4], 768
  %2972 = vst [vmem:[%s2971] sm:$0xff] %v2677
  %2973 = vst [vmem:[%s2971 + $0x8] sm:$0xff] %v2680
  %2974 = vst [vmem:[%s2971 + $0x10] sm:$0xff] %v2683
  %2975 = vst [vmem:[%s2971 + $0x18] sm:$0xff] %v2686
  %2976 = vst [vmem:[%s2971 + $0x20] sm:$0xff] %v2689
  %2977 = vst [vmem:[%s2971 + $0x28] sm:$0xff] %v2692
  %2978 = vst [vmem:[%s2971 + $0x30] sm:$0xff] %v2695
  %2979 = vst [vmem:[%s2971 + $0x38] sm:$0xff] %v2698
  %2980 = vst [vmem:[%s2971 + $0x40] sm:$0xff] %v2701
  %2981 = vst [vmem:[%s2971 + $0x48] sm:$0xff] %v2704
  %2982 = vst [vmem:[%s2971 + $0x50] sm:$0xff] %v2707
  %2983 = vst [vmem:[%s2971 + $0x58] sm:$0xff] %v2710
  %2984 = vst [vmem:[%s2971 + $0x60] sm:$0xff] %v2713
  %2985 = vst [vmem:[%s2971 + $0x68] sm:$0xff] %v2716
  %2986 = vst [vmem:[%s2971 + $0x70] sm:$0xff] %v2719
  %2987 = vst [vmem:[%s2971 + $0x78] sm:$0xff] %v2722
  %2988 = vst [vmem:[%s2971 + $0x80] sm:$0xff] %v2725
  %2989 = vst [vmem:[%s2971 + $0x88] sm:$0xff] %v2728
  %2990 = vst [vmem:[%s2971 + $0x90] sm:$0xff] %v2731
  %2991 = vst [vmem:[%s2971 + $0x98] sm:$0xff] %v2734
  %2992 = vst [vmem:[%s2971 + $0xa0] sm:$0xff] %v2737
  %2993 = vst [vmem:[%s2971 + $0xa8] sm:$0xff] %v2740
  %2994 = vst [vmem:[%s2971 + $0xb0] sm:$0xff] %v2743
  %2995 = vst [vmem:[%s2971 + $0xb8] sm:$0xff] %v2746
  %2996 = vst [vmem:[%s2971 + $0xc0] sm:$0xff] %v2749
  %2997 = vst [vmem:[%s2971 + $0xc8] sm:$0xff] %v2752
  %2998 = vst [vmem:[%s2971 + $0xd0] sm:$0xff] %v2755
  %2999 = vst [vmem:[%s2971 + $0xd8] sm:$0xff] %v2758
  %3000 = vst [vmem:[%s2971 + $0xe0] sm:$0xff] %v2761
  %3001 = vst [vmem:[%s2971 + $0xe8] sm:$0xff] %v2764
  %3002 = vst [vmem:[%s2971 + $0xf0] sm:$0xff] %v2767
  %3003 = vst [vmem:[%s2971 + $0xf8] sm:$0xff] %v2770
  %s3004 = scalar_lea.vmem %s3, 512
  %v3005 = vld [vmem:[%s3004] sm:$0xff]
  %v3006 = vld [vmem:[%s3004 + $0x8] sm:$0xff]
  %v3007 = vld [vmem:[%s3004 + $0x10] sm:$0xff]
  %v3008 = vld [vmem:[%s3004 + $0x18] sm:$0xff]
  %v3009 = vld [vmem:[%s3004 + $0x20] sm:$0xff]
  %v3010 = vld [vmem:[%s3004 + $0x28] sm:$0xff]
  %v3011 = vld [vmem:[%s3004 + $0x30] sm:$0xff]
  %v3012 = vld [vmem:[%s3004 + $0x38] sm:$0xff]
  %v3013 = vld [vmem:[%s3004 + $0x40] sm:$0xff]
  %v3014 = vld [vmem:[%s3004 + $0x48] sm:$0xff]
  %v3015 = vld [vmem:[%s3004 + $0x50] sm:$0xff]
  %v3016 = vld [vmem:[%s3004 + $0x58] sm:$0xff]
  %v3017 = vld [vmem:[%s3004 + $0x60] sm:$0xff]
  %v3018 = vld [vmem:[%s3004 + $0x68] sm:$0xff]
  %v3019 = vld [vmem:[%s3004 + $0x70] sm:$0xff]
  %v3020 = vld [vmem:[%s3004 + $0x78] sm:$0xff]
  %3021 = vmatpush.msra.mxu0 0.0
  %3022 = vmatpush.msra.mxu0 0.0
  %3023 = vmatpush.msra.mxu0 0.0
  %3024 = vmatpush.msra.mxu0 0.0
  %3025 = vmatpush.msra.mxu0 0.0
  %3026 = vmatpush.msra.mxu0 0.0
  %3027 = vmatpush.msra.mxu0 0.0
  %3028 = vmatpush.msra.mxu0 0.0
  %3029 = vmatpush.msra.mxu0 %v3019
  %3030 = vmatpush.msra.mxu0 %v3017
  %3031 = vmatpush.msra.mxu0 %v3015
  %3032 = vmatpush.msra.mxu0 %v3013
  %3033 = vmatpush.msra.mxu0 %v3011
  %3034 = vmatpush.msra.mxu0 %v3009
  %3035 = vmatpush.msra.mxu0 %v3007
  %3036 = vmatpush.msra.mxu0 %v3005
  %3037 = vmatmul.f32.gmra.mxu0 %v69
  %v3038 = vpop.f32.mrf.mxu0
  %v3039 = vadd.f32 0.0, %v3038
  %3040 = vmatmul.f32.gmra.mxu0 %v72
  %v3041 = vpop.f32.mrf.mxu0
  %v3042 = vadd.f32 0.0, %v3041
  %3043 = vmatmul.f32.gmra.mxu0 %v75
  %v3044 = vpop.f32.mrf.mxu0
  %v3045 = vadd.f32 0.0, %v3044
  %3046 = vmatmul.f32.gmra.mxu0 %v78
  %v3047 = vpop.f32.mrf.mxu0
  %v3048 = vadd.f32 0.0, %v3047
  %3049 = vmatmul.f32.gmra.mxu0 %v81
  %v3050 = vpop.f32.mrf.mxu0
  %v3051 = vadd.f32 0.0, %v3050
  %3052 = vmatmul.f32.gmra.mxu0 %v84
  %v3053 = vpop.f32.mrf.mxu0
  %v3054 = vadd.f32 0.0, %v3053
  %3055 = vmatmul.f32.gmra.mxu0 %v87
  %v3056 = vpop.f32.mrf.mxu0
  %v3057 = vadd.f32 0.0, %v3056
  %3058 = vmatmul.f32.gmra.mxu0 %v90
  %v3059 = vpop.f32.mrf.mxu0
  %v3060 = vadd.f32 0.0, %v3059
  %3061 = vmatmul.f32.gmra.mxu0 %v93
  %v3062 = vpop.f32.mrf.mxu0
  %v3063 = vadd.f32 0.0, %v3062
  %3064 = vmatmul.f32.gmra.mxu0 %v96
  %v3065 = vpop.f32.mrf.mxu0
  %v3066 = vadd.f32 0.0, %v3065
  %3067 = vmatmul.f32.gmra.mxu0 %v99
  %v3068 = vpop.f32.mrf.mxu0
  %v3069 = vadd.f32 0.0, %v3068
  %3070 = vmatmul.f32.gmra.mxu0 %v102
  %v3071 = vpop.f32.mrf.mxu0
  %v3072 = vadd.f32 0.0, %v3071
  %3073 = vmatmul.f32.gmra.mxu0 %v105
  %v3074 = vpop.f32.mrf.mxu0
  %v3075 = vadd.f32 0.0, %v3074
  %3076 = vmatmul.f32.gmra.mxu0 %v108
  %v3077 = vpop.f32.mrf.mxu0
  %v3078 = vadd.f32 0.0, %v3077
  %3079 = vmatmul.f32.gmra.mxu0 %v111
  %v3080 = vpop.f32.mrf.mxu0
  %v3081 = vadd.f32 0.0, %v3080
  %3082 = vmatmul.f32.gmra.mxu0 %v114
  %v3083 = vpop.f32.mrf.mxu0
  %v3084 = vadd.f32 0.0, %v3083
  %3085 = vmatmul.f32.gmra.mxu0 %v117
  %v3086 = vpop.f32.mrf.mxu0
  %v3087 = vadd.f32 0.0, %v3086
  %3088 = vmatmul.f32.gmra.mxu0 %v120
  %v3089 = vpop.f32.mrf.mxu0
  %v3090 = vadd.f32 0.0, %v3089
  %3091 = vmatmul.f32.gmra.mxu0 %v123
  %v3092 = vpop.f32.mrf.mxu0
  %v3093 = vadd.f32 0.0, %v3092
  %3094 = vmatmul.f32.gmra.mxu0 %v126
  %v3095 = vpop.f32.mrf.mxu0
  %v3096 = vadd.f32 0.0, %v3095
  %3097 = vmatmul.f32.gmra.mxu0 %v129
  %v3098 = vpop.f32.mrf.mxu0
  %v3099 = vadd.f32 0.0, %v3098
  %3100 = vmatmul.f32.gmra.mxu0 %v132
  %v3101 = vpop.f32.mrf.mxu0
  %v3102 = vadd.f32 0.0, %v3101
  %3103 = vmatmul.f32.gmra.mxu0 %v135
  %v3104 = vpop.f32.mrf.mxu0
  %v3105 = vadd.f32 0.0, %v3104
  %3106 = vmatmul.f32.gmra.mxu0 %v138
  %v3107 = vpop.f32.mrf.mxu0
  %v3108 = vadd.f32 0.0, %v3107
  %3109 = vmatmul.f32.gmra.mxu0 %v141
  %v3110 = vpop.f32.mrf.mxu0
  %v3111 = vadd.f32 0.0, %v3110
  %3112 = vmatmul.f32.gmra.mxu0 %v144
  %v3113 = vpop.f32.mrf.mxu0
  %v3114 = vadd.f32 0.0, %v3113
  %3115 = vmatmul.f32.gmra.mxu0 %v147
  %v3116 = vpop.f32.mrf.mxu0
  %v3117 = vadd.f32 0.0, %v3116
  %3118 = vmatmul.f32.gmra.mxu0 %v150
  %v3119 = vpop.f32.mrf.mxu0
  %v3120 = vadd.f32 0.0, %v3119
  %3121 = vmatmul.f32.gmra.mxu0 %v153
  %v3122 = vpop.f32.mrf.mxu0
  %v3123 = vadd.f32 0.0, %v3122
  %3124 = vmatmul.f32.gmra.mxu0 %v156
  %v3125 = vpop.f32.mrf.mxu0
  %v3126 = vadd.f32 0.0, %v3125
  %3127 = vmatmul.f32.gmra.mxu0 %v159
  %v3128 = vpop.f32.mrf.mxu0
  %v3129 = vadd.f32 0.0, %v3128
  %3130 = vmatmul.f32.gmra.mxu0 %v162
  %v3131 = vpop.f32.mrf.mxu0
  %v3132 = vadd.f32 0.0, %v3131
  %3133 = vdwg.mxu0
  %3134 = vmatpush.msra.mxu0 0.0
  %3135 = vmatpush.msra.mxu0 0.0
  %3136 = vmatpush.msra.mxu0 0.0
  %3137 = vmatpush.msra.mxu0 0.0
  %3138 = vmatpush.msra.mxu0 0.0
  %3139 = vmatpush.msra.mxu0 0.0
  %3140 = vmatpush.msra.mxu0 0.0
  %3141 = vmatpush.msra.mxu0 0.0
  %3142 = vmatpush.msra.mxu0 %v3020
  %3143 = vmatpush.msra.mxu0 %v3018
  %3144 = vmatpush.msra.mxu0 %v3016
  %3145 = vmatpush.msra.mxu0 %v3014
  %3146 = vmatpush.msra.mxu0 %v3012
  %3147 = vmatpush.msra.mxu0 %v3010
  %3148 = vmatpush.msra.mxu0 %v3008
  %3149 = vmatpush.msra.mxu0 %v3006
  %3150 = vmatmul.f32.gmra.mxu0 %v69
  %v3151 = vpop.f32.mrf.mxu0
  %v3152 = vadd.f32 0.0, %v3151
  %3153 = vmatmul.f32.gmra.mxu0 %v72
  %v3154 = vpop.f32.mrf.mxu0
  %v3155 = vadd.f32 0.0, %v3154
  %3156 = vmatmul.f32.gmra.mxu0 %v75
  %v3157 = vpop.f32.mrf.mxu0
  %v3158 = vadd.f32 0.0, %v3157
  %3159 = vmatmul.f32.gmra.mxu0 %v78
  %v3160 = vpop.f32.mrf.mxu0
  %v3161 = vadd.f32 0.0, %v3160
  %3162 = vmatmul.f32.gmra.mxu0 %v81
  %v3163 = vpop.f32.mrf.mxu0
  %v3164 = vadd.f32 0.0, %v3163
  %3165 = vmatmul.f32.gmra.mxu0 %v84
  %v3166 = vpop.f32.mrf.mxu0
  %v3167 = vadd.f32 0.0, %v3166
  %3168 = vmatmul.f32.gmra.mxu0 %v87
  %v3169 = vpop.f32.mrf.mxu0
  %v3170 = vadd.f32 0.0, %v3169
  %3171 = vmatmul.f32.gmra.mxu0 %v90
  %v3172 = vpop.f32.mrf.mxu0
  %v3173 = vadd.f32 0.0, %v3172
  %3174 = vmatmul.f32.gmra.mxu0 %v93
  %v3175 = vpop.f32.mrf.mxu0
  %v3176 = vadd.f32 0.0, %v3175
  %3177 = vmatmul.f32.gmra.mxu0 %v96
  %v3178 = vpop.f32.mrf.mxu0
  %v3179 = vadd.f32 0.0, %v3178
  %3180 = vmatmul.f32.gmra.mxu0 %v99
  %v3181 = vpop.f32.mrf.mxu0
  %v3182 = vadd.f32 0.0, %v3181
  %3183 = vmatmul.f32.gmra.mxu0 %v102
  %v3184 = vpop.f32.mrf.mxu0
  %v3185 = vadd.f32 0.0, %v3184
  %3186 = vmatmul.f32.gmra.mxu0 %v105
  %v3187 = vpop.f32.mrf.mxu0
  %v3188 = vadd.f32 0.0, %v3187
  %3189 = vmatmul.f32.gmra.mxu0 %v108
  %v3190 = vpop.f32.mrf.mxu0
  %v3191 = vadd.f32 0.0, %v3190
  %3192 = vmatmul.f32.gmra.mxu0 %v111
  %v3193 = vpop.f32.mrf.mxu0
  %v3194 = vadd.f32 0.0, %v3193
  %3195 = vmatmul.f32.gmra.mxu0 %v114
  %v3196 = vpop.f32.mrf.mxu0
  %v3197 = vadd.f32 0.0, %v3196
  %3198 = vmatmul.f32.gmra.mxu0 %v117
  %v3199 = vpop.f32.mrf.mxu0
  %v3200 = vadd.f32 0.0, %v3199
  %3201 = vmatmul.f32.gmra.mxu0 %v120
  %v3202 = vpop.f32.mrf.mxu0
  %v3203 = vadd.f32 0.0, %v3202
  %3204 = vmatmul.f32.gmra.mxu0 %v123
  %v3205 = vpop.f32.mrf.mxu0
  %v3206 = vadd.f32 0.0, %v3205
  %3207 = vmatmul.f32.gmra.mxu0 %v126
  %v3208 = vpop.f32.mrf.mxu0
  %v3209 = vadd.f32 0.0, %v3208
  %3210 = vmatmul.f32.gmra.mxu0 %v129
  %v3211 = vpop.f32.mrf.mxu0
  %v3212 = vadd.f32 0.0, %v3211
  %3213 = vmatmul.f32.gmra.mxu0 %v132
  %v3214 = vpop.f32.mrf.mxu0
  %v3215 = vadd.f32 0.0, %v3214
  %3216 = vmatmul.f32.gmra.mxu0 %v135
  %v3217 = vpop.f32.mrf.mxu0
  %v3218 = vadd.f32 0.0, %v3217
  %3219 = vmatmul.f32.gmra.mxu0 %v138
  %v3220 = vpop.f32.mrf.mxu0
  %v3221 = vadd.f32 0.0, %v3220
  %3222 = vmatmul.f32.gmra.mxu0 %v141
  %v3223 = vpop.f32.mrf.mxu0
  %v3224 = vadd.f32 0.0, %v3223
  %3225 = vmatmul.f32.gmra.mxu0 %v144
  %v3226 = vpop.f32.mrf.mxu0
  %v3227 = vadd.f32 0.0, %v3226
  %3228 = vmatmul.f32.gmra.mxu0 %v147
  %v3229 = vpop.f32.mrf.mxu0
  %v3230 = vadd.f32 0.0, %v3229
  %3231 = vmatmul.f32.gmra.mxu0 %v150
  %v3232 = vpop.f32.mrf.mxu0
  %v3233 = vadd.f32 0.0, %v3232
  %3234 = vmatmul.f32.gmra.mxu0 %v153
  %v3235 = vpop.f32.mrf.mxu0
  %v3236 = vadd.f32 0.0, %v3235
  %3237 = vmatmul.f32.gmra.mxu0 %v156
  %v3238 = vpop.f32.mrf.mxu0
  %v3239 = vadd.f32 0.0, %v3238
  %3240 = vmatmul.f32.gmra.mxu0 %v159
  %v3241 = vpop.f32.mrf.mxu0
  %v3242 = vadd.f32 0.0, %v3241
  %3243 = vmatmul.f32.gmra.mxu0 %v162
  %v3244 = vpop.f32.mrf.mxu0
  %v3245 = vadd.f32 0.0, %v3244
  %3246 = vdwg.mxu0
  %s3247 = scalar_lea.vmem %s4, 4
  %v3248 = vld [vmem:[%s3247] sm:$0x1]
  %v3250 = vperm.slane %v3248, 0
  %v3252 = vmul.f32 %v917, %v3250
  %v3253 = vmul.f32 %v918, %v3250
  %v3254 = vmul.f32 %v919, %v3250
  %v3255 = vmul.f32 %v920, %v3250
  %v3256 = vmul.f32 %v921, %v3250
  %v3257 = vmul.f32 %v922, %v3250
  %v3258 = vmul.f32 %v923, %v3250
  %v3259 = vmul.f32 %v924, %v3250
  %v3260 = vmul.f32 %v925, %v3250
  %v3261 = vmul.f32 %v926, %v3250
  %v3262 = vmul.f32 %v927, %v3250
  %v3263 = vmul.f32 %v928, %v3250
  %v3264 = vmul.f32 %v929, %v3250
  %v3265 = vmul.f32 %v930, %v3250
  %v3266 = vmul.f32 %v931, %v3250
  %v3267 = vmul.f32 %v932, %v3250
  %v3268 = vmul.f32 %v933, %v3250
  %v3269 = vmul.f32 %v934, %v3250
  %v3270 = vmul.f32 %v935, %v3250
  %v3271 = vmul.f32 %v936, %v3250
  %v3272 = vmul.f32 %v937, %v3250
  %v3273 = vmul.f32 %v938, %v3250
  %v3274 = vmul.f32 %v939, %v3250
  %v3275 = vmul.f32 %v940, %v3250
  %v3276 = vmul.f32 %v941, %v3250
  %v3277 = vmul.f32 %v942, %v3250
  %v3278 = vmul.f32 %v943, %v3250
  %v3279 = vmul.f32 %v944, %v3250
  %v3280 = vmul.f32 %v945, %v3250
  %v3281 = vmul.f32 %v946, %v3250
  %v3282 = vmul.f32 %v947, %v3250
  %v3283 = vmul.f32 %v948, %v3250
  %v3284 = vmul.f32 %v3252, 1.442695
  %v3285 = vpow.pop %v3284
  %v3286 = vmul.f32 %v3253, 1.442695
  %v3287 = vpow.pop %v3286
  %v3288 = vmul.f32 %v3254, 1.442695
  %v3289 = vpow.pop %v3288
  %v3290 = vmul.f32 %v3255, 1.442695
  %v3291 = vpow.pop %v3290
  %v3292 = vmul.f32 %v3256, 1.442695
  %v3293 = vpow.pop %v3292
  %v3294 = vmul.f32 %v3257, 1.442695
  %v3295 = vpow.pop %v3294
  %v3296 = vmul.f32 %v3258, 1.442695
  %v3297 = vpow.pop %v3296
  %v3298 = vmul.f32 %v3259, 1.442695
  %v3299 = vpow.pop %v3298
  %v3300 = vmul.f32 %v3260, 1.442695
  %v3301 = vpow.pop %v3300
  %v3302 = vmul.f32 %v3261, 1.442695
  %v3303 = vpow.pop %v3302
  %v3304 = vmul.f32 %v3262, 1.442695
  %v3305 = vpow.pop %v3304
  %v3306 = vmul.f32 %v3263, 1.442695
  %v3307 = vpow.pop %v3306
  %v3308 = vmul.f32 %v3264, 1.442695
  %v3309 = vpow.pop %v3308
  %v3310 = vmul.f32 %v3265, 1.442695
  %v3311 = vpow.pop %v3310
  %v3312 = vmul.f32 %v3266, 1.442695
  %v3313 = vpow.pop %v3312
  %v3314 = vmul.f32 %v3267, 1.442695
  %v3315 = vpow.pop %v3314
  %v3316 = vmul.f32 %v3268, 1.442695
  %v3317 = vpow.pop %v3316
  %v3318 = vmul.f32 %v3269, 1.442695
  %v3319 = vpow.pop %v3318
  %v3320 = vmul.f32 %v3270, 1.442695
  %v3321 = vpow.pop %v3320
  %v3322 = vmul.f32 %v3271, 1.442695
  %v3323 = vpow.pop %v3322
  %v3324 = vmul.f32 %v3272, 1.442695
  %v3325 = vpow.pop %v3324
  %v3326 = vmul.f32 %v3273, 1.442695
  %v3327 = vpow.pop %v3326
  %v3328 = vmul.f32 %v3274, 1.442695
  %v3329 = vpow.pop %v3328
  %v3330 = vmul.f32 %v3275, 1.442695
  %v3331 = vpow.pop %v3330
  %v3332 = vmul.f32 %v3276, 1.442695
  %v3333 = vpow.pop %v3332
  %v3334 = vmul.f32 %v3277, 1.442695
  %v3335 = vpow.pop %v3334
  %v3336 = vmul.f32 %v3278, 1.442695
  %v3337 = vpow.pop %v3336
  %v3338 = vmul.f32 %v3279, 1.442695
  %v3339 = vpow.pop %v3338
  %v3340 = vmul.f32 %v3280, 1.442695
  %v3341 = vpow.pop %v3340
  %v3342 = vmul.f32 %v3281, 1.442695
  %v3343 = vpow.pop %v3342
  %v3344 = vmul.f32 %v3282, 1.442695
  %v3345 = vpow.pop %v3344
  %v3346 = vmul.f32 %v3283, 1.442695
  %v3347 = vpow.pop %v3346
  %s3348 = scalar_lea.vmem [#allocation2], 1024
  %3349 = vst [vmem:[%s3348] sm:$0xff] %v3285
  %3350 = vst [vmem:[%s3348 + $0x8] sm:$0xff] %v3287
  %3351 = vst [vmem:[%s3348 + $0x10] sm:$0xff] %v3289
  %3352 = vst [vmem:[%s3348 + $0x18] sm:$0xff] %v3291
  %3353 = vst [vmem:[%s3348 + $0x20] sm:$0xff] %v3293
  %3354 = vst [vmem:[%s3348 + $0x28] sm:$0xff] %v3295
  %3355 = vst [vmem:[%s3348 + $0x30] sm:$0xff] %v3297
  %3356 = vst [vmem:[%s3348 + $0x38] sm:$0xff] %v3299
  %3357 = vst [vmem:[%s3348 + $0x40] sm:$0xff] %v3301
  %3358 = vst [vmem:[%s3348 + $0x48] sm:$0xff] %v3303
  %3359 = vst [vmem:[%s3348 + $0x50] sm:$0xff] %v3305
  %3360 = vst [vmem:[%s3348 + $0x58] sm:$0xff] %v3307
  %3361 = vst [vmem:[%s3348 + $0x60] sm:$0xff] %v3309
  %3362 = vst [vmem:[%s3348 + $0x68] sm:$0xff] %v3311
  %3363 = vst [vmem:[%s3348 + $0x70] sm:$0xff] %v3313
  %3364 = vst [vmem:[%s3348 + $0x78] sm:$0xff] %v3315
  %3365 = vst [vmem:[%s3348 + $0x80] sm:$0xff] %v3317
  %3366 = vst [vmem:[%s3348 + $0x88] sm:$0xff] %v3319
  %3367 = vst [vmem:[%s3348 + $0x90] sm:$0xff] %v3321
  %3368 = vst [vmem:[%s3348 + $0x98] sm:$0xff] %v3323
  %3369 = vst [vmem:[%s3348 + $0xa0] sm:$0xff] %v3325
  %3370 = vst [vmem:[%s3348 + $0xa8] sm:$0xff] %v3327
  %3371 = vst [vmem:[%s3348 + $0xb0] sm:$0xff] %v3329
  %3372 = vst [vmem:[%s3348 + $0xb8] sm:$0xff] %v3331
  %3373 = vst [vmem:[%s3348 + $0xc0] sm:$0xff] %v3333
  %3374 = vst [vmem:[%s3348 + $0xc8] sm:$0xff] %v3335
  %3375 = vst [vmem:[%s3348 + $0xd0] sm:$0xff] %v3337
  %3376 = vst [vmem:[%s3348 + $0xd8] sm:$0xff] %v3339
  %3377 = vst [vmem:[%s3348 + $0xe0] sm:$0xff] %v3341
  %3378 = vst [vmem:[%s3348 + $0xe8] sm:$0xff] %v3343
  %3379 = vst [vmem:[%s3348 + $0xf0] sm:$0xff] %v3345
  %3380 = vst [vmem:[%s3348 + $0xf8] sm:$0xff] %v3347
  %v3381 = vmul.f32 %v1077, %v3039
  %v3382 = vmul.f32 %v1078, %v3042
  %v3383 = vmul.f32 %v1079, %v3045
  %v3384 = vmul.f32 %v1080, %v3048
  %v3385 = vmul.f32 %v1081, %v3051
  %v3386 = vmul.f32 %v1082, %v3054
  %v3387 = vmul.f32 %v1083, %v3057
  %v3388 = vmul.f32 %v1084, %v3060
  %v3389 = vmul.f32 %v1085, %v3063
  %v3390 = vmul.f32 %v1086, %v3066
  %v3391 = vmul.f32 %v1087, %v3069
  %v3392 = vmul.f32 %v1088, %v3072
  %v3393 = vmul.f32 %v1089, %v3075
  %v3394 = vmul.f32 %v1090, %v3078
  %v3395 = vmul.f32 %v1091, %v3081
  %v3396 = vmul.f32 %v1092, %v3084
  %v3397 = vmul.f32 %v1093, %v3087
  %v3398 = vmul.f32 %v1094, %v3090
  %v3399 = vmul.f32 %v1095, %v3093
  %v3400 = vmul.f32 %v1096, %v3096
  %v3401 = vmul.f32 %v1097, %v3099
  %v3402 = vmul.f32 %v1098, %v3102
  %v3403 = vmul.f32 %v1099, %v3105
  %v3404 = vmul.f32 %v1100, %v3108
  %v3405 = vmul.f32 %v1101, %v3111
  %v3406 = vmul.f32 %v1102, %v3114
  %v3407 = vmul.f32 %v1103, %v3117
  %v3408 = vmul.f32 %v1104, %v3120
  %v3409 = vmul.f32 %v1105, %v3123
  %v3410 = vmul.f32 %v1106, %v3126
  %v3411 = vmul.f32 %v1107, %v3129
  %v3412 = vmul.f32 %v1108, %v3132
  %s3413 = scalar_lea.vmem [#allocation3], 1024
  %3414 = vst [vmem:[%s3413] sm:$0xff] %v3381
  %3415 = vst [vmem:[%s3413 + $0x8] sm:$0xff] %v3382
  %3416 = vst [vmem:[%s3413 + $0x10] sm:$0xff] %v3383
  %3417 = vst [vmem:[%s3413 + $0x18] sm:$0xff] %v3384
  %3418 = vst [vmem:[%s3413 + $0x20] sm:$0xff] %v3385
  %3419 = vst [vmem:[%s3413 + $0x28] sm:$0xff] %v3386
  %3420 = vst [vmem:[%s3413 + $0x30] sm:$0xff] %v3387
  %3421 = vst [vmem:[%s3413 + $0x38] sm:$0xff] %v3388
  %3422 = vst [vmem:[%s3413 + $0x40] sm:$0xff] %v3389
  %3423 = vst [vmem:[%s3413 + $0x48] sm:$0xff] %v3390
  %3424 = vst [vmem:[%s3413 + $0x50] sm:$0xff] %v3391
  %3425 = vst [vmem:[%s3413 + $0x58] sm:$0xff] %v3392
  %3426 = vst [vmem:[%s3413 + $0x60] sm:$0xff] %v3393
  %3427 = vst [vmem:[%s3413 + $0x68] sm:$0xff] %v3394
  %3428 = vst [vmem:[%s3413 + $0x70] sm:$0xff] %v3395
  %3429 = vst [vmem:[%s3413 + $0x78] sm:$0xff] %v3396
  %3430 = vst [vmem:[%s3413 + $0x80] sm:$0xff] %v3397
  %3431 = vst [vmem:[%s3413 + $0x88] sm:$0xff] %v3398
  %3432 = vst [vmem:[%s3413 + $0x90] sm:$0xff] %v3399
  %3433 = vst [vmem:[%s3413 + $0x98] sm:$0xff] %v3400
  %3434 = vst [vmem:[%s3413 + $0xa0] sm:$0xff] %v3401
  %3435 = vst [vmem:[%s3413 + $0xa8] sm:$0xff] %v3402
  %3436 = vst [vmem:[%s3413 + $0xb0] sm:$0xff] %v3403
  %3437 = vst [vmem:[%s3413 + $0xb8] sm:$0xff] %v3404
  %3438 = vst [vmem:[%s3413 + $0xc0] sm:$0xff] %v3405
  %3439 = vst [vmem:[%s3413 + $0xc8] sm:$0xff] %v3406
  %3440 = vst [vmem:[%s3413 + $0xd0] sm:$0xff] %v3407
  %3441 = vst [vmem:[%s3413 + $0xd8] sm:$0xff] %v3408
  %3442 = vst [vmem:[%s3413 + $0xe0] sm:$0xff] %v3409
  %3443 = vst [vmem:[%s3413 + $0xe8] sm:$0xff] %v3410
  %3444 = vst [vmem:[%s3413 + $0xf0] sm:$0xff] %v3411
  %3445 = vst [vmem:[%s3413 + $0xf8] sm:$0xff] %v3412
  %s3446 = scalar_lea.vmem [#allocation4], 1024
  %3447 = vst [vmem:[%s3446] sm:$0xff] %v3152
  %3448 = vst [vmem:[%s3446 + $0x8] sm:$0xff] %v3155
  %3449 = vst [vmem:[%s3446 + $0x10] sm:$0xff] %v3158
  %3450 = vst [vmem:[%s3446 + $0x18] sm:$0xff] %v3161
  %3451 = vst [vmem:[%s3446 + $0x20] sm:$0xff] %v3164
  %3452 = vst [vmem:[%s3446 + $0x28] sm:$0xff] %v3167
  %3453 = vst [vmem:[%s3446 + $0x30] sm:$0xff] %v3170
  %3454 = vst [vmem:[%s3446 + $0x38] sm:$0xff] %v3173
  %3455 = vst [vmem:[%s3446 + $0x40] sm:$0xff] %v3176
  %3456 = vst [vmem:[%s3446 + $0x48] sm:$0xff] %v3179
  %3457 = vst [vmem:[%s3446 + $0x50] sm:$0xff] %v3182
  %3458 = vst [vmem:[%s3446 + $0x58] sm:$0xff] %v3185
  %3459 = vst [vmem:[%s3446 + $0x60] sm:$0xff] %v3188
  %3460 = vst [vmem:[%s3446 + $0x68] sm:$0xff] %v3191
  %3461 = vst [vmem:[%s3446 + $0x70] sm:$0xff] %v3194
  %3462 = vst [vmem:[%s3446 + $0x78] sm:$0xff] %v3197
  %3463 = vst [vmem:[%s3446 + $0x80] sm:$0xff] %v3200
  %3464 = vst [vmem:[%s3446 + $0x88] sm:$0xff] %v3203
  %3465 = vst [vmem:[%s3446 + $0x90] sm:$0xff] %v3206
  %3466 = vst [vmem:[%s3446 + $0x98] sm:$0xff] %v3209
  %3467 = vst [vmem:[%s3446 + $0xa0] sm:$0xff] %v3212
  %3468 = vst [vmem:[%s3446 + $0xa8] sm:$0xff] %v3215
  %3469 = vst [vmem:[%s3446 + $0xb0] sm:$0xff] %v3218
  %3470 = vst [vmem:[%s3446 + $0xb8] sm:$0xff] %v3221
  %3471 = vst [vmem:[%s3446 + $0xc0] sm:$0xff] %v3224
  %3472 = vst [vmem:[%s3446 + $0xc8] sm:$0xff] %v3227
  %3473 = vst [vmem:[%s3446 + $0xd0] sm:$0xff] %v3230
  %3474 = vst [vmem:[%s3446 + $0xd8] sm:$0xff] %v3233
  %3475 = vst [vmem:[%s3446 + $0xe0] sm:$0xff] %v3236
  %3476 = vst [vmem:[%s3446 + $0xe8] sm:$0xff] %v3239
  %3477 = vst [vmem:[%s3446 + $0xf0] sm:$0xff] %v3242
  %3478 = vst [vmem:[%s3446 + $0xf8] sm:$0xff] %v3245
  %s3479 = scalar_lea.vmem %s3, 640
  %v3480 = vld [vmem:[%s3479] sm:$0xff]
  %v3481 = vld [vmem:[%s3479 + $0x8] sm:$0xff]
  %v3482 = vld [vmem:[%s3479 + $0x10] sm:$0xff]
  %v3483 = vld [vmem:[%s3479 + $0x18] sm:$0xff]
  %v3484 = vld [vmem:[%s3479 + $0x20] sm:$0xff]
  %v3485 = vld [vmem:[%s3479 + $0x28] sm:$0xff]
  %v3486 = vld [vmem:[%s3479 + $0x30] sm:$0xff]
  %v3487 = vld [vmem:[%s3479 + $0x38] sm:$0xff]
  %v3488 = vld [vmem:[%s3479 + $0x40] sm:$0xff]
  %v3489 = vld [vmem:[%s3479 + $0x48] sm:$0xff]
  %v3490 = vld [vmem:[%s3479 + $0x50] sm:$0xff]
  %v3491 = vld [vmem:[%s3479 + $0x58] sm:$0xff]
  %v3492 = vld [vmem:[%s3479 + $0x60] sm:$0xff]
  %v3493 = vld [vmem:[%s3479 + $0x68] sm:$0xff]
  %v3494 = vld [vmem:[%s3479 + $0x70] sm:$0xff]
  %v3495 = vld [vmem:[%s3479 + $0x78] sm:$0xff]
  %3496 = vmatpush.msra.mxu0 0.0
  %3497 = vmatpush.msra.mxu0 0.0
  %3498 = vmatpush.msra.mxu0 0.0
  %3499 = vmatpush.msra.mxu0 0.0
  %3500 = vmatpush.msra.mxu0 0.0
  %3501 = vmatpush.msra.mxu0 0.0
  %3502 = vmatpush.msra.mxu0 0.0
  %3503 = vmatpush.msra.mxu0 0.0
  %3504 = vmatpush.msra.mxu0 %v3494
  %3505 = vmatpush.msra.mxu0 %v3492
  %3506 = vmatpush.msra.mxu0 %v3490
  %3507 = vmatpush.msra.mxu0 %v3488
  %3508 = vmatpush.msra.mxu0 %v3486
  %3509 = vmatpush.msra.mxu0 %v3484
  %3510 = vmatpush.msra.mxu0 %v3482
  %3511 = vmatpush.msra.mxu0 %v3480
  %3512 = vmatmul.f32.gmra.mxu0 %v69
  %v3513 = vpop.f32.mrf.mxu0
  %v3514 = vadd.f32 0.0, %v3513
  %3515 = vmatmul.f32.gmra.mxu0 %v72
  %v3516 = vpop.f32.mrf.mxu0
  %v3517 = vadd.f32 0.0, %v3516
  %3518 = vmatmul.f32.gmra.mxu0 %v75
  %v3519 = vpop.f32.mrf.mxu0
  %v3520 = vadd.f32 0.0, %v3519
  %3521 = vmatmul.f32.gmra.mxu0 %v78
  %v3522 = vpop.f32.mrf.mxu0
  %v3523 = vadd.f32 0.0, %v3522
  %3524 = vmatmul.f32.gmra.mxu0 %v81
  %v3525 = vpop.f32.mrf.mxu0
  %v3526 = vadd.f32 0.0, %v3525
  %3527 = vmatmul.f32.gmra.mxu0 %v84
  %v3528 = vpop.f32.mrf.mxu0
  %v3529 = vadd.f32 0.0, %v3528
  %3530 = vmatmul.f32.gmra.mxu0 %v87
  %v3531 = vpop.f32.mrf.mxu0
  %v3532 = vadd.f32 0.0, %v3531
  %3533 = vmatmul.f32.gmra.mxu0 %v90
  %v3534 = vpop.f32.mrf.mxu0
  %v3535 = vadd.f32 0.0, %v3534
  %3536 = vmatmul.f32.gmra.mxu0 %v93
  %v3537 = vpop.f32.mrf.mxu0
  %v3538 = vadd.f32 0.0, %v3537
  %3539 = vmatmul.f32.gmra.mxu0 %v96
  %v3540 = vpop.f32.mrf.mxu0
  %v3541 = vadd.f32 0.0, %v3540
  %3542 = vmatmul.f32.gmra.mxu0 %v99
  %v3543 = vpop.f32.mrf.mxu0
  %v3544 = vadd.f32 0.0, %v3543
  %3545 = vmatmul.f32.gmra.mxu0 %v102
  %v3546 = vpop.f32.mrf.mxu0
  %v3547 = vadd.f32 0.0, %v3546
  %3548 = vmatmul.f32.gmra.mxu0 %v105
  %v3549 = vpop.f32.mrf.mxu0
  %v3550 = vadd.f32 0.0, %v3549
  %3551 = vmatmul.f32.gmra.mxu0 %v108
  %v3552 = vpop.f32.mrf.mxu0
  %v3553 = vadd.f32 0.0, %v3552
  %3554 = vmatmul.f32.gmra.mxu0 %v111
  %v3555 = vpop.f32.mrf.mxu0
  %v3556 = vadd.f32 0.0, %v3555
  %3557 = vmatmul.f32.gmra.mxu0 %v114
  %v3558 = vpop.f32.mrf.mxu0
  %v3559 = vadd.f32 0.0, %v3558
  %3560 = vmatmul.f32.gmra.mxu0 %v117
  %v3561 = vpop.f32.mrf.mxu0
  %v3562 = vadd.f32 0.0, %v3561
  %3563 = vmatmul.f32.gmra.mxu0 %v120
  %v3564 = vpop.f32.mrf.mxu0
  %v3565 = vadd.f32 0.0, %v3564
  %3566 = vmatmul.f32.gmra.mxu0 %v123
  %v3567 = vpop.f32.mrf.mxu0
  %v3568 = vadd.f32 0.0, %v3567
  %3569 = vmatmul.f32.gmra.mxu0 %v126
  %v3570 = vpop.f32.mrf.mxu0
  %v3571 = vadd.f32 0.0, %v3570
  %3572 = vmatmul.f32.gmra.mxu0 %v129
  %v3573 = vpop.f32.mrf.mxu0
  %v3574 = vadd.f32 0.0, %v3573
  %3575 = vmatmul.f32.gmra.mxu0 %v132
  %v3576 = vpop.f32.mrf.mxu0
  %v3577 = vadd.f32 0.0, %v3576
  %3578 = vmatmul.f32.gmra.mxu0 %v135
  %v3579 = vpop.f32.mrf.mxu0
  %v3580 = vadd.f32 0.0, %v3579
  %3581 = vmatmul.f32.gmra.mxu0 %v138
  %v3582 = vpop.f32.mrf.mxu0
  %v3583 = vadd.f32 0.0, %v3582
  %3584 = vmatmul.f32.gmra.mxu0 %v141
  %v3585 = vpop.f32.mrf.mxu0
  %v3586 = vadd.f32 0.0, %v3585
  %3587 = vmatmul.f32.gmra.mxu0 %v144
  %v3588 = vpop.f32.mrf.mxu0
  %v3589 = vadd.f32 0.0, %v3588
  %3590 = vmatmul.f32.gmra.mxu0 %v147
  %v3591 = vpop.f32.mrf.mxu0
  %v3592 = vadd.f32 0.0, %v3591
  %3593 = vmatmul.f32.gmra.mxu0 %v150
  %v3594 = vpop.f32.mrf.mxu0
  %v3595 = vadd.f32 0.0, %v3594
  %3596 = vmatmul.f32.gmra.mxu0 %v153
  %v3597 = vpop.f32.mrf.mxu0
  %v3598 = vadd.f32 0.0, %v3597
  %3599 = vmatmul.f32.gmra.mxu0 %v156
  %v3600 = vpop.f32.mrf.mxu0
  %v3601 = vadd.f32 0.0, %v3600
  %3602 = vmatmul.f32.gmra.mxu0 %v159
  %v3603 = vpop.f32.mrf.mxu0
  %v3604 = vadd.f32 0.0, %v3603
  %3605 = vmatmul.f32.gmra.mxu0 %v162
  %v3606 = vpop.f32.mrf.mxu0
  %v3607 = vadd.f32 0.0, %v3606
  %3608 = vdwg.mxu0
  %3609 = vmatpush.msra.mxu0 0.0
  %3610 = vmatpush.msra.mxu0 0.0
  %3611 = vmatpush.msra.mxu0 0.0
  %3612 = vmatpush.msra.mxu0 0.0
  %3613 = vmatpush.msra.mxu0 0.0
  %3614 = vmatpush.msra.mxu0 0.0
  %3615 = vmatpush.msra.mxu0 0.0
  %3616 = vmatpush.msra.mxu0 0.0
  %3617 = vmatpush.msra.mxu0 %v3495
  %3618 = vmatpush.msra.mxu0 %v3493
  %3619 = vmatpush.msra.mxu0 %v3491
  %3620 = vmatpush.msra.mxu0 %v3489
  %3621 = vmatpush.msra.mxu0 %v3487
  %3622 = vmatpush.msra.mxu0 %v3485
  %3623 = vmatpush.msra.mxu0 %v3483
  %3624 = vmatpush.msra.mxu0 %v3481
  %3625 = vmatmul.f32.gmra.mxu0 %v69
  %v3626 = vpop.f32.mrf.mxu0
  %v3627 = vadd.f32 0.0, %v3626
  %3628 = vmatmul.f32.gmra.mxu0 %v72
  %v3629 = vpop.f32.mrf.mxu0
  %v3630 = vadd.f32 0.0, %v3629
  %3631 = vmatmul.f32.gmra.mxu0 %v75
  %v3632 = vpop.f32.mrf.mxu0
  %v3633 = vadd.f32 0.0, %v3632
  %3634 = vmatmul.f32.gmra.mxu0 %v78
  %v3635 = vpop.f32.mrf.mxu0
  %v3636 = vadd.f32 0.0, %v3635
  %3637 = vmatmul.f32.gmra.mxu0 %v81
  %v3638 = vpop.f32.mrf.mxu0
  %v3639 = vadd.f32 0.0, %v3638
  %3640 = vmatmul.f32.gmra.mxu0 %v84
  %v3641 = vpop.f32.mrf.mxu0
  %v3642 = vadd.f32 0.0, %v3641
  %3643 = vmatmul.f32.gmra.mxu0 %v87
  %v3644 = vpop.f32.mrf.mxu0
  %v3645 = vadd.f32 0.0, %v3644
  %3646 = vmatmul.f32.gmra.mxu0 %v90
  %v3647 = vpop.f32.mrf.mxu0
  %v3648 = vadd.f32 0.0, %v3647
  %3649 = vmatmul.f32.gmra.mxu0 %v93
  %v3650 = vpop.f32.mrf.mxu0
  %v3651 = vadd.f32 0.0, %v3650
  %3652 = vmatmul.f32.gmra.mxu0 %v96
  %v3653 = vpop.f32.mrf.mxu0
  %v3654 = vadd.f32 0.0, %v3653
  %3655 = vmatmul.f32.gmra.mxu0 %v99
  %v3656 = vpop.f32.mrf.mxu0
  %v3657 = vadd.f32 0.0, %v3656
  %3658 = vmatmul.f32.gmra.mxu0 %v102
  %v3659 = vpop.f32.mrf.mxu0
  %v3660 = vadd.f32 0.0, %v3659
  %3661 = vmatmul.f32.gmra.mxu0 %v105
  %v3662 = vpop.f32.mrf.mxu0
  %v3663 = vadd.f32 0.0, %v3662
  %3664 = vmatmul.f32.gmra.mxu0 %v108
  %v3665 = vpop.f32.mrf.mxu0
  %v3666 = vadd.f32 0.0, %v3665
  %3667 = vmatmul.f32.gmra.mxu0 %v111
  %v3668 = vpop.f32.mrf.mxu0
  %v3669 = vadd.f32 0.0, %v3668
  %3670 = vmatmul.f32.gmra.mxu0 %v114
  %v3671 = vpop.f32.mrf.mxu0
  %v3672 = vadd.f32 0.0, %v3671
  %3673 = vmatmul.f32.gmra.mxu0 %v117
  %v3674 = vpop.f32.mrf.mxu0
  %v3675 = vadd.f32 0.0, %v3674
  %3676 = vmatmul.f32.gmra.mxu0 %v120
  %v3677 = vpop.f32.mrf.mxu0
  %v3678 = vadd.f32 0.0, %v3677
  %3679 = vmatmul.f32.gmra.mxu0 %v123
  %v3680 = vpop.f32.mrf.mxu0
  %v3681 = vadd.f32 0.0, %v3680
  %3682 = vmatmul.f32.gmra.mxu0 %v126
  %v3683 = vpop.f32.mrf.mxu0
  %v3684 = vadd.f32 0.0, %v3683
  %3685 = vmatmul.f32.gmra.mxu0 %v129
  %v3686 = vpop.f32.mrf.mxu0
  %v3687 = vadd.f32 0.0, %v3686
  %3688 = vmatmul.f32.gmra.mxu0 %v132
  %v3689 = vpop.f32.mrf.mxu0
  %v3690 = vadd.f32 0.0, %v3689
  %3691 = vmatmul.f32.gmra.mxu0 %v135
  %v3692 = vpop.f32.mrf.mxu0
  %v3693 = vadd.f32 0.0, %v3692
  %3694 = vmatmul.f32.gmra.mxu0 %v138
  %v3695 = vpop.f32.mrf.mxu0
  %v3696 = vadd.f32 0.0, %v3695
  %3697 = vmatmul.f32.gmra.mxu0 %v141
  %v3698 = vpop.f32.mrf.mxu0
  %v3699 = vadd.f32 0.0, %v3698
  %3700 = vmatmul.f32.gmra.mxu0 %v144
  %v3701 = vpop.f32.mrf.mxu0
  %v3702 = vadd.f32 0.0, %v3701
  %3703 = vmatmul.f32.gmra.mxu0 %v147
  %v3704 = vpop.f32.mrf.mxu0
  %v3705 = vadd.f32 0.0, %v3704
  %3706 = vmatmul.f32.gmra.mxu0 %v150
  %v3707 = vpop.f32.mrf.mxu0
  %v3708 = vadd.f32 0.0, %v3707
  %3709 = vmatmul.f32.gmra.mxu0 %v153
  %v3710 = vpop.f32.mrf.mxu0
  %v3711 = vadd.f32 0.0, %v3710
  %3712 = vmatmul.f32.gmra.mxu0 %v156
  %v3713 = vpop.f32.mrf.mxu0
  %v3714 = vadd.f32 0.0, %v3713
  %3715 = vmatmul.f32.gmra.mxu0 %v159
  %v3716 = vpop.f32.mrf.mxu0
  %v3717 = vadd.f32 0.0, %v3716
  %3718 = vmatmul.f32.gmra.mxu0 %v162
  %v3719 = vpop.f32.mrf.mxu0
  %v3720 = vadd.f32 0.0, %v3719
  %3721 = vdwg.mxu0
  %s3722 = scalar_lea.vmem %s4, 5
  %v3723 = vld [vmem:[%s3722] sm:$0x1]
  %v3725 = vperm.slane %v3723, 0
  %v3727 = vmul.f32 %v917, %v3725
  %v3728 = vmul.f32 %v918, %v3725
  %v3729 = vmul.f32 %v919, %v3725
  %v3730 = vmul.f32 %v920, %v3725
  %v3731 = vmul.f32 %v921, %v3725
  %v3732 = vmul.f32 %v922, %v3725
  %v3733 = vmul.f32 %v923, %v3725
  %v3734 = vmul.f32 %v924, %v3725
  %v3735 = vmul.f32 %v925, %v3725
  %v3736 = vmul.f32 %v926, %v3725
  %v3737 = vmul.f32 %v927, %v3725
  %v3738 = vmul.f32 %v928, %v3725
  %v3739 = vmul.f32 %v929, %v3725
  %v3740 = vmul.f32 %v930, %v3725
  %v3741 = vmul.f32 %v931, %v3725
  %v3742 = vmul.f32 %v932, %v3725
  %v3743 = vmul.f32 %v933, %v3725
  %v3744 = vmul.f32 %v934, %v3725
  %v3745 = vmul.f32 %v935, %v3725
  %v3746 = vmul.f32 %v936, %v3725
  %v3747 = vmul.f32 %v937, %v3725
  %v3748 = vmul.f32 %v938, %v3725
  %v3749 = vmul.f32 %v939, %v3725
  %v3750 = vmul.f32 %v940, %v3725
  %v3751 = vmul.f32 %v941, %v3725
  %v3752 = vmul.f32 %v942, %v3725
  %v3753 = vmul.f32 %v943, %v3725
  %v3754 = vmul.f32 %v944, %v3725
  %v3755 = vmul.f32 %v945, %v3725
  %v3756 = vmul.f32 %v946, %v3725
  %v3757 = vmul.f32 %v947, %v3725
  %v3758 = vmul.f32 %v948, %v3725
  %v3759 = vmul.f32 %v3727, 1.442695
  %v3760 = vpow.pop %v3759
  %v3761 = vmul.f32 %v3728, 1.442695
  %v3762 = vpow.pop %v3761
  %v3763 = vmul.f32 %v3729, 1.442695
  %v3764 = vpow.pop %v3763
  %v3765 = vmul.f32 %v3730, 1.442695
  %v3766 = vpow.pop %v3765
  %v3767 = vmul.f32 %v3731, 1.442695
  %v3768 = vpow.pop %v3767
  %v3769 = vmul.f32 %v3732, 1.442695
  %v3770 = vpow.pop %v3769
  %v3771 = vmul.f32 %v3733, 1.442695
  %v3772 = vpow.pop %v3771
  %v3773 = vmul.f32 %v3734, 1.442695
  %v3774 = vpow.pop %v3773
  %v3775 = vmul.f32 %v3735, 1.442695
  %v3776 = vpow.pop %v3775
  %v3777 = vmul.f32 %v3736, 1.442695
  %v3778 = vpow.pop %v3777
  %v3779 = vmul.f32 %v3737, 1.442695
  %v3780 = vpow.pop %v3779
  %v3781 = vmul.f32 %v3738, 1.442695
  %v3782 = vpow.pop %v3781
  %v3783 = vmul.f32 %v3739, 1.442695
  %v3784 = vpow.pop %v3783
  %v3785 = vmul.f32 %v3740, 1.442695
  %v3786 = vpow.pop %v3785
  %v3787 = vmul.f32 %v3741, 1.442695
  %v3788 = vpow.pop %v3787
  %v3789 = vmul.f32 %v3742, 1.442695
  %v3790 = vpow.pop %v3789
  %v3791 = vmul.f32 %v3743, 1.442695
  %v3792 = vpow.pop %v3791
  %v3793 = vmul.f32 %v3744, 1.442695
  %v3794 = vpow.pop %v3793
  %v3795 = vmul.f32 %v3745, 1.442695
  %v3796 = vpow.pop %v3795
  %v3797 = vmul.f32 %v3746, 1.442695
  %v3798 = vpow.pop %v3797
  %v3799 = vmul.f32 %v3747, 1.442695
  %v3800 = vpow.pop %v3799
  %v3801 = vmul.f32 %v3748, 1.442695
  %v3802 = vpow.pop %v3801
  %v3803 = vmul.f32 %v3749, 1.442695
  %v3804 = vpow.pop %v3803
  %v3805 = vmul.f32 %v3750, 1.442695
  %v3806 = vpow.pop %v3805
  %v3807 = vmul.f32 %v3751, 1.442695
  %v3808 = vpow.pop %v3807
  %v3809 = vmul.f32 %v3752, 1.442695
  %v3810 = vpow.pop %v3809
  %v3811 = vmul.f32 %v3753, 1.442695
  %v3812 = vpow.pop %v3811
  %v3813 = vmul.f32 %v3754, 1.442695
  %v3814 = vpow.pop %v3813
  %v3815 = vmul.f32 %v3755, 1.442695
  %v3816 = vpow.pop %v3815
  %v3817 = vmul.f32 %v3756, 1.442695
  %v3818 = vpow.pop %v3817
  %v3819 = vmul.f32 %v3757, 1.442695
  %v3820 = vpow.pop %v3819
  %v3821 = vmul.f32 %v3758, 1.442695
  %v3822 = vpow.pop %v3821
  %s3823 = scalar_lea.vmem [#allocation2], 1280
  %3824 = vst [vmem:[%s3823] sm:$0xff] %v3760
  %3825 = vst [vmem:[%s3823 + $0x8] sm:$0xff] %v3762
  %3826 = vst [vmem:[%s3823 + $0x10] sm:$0xff] %v3764
  %3827 = vst [vmem:[%s3823 + $0x18] sm:$0xff] %v3766
  %3828 = vst [vmem:[%s3823 + $0x20] sm:$0xff] %v3768
  %3829 = vst [vmem:[%s3823 + $0x28] sm:$0xff] %v3770
  %3830 = vst [vmem:[%s3823 + $0x30] sm:$0xff] %v3772
  %3831 = vst [vmem:[%s3823 + $0x38] sm:$0xff] %v3774
  %3832 = vst [vmem:[%s3823 + $0x40] sm:$0xff] %v3776
  %3833 = vst [vmem:[%s3823 + $0x48] sm:$0xff] %v3778
  %3834 = vst [vmem:[%s3823 + $0x50] sm:$0xff] %v3780
  %3835 = vst [vmem:[%s3823 + $0x58] sm:$0xff] %v3782
  %3836 = vst [vmem:[%s3823 + $0x60] sm:$0xff] %v3784
  %3837 = vst [vmem:[%s3823 + $0x68] sm:$0xff] %v3786
  %3838 = vst [vmem:[%s3823 + $0x70] sm:$0xff] %v3788
  %3839 = vst [vmem:[%s3823 + $0x78] sm:$0xff] %v3790
  %3840 = vst [vmem:[%s3823 + $0x80] sm:$0xff] %v3792
  %3841 = vst [vmem:[%s3823 + $0x88] sm:$0xff] %v3794
  %3842 = vst [vmem:[%s3823 + $0x90] sm:$0xff] %v3796
  %3843 = vst [vmem:[%s3823 + $0x98] sm:$0xff] %v3798
  %3844 = vst [vmem:[%s3823 + $0xa0] sm:$0xff] %v3800
  %3845 = vst [vmem:[%s3823 + $0xa8] sm:$0xff] %v3802
  %3846 = vst [vmem:[%s3823 + $0xb0] sm:$0xff] %v3804
  %3847 = vst [vmem:[%s3823 + $0xb8] sm:$0xff] %v3806
  %3848 = vst [vmem:[%s3823 + $0xc0] sm:$0xff] %v3808
  %3849 = vst [vmem:[%s3823 + $0xc8] sm:$0xff] %v3810
  %3850 = vst [vmem:[%s3823 + $0xd0] sm:$0xff] %v3812
  %3851 = vst [vmem:[%s3823 + $0xd8] sm:$0xff] %v3814
  %3852 = vst [vmem:[%s3823 + $0xe0] sm:$0xff] %v3816
  %3853 = vst [vmem:[%s3823 + $0xe8] sm:$0xff] %v3818
  %3854 = vst [vmem:[%s3823 + $0xf0] sm:$0xff] %v3820
  %3855 = vst [vmem:[%s3823 + $0xf8] sm:$0xff] %v3822
  %v3856 = vmul.f32 %v1077, %v3514
  %v3857 = vmul.f32 %v1078, %v3517
  %v3858 = vmul.f32 %v1079, %v3520
  %v3859 = vmul.f32 %v1080, %v3523
  %v3860 = vmul.f32 %v1081, %v3526
  %v3861 = vmul.f32 %v1082, %v3529
  %v3862 = vmul.f32 %v1083, %v3532
  %v3863 = vmul.f32 %v1084, %v3535
  %v3864 = vmul.f32 %v1085, %v3538
  %v3865 = vmul.f32 %v1086, %v3541
  %v3866 = vmul.f32 %v1087, %v3544
  %v3867 = vmul.f32 %v1088, %v3547
  %v3868 = vmul.f32 %v1089, %v3550
  %v3869 = vmul.f32 %v1090, %v3553
  %v3870 = vmul.f32 %v1091, %v3556
  %v3871 = vmul.f32 %v1092, %v3559
  %v3872 = vmul.f32 %v1093, %v3562
  %v3873 = vmul.f32 %v1094, %v3565
  %v3874 = vmul.f32 %v1095, %v3568
  %v3875 = vmul.f32 %v1096, %v3571
  %v3876 = vmul.f32 %v1097, %v3574
  %v3877 = vmul.f32 %v1098, %v3577
  %v3878 = vmul.f32 %v1099, %v3580
  %v3879 = vmul.f32 %v1100, %v3583
  %v3880 = vmul.f32 %v1101, %v3586
  %v3881 = vmul.f32 %v1102, %v3589
  %v3882 = vmul.f32 %v1103, %v3592
  %v3883 = vmul.f32 %v1104, %v3595
  %v3884 = vmul.f32 %v1105, %v3598
  %v3885 = vmul.f32 %v1106, %v3601
  %v3886 = vmul.f32 %v1107, %v3604
  %v3887 = vmul.f32 %v1108, %v3607
  %s3888 = scalar_lea.vmem [#allocation3], 1280
  %3889 = vst [vmem:[%s3888] sm:$0xff] %v3856
  %3890 = vst [vmem:[%s3888 + $0x8] sm:$0xff] %v3857
  %3891 = vst [vmem:[%s3888 + $0x10] sm:$0xff] %v3858
  %3892 = vst [vmem:[%s3888 + $0x18] sm:$0xff] %v3859
  %3893 = vst [vmem:[%s3888 + $0x20] sm:$0xff] %v3860
  %3894 = vst [vmem:[%s3888 + $0x28] sm:$0xff] %v3861
  %3895 = vst [vmem:[%s3888 + $0x30] sm:$0xff] %v3862
  %3896 = vst [vmem:[%s3888 + $0x38] sm:$0xff] %v3863
  %3897 = vst [vmem:[%s3888 + $0x40] sm:$0xff] %v3864
  %3898 = vst [vmem:[%s3888 + $0x48] sm:$0xff] %v3865
  %3899 = vst [vmem:[%s3888 + $0x50] sm:$0xff] %v3866
  %3900 = vst [vmem:[%s3888 + $0x58] sm:$0xff] %v3867
  %3901 = vst [vmem:[%s3888 + $0x60] sm:$0xff] %v3868
  %3902 = vst [vmem:[%s3888 + $0x68] sm:$0xff] %v3869
  %3903 = vst [vmem:[%s3888 + $0x70] sm:$0xff] %v3870
  %3904 = vst [vmem:[%s3888 + $0x78] sm:$0xff] %v3871
  %3905 = vst [vmem:[%s3888 + $0x80] sm:$0xff] %v3872
  %3906 = vst [vmem:[%s3888 + $0x88] sm:$0xff] %v3873
  %3907 = vst [vmem:[%s3888 + $0x90] sm:$0xff] %v3874
  %3908 = vst [vmem:[%s3888 + $0x98] sm:$0xff] %v3875
  %3909 = vst [vmem:[%s3888 + $0xa0] sm:$0xff] %v3876
  %3910 = vst [vmem:[%s3888 + $0xa8] sm:$0xff] %v3877
  %3911 = vst [vmem:[%s3888 + $0xb0] sm:$0xff] %v3878
  %3912 = vst [vmem:[%s3888 + $0xb8] sm:$0xff] %v3879
  %3913 = vst [vmem:[%s3888 + $0xc0] sm:$0xff] %v3880
  %3914 = vst [vmem:[%s3888 + $0xc8] sm:$0xff] %v3881
  %3915 = vst [vmem:[%s3888 + $0xd0] sm:$0xff] %v3882
  %3916 = vst [vmem:[%s3888 + $0xd8] sm:$0xff] %v3883
  %3917 = vst [vmem:[%s3888 + $0xe0] sm:$0xff] %v3884
  %3918 = vst [vmem:[%s3888 + $0xe8] sm:$0xff] %v3885
  %3919 = vst [vmem:[%s3888 + $0xf0] sm:$0xff] %v3886
  %3920 = vst [vmem:[%s3888 + $0xf8] sm:$0xff] %v3887
  %s3921 = scalar_lea.vmem [#allocation4], 1280
  %3922 = vst [vmem:[%s3921] sm:$0xff] %v3627
  %3923 = vst [vmem:[%s3921 + $0x8] sm:$0xff] %v3630
  %3924 = vst [vmem:[%s3921 + $0x10] sm:$0xff] %v3633
  %3925 = vst [vmem:[%s3921 + $0x18] sm:$0xff] %v3636
  %3926 = vst [vmem:[%s3921 + $0x20] sm:$0xff] %v3639
  %3927 = vst [vmem:[%s3921 + $0x28] sm:$0xff] %v3642
  %3928 = vst [vmem:[%s3921 + $0x30] sm:$0xff] %v3645
  %3929 = vst [vmem:[%s3921 + $0x38] sm:$0xff] %v3648
  %3930 = vst [vmem:[%s3921 + $0x40] sm:$0xff] %v3651
  %3931 = vst [vmem:[%s3921 + $0x48] sm:$0xff] %v3654
  %3932 = vst [vmem:[%s3921 + $0x50] sm:$0xff] %v3657
  %3933 = vst [vmem:[%s3921 + $0x58] sm:$0xff] %v3660
  %3934 = vst [vmem:[%s3921 + $0x60] sm:$0xff] %v3663
  %3935 = vst [vmem:[%s3921 + $0x68] sm:$0xff] %v3666
  %3936 = vst [vmem:[%s3921 + $0x70] sm:$0xff] %v3669
  %3937 = vst [vmem:[%s3921 + $0x78] sm:$0xff] %v3672
  %3938 = vst [vmem:[%s3921 + $0x80] sm:$0xff] %v3675
  %3939 = vst [vmem:[%s3921 + $0x88] sm:$0xff] %v3678
  %3940 = vst [vmem:[%s3921 + $0x90] sm:$0xff] %v3681
  %3941 = vst [vmem:[%s3921 + $0x98] sm:$0xff] %v3684
  %3942 = vst [vmem:[%s3921 + $0xa0] sm:$0xff] %v3687
  %3943 = vst [vmem:[%s3921 + $0xa8] sm:$0xff] %v3690
  %3944 = vst [vmem:[%s3921 + $0xb0] sm:$0xff] %v3693
  %3945 = vst [vmem:[%s3921 + $0xb8] sm:$0xff] %v3696
  %3946 = vst [vmem:[%s3921 + $0xc0] sm:$0xff] %v3699
  %3947 = vst [vmem:[%s3921 + $0xc8] sm:$0xff] %v3702
  %3948 = vst [vmem:[%s3921 + $0xd0] sm:$0xff] %v3705
  %3949 = vst [vmem:[%s3921 + $0xd8] sm:$0xff] %v3708
  %3950 = vst [vmem:[%s3921 + $0xe0] sm:$0xff] %v3711
  %3951 = vst [vmem:[%s3921 + $0xe8] sm:$0xff] %v3714
  %3952 = vst [vmem:[%s3921 + $0xf0] sm:$0xff] %v3717
  %3953 = vst [vmem:[%s3921 + $0xf8] sm:$0xff] %v3720
  %s3954 = scalar_lea.vmem %s3, 768
  %v3955 = vld [vmem:[%s3954] sm:$0xff]
  %v3956 = vld [vmem:[%s3954 + $0x8] sm:$0xff]
  %v3957 = vld [vmem:[%s3954 + $0x10] sm:$0xff]
  %v3958 = vld [vmem:[%s3954 + $0x18] sm:$0xff]
  %v3959 = vld [vmem:[%s3954 + $0x20] sm:$0xff]
  %v3960 = vld [vmem:[%s3954 + $0x28] sm:$0xff]
  %v3961 = vld [vmem:[%s3954 + $0x30] sm:$0xff]
  %v3962 = vld [vmem:[%s3954 + $0x38] sm:$0xff]
  %v3963 = vld [vmem:[%s3954 + $0x40] sm:$0xff]
  %v3964 = vld [vmem:[%s3954 + $0x48] sm:$0xff]
  %v3965 = vld [vmem:[%s3954 + $0x50] sm:$0xff]
  %v3966 = vld [vmem:[%s3954 + $0x58] sm:$0xff]
  %v3967 = vld [vmem:[%s3954 + $0x60] sm:$0xff]
  %v3968 = vld [vmem:[%s3954 + $0x68] sm:$0xff]
  %v3969 = vld [vmem:[%s3954 + $0x70] sm:$0xff]
  %v3970 = vld [vmem:[%s3954 + $0x78] sm:$0xff]
  %3971 = vmatpush.msra.mxu0 0.0
  %3972 = vmatpush.msra.mxu0 0.0
  %3973 = vmatpush.msra.mxu0 0.0
  %3974 = vmatpush.msra.mxu0 0.0
  %3975 = vmatpush.msra.mxu0 0.0
  %3976 = vmatpush.msra.mxu0 0.0
  %3977 = vmatpush.msra.mxu0 0.0
  %3978 = vmatpush.msra.mxu0 0.0
  %3979 = vmatpush.msra.mxu0 %v3969
  %3980 = vmatpush.msra.mxu0 %v3967
  %3981 = vmatpush.msra.mxu0 %v3965
  %3982 = vmatpush.msra.mxu0 %v3963
  %3983 = vmatpush.msra.mxu0 %v3961
  %3984 = vmatpush.msra.mxu0 %v3959
  %3985 = vmatpush.msra.mxu0 %v3957
  %3986 = vmatpush.msra.mxu0 %v3955
  %3987 = vmatmul.f32.gmra.mxu0 %v69
  %v3988 = vpop.f32.mrf.mxu0
  %v3989 = vadd.f32 0.0, %v3988
  %3990 = vmatmul.f32.gmra.mxu0 %v72
  %v3991 = vpop.f32.mrf.mxu0
  %v3992 = vadd.f32 0.0, %v3991
  %3993 = vmatmul.f32.gmra.mxu0 %v75
  %v3994 = vpop.f32.mrf.mxu0
  %v3995 = vadd.f32 0.0, %v3994
  %3996 = vmatmul.f32.gmra.mxu0 %v78
  %v3997 = vpop.f32.mrf.mxu0
  %v3998 = vadd.f32 0.0, %v3997
  %3999 = vmatmul.f32.gmra.mxu0 %v81
  %v4000 = vpop.f32.mrf.mxu0
  %v4001 = vadd.f32 0.0, %v4000
  %4002 = vmatmul.f32.gmra.mxu0 %v84
  %v4003 = vpop.f32.mrf.mxu0
  %v4004 = vadd.f32 0.0, %v4003
  %4005 = vmatmul.f32.gmra.mxu0 %v87
  %v4006 = vpop.f32.mrf.mxu0
  %v4007 = vadd.f32 0.0, %v4006
  %4008 = vmatmul.f32.gmra.mxu0 %v90
  %v4009 = vpop.f32.mrf.mxu0
  %v4010 = vadd.f32 0.0, %v4009
  %4011 = vmatmul.f32.gmra.mxu0 %v93
  %v4012 = vpop.f32.mrf.mxu0
  %v4013 = vadd.f32 0.0, %v4012
  %4014 = vmatmul.f32.gmra.mxu0 %v96
  %v4015 = vpop.f32.mrf.mxu0
  %v4016 = vadd.f32 0.0, %v4015
  %4017 = vmatmul.f32.gmra.mxu0 %v99
  %v4018 = vpop.f32.mrf.mxu0
  %v4019 = vadd.f32 0.0, %v4018
  %4020 = vmatmul.f32.gmra.mxu0 %v102
  %v4021 = vpop.f32.mrf.mxu0
  %v4022 = vadd.f32 0.0, %v4021
  %4023 = vmatmul.f32.gmra.mxu0 %v105
  %v4024 = vpop.f32.mrf.mxu0
  %v4025 = vadd.f32 0.0, %v4024
  %4026 = vmatmul.f32.gmra.mxu0 %v108
  %v4027 = vpop.f32.mrf.mxu0
  %v4028 = vadd.f32 0.0, %v4027
  %4029 = vmatmul.f32.gmra.mxu0 %v111
  %v4030 = vpop.f32.mrf.mxu0
  %v4031 = vadd.f32 0.0, %v4030
  %4032 = vmatmul.f32.gmra.mxu0 %v114
  %v4033 = vpop.f32.mrf.mxu0
  %v4034 = vadd.f32 0.0, %v4033
  %4035 = vmatmul.f32.gmra.mxu0 %v117
  %v4036 = vpop.f32.mrf.mxu0
  %v4037 = vadd.f32 0.0, %v4036
  %4038 = vmatmul.f32.gmra.mxu0 %v120
  %v4039 = vpop.f32.mrf.mxu0
  %v4040 = vadd.f32 0.0, %v4039
  %4041 = vmatmul.f32.gmra.mxu0 %v123
  %v4042 = vpop.f32.mrf.mxu0
  %v4043 = vadd.f32 0.0, %v4042
  %4044 = vmatmul.f32.gmra.mxu0 %v126
  %v4045 = vpop.f32.mrf.mxu0
  %v4046 = vadd.f32 0.0, %v4045
  %4047 = vmatmul.f32.gmra.mxu0 %v129
  %v4048 = vpop.f32.mrf.mxu0
  %v4049 = vadd.f32 0.0, %v4048
  %4050 = vmatmul.f32.gmra.mxu0 %v132
  %v4051 = vpop.f32.mrf.mxu0
  %v4052 = vadd.f32 0.0, %v4051
  %4053 = vmatmul.f32.gmra.mxu0 %v135
  %v4054 = vpop.f32.mrf.mxu0
  %v4055 = vadd.f32 0.0, %v4054
  %4056 = vmatmul.f32.gmra.mxu0 %v138
  %v4057 = vpop.f32.mrf.mxu0
  %v4058 = vadd.f32 0.0, %v4057
  %4059 = vmatmul.f32.gmra.mxu0 %v141
  %v4060 = vpop.f32.mrf.mxu0
  %v4061 = vadd.f32 0.0, %v4060
  %4062 = vmatmul.f32.gmra.mxu0 %v144
  %v4063 = vpop.f32.mrf.mxu0
  %v4064 = vadd.f32 0.0, %v4063
  %4065 = vmatmul.f32.gmra.mxu0 %v147
  %v4066 = vpop.f32.mrf.mxu0
  %v4067 = vadd.f32 0.0, %v4066
  %4068 = vmatmul.f32.gmra.mxu0 %v150
  %v4069 = vpop.f32.mrf.mxu0
  %v4070 = vadd.f32 0.0, %v4069
  %4071 = vmatmul.f32.gmra.mxu0 %v153
  %v4072 = vpop.f32.mrf.mxu0
  %v4073 = vadd.f32 0.0, %v4072
  %4074 = vmatmul.f32.gmra.mxu0 %v156
  %v4075 = vpop.f32.mrf.mxu0
  %v4076 = vadd.f32 0.0, %v4075
  %4077 = vmatmul.f32.gmra.mxu0 %v159
  %v4078 = vpop.f32.mrf.mxu0
  %v4079 = vadd.f32 0.0, %v4078
  %4080 = vmatmul.f32.gmra.mxu0 %v162
  %v4081 = vpop.f32.mrf.mxu0
  %v4082 = vadd.f32 0.0, %v4081
  %4083 = vdwg.mxu0
  %4084 = vmatpush.msra.mxu0 0.0
  %4085 = vmatpush.msra.mxu0 0.0
  %4086 = vmatpush.msra.mxu0 0.0
  %4087 = vmatpush.msra.mxu0 0.0
  %4088 = vmatpush.msra.mxu0 0.0
  %4089 = vmatpush.msra.mxu0 0.0
  %4090 = vmatpush.msra.mxu0 0.0
  %4091 = vmatpush.msra.mxu0 0.0
  %4092 = vmatpush.msra.mxu0 %v3970
  %4093 = vmatpush.msra.mxu0 %v3968
  %4094 = vmatpush.msra.mxu0 %v3966
  %4095 = vmatpush.msra.mxu0 %v3964
  %4096 = vmatpush.msra.mxu0 %v3962
  %4097 = vmatpush.msra.mxu0 %v3960
  %4098 = vmatpush.msra.mxu0 %v3958
  %4099 = vmatpush.msra.mxu0 %v3956
  %4100 = vmatmul.f32.gmra.mxu0 %v69
  %v4101 = vpop.f32.mrf.mxu0
  %v4102 = vadd.f32 0.0, %v4101
  %4103 = vmatmul.f32.gmra.mxu0 %v72
  %v4104 = vpop.f32.mrf.mxu0
  %v4105 = vadd.f32 0.0, %v4104
  %4106 = vmatmul.f32.gmra.mxu0 %v75
  %v4107 = vpop.f32.mrf.mxu0
  %v4108 = vadd.f32 0.0, %v4107
  %4109 = vmatmul.f32.gmra.mxu0 %v78
  %v4110 = vpop.f32.mrf.mxu0
  %v4111 = vadd.f32 0.0, %v4110
  %4112 = vmatmul.f32.gmra.mxu0 %v81
  %v4113 = vpop.f32.mrf.mxu0
  %v4114 = vadd.f32 0.0, %v4113
  %4115 = vmatmul.f32.gmra.mxu0 %v84
  %v4116 = vpop.f32.mrf.mxu0
  %v4117 = vadd.f32 0.0, %v4116
  %4118 = vmatmul.f32.gmra.mxu0 %v87
  %v4119 = vpop.f32.mrf.mxu0
  %v4120 = vadd.f32 0.0, %v4119
  %4121 = vmatmul.f32.gmra.mxu0 %v90
  %v4122 = vpop.f32.mrf.mxu0
  %v4123 = vadd.f32 0.0, %v4122
  %4124 = vmatmul.f32.gmra.mxu0 %v93
  %v4125 = vpop.f32.mrf.mxu0
  %v4126 = vadd.f32 0.0, %v4125
  %4127 = vmatmul.f32.gmra.mxu0 %v96
  %v4128 = vpop.f32.mrf.mxu0
  %v4129 = vadd.f32 0.0, %v4128
  %4130 = vmatmul.f32.gmra.mxu0 %v99
  %v4131 = vpop.f32.mrf.mxu0
  %v4132 = vadd.f32 0.0, %v4131
  %4133 = vmatmul.f32.gmra.mxu0 %v102
  %v4134 = vpop.f32.mrf.mxu0
  %v4135 = vadd.f32 0.0, %v4134
  %4136 = vmatmul.f32.gmra.mxu0 %v105
  %v4137 = vpop.f32.mrf.mxu0
  %v4138 = vadd.f32 0.0, %v4137
  %4139 = vmatmul.f32.gmra.mxu0 %v108
  %v4140 = vpop.f32.mrf.mxu0
  %v4141 = vadd.f32 0.0, %v4140
  %4142 = vmatmul.f32.gmra.mxu0 %v111
  %v4143 = vpop.f32.mrf.mxu0
  %v4144 = vadd.f32 0.0, %v4143
  %4145 = vmatmul.f32.gmra.mxu0 %v114
  %v4146 = vpop.f32.mrf.mxu0
  %v4147 = vadd.f32 0.0, %v4146
  %4148 = vmatmul.f32.gmra.mxu0 %v117
  %v4149 = vpop.f32.mrf.mxu0
  %v4150 = vadd.f32 0.0, %v4149
  %4151 = vmatmul.f32.gmra.mxu0 %v120
  %v4152 = vpop.f32.mrf.mxu0
  %v4153 = vadd.f32 0.0, %v4152
  %4154 = vmatmul.f32.gmra.mxu0 %v123
  %v4155 = vpop.f32.mrf.mxu0
  %v4156 = vadd.f32 0.0, %v4155
  %4157 = vmatmul.f32.gmra.mxu0 %v126
  %v4158 = vpop.f32.mrf.mxu0
  %v4159 = vadd.f32 0.0, %v4158
  %4160 = vmatmul.f32.gmra.mxu0 %v129
  %v4161 = vpop.f32.mrf.mxu0
  %v4162 = vadd.f32 0.0, %v4161
  %4163 = vmatmul.f32.gmra.mxu0 %v132
  %v4164 = vpop.f32.mrf.mxu0
  %v4165 = vadd.f32 0.0, %v4164
  %4166 = vmatmul.f32.gmra.mxu0 %v135
  %v4167 = vpop.f32.mrf.mxu0
  %v4168 = vadd.f32 0.0, %v4167
  %4169 = vmatmul.f32.gmra.mxu0 %v138
  %v4170 = vpop.f32.mrf.mxu0
  %v4171 = vadd.f32 0.0, %v4170
  %4172 = vmatmul.f32.gmra.mxu0 %v141
  %v4173 = vpop.f32.mrf.mxu0
  %v4174 = vadd.f32 0.0, %v4173
  %4175 = vmatmul.f32.gmra.mxu0 %v144
  %v4176 = vpop.f32.mrf.mxu0
  %v4177 = vadd.f32 0.0, %v4176
  %4178 = vmatmul.f32.gmra.mxu0 %v147
  %v4179 = vpop.f32.mrf.mxu0
  %v4180 = vadd.f32 0.0, %v4179
  %4181 = vmatmul.f32.gmra.mxu0 %v150
  %v4182 = vpop.f32.mrf.mxu0
  %v4183 = vadd.f32 0.0, %v4182
  %4184 = vmatmul.f32.gmra.mxu0 %v153
  %v4185 = vpop.f32.mrf.mxu0
  %v4186 = vadd.f32 0.0, %v4185
  %4187 = vmatmul.f32.gmra.mxu0 %v156
  %v4188 = vpop.f32.mrf.mxu0
  %v4189 = vadd.f32 0.0, %v4188
  %4190 = vmatmul.f32.gmra.mxu0 %v159
  %v4191 = vpop.f32.mrf.mxu0
  %v4192 = vadd.f32 0.0, %v4191
  %4193 = vmatmul.f32.gmra.mxu0 %v162
  %v4194 = vpop.f32.mrf.mxu0
  %v4195 = vadd.f32 0.0, %v4194
  %4196 = vdwg.mxu0
  %s4197 = scalar_lea.vmem %s4, 6
  %v4198 = vld [vmem:[%s4197] sm:$0x1]
  %v4200 = vperm.slane %v4198, 0
  %v4202 = vmul.f32 %v917, %v4200
  %v4203 = vmul.f32 %v918, %v4200
  %v4204 = vmul.f32 %v919, %v4200
  %v4205 = vmul.f32 %v920, %v4200
  %v4206 = vmul.f32 %v921, %v4200
  %v4207 = vmul.f32 %v922, %v4200
  %v4208 = vmul.f32 %v923, %v4200
  %v4209 = vmul.f32 %v924, %v4200
  %v4210 = vmul.f32 %v925, %v4200
  %v4211 = vmul.f32 %v926, %v4200
  %v4212 = vmul.f32 %v927, %v4200
  %v4213 = vmul.f32 %v928, %v4200
  %v4214 = vmul.f32 %v929, %v4200
  %v4215 = vmul.f32 %v930, %v4200
  %v4216 = vmul.f32 %v931, %v4200
  %v4217 = vmul.f32 %v932, %v4200
  %v4218 = vmul.f32 %v933, %v4200
  %v4219 = vmul.f32 %v934, %v4200
  %v4220 = vmul.f32 %v935, %v4200
  %v4221 = vmul.f32 %v936, %v4200
  %v4222 = vmul.f32 %v937, %v4200
  %v4223 = vmul.f32 %v938, %v4200
  %v4224 = vmul.f32 %v939, %v4200
  %v4225 = vmul.f32 %v940, %v4200
  %v4226 = vmul.f32 %v941, %v4200
  %v4227 = vmul.f32 %v942, %v4200
  %v4228 = vmul.f32 %v943, %v4200
  %v4229 = vmul.f32 %v944, %v4200
  %v4230 = vmul.f32 %v945, %v4200
  %v4231 = vmul.f32 %v946, %v4200
  %v4232 = vmul.f32 %v947, %v4200
  %v4233 = vmul.f32 %v948, %v4200
  %v4234 = vmul.f32 %v4202, 1.442695
  %v4235 = vpow.pop %v4234
  %v4236 = vmul.f32 %v4203, 1.442695
  %v4237 = vpow.pop %v4236
  %v4238 = vmul.f32 %v4204, 1.442695
  %v4239 = vpow.pop %v4238
  %v4240 = vmul.f32 %v4205, 1.442695
  %v4241 = vpow.pop %v4240
  %v4242 = vmul.f32 %v4206, 1.442695
  %v4243 = vpow.pop %v4242
  %v4244 = vmul.f32 %v4207, 1.442695
  %v4245 = vpow.pop %v4244
  %v4246 = vmul.f32 %v4208, 1.442695
  %v4247 = vpow.pop %v4246
  %v4248 = vmul.f32 %v4209, 1.442695
  %v4249 = vpow.pop %v4248
  %v4250 = vmul.f32 %v4210, 1.442695
  %v4251 = vpow.pop %v4250
  %v4252 = vmul.f32 %v4211, 1.442695
  %v4253 = vpow.pop %v4252
  %v4254 = vmul.f32 %v4212, 1.442695
  %v4255 = vpow.pop %v4254
  %v4256 = vmul.f32 %v4213, 1.442695
  %v4257 = vpow.pop %v4256
  %v4258 = vmul.f32 %v4214, 1.442695
  %v4259 = vpow.pop %v4258
  %v4260 = vmul.f32 %v4215, 1.442695
  %v4261 = vpow.pop %v4260
  %v4262 = vmul.f32 %v4216, 1.442695
  %v4263 = vpow.pop %v4262
  %v4264 = vmul.f32 %v4217, 1.442695
  %v4265 = vpow.pop %v4264
  %v4266 = vmul.f32 %v4218, 1.442695
  %v4267 = vpow.pop %v4266
  %v4268 = vmul.f32 %v4219, 1.442695
  %v4269 = vpow.pop %v4268
  %v4270 = vmul.f32 %v4220, 1.442695
  %v4271 = vpow.pop %v4270
  %v4272 = vmul.f32 %v4221, 1.442695
  %v4273 = vpow.pop %v4272
  %v4274 = vmul.f32 %v4222, 1.442695
  %v4275 = vpow.pop %v4274
  %v4276 = vmul.f32 %v4223, 1.442695
  %v4277 = vpow.pop %v4276
  %v4278 = vmul.f32 %v4224, 1.442695
  %v4279 = vpow.pop %v4278
  %v4280 = vmul.f32 %v4225, 1.442695
  %v4281 = vpow.pop %v4280
  %v4282 = vmul.f32 %v4226, 1.442695
  %v4283 = vpow.pop %v4282
  %v4284 = vmul.f32 %v4227, 1.442695
  %v4285 = vpow.pop %v4284
  %v4286 = vmul.f32 %v4228, 1.442695
  %v4287 = vpow.pop %v4286
  %v4288 = vmul.f32 %v4229, 1.442695
  %v4289 = vpow.pop %v4288
  %v4290 = vmul.f32 %v4230, 1.442695
  %v4291 = vpow.pop %v4290
  %v4292 = vmul.f32 %v4231, 1.442695
  %v4293 = vpow.pop %v4292
  %v4294 = vmul.f32 %v4232, 1.442695
  %v4295 = vpow.pop %v4294
  %v4296 = vmul.f32 %v4233, 1.442695
  %v4297 = vpow.pop %v4296
  %s4298 = scalar_lea.vmem [#allocation2], 1536
  %4299 = vst [vmem:[%s4298] sm:$0xff] %v4235
  %4300 = vst [vmem:[%s4298 + $0x8] sm:$0xff] %v4237
  %4301 = vst [vmem:[%s4298 + $0x10] sm:$0xff] %v4239
  %4302 = vst [vmem:[%s4298 + $0x18] sm:$0xff] %v4241
  %4303 = vst [vmem:[%s4298 + $0x20] sm:$0xff] %v4243
  %4304 = vst [vmem:[%s4298 + $0x28] sm:$0xff] %v4245
  %4305 = vst [vmem:[%s4298 + $0x30] sm:$0xff] %v4247
  %4306 = vst [vmem:[%s4298 + $0x38] sm:$0xff] %v4249
  %4307 = vst [vmem:[%s4298 + $0x40] sm:$0xff] %v4251
  %4308 = vst [vmem:[%s4298 + $0x48] sm:$0xff] %v4253
  %4309 = vst [vmem:[%s4298 + $0x50] sm:$0xff] %v4255
  %4310 = vst [vmem:[%s4298 + $0x58] sm:$0xff] %v4257
  %4311 = vst [vmem:[%s4298 + $0x60] sm:$0xff] %v4259
  %4312 = vst [vmem:[%s4298 + $0x68] sm:$0xff] %v4261
  %4313 = vst [vmem:[%s4298 + $0x70] sm:$0xff] %v4263
  %4314 = vst [vmem:[%s4298 + $0x78] sm:$0xff] %v4265
  %4315 = vst [vmem:[%s4298 + $0x80] sm:$0xff] %v4267
  %4316 = vst [vmem:[%s4298 + $0x88] sm:$0xff] %v4269
  %4317 = vst [vmem:[%s4298 + $0x90] sm:$0xff] %v4271
  %4318 = vst [vmem:[%s4298 + $0x98] sm:$0xff] %v4273
  %4319 = vst [vmem:[%s4298 + $0xa0] sm:$0xff] %v4275
  %4320 = vst [vmem:[%s4298 + $0xa8] sm:$0xff] %v4277
  %4321 = vst [vmem:[%s4298 + $0xb0] sm:$0xff] %v4279
  %4322 = vst [vmem:[%s4298 + $0xb8] sm:$0xff] %v4281
  %4323 = vst [vmem:[%s4298 + $0xc0] sm:$0xff] %v4283
  %4324 = vst [vmem:[%s4298 + $0xc8] sm:$0xff] %v4285
  %4325 = vst [vmem:[%s4298 + $0xd0] sm:$0xff] %v4287
  %4326 = vst [vmem:[%s4298 + $0xd8] sm:$0xff] %v4289
  %4327 = vst [vmem:[%s4298 + $0xe0] sm:$0xff] %v4291
  %4328 = vst [vmem:[%s4298 + $0xe8] sm:$0xff] %v4293
  %4329 = vst [vmem:[%s4298 + $0xf0] sm:$0xff] %v4295
  %4330 = vst [vmem:[%s4298 + $0xf8] sm:$0xff] %v4297
  %v4331 = vmul.f32 %v1077, %v3989
  %v4332 = vmul.f32 %v1078, %v3992
  %v4333 = vmul.f32 %v1079, %v3995
  %v4334 = vmul.f32 %v1080, %v3998
  %v4335 = vmul.f32 %v1081, %v4001
  %v4336 = vmul.f32 %v1082, %v4004
  %v4337 = vmul.f32 %v1083, %v4007
  %v4338 = vmul.f32 %v1084, %v4010
  %v4339 = vmul.f32 %v1085, %v4013
  %v4340 = vmul.f32 %v1086, %v4016
  %v4341 = vmul.f32 %v1087, %v4019
  %v4342 = vmul.f32 %v1088, %v4022
  %v4343 = vmul.f32 %v1089, %v4025
  %v4344 = vmul.f32 %v1090, %v4028
  %v4345 = vmul.f32 %v1091, %v4031
  %v4346 = vmul.f32 %v1092, %v4034
  %v4347 = vmul.f32 %v1093, %v4037
  %v4348 = vmul.f32 %v1094, %v4040
  %v4349 = vmul.f32 %v1095, %v4043
  %v4350 = vmul.f32 %v1096, %v4046
  %v4351 = vmul.f32 %v1097, %v4049
  %v4352 = vmul.f32 %v1098, %v4052
  %v4353 = vmul.f32 %v1099, %v4055
  %v4354 = vmul.f32 %v1100, %v4058
  %v4355 = vmul.f32 %v1101, %v4061
  %v4356 = vmul.f32 %v1102, %v4064
  %v4357 = vmul.f32 %v1103, %v4067
  %v4358 = vmul.f32 %v1104, %v4070
  %v4359 = vmul.f32 %v1105, %v4073
  %v4360 = vmul.f32 %v1106, %v4076
  %v4361 = vmul.f32 %v1107, %v4079
  %v4362 = vmul.f32 %v1108, %v4082
  %s4363 = scalar_lea.vmem [#allocation3], 1536
  %4364 = vst [vmem:[%s4363] sm:$0xff] %v4331
  %4365 = vst [vmem:[%s4363 + $0x8] sm:$0xff] %v4332
  %4366 = vst [vmem:[%s4363 + $0x10] sm:$0xff] %v4333
  %4367 = vst [vmem:[%s4363 + $0x18] sm:$0xff] %v4334
  %4368 = vst [vmem:[%s4363 + $0x20] sm:$0xff] %v4335
  %4369 = vst [vmem:[%s4363 + $0x28] sm:$0xff] %v4336
  %4370 = vst [vmem:[%s4363 + $0x30] sm:$0xff] %v4337
  %4371 = vst [vmem:[%s4363 + $0x38] sm:$0xff] %v4338
  %4372 = vst [vmem:[%s4363 + $0x40] sm:$0xff] %v4339
  %4373 = vst [vmem:[%s4363 + $0x48] sm:$0xff] %v4340
  %4374 = vst [vmem:[%s4363 + $0x50] sm:$0xff] %v4341
  %4375 = vst [vmem:[%s4363 + $0x58] sm:$0xff] %v4342
  %4376 = vst [vmem:[%s4363 + $0x60] sm:$0xff] %v4343
  %4377 = vst [vmem:[%s4363 + $0x68] sm:$0xff] %v4344
  %4378 = vst [vmem:[%s4363 + $0x70] sm:$0xff] %v4345
  %4379 = vst [vmem:[%s4363 + $0x78] sm:$0xff] %v4346
  %4380 = vst [vmem:[%s4363 + $0x80] sm:$0xff] %v4347
  %4381 = vst [vmem:[%s4363 + $0x88] sm:$0xff] %v4348
  %4382 = vst [vmem:[%s4363 + $0x90] sm:$0xff] %v4349
  %4383 = vst [vmem:[%s4363 + $0x98] sm:$0xff] %v4350
  %4384 = vst [vmem:[%s4363 + $0xa0] sm:$0xff] %v4351
  %4385 = vst [vmem:[%s4363 + $0xa8] sm:$0xff] %v4352
  %4386 = vst [vmem:[%s4363 + $0xb0] sm:$0xff] %v4353
  %4387 = vst [vmem:[%s4363 + $0xb8] sm:$0xff] %v4354
  %4388 = vst [vmem:[%s4363 + $0xc0] sm:$0xff] %v4355
  %4389 = vst [vmem:[%s4363 + $0xc8] sm:$0xff] %v4356
  %4390 = vst [vmem:[%s4363 + $0xd0] sm:$0xff] %v4357
  %4391 = vst [vmem:[%s4363 + $0xd8] sm:$0xff] %v4358
  %4392 = vst [vmem:[%s4363 + $0xe0] sm:$0xff] %v4359
  %4393 = vst [vmem:[%s4363 + $0xe8] sm:$0xff] %v4360
  %4394 = vst [vmem:[%s4363 + $0xf0] sm:$0xff] %v4361
  %4395 = vst [vmem:[%s4363 + $0xf8] sm:$0xff] %v4362
  %s4396 = scalar_lea.vmem [#allocation4], 1536
  %4397 = vst [vmem:[%s4396] sm:$0xff] %v4102
  %4398 = vst [vmem:[%s4396 + $0x8] sm:$0xff] %v4105
  %4399 = vst [vmem:[%s4396 + $0x10] sm:$0xff] %v4108
  %4400 = vst [vmem:[%s4396 + $0x18] sm:$0xff] %v4111
  %4401 = vst [vmem:[%s4396 + $0x20] sm:$0xff] %v4114
  %4402 = vst [vmem:[%s4396 + $0x28] sm:$0xff] %v4117
  %4403 = vst [vmem:[%s4396 + $0x30] sm:$0xff] %v4120
  %4404 = vst [vmem:[%s4396 + $0x38] sm:$0xff] %v4123
  %4405 = vst [vmem:[%s4396 + $0x40] sm:$0xff] %v4126
  %4406 = vst [vmem:[%s4396 + $0x48] sm:$0xff] %v4129
  %4407 = vst [vmem:[%s4396 + $0x50] sm:$0xff] %v4132
  %4408 = vst [vmem:[%s4396 + $0x58] sm:$0xff] %v4135
  %4409 = vst [vmem:[%s4396 + $0x60] sm:$0xff] %v4138
  %4410 = vst [vmem:[%s4396 + $0x68] sm:$0xff] %v4141
  %4411 = vst [vmem:[%s4396 + $0x70] sm:$0xff] %v4144
  %4412 = vst [vmem:[%s4396 + $0x78] sm:$0xff] %v4147
  %4413 = vst [vmem:[%s4396 + $0x80] sm:$0xff] %v4150
  %4414 = vst [vmem:[%s4396 + $0x88] sm:$0xff] %v4153
  %4415 = vst [vmem:[%s4396 + $0x90] sm:$0xff] %v4156
  %4416 = vst [vmem:[%s4396 + $0x98] sm:$0xff] %v4159
  %4417 = vst [vmem:[%s4396 + $0xa0] sm:$0xff] %v4162
  %4418 = vst [vmem:[%s4396 + $0xa8] sm:$0xff] %v4165
  %4419 = vst [vmem:[%s4396 + $0xb0] sm:$0xff] %v4168
  %4420 = vst [vmem:[%s4396 + $0xb8] sm:$0xff] %v4171
  %4421 = vst [vmem:[%s4396 + $0xc0] sm:$0xff] %v4174
  %4422 = vst [vmem:[%s4396 + $0xc8] sm:$0xff] %v4177
  %4423 = vst [vmem:[%s4396 + $0xd0] sm:$0xff] %v4180
  %4424 = vst [vmem:[%s4396 + $0xd8] sm:$0xff] %v4183
  %4425 = vst [vmem:[%s4396 + $0xe0] sm:$0xff] %v4186
  %4426 = vst [vmem:[%s4396 + $0xe8] sm:$0xff] %v4189
  %4427 = vst [vmem:[%s4396 + $0xf0] sm:$0xff] %v4192
  %4428 = vst [vmem:[%s4396 + $0xf8] sm:$0xff] %v4195
  %s4429 = scalar_lea.vmem %s3, 896
  %v4430 = vld [vmem:[%s4429] sm:$0xff]
  %v4431 = vld [vmem:[%s4429 + $0x8] sm:$0xff]
  %v4432 = vld [vmem:[%s4429 + $0x10] sm:$0xff]
  %v4433 = vld [vmem:[%s4429 + $0x18] sm:$0xff]
  %v4434 = vld [vmem:[%s4429 + $0x20] sm:$0xff]
  %v4435 = vld [vmem:[%s4429 + $0x28] sm:$0xff]
  %v4436 = vld [vmem:[%s4429 + $0x30] sm:$0xff]
  %v4437 = vld [vmem:[%s4429 + $0x38] sm:$0xff]
  %v4438 = vld [vmem:[%s4429 + $0x40] sm:$0xff]
  %v4439 = vld [vmem:[%s4429 + $0x48] sm:$0xff]
  %v4440 = vld [vmem:[%s4429 + $0x50] sm:$0xff]
  %v4441 = vld [vmem:[%s4429 + $0x58] sm:$0xff]
  %v4442 = vld [vmem:[%s4429 + $0x60] sm:$0xff]
  %v4443 = vld [vmem:[%s4429 + $0x68] sm:$0xff]
  %v4444 = vld [vmem:[%s4429 + $0x70] sm:$0xff]
  %v4445 = vld [vmem:[%s4429 + $0x78] sm:$0xff]
  %4446 = vmatpush.msra.mxu0 0.0
  %4447 = vmatpush.msra.mxu0 0.0
  %4448 = vmatpush.msra.mxu0 0.0
  %4449 = vmatpush.msra.mxu0 0.0
  %4450 = vmatpush.msra.mxu0 0.0
  %4451 = vmatpush.msra.mxu0 0.0
  %4452 = vmatpush.msra.mxu0 0.0
  %4453 = vmatpush.msra.mxu0 0.0
  %4454 = vmatpush.msra.mxu0 %v4444
  %4455 = vmatpush.msra.mxu0 %v4442
  %4456 = vmatpush.msra.mxu0 %v4440
  %4457 = vmatpush.msra.mxu0 %v4438
  %4458 = vmatpush.msra.mxu0 %v4436
  %4459 = vmatpush.msra.mxu0 %v4434
  %4460 = vmatpush.msra.mxu0 %v4432
  %4461 = vmatpush.msra.mxu0 %v4430
  %4462 = vmatmul.f32.gmra.mxu0 %v69
  %v4463 = vpop.f32.mrf.mxu0
  %v4464 = vadd.f32 0.0, %v4463
  %4465 = vmatmul.f32.gmra.mxu0 %v72
  %v4466 = vpop.f32.mrf.mxu0
  %v4467 = vadd.f32 0.0, %v4466
  %4468 = vmatmul.f32.gmra.mxu0 %v75
  %v4469 = vpop.f32.mrf.mxu0
  %v4470 = vadd.f32 0.0, %v4469
  %4471 = vmatmul.f32.gmra.mxu0 %v78
  %v4472 = vpop.f32.mrf.mxu0
  %v4473 = vadd.f32 0.0, %v4472
  %4474 = vmatmul.f32.gmra.mxu0 %v81
  %v4475 = vpop.f32.mrf.mxu0
  %v4476 = vadd.f32 0.0, %v4475
  %4477 = vmatmul.f32.gmra.mxu0 %v84
  %v4478 = vpop.f32.mrf.mxu0
  %v4479 = vadd.f32 0.0, %v4478
  %4480 = vmatmul.f32.gmra.mxu0 %v87
  %v4481 = vpop.f32.mrf.mxu0
  %v4482 = vadd.f32 0.0, %v4481
  %4483 = vmatmul.f32.gmra.mxu0 %v90
  %v4484 = vpop.f32.mrf.mxu0
  %v4485 = vadd.f32 0.0, %v4484
  %4486 = vmatmul.f32.gmra.mxu0 %v93
  %v4487 = vpop.f32.mrf.mxu0
  %v4488 = vadd.f32 0.0, %v4487
  %4489 = vmatmul.f32.gmra.mxu0 %v96
  %v4490 = vpop.f32.mrf.mxu0
  %v4491 = vadd.f32 0.0, %v4490
  %4492 = vmatmul.f32.gmra.mxu0 %v99
  %v4493 = vpop.f32.mrf.mxu0
  %v4494 = vadd.f32 0.0, %v4493
  %4495 = vmatmul.f32.gmra.mxu0 %v102
  %v4496 = vpop.f32.mrf.mxu0
  %v4497 = vadd.f32 0.0, %v4496
  %4498 = vmatmul.f32.gmra.mxu0 %v105
  %v4499 = vpop.f32.mrf.mxu0
  %v4500 = vadd.f32 0.0, %v4499
  %4501 = vmatmul.f32.gmra.mxu0 %v108
  %v4502 = vpop.f32.mrf.mxu0
  %v4503 = vadd.f32 0.0, %v4502
  %4504 = vmatmul.f32.gmra.mxu0 %v111
  %v4505 = vpop.f32.mrf.mxu0
  %v4506 = vadd.f32 0.0, %v4505
  %4507 = vmatmul.f32.gmra.mxu0 %v114
  %v4508 = vpop.f32.mrf.mxu0
  %v4509 = vadd.f32 0.0, %v4508
  %4510 = vmatmul.f32.gmra.mxu0 %v117
  %v4511 = vpop.f32.mrf.mxu0
  %v4512 = vadd.f32 0.0, %v4511
  %4513 = vmatmul.f32.gmra.mxu0 %v120
  %v4514 = vpop.f32.mrf.mxu0
  %v4515 = vadd.f32 0.0, %v4514
  %4516 = vmatmul.f32.gmra.mxu0 %v123
  %v4517 = vpop.f32.mrf.mxu0
  %v4518 = vadd.f32 0.0, %v4517
  %4519 = vmatmul.f32.gmra.mxu0 %v126
  %v4520 = vpop.f32.mrf.mxu0
  %v4521 = vadd.f32 0.0, %v4520
  %4522 = vmatmul.f32.gmra.mxu0 %v129
  %v4523 = vpop.f32.mrf.mxu0
  %v4524 = vadd.f32 0.0, %v4523
  %4525 = vmatmul.f32.gmra.mxu0 %v132
  %v4526 = vpop.f32.mrf.mxu0
  %v4527 = vadd.f32 0.0, %v4526
  %4528 = vmatmul.f32.gmra.mxu0 %v135
  %v4529 = vpop.f32.mrf.mxu0
  %v4530 = vadd.f32 0.0, %v4529
  %4531 = vmatmul.f32.gmra.mxu0 %v138
  %v4532 = vpop.f32.mrf.mxu0
  %v4533 = vadd.f32 0.0, %v4532
  %4534 = vmatmul.f32.gmra.mxu0 %v141
  %v4535 = vpop.f32.mrf.mxu0
  %v4536 = vadd.f32 0.0, %v4535
  %4537 = vmatmul.f32.gmra.mxu0 %v144
  %v4538 = vpop.f32.mrf.mxu0
  %v4539 = vadd.f32 0.0, %v4538
  %4540 = vmatmul.f32.gmra.mxu0 %v147
  %v4541 = vpop.f32.mrf.mxu0
  %v4542 = vadd.f32 0.0, %v4541
  %4543 = vmatmul.f32.gmra.mxu0 %v150
  %v4544 = vpop.f32.mrf.mxu0
  %v4545 = vadd.f32 0.0, %v4544
  %4546 = vmatmul.f32.gmra.mxu0 %v153
  %v4547 = vpop.f32.mrf.mxu0
  %v4548 = vadd.f32 0.0, %v4547
  %4549 = vmatmul.f32.gmra.mxu0 %v156
  %v4550 = vpop.f32.mrf.mxu0
  %v4551 = vadd.f32 0.0, %v4550
  %4552 = vmatmul.f32.gmra.mxu0 %v159
  %v4553 = vpop.f32.mrf.mxu0
  %v4554 = vadd.f32 0.0, %v4553
  %4555 = vmatmul.f32.gmra.mxu0 %v162
  %v4556 = vpop.f32.mrf.mxu0
  %v4557 = vadd.f32 0.0, %v4556
  %4558 = vdwg.mxu0
  %4559 = vmatpush.msra.mxu0 0.0
  %4560 = vmatpush.msra.mxu0 0.0
  %4561 = vmatpush.msra.mxu0 0.0
  %4562 = vmatpush.msra.mxu0 0.0
  %4563 = vmatpush.msra.mxu0 0.0
  %4564 = vmatpush.msra.mxu0 0.0
  %4565 = vmatpush.msra.mxu0 0.0
  %4566 = vmatpush.msra.mxu0 0.0
  %4567 = vmatpush.msra.mxu0 %v4445
  %4568 = vmatpush.msra.mxu0 %v4443
  %4569 = vmatpush.msra.mxu0 %v4441
  %4570 = vmatpush.msra.mxu0 %v4439
  %4571 = vmatpush.msra.mxu0 %v4437
  %4572 = vmatpush.msra.mxu0 %v4435
  %4573 = vmatpush.msra.mxu0 %v4433
  %4574 = vmatpush.msra.mxu0 %v4431
  %4575 = vmatmul.f32.gmra.mxu0 %v69
  %v4576 = vpop.f32.mrf.mxu0
  %v4577 = vadd.f32 0.0, %v4576
  %4578 = vmatmul.f32.gmra.mxu0 %v72
  %v4579 = vpop.f32.mrf.mxu0
  %v4580 = vadd.f32 0.0, %v4579
  %4581 = vmatmul.f32.gmra.mxu0 %v75
  %v4582 = vpop.f32.mrf.mxu0
  %v4583 = vadd.f32 0.0, %v4582
  %4584 = vmatmul.f32.gmra.mxu0 %v78
  %v4585 = vpop.f32.mrf.mxu0
  %v4586 = vadd.f32 0.0, %v4585
  %4587 = vmatmul.f32.gmra.mxu0 %v81
  %v4588 = vpop.f32.mrf.mxu0
  %v4589 = vadd.f32 0.0, %v4588
  %4590 = vmatmul.f32.gmra.mxu0 %v84
  %v4591 = vpop.f32.mrf.mxu0
  %v4592 = vadd.f32 0.0, %v4591
  %4593 = vmatmul.f32.gmra.mxu0 %v87
  %v4594 = vpop.f32.mrf.mxu0
  %v4595 = vadd.f32 0.0, %v4594
  %4596 = vmatmul.f32.gmra.mxu0 %v90
  %v4597 = vpop.f32.mrf.mxu0
  %v4598 = vadd.f32 0.0, %v4597
  %4599 = vmatmul.f32.gmra.mxu0 %v93
  %v4600 = vpop.f32.mrf.mxu0
  %v4601 = vadd.f32 0.0, %v4600
  %4602 = vmatmul.f32.gmra.mxu0 %v96
  %v4603 = vpop.f32.mrf.mxu0
  %v4604 = vadd.f32 0.0, %v4603
  %4605 = vmatmul.f32.gmra.mxu0 %v99
  %v4606 = vpop.f32.mrf.mxu0
  %v4607 = vadd.f32 0.0, %v4606
  %4608 = vmatmul.f32.gmra.mxu0 %v102
  %v4609 = vpop.f32.mrf.mxu0
  %v4610 = vadd.f32 0.0, %v4609
  %4611 = vmatmul.f32.gmra.mxu0 %v105
  %v4612 = vpop.f32.mrf.mxu0
  %v4613 = vadd.f32 0.0, %v4612
  %4614 = vmatmul.f32.gmra.mxu0 %v108
  %v4615 = vpop.f32.mrf.mxu0
  %v4616 = vadd.f32 0.0, %v4615
  %4617 = vmatmul.f32.gmra.mxu0 %v111
  %v4618 = vpop.f32.mrf.mxu0
  %v4619 = vadd.f32 0.0, %v4618
  %4620 = vmatmul.f32.gmra.mxu0 %v114
  %v4621 = vpop.f32.mrf.mxu0
  %v4622 = vadd.f32 0.0, %v4621
  %4623 = vmatmul.f32.gmra.mxu0 %v117
  %v4624 = vpop.f32.mrf.mxu0
  %v4625 = vadd.f32 0.0, %v4624
  %4626 = vmatmul.f32.gmra.mxu0 %v120
  %v4627 = vpop.f32.mrf.mxu0
  %v4628 = vadd.f32 0.0, %v4627
  %4629 = vmatmul.f32.gmra.mxu0 %v123
  %v4630 = vpop.f32.mrf.mxu0
  %v4631 = vadd.f32 0.0, %v4630
  %4632 = vmatmul.f32.gmra.mxu0 %v126
  %v4633 = vpop.f32.mrf.mxu0
  %v4634 = vadd.f32 0.0, %v4633
  %4635 = vmatmul.f32.gmra.mxu0 %v129
  %v4636 = vpop.f32.mrf.mxu0
  %v4637 = vadd.f32 0.0, %v4636
  %4638 = vmatmul.f32.gmra.mxu0 %v132
  %v4639 = vpop.f32.mrf.mxu0
  %v4640 = vadd.f32 0.0, %v4639
  %4641 = vmatmul.f32.gmra.mxu0 %v135
  %v4642 = vpop.f32.mrf.mxu0
  %v4643 = vadd.f32 0.0, %v4642
  %4644 = vmatmul.f32.gmra.mxu0 %v138
  %v4645 = vpop.f32.mrf.mxu0
  %v4646 = vadd.f32 0.0, %v4645
  %4647 = vmatmul.f32.gmra.mxu0 %v141
  %v4648 = vpop.f32.mrf.mxu0
  %v4649 = vadd.f32 0.0, %v4648
  %4650 = vmatmul.f32.gmra.mxu0 %v144
  %v4651 = vpop.f32.mrf.mxu0
  %v4652 = vadd.f32 0.0, %v4651
  %4653 = vmatmul.f32.gmra.mxu0 %v147
  %v4654 = vpop.f32.mrf.mxu0
  %v4655 = vadd.f32 0.0, %v4654
  %4656 = vmatmul.f32.gmra.mxu0 %v150
  %v4657 = vpop.f32.mrf.mxu0
  %v4658 = vadd.f32 0.0, %v4657
  %4659 = vmatmul.f32.gmra.mxu0 %v153
  %v4660 = vpop.f32.mrf.mxu0
  %v4661 = vadd.f32 0.0, %v4660
  %4662 = vmatmul.f32.gmra.mxu0 %v156
  %v4663 = vpop.f32.mrf.mxu0
  %v4664 = vadd.f32 0.0, %v4663
  %4665 = vmatmul.f32.gmra.mxu0 %v159
  %v4666 = vpop.f32.mrf.mxu0
  %v4667 = vadd.f32 0.0, %v4666
  %4668 = vmatmul.f32.gmra.mxu0 %v162
  %v4669 = vpop.f32.mrf.mxu0
  %v4670 = vadd.f32 0.0, %v4669
  %4671 = vdwg.mxu0
  %s4672 = scalar_lea.vmem %s4, 7
  %v4673 = vld [vmem:[%s4672] sm:$0x1]
  %v4675 = vperm.slane %v4673, 0
  %v4677 = vmul.f32 %v917, %v4675
  %v4678 = vmul.f32 %v918, %v4675
  %v4679 = vmul.f32 %v919, %v4675
  %v4680 = vmul.f32 %v920, %v4675
  %v4681 = vmul.f32 %v921, %v4675
  %v4682 = vmul.f32 %v922, %v4675
  %v4683 = vmul.f32 %v923, %v4675
  %v4684 = vmul.f32 %v924, %v4675
  %v4685 = vmul.f32 %v925, %v4675
  %v4686 = vmul.f32 %v926, %v4675
  %v4687 = vmul.f32 %v927, %v4675
  %v4688 = vmul.f32 %v928, %v4675
  %v4689 = vmul.f32 %v929, %v4675
  %v4690 = vmul.f32 %v930, %v4675
  %v4691 = vmul.f32 %v931, %v4675
  %v4692 = vmul.f32 %v932, %v4675
  %v4693 = vmul.f32 %v933, %v4675
  %v4694 = vmul.f32 %v934, %v4675
  %v4695 = vmul.f32 %v935, %v4675
  %v4696 = vmul.f32 %v936, %v4675
  %v4697 = vmul.f32 %v937, %v4675
  %v4698 = vmul.f32 %v938, %v4675
  %v4699 = vmul.f32 %v939, %v4675
  %v4700 = vmul.f32 %v940, %v4675
  %v4701 = vmul.f32 %v941, %v4675
  %v4702 = vmul.f32 %v942, %v4675
  %v4703 = vmul.f32 %v943, %v4675
  %v4704 = vmul.f32 %v944, %v4675
  %v4705 = vmul.f32 %v945, %v4675
  %v4706 = vmul.f32 %v946, %v4675
  %v4707 = vmul.f32 %v947, %v4675
  %v4708 = vmul.f32 %v948, %v4675
  %v4709 = vmul.f32 %v4677, 1.442695
  %v4710 = vpow.pop %v4709
  %v4711 = vmul.f32 %v4678, 1.442695
  %v4712 = vpow.pop %v4711
  %v4713 = vmul.f32 %v4679, 1.442695
  %v4714 = vpow.pop %v4713
  %v4715 = vmul.f32 %v4680, 1.442695
  %v4716 = vpow.pop %v4715
  %v4717 = vmul.f32 %v4681, 1.442695
  %v4718 = vpow.pop %v4717
  %v4719 = vmul.f32 %v4682, 1.442695
  %v4720 = vpow.pop %v4719
  %v4721 = vmul.f32 %v4683, 1.442695
  %v4722 = vpow.pop %v4721
  %v4723 = vmul.f32 %v4684, 1.442695
  %v4724 = vpow.pop %v4723
  %v4725 = vmul.f32 %v4685, 1.442695
  %v4726 = vpow.pop %v4725
  %v4727 = vmul.f32 %v4686, 1.442695
  %v4728 = vpow.pop %v4727
  %v4729 = vmul.f32 %v4687, 1.442695
  %v4730 = vpow.pop %v4729
  %v4731 = vmul.f32 %v4688, 1.442695
  %v4732 = vpow.pop %v4731
  %v4733 = vmul.f32 %v4689, 1.442695
  %v4734 = vpow.pop %v4733
  %v4735 = vmul.f32 %v4690, 1.442695
  %v4736 = vpow.pop %v4735
  %v4737 = vmul.f32 %v4691, 1.442695
  %v4738 = vpow.pop %v4737
  %v4739 = vmul.f32 %v4692, 1.442695
  %v4740 = vpow.pop %v4739
  %v4741 = vmul.f32 %v4693, 1.442695
  %v4742 = vpow.pop %v4741
  %v4743 = vmul.f32 %v4694, 1.442695
  %v4744 = vpow.pop %v4743
  %v4745 = vmul.f32 %v4695, 1.442695
  %v4746 = vpow.pop %v4745
  %v4747 = vmul.f32 %v4696, 1.442695
  %v4748 = vpow.pop %v4747
  %v4749 = vmul.f32 %v4697, 1.442695
  %v4750 = vpow.pop %v4749
  %v4751 = vmul.f32 %v4698, 1.442695
  %v4752 = vpow.pop %v4751
  %v4753 = vmul.f32 %v4699, 1.442695
  %v4754 = vpow.pop %v4753
  %v4755 = vmul.f32 %v4700, 1.442695
  %v4756 = vpow.pop %v4755
  %v4757 = vmul.f32 %v4701, 1.442695
  %v4758 = vpow.pop %v4757
  %v4759 = vmul.f32 %v4702, 1.442695
  %v4760 = vpow.pop %v4759
  %v4761 = vmul.f32 %v4703, 1.442695
  %v4762 = vpow.pop %v4761
  %v4763 = vmul.f32 %v4704, 1.442695
  %v4764 = vpow.pop %v4763
  %v4765 = vmul.f32 %v4705, 1.442695
  %v4766 = vpow.pop %v4765
  %v4767 = vmul.f32 %v4706, 1.442695
  %v4768 = vpow.pop %v4767
  %v4769 = vmul.f32 %v4707, 1.442695
  %v4770 = vpow.pop %v4769
  %v4771 = vmul.f32 %v4708, 1.442695
  %v4772 = vpow.pop %v4771
  %s4773 = scalar_lea.vmem [#allocation2], 1792
  %4774 = vst [vmem:[%s4773] sm:$0xff] %v4710
  %4775 = vst [vmem:[%s4773 + $0x8] sm:$0xff] %v4712
  %4776 = vst [vmem:[%s4773 + $0x10] sm:$0xff] %v4714
  %4777 = vst [vmem:[%s4773 + $0x18] sm:$0xff] %v4716
  %4778 = vst [vmem:[%s4773 + $0x20] sm:$0xff] %v4718
  %4779 = vst [vmem:[%s4773 + $0x28] sm:$0xff] %v4720
  %4780 = vst [vmem:[%s4773 + $0x30] sm:$0xff] %v4722
  %4781 = vst [vmem:[%s4773 + $0x38] sm:$0xff] %v4724
  %4782 = vst [vmem:[%s4773 + $0x40] sm:$0xff] %v4726
  %4783 = vst [vmem:[%s4773 + $0x48] sm:$0xff] %v4728
  %4784 = vst [vmem:[%s4773 + $0x50] sm:$0xff] %v4730
  %4785 = vst [vmem:[%s4773 + $0x58] sm:$0xff] %v4732
  %4786 = vst [vmem:[%s4773 + $0x60] sm:$0xff] %v4734
  %4787 = vst [vmem:[%s4773 + $0x68] sm:$0xff] %v4736
  %4788 = vst [vmem:[%s4773 + $0x70] sm:$0xff] %v4738
  %4789 = vst [vmem:[%s4773 + $0x78] sm:$0xff] %v4740
  %4790 = vst [vmem:[%s4773 + $0x80] sm:$0xff] %v4742
  %4791 = vst [vmem:[%s4773 + $0x88] sm:$0xff] %v4744
  %4792 = vst [vmem:[%s4773 + $0x90] sm:$0xff] %v4746
  %4793 = vst [vmem:[%s4773 + $0x98] sm:$0xff] %v4748
  %4794 = vst [vmem:[%s4773 + $0xa0] sm:$0xff] %v4750
  %4795 = vst [vmem:[%s4773 + $0xa8] sm:$0xff] %v4752
  %4796 = vst [vmem:[%s4773 + $0xb0] sm:$0xff] %v4754
  %4797 = vst [vmem:[%s4773 + $0xb8] sm:$0xff] %v4756
  %4798 = vst [vmem:[%s4773 + $0xc0] sm:$0xff] %v4758
  %4799 = vst [vmem:[%s4773 + $0xc8] sm:$0xff] %v4760
  %4800 = vst [vmem:[%s4773 + $0xd0] sm:$0xff] %v4762
  %4801 = vst [vmem:[%s4773 + $0xd8] sm:$0xff] %v4764
  %4802 = vst [vmem:[%s4773 + $0xe0] sm:$0xff] %v4766
  %4803 = vst [vmem:[%s4773 + $0xe8] sm:$0xff] %v4768
  %4804 = vst [vmem:[%s4773 + $0xf0] sm:$0xff] %v4770
  %4805 = vst [vmem:[%s4773 + $0xf8] sm:$0xff] %v4772
  %v4806 = vmul.f32 %v1077, %v4464
  %v4807 = vmul.f32 %v1078, %v4467
  %v4808 = vmul.f32 %v1079, %v4470
  %v4809 = vmul.f32 %v1080, %v4473
  %v4810 = vmul.f32 %v1081, %v4476
  %v4811 = vmul.f32 %v1082, %v4479
  %v4812 = vmul.f32 %v1083, %v4482
  %v4813 = vmul.f32 %v1084, %v4485
  %v4814 = vmul.f32 %v1085, %v4488
  %v4815 = vmul.f32 %v1086, %v4491
  %v4816 = vmul.f32 %v1087, %v4494
  %v4817 = vmul.f32 %v1088, %v4497
  %v4818 = vmul.f32 %v1089, %v4500
  %v4819 = vmul.f32 %v1090, %v4503
  %v4820 = vmul.f32 %v1091, %v4506
  %v4821 = vmul.f32 %v1092, %v4509
  %v4822 = vmul.f32 %v1093, %v4512
  %v4823 = vmul.f32 %v1094, %v4515
  %v4824 = vmul.f32 %v1095, %v4518
  %v4825 = vmul.f32 %v1096, %v4521
  %v4826 = vmul.f32 %v1097, %v4524
  %v4827 = vmul.f32 %v1098, %v4527
  %v4828 = vmul.f32 %v1099, %v4530
  %v4829 = vmul.f32 %v1100, %v4533
  %v4830 = vmul.f32 %v1101, %v4536
  %v4831 = vmul.f32 %v1102, %v4539
  %v4832 = vmul.f32 %v1103, %v4542
  %v4833 = vmul.f32 %v1104, %v4545
  %v4834 = vmul.f32 %v1105, %v4548
  %v4835 = vmul.f32 %v1106, %v4551
  %v4836 = vmul.f32 %v1107, %v4554
  %v4837 = vmul.f32 %v1108, %v4557
  %s4838 = scalar_lea.vmem [#allocation3], 1792
  %4839 = vst [vmem:[%s4838] sm:$0xff] %v4806
  %4840 = vst [vmem:[%s4838 + $0x8] sm:$0xff] %v4807
  %4841 = vst [vmem:[%s4838 + $0x10] sm:$0xff] %v4808
  %4842 = vst [vmem:[%s4838 + $0x18] sm:$0xff] %v4809
  %4843 = vst [vmem:[%s4838 + $0x20] sm:$0xff] %v4810
  %4844 = vst [vmem:[%s4838 + $0x28] sm:$0xff] %v4811
  %4845 = vst [vmem:[%s4838 + $0x30] sm:$0xff] %v4812
  %4846 = vst [vmem:[%s4838 + $0x38] sm:$0xff] %v4813
  %4847 = vst [vmem:[%s4838 + $0x40] sm:$0xff] %v4814
  %4848 = vst [vmem:[%s4838 + $0x48] sm:$0xff] %v4815
  %4849 = vst [vmem:[%s4838 + $0x50] sm:$0xff] %v4816
  %4850 = vst [vmem:[%s4838 + $0x58] sm:$0xff] %v4817
  %4851 = vst [vmem:[%s4838 + $0x60] sm:$0xff] %v4818
  %4852 = vst [vmem:[%s4838 + $0x68] sm:$0xff] %v4819
  %4853 = vst [vmem:[%s4838 + $0x70] sm:$0xff] %v4820
  %4854 = vst [vmem:[%s4838 + $0x78] sm:$0xff] %v4821
  %4855 = vst [vmem:[%s4838 + $0x80] sm:$0xff] %v4822
  %4856 = vst [vmem:[%s4838 + $0x88] sm:$0xff] %v4823
  %4857 = vst [vmem:[%s4838 + $0x90] sm:$0xff] %v4824
  %4858 = vst [vmem:[%s4838 + $0x98] sm:$0xff] %v4825
  %4859 = vst [vmem:[%s4838 + $0xa0] sm:$0xff] %v4826
  %4860 = vst [vmem:[%s4838 + $0xa8] sm:$0xff] %v4827
  %4861 = vst [vmem:[%s4838 + $0xb0] sm:$0xff] %v4828
  %4862 = vst [vmem:[%s4838 + $0xb8] sm:$0xff] %v4829
  %4863 = vst [vmem:[%s4838 + $0xc0] sm:$0xff] %v4830
  %4864 = vst [vmem:[%s4838 + $0xc8] sm:$0xff] %v4831
  %4865 = vst [vmem:[%s4838 + $0xd0] sm:$0xff] %v4832
  %4866 = vst [vmem:[%s4838 + $0xd8] sm:$0xff] %v4833
  %4867 = vst [vmem:[%s4838 + $0xe0] sm:$0xff] %v4834
  %4868 = vst [vmem:[%s4838 + $0xe8] sm:$0xff] %v4835
  %4869 = vst [vmem:[%s4838 + $0xf0] sm:$0xff] %v4836
  %4870 = vst [vmem:[%s4838 + $0xf8] sm:$0xff] %v4837
  %s4871 = scalar_lea.vmem [#allocation4], 1792
  %4872 = vst [vmem:[%s4871] sm:$0xff] %v4577
  %4873 = vst [vmem:[%s4871 + $0x8] sm:$0xff] %v4580
  %4874 = vst [vmem:[%s4871 + $0x10] sm:$0xff] %v4583
  %4875 = vst [vmem:[%s4871 + $0x18] sm:$0xff] %v4586
  %4876 = vst [vmem:[%s4871 + $0x20] sm:$0xff] %v4589
  %4877 = vst [vmem:[%s4871 + $0x28] sm:$0xff] %v4592
  %4878 = vst [vmem:[%s4871 + $0x30] sm:$0xff] %v4595
  %4879 = vst [vmem:[%s4871 + $0x38] sm:$0xff] %v4598
  %4880 = vst [vmem:[%s4871 + $0x40] sm:$0xff] %v4601
  %4881 = vst [vmem:[%s4871 + $0x48] sm:$0xff] %v4604
  %4882 = vst [vmem:[%s4871 + $0x50] sm:$0xff] %v4607
  %4883 = vst [vmem:[%s4871 + $0x58] sm:$0xff] %v4610
  %4884 = vst [vmem:[%s4871 + $0x60] sm:$0xff] %v4613
  %4885 = vst [vmem:[%s4871 + $0x68] sm:$0xff] %v4616
  %4886 = vst [vmem:[%s4871 + $0x70] sm:$0xff] %v4619
  %4887 = vst [vmem:[%s4871 + $0x78] sm:$0xff] %v4622
  %4888 = vst [vmem:[%s4871 + $0x80] sm:$0xff] %v4625
  %4889 = vst [vmem:[%s4871 + $0x88] sm:$0xff] %v4628
  %4890 = vst [vmem:[%s4871 + $0x90] sm:$0xff] %v4631
  %4891 = vst [vmem:[%s4871 + $0x98] sm:$0xff] %v4634
  %4892 = vst [vmem:[%s4871 + $0xa0] sm:$0xff] %v4637
  %4893 = vst [vmem:[%s4871 + $0xa8] sm:$0xff] %v4640
  %4894 = vst [vmem:[%s4871 + $0xb0] sm:$0xff] %v4643
  %4895 = vst [vmem:[%s4871 + $0xb8] sm:$0xff] %v4646
  %4896 = vst [vmem:[%s4871 + $0xc0] sm:$0xff] %v4649
  %4897 = vst [vmem:[%s4871 + $0xc8] sm:$0xff] %v4652
  %4898 = vst [vmem:[%s4871 + $0xd0] sm:$0xff] %v4655
  %4899 = vst [vmem:[%s4871 + $0xd8] sm:$0xff] %v4658
  %4900 = vst [vmem:[%s4871 + $0xe0] sm:$0xff] %v4661
  %4901 = vst [vmem:[%s4871 + $0xe8] sm:$0xff] %v4664
  %4902 = vst [vmem:[%s4871 + $0xf0] sm:$0xff] %v4667
  %4903 = vst [vmem:[%s4871 + $0xf8] sm:$0xff] %v4670
  loop: start=0, step=1, limit=32
  $region26: #{ss2d_forward.4} parent=0 // loop_pre_header
    _
  $region27: #{ss2d_forward.4} parent=0 // loop_header
    %s4905 = sphi 0, %s4909
    %p4906 = scmp.ge.s32.totalorder %s4905, 32
    %v4910 = vphi 0.0, %v5547
    %v4911 = vphi 0.0, %v5557
    %v4912 = vphi 0.0, %v5567
    %v4913 = vphi 0.0, %v5577
    %v4914 = vphi 0.0, %v5587
    %v4915 = vphi 0.0, %v5597
    %v4916 = vphi 0.0, %v5607
    %v4917 = vphi 0.0, %v5617
  $region28: #{ss2d_forward.4} parent=0 // loop_header_branch
    %4908 = sbr.rel (%p4906) target = $region32
  $region29: #{ss2d_forward.4} parent=0 // loop_body
    %s4918 = smul.u32 %s4905, 8
    %s4919 = scalar_lea.vmem [#allocation2], %s4918
    %v4920 = vld [vmem:[%s4919] sm:$0x1]
    %v4921 = vmul.f32 %v4920, %v4910
    %s4922 = scalar_lea.vmem [#allocation3], %s4918
    %v4923 = vld [vmem:[%s4922] sm:$0x1]
    %v4924 = vadd.f32 %v4921, %v4923
    %s4925 = scalar_lea.vmem [#allocation4], %s4918
    %v4926 = vld [vmem:[%s4925] sm:$0x1]
    %v4927 = vmul.f32 %v4926, %v4924
    %s4928 = sadd.s32 %s4918, 256
    %s4929 = scalar_lea.vmem [#allocation2], %s4928
    %v4930 = vld [vmem:[%s4929] sm:$0x1]
    %v4931 = vmul.f32 %v4930, %v4911
    %s4932 = scalar_lea.vmem [#allocation3], %s4928
    %v4933 = vld [vmem:[%s4932] sm:$0x1]
    %v4934 = vadd.f32 %v4931, %v4933
    %s4935 = scalar_lea.vmem [#allocation4], %s4928
    %v4936 = vld [vmem:[%s4935] sm:$0x1]
    %v4937 = vmul.f32 %v4936, %v4934
    %s4938 = sadd.s32 %s4918, 512
    %s4939 = scalar_lea.vmem [#allocation2], %s4938
    %v4940 = vld [vmem:[%s4939] sm:$0x1]
    %v4941 = vmul.f32 %v4940, %v4912
    %s4942 = scalar_lea.vmem [#allocation3], %s4938
    %v4943 = vld [vmem:[%s4942] sm:$0x1]
    %v4944 = vadd.f32 %v4941, %v4943
    %s4945 = scalar_lea.vmem [#allocation4], %s4938
    %v4946 = vld [vmem:[%s4945] sm:$0x1]
    %v4947 = vmul.f32 %v4946, %v4944
    %s4948 = sadd.s32 %s4918, 768
    %s4949 = scalar_lea.vmem [#allocation2], %s4948
    %v4950 = vld [vmem:[%s4949] sm:$0x1]
    %v4951 = vmul.f32 %v4950, %v4913
    %s4952 = scalar_lea.vmem [#allocation3], %s4948
    %v4953 = vld [vmem:[%s4952] sm:$0x1]
    %v4954 = vadd.f32 %v4951, %v4953
    %s4955 = scalar_lea.vmem [#allocation4], %s4948
    %v4956 = vld [vmem:[%s4955] sm:$0x1]
    %v4957 = vmul.f32 %v4956, %v4954
    %s4958 = sadd.s32 %s4918, 1024
    %s4959 = scalar_lea.vmem [#allocation2], %s4958
    %v4960 = vld [vmem:[%s4959] sm:$0x1]
    %v4961 = vmul.f32 %v4960, %v4914
    %s4962 = scalar_lea.vmem [#allocation3], %s4958
    %v4963 = vld [vmem:[%s4962] sm:$0x1]
    %v4964 = vadd.f32 %v4961, %v4963
    %s4965 = scalar_lea.vmem [#allocation4], %s4958
    %v4966 = vld [vmem:[%s4965] sm:$0x1]
    %v4967 = vmul.f32 %v4966, %v4964
    %s4968 = sadd.s32 %s4918, 1280
    %s4969 = scalar_lea.vmem [#allocation2], %s4968
    %v4970 = vld [vmem:[%s4969] sm:$0x1]
    %v4971 = vmul.f32 %v4970, %v4915
    %s4972 = scalar_lea.vmem [#allocation3], %s4968
    %v4973 = vld [vmem:[%s4972] sm:$0x1]
    %v4974 = vadd.f32 %v4971, %v4973
    %s4975 = scalar_lea.vmem [#allocation4], %s4968
    %v4976 = vld [vmem:[%s4975] sm:$0x1]
    %v4977 = vmul.f32 %v4976, %v4974
    %s4978 = sadd.s32 %s4918, 1536
    %s4979 = scalar_lea.vmem [#allocation2], %s4978
    %v4980 = vld [vmem:[%s4979] sm:$0x1]
    %v4981 = vmul.f32 %v4980, %v4916
    %s4982 = scalar_lea.vmem [#allocation3], %s4978
    %v4983 = vld [vmem:[%s4982] sm:$0x1]
    %v4984 = vadd.f32 %v4981, %v4983
    %s4985 = scalar_lea.vmem [#allocation4], %s4978
    %v4986 = vld [vmem:[%s4985] sm:$0x1]
    %v4987 = vmul.f32 %v4986, %v4984
    %s4988 = sadd.s32 %s4918, 1792
    %s4989 = scalar_lea.vmem [#allocation2], %s4988
    %v4990 = vld [vmem:[%s4989] sm:$0x1]
    %v4991 = vmul.f32 %v4990, %v4917
    %s4992 = scalar_lea.vmem [#allocation3], %s4988
    %v4993 = vld [vmem:[%s4992] sm:$0x1]
    %v4994 = vadd.f32 %v4991, %v4993
    %s4995 = scalar_lea.vmem [#allocation4], %s4988
    %v4996 = vld [vmem:[%s4995] sm:$0x1]
    %v4997 = vmul.f32 %v4996, %v4994
    %v4998 = vadd.f32 %v4927, %v4937
    %v4999 = vadd.f32 %v4947, %v4957
    %v5000 = vadd.f32 %v4967, %v4977
    %v5001 = vadd.f32 %v4987, %v4997
    %v5002 = vadd.f32 %v4998, %v4999
    %v5003 = vadd.f32 %v5000, %v5001
    %v5004 = vadd.f32 %v5002, %v5003
    %s5005 = scalar_lea.vmem [#allocation5], %s4918
    %5006 = vst [vmem:[%s5005] sm:$0x1] %v5004
    %s5007 = sadd.s32 %s4918, 1
    %s5008 = scalar_lea.vmem [#allocation2], %s5007
    %v5009 = vld [vmem:[%s5008] sm:$0x1]
    %v5010 = vmul.f32 %v5009, %v4924
    %s5011 = scalar_lea.vmem [#allocation3], %s5007
    %v5012 = vld [vmem:[%s5011] sm:$0x1]
    %v5013 = vadd.f32 %v5010, %v5012
    %s5014 = scalar_lea.vmem [#allocation4], %s5007
    %v5015 = vld [vmem:[%s5014] sm:$0x1]
    %v5016 = vmul.f32 %v5015, %v5013
    %s5017 = sadd.s32 %s5007, 256
    %s5018 = scalar_lea.vmem [#allocation2], %s5017
    %v5019 = vld [vmem:[%s5018] sm:$0x1]
    %v5020 = vmul.f32 %v5019, %v4934
    %s5021 = scalar_lea.vmem [#allocation3], %s5017
    %v5022 = vld [vmem:[%s5021] sm:$0x1]
    %v5023 = vadd.f32 %v5020, %v5022
    %s5024 = scalar_lea.vmem [#allocation4], %s5017
    %v5025 = vld [vmem:[%s5024] sm:$0x1]
    %v5026 = vmul.f32 %v5025, %v5023
    %s5027 = sadd.s32 %s5007, 512
    %s5028 = scalar_lea.vmem [#allocation2], %s5027
    %v5029 = vld [vmem:[%s5028] sm:$0x1]
    %v5030 = vmul.f32 %v5029, %v4944
    %s5031 = scalar_lea.vmem [#allocation3], %s5027
    %v5032 = vld [vmem:[%s5031] sm:$0x1]
    %v5033 = vadd.f32 %v5030, %v5032
    %s5034 = scalar_lea.vmem [#allocation4], %s5027
    %v5035 = vld [vmem:[%s5034] sm:$0x1]
    %v5036 = vmul.f32 %v5035, %v5033
    %s5037 = sadd.s32 %s5007, 768
    %s5038 = scalar_lea.vmem [#allocation2], %s5037
    %v5039 = vld [vmem:[%s5038] sm:$0x1]
    %v5040 = vmul.f32 %v5039, %v4954
    %s5041 = scalar_lea.vmem [#allocation3], %s5037
    %v5042 = vld [vmem:[%s5041] sm:$0x1]
    %v5043 = vadd.f32 %v5040, %v5042
    %s5044 = scalar_lea.vmem [#allocation4], %s5037
    %v5045 = vld [vmem:[%s5044] sm:$0x1]
    %v5046 = vmul.f32 %v5045, %v5043
    %s5047 = sadd.s32 %s5007, 1024
    %s5048 = scalar_lea.vmem [#allocation2], %s5047
    %v5049 = vld [vmem:[%s5048] sm:$0x1]
    %v5050 = vmul.f32 %v5049, %v4964
    %s5051 = scalar_lea.vmem [#allocation3], %s5047
    %v5052 = vld [vmem:[%s5051] sm:$0x1]
    %v5053 = vadd.f32 %v5050, %v5052
    %s5054 = scalar_lea.vmem [#allocation4], %s5047
    %v5055 = vld [vmem:[%s5054] sm:$0x1]
    %v5056 = vmul.f32 %v5055, %v5053
    %s5057 = sadd.s32 %s5007, 1280
    %s5058 = scalar_lea.vmem [#allocation2], %s5057
    %v5059 = vld [vmem:[%s5058] sm:$0x1]
    %v5060 = vmul.f32 %v5059, %v4974
    %s5061 = scalar_lea.vmem [#allocation3], %s5057
    %v5062 = vld [vmem:[%s5061] sm:$0x1]
    %v5063 = vadd.f32 %v5060, %v5062
    %s5064 = scalar_lea.vmem [#allocation4], %s5057
    %v5065 = vld [vmem:[%s5064] sm:$0x1]
    %v5066 = vmul.f32 %v5065, %v5063
    %s5067 = sadd.s32 %s5007, 1536
    %s5068 = scalar_lea.vmem [#allocation2], %s5067
    %v5069 = vld [vmem:[%s5068] sm:$0x1]
    %v5070 = vmul.f32 %v5069, %v4984
    %s5071 = scalar_lea.vmem [#allocation3], %s5067
    %v5072 = vld [vmem:[%s5071] sm:$0x1]
    %v5073 = vadd.f32 %v5070, %v5072
    %s5074 = scalar_lea.vmem [#allocation4], %s5067
    %v5075 = vld [vmem:[%s5074] sm:$0x1]
    %v5076 = vmul.f32 %v5075, %v5073
    %s5077 = sadd.s32 %s5007, 1792
    %s5078 = scalar_lea.vmem [#allocation2], %s5077
    %v5079 = vld [vmem:[%s5078] sm:$0x1]
    %v5080 = vmul.f32 %v5079, %v4994
    %s5081 = scalar_lea.vmem [#allocation3], %s5077
    %v5082 = vld [vmem:[%s5081] sm:$0x1]
    %v5083 = vadd.f32 %v5080, %v5082
    %s5084 = scalar_lea.vmem [#allocation4], %s5077
    %v5085 = vld [vmem:[%s5084] sm:$0x1]
    %v5086 = vmul.f32 %v5085, %v5083
    %v5087 = vadd.f32 %v5016, %v5026
    %v5088 = vadd.f32 %v5036, %v5046
    %v5089 = vadd.f32 %v5056, %v5066
    %v5090 = vadd.f32 %v5076, %v5086
    %v5091 = vadd.f32 %v5087, %v5088
    %v5092 = vadd.f32 %v5089, %v5090
    %v5093 = vadd.f32 %v5091, %v5092
    %s5094 = scalar_lea.vmem [#allocation5], %s5007
    %5095 = vst [vmem:[%s5094] sm:$0x1] %v5093
    %s5096 = sadd.s32 %s4918, 2
    %s5097 = scalar_lea.vmem [#allocation2], %s5096
    %v5098 = vld [vmem:[%s5097] sm:$0x1]
    %v5099 = vmul.f32 %v5098, %v5013
    %s5100 = scalar_lea.vmem [#allocation3], %s5096
    %v5101 = vld [vmem:[%s5100] sm:$0x1]
    %v5102 = vadd.f32 %v5099, %v5101
    %s5103 = scalar_lea.vmem [#allocation4], %s5096
    %v5104 = vld [vmem:[%s5103] sm:$0x1]
    %v5105 = vmul.f32 %v5104, %v5102
    %s5106 = sadd.s32 %s5096, 256
    %s5107 = scalar_lea.vmem [#allocation2], %s5106
    %v5108 = vld [vmem:[%s5107] sm:$0x1]
    %v5109 = vmul.f32 %v5108, %v5023
    %s5110 = scalar_lea.vmem [#allocation3], %s5106
    %v5111 = vld [vmem:[%s5110] sm:$0x1]
    %v5112 = vadd.f32 %v5109, %v5111
    %s5113 = scalar_lea.vmem [#allocation4], %s5106
    %v5114 = vld [vmem:[%s5113] sm:$0x1]
    %v5115 = vmul.f32 %v5114, %v5112
    %s5116 = sadd.s32 %s5096, 512
    %s5117 = scalar_lea.vmem [#allocation2], %s5116
    %v5118 = vld [vmem:[%s5117] sm:$0x1]
    %v5119 = vmul.f32 %v5118, %v5033
    %s5120 = scalar_lea.vmem [#allocation3], %s5116
    %v5121 = vld [vmem:[%s5120] sm:$0x1]
    %v5122 = vadd.f32 %v5119, %v5121
    %s5123 = scalar_lea.vmem [#allocation4], %s5116
    %v5124 = vld [vmem:[%s5123] sm:$0x1]
    %v5125 = vmul.f32 %v5124, %v5122
    %s5126 = sadd.s32 %s5096, 768
    %s5127 = scalar_lea.vmem [#allocation2], %s5126
    %v5128 = vld [vmem:[%s5127] sm:$0x1]
    %v5129 = vmul.f32 %v5128, %v5043
    %s5130 = scalar_lea.vmem [#allocation3], %s5126
    %v5131 = vld [vmem:[%s5130] sm:$0x1]
    %v5132 = vadd.f32 %v5129, %v5131
    %s5133 = scalar_lea.vmem [#allocation4], %s5126
    %v5134 = vld [vmem:[%s5133] sm:$0x1]
    %v5135 = vmul.f32 %v5134, %v5132
    %s5136 = sadd.s32 %s5096, 1024
    %s5137 = scalar_lea.vmem [#allocation2], %s5136
    %v5138 = vld [vmem:[%s5137] sm:$0x1]
    %v5139 = vmul.f32 %v5138, %v5053
    %s5140 = scalar_lea.vmem [#allocation3], %s5136
    %v5141 = vld [vmem:[%s5140] sm:$0x1]
    %v5142 = vadd.f32 %v5139, %v5141
    %s5143 = scalar_lea.vmem [#allocation4], %s5136
    %v5144 = vld [vmem:[%s5143] sm:$0x1]
    %v5145 = vmul.f32 %v5144, %v5142
    %s5146 = sadd.s32 %s5096, 1280
    %s5147 = scalar_lea.vmem [#allocation2], %s5146
    %v5148 = vld [vmem:[%s5147] sm:$0x1]
    %v5149 = vmul.f32 %v5148, %v5063
    %s5150 = scalar_lea.vmem [#allocation3], %s5146
    %v5151 = vld [vmem:[%s5150] sm:$0x1]
    %v5152 = vadd.f32 %v5149, %v5151
    %s5153 = scalar_lea.vmem [#allocation4], %s5146
    %v5154 = vld [vmem:[%s5153] sm:$0x1]
    %v5155 = vmul.f32 %v5154, %v5152
    %s5156 = sadd.s32 %s5096, 1536
    %s5157 = scalar_lea.vmem [#allocation2], %s5156
    %v5158 = vld [vmem:[%s5157] sm:$0x1]
    %v5159 = vmul.f32 %v5158, %v5073
    %s5160 = scalar_lea.vmem [#allocation3], %s5156
    %v5161 = vld [vmem:[%s5160] sm:$0x1]
    %v5162 = vadd.f32 %v5159, %v5161
    %s5163 = scalar_lea.vmem [#allocation4], %s5156
    %v5164 = vld [vmem:[%s5163] sm:$0x1]
    %v5165 = vmul.f32 %v5164, %v5162
    %s5166 = sadd.s32 %s5096, 1792
    %s5167 = scalar_lea.vmem [#allocation2], %s5166
    %v5168 = vld [vmem:[%s5167] sm:$0x1]
    %v5169 = vmul.f32 %v5168, %v5083
    %s5170 = scalar_lea.vmem [#allocation3], %s5166
    %v5171 = vld [vmem:[%s5170] sm:$0x1]
    %v5172 = vadd.f32 %v5169, %v5171
    %s5173 = scalar_lea.vmem [#allocation4], %s5166
    %v5174 = vld [vmem:[%s5173] sm:$0x1]
    %v5175 = vmul.f32 %v5174, %v5172
    %v5176 = vadd.f32 %v5105, %v5115
    %v5177 = vadd.f32 %v5125, %v5135
    %v5178 = vadd.f32 %v5145, %v5155
    %v5179 = vadd.f32 %v5165, %v5175
    %v5180 = vadd.f32 %v5176, %v5177
    %v5181 = vadd.f32 %v5178, %v5179
    %v5182 = vadd.f32 %v5180, %v5181
    %s5183 = scalar_lea.vmem [#allocation5], %s5096
    %5184 = vst [vmem:[%s5183] sm:$0x1] %v5182
    %s5185 = sadd.s32 %s4918, 3
    %s5186 = scalar_lea.vmem [#allocation2], %s5185
    %v5187 = vld [vmem:[%s5186] sm:$0x1]
    %v5188 = vmul.f32 %v5187, %v5102
    %s5189 = scalar_lea.vmem [#allocation3], %s5185
    %v5190 = vld [vmem:[%s5189] sm:$0x1]
    %v5191 = vadd.f32 %v5188, %v5190
    %s5192 = scalar_lea.vmem [#allocation4], %s5185
    %v5193 = vld [vmem:[%s5192] sm:$0x1]
    %v5194 = vmul.f32 %v5193, %v5191
    %s5195 = sadd.s32 %s5185, 256
    %s5196 = scalar_lea.vmem [#allocation2], %s5195
    %v5197 = vld [vmem:[%s5196] sm:$0x1]
    %v5198 = vmul.f32 %v5197, %v5112
    %s5199 = scalar_lea.vmem [#allocation3], %s5195
    %v5200 = vld [vmem:[%s5199] sm:$0x1]
    %v5201 = vadd.f32 %v5198, %v5200
    %s5202 = scalar_lea.vmem [#allocation4], %s5195
    %v5203 = vld [vmem:[%s5202] sm:$0x1]
    %v5204 = vmul.f32 %v5203, %v5201
    %s5205 = sadd.s32 %s5185, 512
    %s5206 = scalar_lea.vmem [#allocation2], %s5205
    %v5207 = vld [vmem:[%s5206] sm:$0x1]
    %v5208 = vmul.f32 %v5207, %v5122
    %s5209 = scalar_lea.vmem [#allocation3], %s5205
    %v5210 = vld [vmem:[%s5209] sm:$0x1]
    %v5211 = vadd.f32 %v5208, %v5210
    %s5212 = scalar_lea.vmem [#allocation4], %s5205
    %v5213 = vld [vmem:[%s5212] sm:$0x1]
    %v5214 = vmul.f32 %v5213, %v5211
    %s5215 = sadd.s32 %s5185, 768
    %s5216 = scalar_lea.vmem [#allocation2], %s5215
    %v5217 = vld [vmem:[%s5216] sm:$0x1]
    %v5218 = vmul.f32 %v5217, %v5132
    %s5219 = scalar_lea.vmem [#allocation3], %s5215
    %v5220 = vld [vmem:[%s5219] sm:$0x1]
    %v5221 = vadd.f32 %v5218, %v5220
    %s5222 = scalar_lea.vmem [#allocation4], %s5215
    %v5223 = vld [vmem:[%s5222] sm:$0x1]
    %v5224 = vmul.f32 %v5223, %v5221
    %s5225 = sadd.s32 %s5185, 1024
    %s5226 = scalar_lea.vmem [#allocation2], %s5225
    %v5227 = vld [vmem:[%s5226] sm:$0x1]
    %v5228 = vmul.f32 %v5227, %v5142
    %s5229 = scalar_lea.vmem [#allocation3], %s5225
    %v5230 = vld [vmem:[%s5229] sm:$0x1]
    %v5231 = vadd.f32 %v5228, %v5230
    %s5232 = scalar_lea.vmem [#allocation4], %s5225
    %v5233 = vld [vmem:[%s5232] sm:$0x1]
    %v5234 = vmul.f32 %v5233, %v5231
    %s5235 = sadd.s32 %s5185, 1280
    %s5236 = scalar_lea.vmem [#allocation2], %s5235
    %v5237 = vld [vmem:[%s5236] sm:$0x1]
    %v5238 = vmul.f32 %v5237, %v5152
    %s5239 = scalar_lea.vmem [#allocation3], %s5235
    %v5240 = vld [vmem:[%s5239] sm:$0x1]
    %v5241 = vadd.f32 %v5238, %v5240
    %s5242 = scalar_lea.vmem [#allocation4], %s5235
    %v5243 = vld [vmem:[%s5242] sm:$0x1]
    %v5244 = vmul.f32 %v5243, %v5241
    %s5245 = sadd.s32 %s5185, 1536
    %s5246 = scalar_lea.vmem [#allocation2], %s5245
    %v5247 = vld [vmem:[%s5246] sm:$0x1]
    %v5248 = vmul.f32 %v5247, %v5162
    %s5249 = scalar_lea.vmem [#allocation3], %s5245
    %v5250 = vld [vmem:[%s5249] sm:$0x1]
    %v5251 = vadd.f32 %v5248, %v5250
    %s5252 = scalar_lea.vmem [#allocation4], %s5245
    %v5253 = vld [vmem:[%s5252] sm:$0x1]
    %v5254 = vmul.f32 %v5253, %v5251
    %s5255 = sadd.s32 %s5185, 1792
    %s5256 = scalar_lea.vmem [#allocation2], %s5255
    %v5257 = vld [vmem:[%s5256] sm:$0x1]
    %v5258 = vmul.f32 %v5257, %v5172
    %s5259 = scalar_lea.vmem [#allocation3], %s5255
    %v5260 = vld [vmem:[%s5259] sm:$0x1]
    %v5261 = vadd.f32 %v5258, %v5260
    %s5262 = scalar_lea.vmem [#allocation4], %s5255
    %v5263 = vld [vmem:[%s5262] sm:$0x1]
    %v5264 = vmul.f32 %v5263, %v5261
    %v5265 = vadd.f32 %v5194, %v5204
    %v5266 = vadd.f32 %v5214, %v5224
    %v5267 = vadd.f32 %v5234, %v5244
    %v5268 = vadd.f32 %v5254, %v5264
    %v5269 = vadd.f32 %v5265, %v5266
    %v5270 = vadd.f32 %v5267, %v5268
    %v5271 = vadd.f32 %v5269, %v5270
    %s5272 = scalar_lea.vmem [#allocation5], %s5185
    %5273 = vst [vmem:[%s5272] sm:$0x1] %v5271
    %s5274 = sadd.s32 %s4918, 4
    %s5275 = scalar_lea.vmem [#allocation2], %s5274
    %v5276 = vld [vmem:[%s5275] sm:$0x1]
    %v5277 = vmul.f32 %v5276, %v5191
    %s5278 = scalar_lea.vmem [#allocation3], %s5274
    %v5279 = vld [vmem:[%s5278] sm:$0x1]
    %v5280 = vadd.f32 %v5277, %v5279
    %s5281 = scalar_lea.vmem [#allocation4], %s5274
    %v5282 = vld [vmem:[%s5281] sm:$0x1]
    %v5283 = vmul.f32 %v5282, %v5280
    %s5284 = sadd.s32 %s5274, 256
    %s5285 = scalar_lea.vmem [#allocation2], %s5284
    %v5286 = vld [vmem:[%s5285] sm:$0x1]
    %v5287 = vmul.f32 %v5286, %v5201
    %s5288 = scalar_lea.vmem [#allocation3], %s5284
    %v5289 = vld [vmem:[%s5288] sm:$0x1]
    %v5290 = vadd.f32 %v5287, %v5289
    %s5291 = scalar_lea.vmem [#allocation4], %s5284
    %v5292 = vld [vmem:[%s5291] sm:$0x1]
    %v5293 = vmul.f32 %v5292, %v5290
    %s5294 = sadd.s32 %s5274, 512
    %s5295 = scalar_lea.vmem [#allocation2], %s5294
    %v5296 = vld [vmem:[%s5295] sm:$0x1]
    %v5297 = vmul.f32 %v5296, %v5211
    %s5298 = scalar_lea.vmem [#allocation3], %s5294
    %v5299 = vld [vmem:[%s5298] sm:$0x1]
    %v5300 = vadd.f32 %v5297, %v5299
    %s5301 = scalar_lea.vmem [#allocation4], %s5294
    %v5302 = vld [vmem:[%s5301] sm:$0x1]
    %v5303 = vmul.f32 %v5302, %v5300
    %s5304 = sadd.s32 %s5274, 768
    %s5305 = scalar_lea.vmem [#allocation2], %s5304
    %v5306 = vld [vmem:[%s5305] sm:$0x1]
    %v5307 = vmul.f32 %v5306, %v5221
    %s5308 = scalar_lea.vmem [#allocation3], %s5304
    %v5309 = vld [vmem:[%s5308] sm:$0x1]
    %v5310 = vadd.f32 %v5307, %v5309
    %s5311 = scalar_lea.vmem [#allocation4], %s5304
    %v5312 = vld [vmem:[%s5311] sm:$0x1]
    %v5313 = vmul.f32 %v5312, %v5310
    %s5314 = sadd.s32 %s5274, 1024
    %s5315 = scalar_lea.vmem [#allocation2], %s5314
    %v5316 = vld [vmem:[%s5315] sm:$0x1]
    %v5317 = vmul.f32 %v5316, %v5231
    %s5318 = scalar_lea.vmem [#allocation3], %s5314
    %v5319 = vld [vmem:[%s5318] sm:$0x1]
    %v5320 = vadd.f32 %v5317, %v5319
    %s5321 = scalar_lea.vmem [#allocation4], %s5314
    %v5322 = vld [vmem:[%s5321] sm:$0x1]
    %v5323 = vmul.f32 %v5322, %v5320
    %s5324 = sadd.s32 %s5274, 1280
    %s5325 = scalar_lea.vmem [#allocation2], %s5324
    %v5326 = vld [vmem:[%s5325] sm:$0x1]
    %v5327 = vmul.f32 %v5326, %v5241
    %s5328 = scalar_lea.vmem [#allocation3], %s5324
    %v5329 = vld [vmem:[%s5328] sm:$0x1]
    %v5330 = vadd.f32 %v5327, %v5329
    %s5331 = scalar_lea.vmem [#allocation4], %s5324
    %v5332 = vld [vmem:[%s5331] sm:$0x1]
    %v5333 = vmul.f32 %v5332, %v5330
    %s5334 = sadd.s32 %s5274, 1536
    %s5335 = scalar_lea.vmem [#allocation2], %s5334
    %v5336 = vld [vmem:[%s5335] sm:$0x1]
    %v5337 = vmul.f32 %v5336, %v5251
    %s5338 = scalar_lea.vmem [#allocation3], %s5334
    %v5339 = vld [vmem:[%s5338] sm:$0x1]
    %v5340 = vadd.f32 %v5337, %v5339
    %s5341 = scalar_lea.vmem [#allocation4], %s5334
    %v5342 = vld [vmem:[%s5341] sm:$0x1]
    %v5343 = vmul.f32 %v5342, %v5340
    %s5344 = sadd.s32 %s5274, 1792
    %s5345 = scalar_lea.vmem [#allocation2], %s5344
    %v5346 = vld [vmem:[%s5345] sm:$0x1]
    %v5347 = vmul.f32 %v5346, %v5261
    %s5348 = scalar_lea.vmem [#allocation3], %s5344
    %v5349 = vld [vmem:[%s5348] sm:$0x1]
    %v5350 = vadd.f32 %v5347, %v5349
    %s5351 = scalar_lea.vmem [#allocation4], %s5344
    %v5352 = vld [vmem:[%s5351] sm:$0x1]
    %v5353 = vmul.f32 %v5352, %v5350
    %v5354 = vadd.f32 %v5283, %v5293
    %v5355 = vadd.f32 %v5303, %v5313
    %v5356 = vadd.f32 %v5323, %v5333
    %v5357 = vadd.f32 %v5343, %v5353
    %v5358 = vadd.f32 %v5354, %v5355
    %v5359 = vadd.f32 %v5356, %v5357
    %v5360 = vadd.f32 %v5358, %v5359
    %s5361 = scalar_lea.vmem [#allocation5], %s5274
    %5362 = vst [vmem:[%s5361] sm:$0x1] %v5360
    %s5363 = sadd.s32 %s4918, 5
    %s5364 = scalar_lea.vmem [#allocation2], %s5363
    %v5365 = vld [vmem:[%s5364] sm:$0x1]
    %v5366 = vmul.f32 %v5365, %v5280
    %s5367 = scalar_lea.vmem [#allocation3], %s5363
    %v5368 = vld [vmem:[%s5367] sm:$0x1]
    %v5369 = vadd.f32 %v5366, %v5368
    %s5370 = scalar_lea.vmem [#allocation4], %s5363
    %v5371 = vld [vmem:[%s5370] sm:$0x1]
    %v5372 = vmul.f32 %v5371, %v5369
    %s5373 = sadd.s32 %s5363, 256
    %s5374 = scalar_lea.vmem [#allocation2], %s5373
    %v5375 = vld [vmem:[%s5374] sm:$0x1]
    %v5376 = vmul.f32 %v5375, %v5290
    %s5377 = scalar_lea.vmem [#allocation3], %s5373
    %v5378 = vld [vmem:[%s5377] sm:$0x1]
    %v5379 = vadd.f32 %v5376, %v5378
    %s5380 = scalar_lea.vmem [#allocation4], %s5373
    %v5381 = vld [vmem:[%s5380] sm:$0x1]
    %v5382 = vmul.f32 %v5381, %v5379
    %s5383 = sadd.s32 %s5363, 512
    %s5384 = scalar_lea.vmem [#allocation2], %s5383
    %v5385 = vld [vmem:[%s5384] sm:$0x1]
    %v5386 = vmul.f32 %v5385, %v5300
    %s5387 = scalar_lea.vmem [#allocation3], %s5383
    %v5388 = vld [vmem:[%s5387] sm:$0x1]
    %v5389 = vadd.f32 %v5386, %v5388
    %s5390 = scalar_lea.vmem [#allocation4], %s5383
    %v5391 = vld [vmem:[%s5390] sm:$0x1]
    %v5392 = vmul.f32 %v5391, %v5389
    %s5393 = sadd.s32 %s5363, 768
    %s5394 = scalar_lea.vmem [#allocation2], %s5393
    %v5395 = vld [vmem:[%s5394] sm:$0x1]
    %v5396 = vmul.f32 %v5395, %v5310
    %s5397 = scalar_lea.vmem [#allocation3], %s5393
    %v5398 = vld [vmem:[%s5397] sm:$0x1]
    %v5399 = vadd.f32 %v5396, %v5398
    %s5400 = scalar_lea.vmem [#allocation4], %s5393
    %v5401 = vld [vmem:[%s5400] sm:$0x1]
    %v5402 = vmul.f32 %v5401, %v5399
    %s5403 = sadd.s32 %s5363, 1024
    %s5404 = scalar_lea.vmem [#allocation2], %s5403
    %v5405 = vld [vmem:[%s5404] sm:$0x1]
    %v5406 = vmul.f32 %v5405, %v5320
    %s5407 = scalar_lea.vmem [#allocation3], %s5403
    %v5408 = vld [vmem:[%s5407] sm:$0x1]
    %v5409 = vadd.f32 %v5406, %v5408
    %s5410 = scalar_lea.vmem [#allocation4], %s5403
    %v5411 = vld [vmem:[%s5410] sm:$0x1]
    %v5412 = vmul.f32 %v5411, %v5409
    %s5413 = sadd.s32 %s5363, 1280
    %s5414 = scalar_lea.vmem [#allocation2], %s5413
    %v5415 = vld [vmem:[%s5414] sm:$0x1]
    %v5416 = vmul.f32 %v5415, %v5330
    %s5417 = scalar_lea.vmem [#allocation3], %s5413
    %v5418 = vld [vmem:[%s5417] sm:$0x1]
    %v5419 = vadd.f32 %v5416, %v5418
    %s5420 = scalar_lea.vmem [#allocation4], %s5413
    %v5421 = vld [vmem:[%s5420] sm:$0x1]
    %v5422 = vmul.f32 %v5421, %v5419
    %s5423 = sadd.s32 %s5363, 1536
    %s5424 = scalar_lea.vmem [#allocation2], %s5423
    %v5425 = vld [vmem:[%s5424] sm:$0x1]
    %v5426 = vmul.f32 %v5425, %v5340
    %s5427 = scalar_lea.vmem [#allocation3], %s5423
    %v5428 = vld [vmem:[%s5427] sm:$0x1]
    %v5429 = vadd.f32 %v5426, %v5428
    %s5430 = scalar_lea.vmem [#allocation4], %s5423
    %v5431 = vld [vmem:[%s5430] sm:$0x1]
    %v5432 = vmul.f32 %v5431, %v5429
    %s5433 = sadd.s32 %s5363, 1792
    %s5434 = scalar_lea.vmem [#allocation2], %s5433
    %v5435 = vld [vmem:[%s5434] sm:$0x1]
    %v5436 = vmul.f32 %v5435, %v5350
    %s5437 = scalar_lea.vmem [#allocation3], %s5433
    %v5438 = vld [vmem:[%s5437] sm:$0x1]
    %v5439 = vadd.f32 %v5436, %v5438
    %s5440 = scalar_lea.vmem [#allocation4], %s5433
    %v5441 = vld [vmem:[%s5440] sm:$0x1]
    %v5442 = vmul.f32 %v5441, %v5439
    %v5443 = vadd.f32 %v5372, %v5382
    %v5444 = vadd.f32 %v5392, %v5402
    %v5445 = vadd.f32 %v5412, %v5422
    %v5446 = vadd.f32 %v5432, %v5442
    %v5447 = vadd.f32 %v5443, %v5444
    %v5448 = vadd.f32 %v5445, %v5446
    %v5449 = vadd.f32 %v5447, %v5448
    %s5450 = scalar_lea.vmem [#allocation5], %s5363
    %5451 = vst [vmem:[%s5450] sm:$0x1] %v5449
    %s5452 = sadd.s32 %s4918, 6
    %s5453 = scalar_lea.vmem [#allocation2], %s5452
    %v5454 = vld [vmem:[%s5453] sm:$0x1]
    %v5455 = vmul.f32 %v5454, %v5369
    %s5456 = scalar_lea.vmem [#allocation3], %s5452
    %v5457 = vld [vmem:[%s5456] sm:$0x1]
    %v5458 = vadd.f32 %v5455, %v5457
    %s5459 = scalar_lea.vmem [#allocation4], %s5452
    %v5460 = vld [vmem:[%s5459] sm:$0x1]
    %v5461 = vmul.f32 %v5460, %v5458
    %s5462 = sadd.s32 %s5452, 256
    %s5463 = scalar_lea.vmem [#allocation2], %s5462
    %v5464 = vld [vmem:[%s5463] sm:$0x1]
    %v5465 = vmul.f32 %v5464, %v5379
    %s5466 = scalar_lea.vmem [#allocation3], %s5462
    %v5467 = vld [vmem:[%s5466] sm:$0x1]
    %v5468 = vadd.f32 %v5465, %v5467
    %s5469 = scalar_lea.vmem [#allocation4], %s5462
    %v5470 = vld [vmem:[%s5469] sm:$0x1]
    %v5471 = vmul.f32 %v5470, %v5468
    %s5472 = sadd.s32 %s5452, 512
    %s5473 = scalar_lea.vmem [#allocation2], %s5472
    %v5474 = vld [vmem:[%s5473] sm:$0x1]
    %v5475 = vmul.f32 %v5474, %v5389
    %s5476 = scalar_lea.vmem [#allocation3], %s5472
    %v5477 = vld [vmem:[%s5476] sm:$0x1]
    %v5478 = vadd.f32 %v5475, %v5477
    %s5479 = scalar_lea.vmem [#allocation4], %s5472
    %v5480 = vld [vmem:[%s5479] sm:$0x1]
    %v5481 = vmul.f32 %v5480, %v5478
    %s5482 = sadd.s32 %s5452, 768
    %s5483 = scalar_lea.vmem [#allocation2], %s5482
    %v5484 = vld [vmem:[%s5483] sm:$0x1]
    %v5485 = vmul.f32 %v5484, %v5399
    %s5486 = scalar_lea.vmem [#allocation3], %s5482
    %v5487 = vld [vmem:[%s5486] sm:$0x1]
    %v5488 = vadd.f32 %v5485, %v5487
    %s5489 = scalar_lea.vmem [#allocation4], %s5482
    %v5490 = vld [vmem:[%s5489] sm:$0x1]
    %v5491 = vmul.f32 %v5490, %v5488
    %s5492 = sadd.s32 %s5452, 1024
    %s5493 = scalar_lea.vmem [#allocation2], %s5492
    %v5494 = vld [vmem:[%s5493] sm:$0x1]
    %v5495 = vmul.f32 %v5494, %v5409
    %s5496 = scalar_lea.vmem [#allocation3], %s5492
    %v5497 = vld [vmem:[%s5496] sm:$0x1]
    %v5498 = vadd.f32 %v5495, %v5497
    %s5499 = scalar_lea.vmem [#allocation4], %s5492
    %v5500 = vld [vmem:[%s5499] sm:$0x1]
    %v5501 = vmul.f32 %v5500, %v5498
    %s5502 = sadd.s32 %s5452, 1280
    %s5503 = scalar_lea.vmem [#allocation2], %s5502
    %v5504 = vld [vmem:[%s5503] sm:$0x1]
    %v5505 = vmul.f32 %v5504, %v5419
    %s5506 = scalar_lea.vmem [#allocation3], %s5502
    %v5507 = vld [vmem:[%s5506] sm:$0x1]
    %v5508 = vadd.f32 %v5505, %v5507
    %s5509 = scalar_lea.vmem [#allocation4], %s5502
    %v5510 = vld [vmem:[%s5509] sm:$0x1]
    %v5511 = vmul.f32 %v5510, %v5508
    %s5512 = sadd.s32 %s5452, 1536
    %s5513 = scalar_lea.vmem [#allocation2], %s5512
    %v5514 = vld [vmem:[%s5513] sm:$0x1]
    %v5515 = vmul.f32 %v5514, %v5429
    %s5516 = scalar_lea.vmem [#allocation3], %s5512
    %v5517 = vld [vmem:[%s5516] sm:$0x1]
    %v5518 = vadd.f32 %v5515, %v5517
    %s5519 = scalar_lea.vmem [#allocation4], %s5512
    %v5520 = vld [vmem:[%s5519] sm:$0x1]
    %v5521 = vmul.f32 %v5520, %v5518
    %s5522 = sadd.s32 %s5452, 1792
    %s5523 = scalar_lea.vmem [#allocation2], %s5522
    %v5524 = vld [vmem:[%s5523] sm:$0x1]
    %v5525 = vmul.f32 %v5524, %v5439
    %s5526 = scalar_lea.vmem [#allocation3], %s5522
    %v5527 = vld [vmem:[%s5526] sm:$0x1]
    %v5528 = vadd.f32 %v5525, %v5527
    %s5529 = scalar_lea.vmem [#allocation4], %s5522
    %v5530 = vld [vmem:[%s5529] sm:$0x1]
    %v5531 = vmul.f32 %v5530, %v5528
    %v5532 = vadd.f32 %v5461, %v5471
    %v5533 = vadd.f32 %v5481, %v5491
    %v5534 = vadd.f32 %v5501, %v5511
    %v5535 = vadd.f32 %v5521, %v5531
    %v5536 = vadd.f32 %v5532, %v5533
    %v5537 = vadd.f32 %v5534, %v5535
    %v5538 = vadd.f32 %v5536, %v5537
    %s5539 = scalar_lea.vmem [#allocation5], %s5452
    %5540 = vst [vmem:[%s5539] sm:$0x1] %v5538
    %s5541 = sadd.s32 %s4918, 7
    %s5542 = scalar_lea.vmem [#allocation2], %s5541
    %v5543 = vld [vmem:[%s5542] sm:$0x1]
    %v5544 = vmul.f32 %v5543, %v5458
    %s5545 = scalar_lea.vmem [#allocation3], %s5541
    %v5546 = vld [vmem:[%s5545] sm:$0x1]
    %v5547 = vadd.f32 %v5544, %v5546
    %s5548 = scalar_lea.vmem [#allocation4], %s5541
    %v5549 = vld [vmem:[%s5548] sm:$0x1]
    %v5550 = vmul.f32 %v5549, %v5547
    %s5551 = sadd.s32 %s5541, 256
    %s5552 = scalar_lea.vmem [#allocation2], %s5551
    %v5553 = vld [vmem:[%s5552] sm:$0x1]
    %v5554 = vmul.f32 %v5553, %v5468
    %s5555 = scalar_lea.vmem [#allocation3], %s5551
    %v5556 = vld [vmem:[%s5555] sm:$0x1]
    %v5557 = vadd.f32 %v5554, %v5556
    %s5558 = scalar_lea.vmem [#allocation4], %s5551
    %v5559 = vld [vmem:[%s5558] sm:$0x1]
    %v5560 = vmul.f32 %v5559, %v5557
    %s5561 = sadd.s32 %s5541, 512
    %s5562 = scalar_lea.vmem [#allocation2], %s5561
    %v5563 = vld [vmem:[%s5562] sm:$0x1]
    %v5564 = vmul.f32 %v5563, %v5478
    %s5565 = scalar_lea.vmem [#allocation3], %s5561
    %v5566 = vld [vmem:[%s5565] sm:$0x1]
    %v5567 = vadd.f32 %v5564, %v5566
    %s5568 = scalar_lea.vmem [#allocation4], %s5561
    %v5569 = vld [vmem:[%s5568] sm:$0x1]
    %v5570 = vmul.f32 %v5569, %v5567
    %s5571 = sadd.s32 %s5541, 768
    %s5572 = scalar_lea.vmem [#allocation2], %s5571
    %v5573 = vld [vmem:[%s5572] sm:$0x1]
    %v5574 = vmul.f32 %v5573, %v5488
    %s5575 = scalar_lea.vmem [#allocation3], %s5571
    %v5576 = vld [vmem:[%s5575] sm:$0x1]
    %v5577 = vadd.f32 %v5574, %v5576
    %s5578 = scalar_lea.vmem [#allocation4], %s5571
    %v5579 = vld [vmem:[%s5578] sm:$0x1]
    %v5580 = vmul.f32 %v5579, %v5577
    %s5581 = sadd.s32 %s5541, 1024
    %s5582 = scalar_lea.vmem [#allocation2], %s5581
    %v5583 = vld [vmem:[%s5582] sm:$0x1]
    %v5584 = vmul.f32 %v5583, %v5498
    %s5585 = scalar_lea.vmem [#allocation3], %s5581
    %v5586 = vld [vmem:[%s5585] sm:$0x1]
    %v5587 = vadd.f32 %v5584, %v5586
    %s5588 = scalar_lea.vmem [#allocation4], %s5581
    %v5589 = vld [vmem:[%s5588] sm:$0x1]
    %v5590 = vmul.f32 %v5589, %v5587
    %s5591 = sadd.s32 %s5541, 1280
    %s5592 = scalar_lea.vmem [#allocation2], %s5591
    %v5593 = vld [vmem:[%s5592] sm:$0x1]
    %v5594 = vmul.f32 %v5593, %v5508
    %s5595 = scalar_lea.vmem [#allocation3], %s5591
    %v5596 = vld [vmem:[%s5595] sm:$0x1]
    %v5597 = vadd.f32 %v5594, %v5596
    %s5598 = scalar_lea.vmem [#allocation4], %s5591
    %v5599 = vld [vmem:[%s5598] sm:$0x1]
    %v5600 = vmul.f32 %v5599, %v5597
    %s5601 = sadd.s32 %s5541, 1536
    %s5602 = scalar_lea.vmem [#allocation2], %s5601
    %v5603 = vld [vmem:[%s5602] sm:$0x1]
    %v5604 = vmul.f32 %v5603, %v5518
    %s5605 = scalar_lea.vmem [#allocation3], %s5601
    %v5606 = vld [vmem:[%s5605] sm:$0x1]
    %v5607 = vadd.f32 %v5604, %v5606
    %s5608 = scalar_lea.vmem [#allocation4], %s5601
    %v5609 = vld [vmem:[%s5608] sm:$0x1]
    %v5610 = vmul.f32 %v5609, %v5607
    %s5611 = sadd.s32 %s5541, 1792
    %s5612 = scalar_lea.vmem [#allocation2], %s5611
    %v5613 = vld [vmem:[%s5612] sm:$0x1]
    %v5614 = vmul.f32 %v5613, %v5528
    %s5615 = scalar_lea.vmem [#allocation3], %s5611
    %v5616 = vld [vmem:[%s5615] sm:$0x1]
    %v5617 = vadd.f32 %v5614, %v5616
    %s5618 = scalar_lea.vmem [#allocation4], %s5611
    %v5619 = vld [vmem:[%s5618] sm:$0x1]
    %v5620 = vmul.f32 %v5619, %v5617
    %v5621 = vadd.f32 %v5550, %v5560
    %v5622 = vadd.f32 %v5570, %v5580
    %v5623 = vadd.f32 %v5590, %v5600
    %v5624 = vadd.f32 %v5610, %v5620
    %v5625 = vadd.f32 %v5621, %v5622
    %v5626 = vadd.f32 %v5623, %v5624
    %v5627 = vadd.f32 %v5625, %v5626
    %s5628 = scalar_lea.vmem [#allocation5], %s5541
    %5629 = vst [vmem:[%s5628] sm:$0x1] %v5627
  $region30: #{ss2d_forward.4} parent=0 // loop_footer
    %s4909 = sadd.s32 1, %s4905
  $region31: #{ss2d_forward.4} parent=0 // loop_footer_branch
    %4904 = sbr.rel target = $region27
  $region32: #{ss2d_forward.4} parent=0 // loop_exit
    _
  %v5630 = vld [vmem:[#allocation5] sm:$0xff]
  %v5631 = vld [vmem:[#allocation5 + $0x8] sm:$0xff]
  %v5632 = vld [vmem:[#allocation5 + $0x10] sm:$0xff]
  %v5633 = vld [vmem:[#allocation5 + $0x18] sm:$0xff]
  %v5634 = vld [vmem:[#allocation5 + $0x20] sm:$0xff]
  %v5635 = vld [vmem:[#allocation5 + $0x28] sm:$0xff]
  %v5636 = vld [vmem:[#allocation5 + $0x30] sm:$0xff]
  %v5637 = vld [vmem:[#allocation5 + $0x38] sm:$0xff]
  %v5638 = vld [vmem:[#allocation5 + $0x40] sm:$0xff]
  %v5639 = vld [vmem:[#allocation5 + $0x48] sm:$0xff]
  %v5640 = vld [vmem:[#allocation5 + $0x50] sm:$0xff]
  %v5641 = vld [vmem:[#allocation5 + $0x58] sm:$0xff]
  %v5642 = vld [vmem:[#allocation5 + $0x60] sm:$0xff]
  %v5643 = vld [vmem:[#allocation5 + $0x68] sm:$0xff]
  %v5644 = vld [vmem:[#allocation5 + $0x70] sm:$0xff]
  %v5645 = vld [vmem:[#allocation5 + $0x78] sm:$0xff]
  %v5646 = vld [vmem:[#allocation5 + $0x80] sm:$0xff]
  %v5647 = vld [vmem:[#allocation5 + $0x88] sm:$0xff]
  %v5648 = vld [vmem:[#allocation5 + $0x90] sm:$0xff]
  %v5649 = vld [vmem:[#allocation5 + $0x98] sm:$0xff]
  %v5650 = vld [vmem:[#allocation5 + $0xa0] sm:$0xff]
  %v5651 = vld [vmem:[#allocation5 + $0xa8] sm:$0xff]
  %v5652 = vld [vmem:[#allocation5 + $0xb0] sm:$0xff]
  %v5653 = vld [vmem:[#allocation5 + $0xb8] sm:$0xff]
  %v5654 = vld [vmem:[#allocation5 + $0xc0] sm:$0xff]
  %v5655 = vld [vmem:[#allocation5 + $0xc8] sm:$0xff]
  %v5656 = vld [vmem:[#allocation5 + $0xd0] sm:$0xff]
  %v5657 = vld [vmem:[#allocation5 + $0xd8] sm:$0xff]
  %v5658 = vld [vmem:[#allocation5 + $0xe0] sm:$0xff]
  %v5659 = vld [vmem:[#allocation5 + $0xe8] sm:$0xff]
  %v5660 = vld [vmem:[#allocation5 + $0xf0] sm:$0xff]
  %v5661 = vld [vmem:[#allocation5 + $0xf8] sm:$0xff]
  %5694 = vrot.lane.b32.xlu0 %v5630, 64
  %v5695 = vpop.permute.xlu0 %5694
  %5696 = vrot.lane.b32.xlu0 %v5631, 64
  %v5697 = vpop.permute.xlu0 %5696
  %5698 = vrot.lane.b32.xlu0 %v5632, 64
  %v5699 = vpop.permute.xlu0 %5698
  %5700 = vrot.lane.b32.xlu0 %v5633, 64
  %v5701 = vpop.permute.xlu0 %5700
  %5702 = vrot.lane.b32.xlu0 %v5634, 64
  %v5703 = vpop.permute.xlu0 %5702
  %5704 = vrot.lane.b32.xlu0 %v5635, 64
  %v5705 = vpop.permute.xlu0 %5704
  %5706 = vrot.lane.b32.xlu0 %v5636, 64
  %v5707 = vpop.permute.xlu0 %5706
  %5708 = vrot.lane.b32.xlu0 %v5637, 64
  %v5709 = vpop.permute.xlu0 %5708
  %5710 = vrot.lane.b32.xlu0 %v5638, 64
  %v5711 = vpop.permute.xlu0 %5710
  %5712 = vrot.lane.b32.xlu0 %v5639, 64
  %v5713 = vpop.permute.xlu0 %5712
  %5714 = vrot.lane.b32.xlu0 %v5640, 64
  %v5715 = vpop.permute.xlu0 %5714
  %5716 = vrot.lane.b32.xlu0 %v5641, 64
  %v5717 = vpop.permute.xlu0 %5716
  %5718 = vrot.lane.b32.xlu0 %v5642, 64
  %v5719 = vpop.permute.xlu0 %5718
  %5720 = vrot.lane.b32.xlu0 %v5643, 64
  %v5721 = vpop.permute.xlu0 %5720
  %5722 = vrot.lane.b32.xlu0 %v5644, 64
  %v5723 = vpop.permute.xlu0 %5722
  %5724 = vrot.lane.b32.xlu0 %v5645, 64
  %v5725 = vpop.permute.xlu0 %5724
  %5726 = vrot.lane.b32.xlu0 %v5646, 64
  %v5727 = vpop.permute.xlu0 %5726
  %5728 = vrot.lane.b32.xlu0 %v5647, 64
  %v5729 = vpop.permute.xlu0 %5728
  %5730 = vrot.lane.b32.xlu0 %v5648, 64
  %v5731 = vpop.permute.xlu0 %5730
  %5732 = vrot.lane.b32.xlu0 %v5649, 64
  %v5733 = vpop.permute.xlu0 %5732
  %5734 = vrot.lane.b32.xlu0 %v5650, 64
  %v5735 = vpop.permute.xlu0 %5734
  %5736 = vrot.lane.b32.xlu0 %v5651, 64
  %v5737 = vpop.permute.xlu0 %5736
  %5738 = vrot.lane.b32.xlu0 %v5652, 64
  %v5739 = vpop.permute.xlu0 %5738
  %5740 = vrot.lane.b32.xlu0 %v5653, 64
  %v5741 = vpop.permute.xlu0 %5740
  %5742 = vrot.lane.b32.xlu0 %v5654, 64
  %v5743 = vpop.permute.xlu0 %5742
  %5744 = vrot.lane.b32.xlu0 %v5655, 64
  %v5745 = vpop.permute.xlu0 %5744
  %5746 = vrot.lane.b32.xlu0 %v5656, 64
  %v5747 = vpop.permute.xlu0 %5746
  %5748 = vrot.lane.b32.xlu0 %v5657, 64
  %v5749 = vpop.permute.xlu0 %5748
  %5750 = vrot.lane.b32.xlu0 %v5658, 64
  %v5751 = vpop.permute.xlu0 %5750
  %5752 = vrot.lane.b32.xlu0 %v5659, 64
  %v5753 = vpop.permute.xlu0 %5752
  %5754 = vrot.lane.b32.xlu0 %v5660, 64
  %v5755 = vpop.permute.xlu0 %5754
  %5756 = vrot.lane.b32.xlu0 %v5661, 64
  %v5757 = vpop.permute.xlu0 %5756
  %v5790 = vadd.f32 %v5630, %v5695
  %v5791 = vadd.f32 %v5631, %v5697
  %v5792 = vadd.f32 %v5632, %v5699
  %v5793 = vadd.f32 %v5633, %v5701
  %v5794 = vadd.f32 %v5634, %v5703
  %v5795 = vadd.f32 %v5635, %v5705
  %v5796 = vadd.f32 %v5636, %v5707
  %v5797 = vadd.f32 %v5637, %v5709
  %v5798 = vadd.f32 %v5638, %v5711
  %v5799 = vadd.f32 %v5639, %v5713
  %v5800 = vadd.f32 %v5640, %v5715
  %v5801 = vadd.f32 %v5641, %v5717
  %v5802 = vadd.f32 %v5642, %v5719
  %v5803 = vadd.f32 %v5643, %v5721
  %v5804 = vadd.f32 %v5644, %v5723
  %v5805 = vadd.f32 %v5645, %v5725
  %v5806 = vadd.f32 %v5646, %v5727
  %v5807 = vadd.f32 %v5647, %v5729
  %v5808 = vadd.f32 %v5648, %v5731
  %v5809 = vadd.f32 %v5649, %v5733
  %v5810 = vadd.f32 %v5650, %v5735
  %v5811 = vadd.f32 %v5651, %v5737
  %v5812 = vadd.f32 %v5652, %v5739
  %v5813 = vadd.f32 %v5653, %v5741
  %v5814 = vadd.f32 %v5654, %v5743
  %v5815 = vadd.f32 %v5655, %v5745
  %v5816 = vadd.f32 %v5656, %v5747
  %v5817 = vadd.f32 %v5657, %v5749
  %v5818 = vadd.f32 %v5658, %v5751
  %v5819 = vadd.f32 %v5659, %v5753
  %v5820 = vadd.f32 %v5660, %v5755
  %v5821 = vadd.f32 %v5661, %v5757
  %v5822 = vld [vmem:[%s5] sm:$0x1]
  %v5824 = vperm.slane %v5822, 0
  %v5826 = vmul.f32 %v5824, %v23
  %v5827 = vmul.f32 %v5824, %v24
  %v5828 = vmul.f32 %v5824, %v25
  %v5829 = vmul.f32 %v5824, %v26
  %v5830 = vmul.f32 %v5824, %v27
  %v5831 = vmul.f32 %v5824, %v28
  %v5832 = vmul.f32 %v5824, %v29
  %v5833 = vmul.f32 %v5824, %v30
  %v5834 = vmul.f32 %v5824, %v31
  %v5835 = vmul.f32 %v5824, %v32
  %v5836 = vmul.f32 %v5824, %v33
  %v5837 = vmul.f32 %v5824, %v34
  %v5838 = vmul.f32 %v5824, %v35
  %v5839 = vmul.f32 %v5824, %v36
  %v5840 = vmul.f32 %v5824, %v37
  %v5841 = vmul.f32 %v5824, %v38
  %v5842 = vmul.f32 %v5824, %v39
  %v5843 = vmul.f32 %v5824, %v40
  %v5844 = vmul.f32 %v5824, %v41
  %v5845 = vmul.f32 %v5824, %v42
  %v5846 = vmul.f32 %v5824, %v43
  %v5847 = vmul.f32 %v5824, %v44
  %v5848 = vmul.f32 %v5824, %v45
  %v5849 = vmul.f32 %v5824, %v46
  %v5850 = vmul.f32 %v5824, %v47
  %v5851 = vmul.f32 %v5824, %v48
  %v5852 = vmul.f32 %v5824, %v49
  %v5853 = vmul.f32 %v5824, %v50
  %v5854 = vmul.f32 %v5824, %v51
  %v5855 = vmul.f32 %v5824, %v52
  %v5856 = vmul.f32 %v5824, %v53
  %v5857 = vmul.f32 %v5824, %v54
  %v5858 = vadd.f32 %v5790, %v5826
  %v5859 = vadd.f32 %v5791, %v5827
  %v5860 = vadd.f32 %v5792, %v5828
  %v5861 = vadd.f32 %v5793, %v5829
  %v5862 = vadd.f32 %v5794, %v5830
  %v5863 = vadd.f32 %v5795, %v5831
  %v5864 = vadd.f32 %v5796, %v5832
  %v5865 = vadd.f32 %v5797, %v5833
  %v5866 = vadd.f32 %v5798, %v5834
  %v5867 = vadd.f32 %v5799, %v5835
  %v5868 = vadd.f32 %v5800, %v5836
  %v5869 = vadd.f32 %v5801, %v5837
  %v5870 = vadd.f32 %v5802, %v5838
  %v5871 = vadd.f32 %v5803, %v5839
  %v5872 = vadd.f32 %v5804, %v5840
  %v5873 = vadd.f32 %v5805, %v5841
  %v5874 = vadd.f32 %v5806, %v5842
  %v5875 = vadd.f32 %v5807, %v5843
  %v5876 = vadd.f32 %v5808, %v5844
  %v5877 = vadd.f32 %v5809, %v5845
  %v5878 = vadd.f32 %v5810, %v5846
  %v5879 = vadd.f32 %v5811, %v5847
  %v5880 = vadd.f32 %v5812, %v5848
  %v5881 = vadd.f32 %v5813, %v5849
  %v5882 = vadd.f32 %v5814, %v5850
  %v5883 = vadd.f32 %v5815, %v5851
  %v5884 = vadd.f32 %v5816, %v5852
  %v5885 = vadd.f32 %v5817, %v5853
  %v5886 = vadd.f32 %v5818, %v5854
  %v5887 = vadd.f32 %v5819, %v5855
  %v5888 = vadd.f32 %v5820, %v5856
  %v5889 = vadd.f32 %v5821, %v5857
  %5890 = vst.msk [vmem:[%s6] sm:$0xff] %vm67, %v5858
  %5891 = vst.msk [vmem:[%s6 + $0x8] sm:$0xff] %vm67, %v5859
  %5892 = vst.msk [vmem:[%s6 + $0x10] sm:$0xff] %vm67, %v5860
  %5893 = vst.msk [vmem:[%s6 + $0x18] sm:$0xff] %vm67, %v5861
  %5894 = vst.msk [vmem:[%s6 + $0x20] sm:$0xff] %vm67, %v5862
  %5895 = vst.msk [vmem:[%s6 + $0x28] sm:$0xff] %vm67, %v5863
  %5896 = vst.msk [vmem:[%s6 + $0x30] sm:$0xff] %vm67, %v5864
  %5897 = vst.msk [vmem:[%s6 + $0x38] sm:$0xff] %vm67, %v5865
  %5898 = vst.msk [vmem:[%s6 + $0x40] sm:$0xff] %vm67, %v5866
  %5899 = vst.msk [vmem:[%s6 + $0x48] sm:$0xff] %vm67, %v5867
  %5900 = vst.msk [vmem:[%s6 + $0x50] sm:$0xff] %vm67, %v5868
  %5901 = vst.msk [vmem:[%s6 + $0x58] sm:$0xff] %vm67, %v5869
  %5902 = vst.msk [vmem:[%s6 + $0x60] sm:$0xff] %vm67, %v5870
  %5903 = vst.msk [vmem:[%s6 + $0x68] sm:$0xff] %vm67, %v5871
  %5904 = vst.msk [vmem:[%s6 + $0x70] sm:$0xff] %vm67, %v5872
  %5905 = vst.msk [vmem:[%s6 + $0x78] sm:$0xff] %vm67, %v5873
  %5906 = vst.msk [vmem:[%s6 + $0x80] sm:$0xff] %vm67, %v5874
  %5907 = vst.msk [vmem:[%s6 + $0x88] sm:$0xff] %vm67, %v5875
  %5908 = vst.msk [vmem:[%s6 + $0x90] sm:$0xff] %vm67, %v5876
  %5909 = vst.msk [vmem:[%s6 + $0x98] sm:$0xff] %vm67, %v5877
  %5910 = vst.msk [vmem:[%s6 + $0xa0] sm:$0xff] %vm67, %v5878
  %5911 = vst.msk [vmem:[%s6 + $0xa8] sm:$0xff] %vm67, %v5879
  %5912 = vst.msk [vmem:[%s6 + $0xb0] sm:$0xff] %vm67, %v5880
  %5913 = vst.msk [vmem:[%s6 + $0xb8] sm:$0xff] %vm67, %v5881
  %5914 = vst.msk [vmem:[%s6 + $0xc0] sm:$0xff] %vm67, %v5882
  %5915 = vst.msk [vmem:[%s6 + $0xc8] sm:$0xff] %vm67, %v5883
  %5916 = vst.msk [vmem:[%s6 + $0xd0] sm:$0xff] %vm67, %v5884
  %5917 = vst.msk [vmem:[%s6 + $0xd8] sm:$0xff] %vm67, %v5885
  %5918 = vst.msk [vmem:[%s6 + $0xe0] sm:$0xff] %vm67, %v5886
  %5919 = vst.msk [vmem:[%s6 + $0xe8] sm:$0xff] %vm67, %v5887
  %5920 = vst.msk [vmem:[%s6 + $0xf0] sm:$0xff] %vm67, %v5888
  %5921 = vst.msk [vmem:[%s6 + $0xf8] sm:$0xff] %vm67, %v5889
  // Predicated region
  $region33: #{ss2d_forward.4} parent=0 // pred_check
    _
  $region34: #{ss2d_forward.4} parent=0 // pred_check_branch
    %5923 = sbr.rel (0) target = $region36
  $region35: #{ss2d_forward.4} parent=0 // pred_region
    _
  $region36: #{ss2d_forward.4} parent=0 // pred_fallthru
    _
  // Predicated region
  $region37: #{ss2d_forward.4} parent=0 // pred_check
    _
  $region38: #{ss2d_forward.4} parent=0 // pred_check_branch
    %5925 = sbr.rel (0) target = $region40
  $region39: #{ss2d_forward.4} parent=0 // pred_region
    _
  $region40: #{ss2d_forward.4} parent=0 // pred_fallthru
    _

</llo_original>
